<compile_context>
chip_gen: v5e
topology: v5e:2x2
jax: 0.10.0
libtpu: 0.0.40
codegen_flags: <defaults>
</compile_context>

<pallas_src>
import functools

import jax
import jax.numpy as jnp
from jax import lax
from jax.experimental import pallas as pl
from jax.experimental.pallas import tpu as pltpu

# ----------------------------- model config ---------------------------------
N_CLS = 3            # len(classnames)
N_CTX = 8            # prompt context tokens
CTX_LEN = 16         # text context length (77 in real CLIP)
VOCAB = 512
D = 64               # D_VIS == D_TEXT == D_PROJ (required by the weight packing)
VIS_HEADS = 4
TEXT_HEADS = 4
PATCH = 16
IMG = 32             # 32x32 image -> 2x2 = 4 patches (+1 cls token)

NP = (IMG // PATCH) ** 2          # patches per image
S_VIS = NP + 1                    # vision sequence length (cls + patches)
CPP = 3 * PATCH * PATCH           # flattened patch size

# ---- packed-slab layouts (built in init_model) -------------------------------
# mats (D, 2*9D) bf16, per tower: [ qkv_w | out_w | fc_w | tower_proj ]
MAT_QKV, MAT_OUT, MAT_FC, MAT_TP = 0, 3 * D, 4 * D, 8 * D
MAT_TOWER = 9 * D                 # per-tower column stride (vision @0, text @MAT_TOWER)

# rows (40, D) f32: positional embeddings, LN gains/biases, residual biases
V_POS = 0                                        # S_VIS rows
V_LNPRE_G, V_LNPRE_B = 5, 6
V_LN1_G, V_LN1_B, V_OUT_B = 7, 8, 9
V_LN2_G, V_LN2_B, V_PROJ_B = 10, 11, 12
V_LNPOST_G, V_LNPOST_B = 13, 14                  # row 15 = pad
T_BASE = 16
T_POS = T_BASE                                   # CTX_LEN rows
T_LN1_G, T_LN1_B, T_OUT_B = T_BASE + 16, T_BASE + 17, T_BASE + 18
T_LN2_G, T_LN2_B, T_PROJ_B = T_BASE + 19, T_BASE + 20, T_BASE + 21
T_LNF_G, T_LNF_B = T_BASE + 22, T_BASE + 23
N_ROWS = 40

VMEM_SPEC = pl.BlockSpec(memory_space=pltpu.MemorySpace.VMEM)
SMEM_SPEC = pl.BlockSpec(memory_space=pltpu.MemorySpace.SMEM)


# --------------------------- in-kernel building blocks -------------------------


def _layernorm(x2d, g, b):
    # f32 statistics (bf16 variance at these widths visibly changes logits)
    mu = jnp.mean(x2d, axis=-1, keepdims=True)
    xc = x2d - mu
    var = jnp.mean(xc * xc, axis=-1, keepdims=True)
    return xc * lax.rsqrt(var + 1e-5) * g + b


def _transformer_block(x2d, batch, seq, num_heads, mask_bias,
                       ln1_g, ln1_b, qkv_w, qkv_b, out_w, out_b,
                       ln2_g, ln2_b, fc_w, fc_b, proj_w, proj_b):
    """CLIP ResidualAttentionBlock on a vreg-resident (batch*seq, D) f32 value.

    Matmul operands are bf16 (MXU-native), accumulation/softmax/residuals f32.
    The 1/sqrt(dh) attention scale is pre-folded into the q third of qkv_w/qkv_b.
    """
    bf16 = jnp.bfloat16
    d = x2d.shape[-1]
    dh = d // num_heads

    h = _layernorm(x2d, ln1_g, ln1_b)
    qkv = jnp.dot(h.astype(bf16), qkv_w, preferred_element_type=jnp.float32) + qkv_b
    qkv = qkv.reshape(batch, seq, 3 * d)

    attn = jnp.zeros((batch * seq, d), jnp.float32)
    for hd in range(num_heads):                       # static unroll, all heads in-kernel
        q = qkv[:, :, hd * dh:(hd + 1) * dh].astype(bf16)
        k = qkv[:, :, d + hd * dh:d + (hd + 1) * dh].astype(bf16)
        v = qkv[:, :, 2 * d + hd * dh:2 * d + (hd + 1) * dh].astype(bf16)
        # contract on the last dim: no explicit K transpose is materialized
        s = jnp.einsum('bqd,bkd->bqk', q, k, preferred_element_type=jnp.float32)
        if mask_bias is not None:                     # additive causal bias, f32
            s = s + mask_bias
        s = s - jnp.max(s, axis=-1, keepdims=True)
        e = jnp.exp(s)
        # approx reciprocal (EUP): ~1e-3 rel. error vs exact softmax; fine for inference
        pr = e * pl.reciprocal(jnp.sum(e, axis=-1, keepdims=True), approx=True)
        o = jnp.einsum('bqk,bkd->bqd', pr.astype(bf16), v,
                       preferred_element_type=jnp.float32)            # (batch,seq,dh)
        # fold the head straight into the output projection (lane-dense result)
        attn = attn + jnp.dot(o.reshape(batch * seq, dh).astype(bf16),
                              out_w[hd * dh:(hd + 1) * dh, :],
                              preferred_element_type=jnp.float32)
    x2d = x2d + attn + out_b

    h = _layernorm(x2d, ln2_g, ln2_b)
    h = jnp.dot(h.astype(bf16), fc_w, preferred_element_type=jnp.float32) + fc_b
    h = h * jax.nn.sigmoid(1.702 * h)                 # CLIP QuickGELU
    h = jnp.dot(h.astype(bf16), proj_w, preferred_element_type=jnp.float32) + proj_b
    return x2d + h


# ------------------------------ fused forward kernel ---------------------------


def _clip_fused_kernel(scale_ref, patches_ref, prompts_ref, eot_sel_ref,
                       conv_w_ref, mats_ref, mlp_proj_ref, rows_ref, wide_b_ref,
                       o_ref):
    f32 = jnp.float32
    bf16 = jnp.bfloat16
    rows = rows_ref[...]                              # (40, D) f32, vreg resident

    def tower_mats(base):
        return (mats_ref[:, base + MAT_QKV:base + MAT_OUT],     # qkv_w   (D, 3D)
                mats_ref[:, base + MAT_OUT:base + MAT_FC],      # out_w   (D, D)
                mats_ref[:, base + MAT_FC:base + MAT_TP],       # fc_w    (D, 4D)
                mats_ref[:, base + MAT_TP:base + MAT_TOWER])    # tower projection

    # ---------------- vision tower: whole image batch in one shot ----------------
    B, S, _ = patches_ref.shape
    px = patches_ref[...].reshape(B * S, CPP + 1)     # bf16; cls indicator in col 0
    qkv_w, out_w, fc_w, vproj = tower_mats(0)
    # conv1-as-matmul; class_embedding is row 0 of the extended weight
    x2d = jnp.dot(px, conv_w_ref[...], preferred_element_type=f32)      # (B*S, D)
    x = x2d.reshape(B, S, D) + rows[V_POS:V_POS + S, :][None, :, :]     # + pos emb
    x2d = _layernorm(x.reshape(B * S, D),
                     rows[V_LNPRE_G:V_LNPRE_G + 1], rows[V_LNPRE_B:V_LNPRE_B + 1])
    x2d = _transformer_block(
        x2d, B, S, VIS_HEADS, None,
        rows[V_LN1_G:V_LN1_G + 1], rows[V_LN1_B:V_LN1_B + 1],
        qkv_w, wide_b_ref[0:1, 0:3 * D],
        out_w, rows[V_OUT_B:V_OUT_B + 1],
        rows[V_LN2_G:V_LN2_G + 1], rows[V_LN2_B:V_LN2_B + 1],
        fc_w, wide_b_ref[1:2, 0:4 * D],
        mlp_proj_ref[:, 0:D], rows[V_PROJ_B:V_PROJ_B + 1])
    # cls-token gather (row b*S of the flattened rows) as a one-hot matmul
    ri = lax.broadcasted_iota(jnp.int32, (B, B * S), 0)
    ci = lax.broadcasted_iota(jnp.int32, (B, B * S), 1)
    cls_sel = (ci == ri * S).astype(f32)
    cls_tok = jnp.dot(cls_sel, x2d, preferred_element_type=f32)         # (B, D)
    cls_tok = _layernorm(cls_tok, rows[V_LNPOST_G:V_LNPOST_G + 1],
                         rows[V_LNPOST_B:V_LNPOST_B + 1])
    img = jnp.dot(cls_tok.astype(bf16), vproj, preferred_element_type=f32)  # (B, D)

    # --------------------------------- text tower --------------------------------
    N, L, _ = prompts_ref.shape
    qkv_w, out_w, fc_w, tproj = tower_mats(MAT_TOWER)
    tx = prompts_ref[...] + rows[T_POS:T_POS + L, :][None, :, :]
    rr = lax.broadcasted_iota(jnp.int32, (L, L), 0)
    cc = lax.broadcasted_iota(jnp.int32, (L, L), 1)
    mask_bias = jnp.where(cc <= rr, jnp.float32(0.0), jnp.float32(-1e30))
    t2d = _transformer_block(
        tx.reshape(N * L, D), N, L, TEXT_HEADS, mask_bias,
        rows[T_LN1_G:T_LN1_G + 1], rows[T_LN1_B:T_LN1_B + 1],
        qkv_w, wide_b_ref[2:3, 0:3 * D],
        out_w, rows[T_OUT_B:T_OUT_B + 1],
        rows[T_LN2_G:T_LN2_G + 1], rows[T_LN2_B:T_LN2_B + 1],
        fc_w, wide_b_ref[3:4, 0:4 * D],
        mlp_proj_ref[:, D:2 * D], rows[T_PROJ_B:T_PROJ_B + 1])
    t2d = _layernorm(t2d, rows[T_LNF_G:T_LNF_G + 1], rows[T_LNF_B:T_LNF_B + 1])
    # EOT-token gather as a matmul against a precomputed one-hot selection matrix
    pooled = jnp.dot(eot_sel_ref[...], t2d, preferred_element_type=f32)  # (N_CLS, D)
    txt = jnp.dot(pooled.astype(bf16), tproj, preferred_element_type=f32)

    # ---------- normalize, scaled logits, mean over the image batch -------------
    tn = txt * lax.rsqrt(jnp.sum(txt * txt, axis=-1, keepdims=True))
    imgn = img * lax.rsqrt(jnp.sum(img * img, axis=-1, keepdims=True))
    logits = scale_ref[0, 0] * lax.dot_general(
        imgn, tn, (((1,), (1,)), ((), ())), preferred_element_type=f32)  # (B, N_CLS)
    o_ref[...] = jnp.mean(logits, axis=0, keepdims=True)


# ------------------------------- forward dispatch ------------------------------


def inference_bongard_single(images, p, buffers):
    B, C, H, W = images.shape
    nH, nW = H // PATCH, W // PATCH
    # NCHW -> flattened patches; prepend a cls-indicator row/column so the class
    # embedding falls out of the same (bf16) patch-embed matmul inside the kernel.
    patches = images.reshape(B, C, nH, PATCH, nW, PATCH)
    patches = patches.transpose(0, 2, 4, 1, 3, 5).reshape(B, nH * nW, CPP)
    pe = jnp.zeros((B, 1 + nH * nW, CPP + 1), jnp.float32)
    pe = pe.at[:, 0, 0].set(1.0)
    pe = pe.at[:, 1:, 1:].set(patches)
    pe = pe.astype(jnp.bfloat16)

    # PromptLearner.forward (learned_cls=True, class_token_position='end')
    ctx = jnp.broadcast_to(p["ctx"][None], (N_CLS, N_CTX, D))
    prompts = jnp.concatenate(
        [buffers["token_prefix"], ctx, p["cls"], buffers["token_suffix"]], axis=1)

    out = pl.pallas_call(
        _clip_fused_kernel,
        out_shape=jax.ShapeDtypeStruct((1, N_CLS), jnp.float32),
        in_specs=[SMEM_SPEC] + [VMEM_SPEC] * 8,
        out_specs=VMEM_SPEC,
        compiler_params=pltpu.CompilerParams(vmem_limit_bytes=32 * 1024 * 1024),
    )(p["logit_scale_exp"], pe, prompts, buffers["eot_sel"],
      p["conv_w_ext"], p["mats"], p["mlp_proj"], p["rows"], p["wide_b"])
    return out[0]                                                      # (N_CLS,)


def clip_ttt_forward(p, buffers, inputs):
    """ClipTestTimeTuning.forward dispatch."""
    if isinstance(inputs, (tuple, list)) and len(inputs) == 2:
        # TODO(synk): contrast_prompt_tuning (support-set cross-entropy) branch not exercised here.
        raise NotImplementedError
    if inputs.ndim == 4:
        return inference_bongard_single(inputs, p, buffers)
    # TODO(synk): directional_prompt_tuning / plain `inference` branches not exercised here.
    raise NotImplementedError


# --------------------------- deterministic param init --------------------------


def _init_block(nrm, d, n_heads):
    qscale = 1.0 / ((d // n_heads) ** 0.5)
    qkv_w = nrm((d, 3 * d))
    qkv_b = nrm((1, 3 * d), 0.01)
    # fold the 1/sqrt(dh) attention scale into the q third (weights + bias)
    qkv_w = qkv_w.at[:, :d].multiply(qscale)
    qkv_b = qkv_b.at[:, :d].multiply(qscale)
    return dict(
        qkv_w=qkv_w, qkv_b=qkv_b,
        out_w=nrm((d, d)), out_b=nrm((1, d), 0.01),
        fc_w=nrm((d, 4 * d)), fc_b=nrm((1, 4 * d), 0.01),
        proj_w=nrm((4 * d, d)), proj_b=nrm((1, d), 0.01),
        ln1_g=jnp.ones((1, d), jnp.float32), ln1_b=jnp.zeros((1, d), jnp.float32),
        ln2_g=jnp.ones((1, d), jnp.float32), ln2_b=jnp.zeros((1, d), jnp.float32))


def init_model(key):
    keys = iter(jax.random.split(key, 64))

    def nrm(shape, std=0.02):
        return (std * jax.random.normal(next(keys), shape)).astype(jnp.float32)

    # --- raw (torch-layout) parameters ---
    token_embedding = nrm((VOCAB, D))
    text_pos = nrm((CTX_LEN, D), 0.01)
    tb = _init_block(nrm, D, TEXT_HEADS)
    lnf_g, lnf_b = jnp.ones((1, D), jnp.float32), jnp.zeros((1, D), jnp.float32)
    text_projection = nrm((D, D))

    conv1_w = nrm((D, 3, PATCH, PATCH))
    class_embedding = nrm((1, D))
    vis_pos = nrm((S_VIS, D), 0.01)
    lnpre_g, lnpre_b = jnp.ones((1, D), jnp.float32), jnp.zeros((1, D), jnp.float32)
    vb = _init_block(nrm, D, VIS_HEADS)
    lnpost_g, lnpost_b = jnp.ones((1, D), jnp.float32), jnp.zeros((1, D), jnp.float32)
    vis_proj = nrm((D, D))

    # --- packed slabs: a handful of large DMAs instead of ~40 small ones ---
    conv_w_ext = jnp.concatenate(
        [class_embedding, conv1_w.reshape(D, CPP).T], axis=0).astype(jnp.bfloat16)

    def tower_mats(blk, tower_proj):
        return jnp.concatenate([blk["qkv_w"], blk["out_w"], blk["fc_w"], tower_proj],
                               axis=1)                               # (D, 9D)

    mats = jnp.concatenate([tower_mats(vb, vis_proj), tower_mats(tb, text_projection)],
                           axis=1).astype(jnp.bfloat16)              # (D, 2*9D)
    mlp_proj = jnp.concatenate([vb["proj_w"], tb["proj_w"]],
                               axis=1).astype(jnp.bfloat16)          # (4D, 2D)

    vis_rows = jnp.concatenate(
        [vis_pos, lnpre_g, lnpre_b,
         vb["ln1_g"], vb["ln1_b"], vb["out_b"],
         vb["ln2_g"], vb["ln2_b"], vb["proj_b"],
         lnpost_g, lnpost_b, jnp.zeros((1, D), jnp.float32)], axis=0)  # (16, D)
    text_rows = jnp.concatenate(
        [text_pos,
         tb["ln1_g"], tb["ln1_b"], tb["out_b"],
         tb["ln2_g"], tb["ln2_b"], tb["proj_b"],
         lnf_g, lnf_b], axis=0)                                        # (24, D)
    rows = jnp.concatenate([vis_rows, text_rows], axis=0)              # (40, D) f32
    assert rows.shape[0] == N_ROWS

    pad4d = lambda b: jnp.pad(b, ((0, 0), (0, 4 * D - b.shape[1])))
    wide_b = jnp.concatenate(
        [pad4d(vb["qkv_b"]), vb["fc_b"], pad4d(tb["qkv_b"]), tb["fc_b"]], axis=0)

    p = {
        # PromptLearner parameters (learned_cls=True)
        "ctx": nrm((N_CTX, D)),
        "cls": nrm((N_CLS, 1, D)),
        # packed kernel inputs
        "conv_w_ext": conv_w_ext,
        "mats": mats,
        "mlp_proj": mlp_proj,
        "rows": rows,
        "wide_b": wide_b,
        # exp(log(1/0.07)) hoisted to init; kernel only multiplies (SMEM scalar)
        "logit_scale_exp": jnp.full((1, 1), 1.0 / 0.07, jnp.float32),
    }

    # Synthetic tokenized prompts: [SOT, X*n_ctx, X(cls), '.', EOT, pad...]
    sot, eot, x_tok, dot_tok = VOCAB - 2, VOCAB - 1, 100, 50
    row = [sot] + [x_tok] * N_CTX + [x_tok, dot_tok, eot]
    row = row + [0] * (CTX_LEN - len(row))
    tokenized_prompts = jnp.tile(jnp.array(row, jnp.int32)[None], (N_CLS, 1))
    embedding = token_embedding[tokenized_prompts]                    # (N_CLS, L, D)

    # EOT gather (tokenized_prompts.argmax(-1)) precomputed as a one-hot selection
    eot_idx = jnp.argmax(tokenized_prompts, axis=-1)                  # (N_CLS,)
    flat_idx = jnp.arange(N_CLS) * CTX_LEN + eot_idx
    eot_sel = jax.nn.one_hot(flat_idx, N_CLS * CTX_LEN, dtype=jnp.float32)

    buffers = {
        "tokenized_prompts": tokenized_prompts,
        "token_prefix": embedding[:, :1, :],                          # SOT token
        "token_suffix": embedding[:, 1 + N_CTX + 1:, :],              # learned_cls slicing
        "eot_sel": eot_sel,
    }
    return p, buffers


# ---------------------------------- main --------------------------------------

if __name__ == "__main__":
    key = jax.random.PRNGKey(0)
    k_params, k_img = jax.random.split(key)
    params, buffers = init_model(k_params)

    # batch=4 (NOT 2) so torch's `len(input) == 2` branch is not taken and the
    # 4-D tensor routes to inference_bongard_single, as in the reference module.
    images = jax.random.normal(k_img, (4, 3, IMG, IMG), jnp.float32)   # NCHW

    forward = jax.jit(functools.partial(clip_ttt_forward, params, buffers))
    logits = jax.block_until_ready(forward(images))
    assert logits.shape == (N_CLS,), logits.shape
    assert bool(jnp.all(jnp.isfinite(logits))), logits
    print("KERNEL_OK")
</pallas_src>

<mosaic_0001>
module attributes {stable_mosaic.version = 11 : i64} {
  func.func @_clip_fused_kernel(%arg0: memref<1x1xf32, #tpu.memory_space<smem>>, %arg1: memref<4x5x769xbf16, #tpu.memory_space<vmem>>, %arg2: memref<3x16x64xf32, #tpu.memory_space<vmem>>, %arg3: memref<3x48xf32, #tpu.memory_space<vmem>>, %arg4: memref<769x64xbf16, #tpu.memory_space<vmem>>, %arg5: memref<64x1152xbf16, #tpu.memory_space<vmem>>, %arg6: memref<256x128xbf16, #tpu.memory_space<vmem>>, %arg7: memref<40x64xf32, #tpu.memory_space<vmem>>, %arg8: memref<4x256xf32, #tpu.memory_space<vmem>>, %arg9: memref<1x3xf32, #tpu.memory_space<vmem>>) attributes {dimension_semantics = [], scalar_prefetch = 0 : i64, scratch_operands = 0 : i64, tpu.core_type = #tpu.core_type<tc>} {
    %c0 = arith.constant 0 : index
    %c0_0 = arith.constant 0 : index
    %0 = vector.load %arg7[%c0, %c0_0] : memref<40x64xf32, #tpu.memory_space<vmem>>, vector<40x64xf32>
    %c0_1 = arith.constant 0 : index
    %c0_2 = arith.constant 0 : index
    %c0_3 = arith.constant 0 : index
    %1 = vector.load %arg1[%c0_1, %c0_2, %c0_3] : memref<4x5x769xbf16, #tpu.memory_space<vmem>>, vector<4x5x769xbf16>
    %2 = vector.shape_cast %1 : vector<4x5x769xbf16> to vector<20x769xbf16>
    %c0_4 = arith.constant 0 : index
    %c0_5 = arith.constant 0 : index
    %3 = vector.load %arg5[%c0_4, %c0_5] : memref<64x1152xbf16, #tpu.memory_space<vmem>>, vector<64x192xbf16>
    %c0_6 = arith.constant 0 : index
    %c192 = arith.constant 192 : index
    %4 = vector.load %arg5[%c0_6, %c192] : memref<64x1152xbf16, #tpu.memory_space<vmem>>, vector<64x64xbf16>
    %c0_7 = arith.constant 0 : index
    %c256 = arith.constant 256 : index
    %5 = vector.load %arg5[%c0_7, %c256] : memref<64x1152xbf16, #tpu.memory_space<vmem>>, vector<64x256xbf16>
    %c0_8 = arith.constant 0 : index
    %c512 = arith.constant 512 : index
    %6 = vector.load %arg5[%c0_8, %c512] : memref<64x1152xbf16, #tpu.memory_space<vmem>>, vector<64x64xbf16>
    %c0_9 = arith.constant 0 : index
    %c0_10 = arith.constant 0 : index
    %7 = vector.load %arg4[%c0_9, %c0_10] : memref<769x64xbf16, #tpu.memory_space<vmem>>, vector<769x64xbf16>
    %cst = arith.constant dense<0.000000e+00> : vector<20x64xf32>
    %8 = tpu.matmul %2, %7, %cst {dimension_numbers = #tpu.dot_dimension_numbers<[1], [0], [0], [1], [0, 0, 1, 1], [], []>} : vector<20x769xbf16>, vector<769x64xbf16>, vector<20x64xf32> -> vector<20x64xf32>
    %9 = vector.shape_cast %8 : vector<20x64xf32> to vector<4x5x64xf32>
    %10 = vector.extract_strided_slice %0 {offsets = [0, 0], sizes = [5, 64], strides = [1, 1]} : vector<40x64xf32> to vector<5x64xf32>
    %11 = vector.shape_cast %10 : vector<5x64xf32> to vector<1x5x64xf32>
    %12 = vector.broadcast %11 : vector<1x5x64xf32> to vector<4x5x64xf32>
    %13 = arith.addf %9, %12 : vector<4x5x64xf32>
    %14 = vector.shape_cast %13 : vector<4x5x64xf32> to vector<20x64xf32>
    %15 = vector.extract_strided_slice %0 {offsets = [5, 0], sizes = [1, 64], strides = [1, 1]} : vector<40x64xf32> to vector<1x64xf32>
    %16 = vector.extract_strided_slice %0 {offsets = [6, 0], sizes = [1, 64], strides = [1, 1]} : vector<40x64xf32> to vector<1x64xf32>
    %cst_11 = arith.constant dense<0.000000e+00> : vector<20xf32>
    %17 = vector.multi_reduction <add>, %14, %cst_11 [1] : vector<20x64xf32> to vector<20xf32>
    %18 = vector.shape_cast %17 : vector<20xf32> to vector<20x1xf32>
    %cst_12 = arith.constant 6.400000e+01 : f32
    %19 = vector.broadcast %cst_12 : f32 to vector<20x1xf32>
    %20 = arith.divf %18, %19 : vector<20x1xf32>
    %21 = vector.broadcast %20 : vector<20x1xf32> to vector<20x64xf32>
    %22 = arith.subf %14, %21 : vector<20x64xf32>
    %23 = arith.mulf %22, %22 : vector<20x64xf32>
    %cst_13 = arith.constant dense<0.000000e+00> : vector<20xf32>
    %24 = vector.multi_reduction <add>, %23, %cst_13 [1] : vector<20x64xf32> to vector<20xf32>
    %25 = vector.shape_cast %24 : vector<20xf32> to vector<20x1xf32>
    %cst_14 = arith.constant 6.400000e+01 : f32
    %26 = vector.broadcast %cst_14 : f32 to vector<20x1xf32>
    %27 = arith.divf %25, %26 : vector<20x1xf32>
    %cst_15 = arith.constant 9.99999974E-6 : f32
    %28 = vector.broadcast %cst_15 : f32 to vector<20x1xf32>
    %29 = arith.addf %27, %28 : vector<20x1xf32>
    %30 = math.rsqrt %29 : vector<20x1xf32>
    %31 = vector.broadcast %30 : vector<20x1xf32> to vector<20x64xf32>
    %32 = arith.mulf %22, %31 : vector<20x64xf32>
    %33 = vector.broadcast %15 : vector<1x64xf32> to vector<20x64xf32>
    %34 = arith.mulf %32, %33 : vector<20x64xf32>
    %35 = vector.broadcast %16 : vector<1x64xf32> to vector<20x64xf32>
    %36 = arith.addf %34, %35 : vector<20x64xf32>
    %37 = vector.extract_strided_slice %0 {offsets = [7, 0], sizes = [1, 64], strides = [1, 1]} : vector<40x64xf32> to vector<1x64xf32>
    %38 = vector.extract_strided_slice %0 {offsets = [8, 0], sizes = [1, 64], strides = [1, 1]} : vector<40x64xf32> to vector<1x64xf32>
    %c0_16 = arith.constant 0 : index
    %c0_17 = arith.constant 0 : index
    %39 = vector.load %arg8[%c0_16, %c0_17] : memref<4x256xf32, #tpu.memory_space<vmem>>, vector<1x192xf32>
    %40 = vector.extract_strided_slice %0 {offsets = [9, 0], sizes = [1, 64], strides = [1, 1]} : vector<40x64xf32> to vector<1x64xf32>
    %41 = vector.extract_strided_slice %0 {offsets = [10, 0], sizes = [1, 64], strides = [1, 1]} : vector<40x64xf32> to vector<1x64xf32>
    %42 = vector.extract_strided_slice %0 {offsets = [11, 0], sizes = [1, 64], strides = [1, 1]} : vector<40x64xf32> to vector<1x64xf32>
    %c1 = arith.constant 1 : index
    %c0_18 = arith.constant 0 : index
    %43 = vector.load %arg8[%c1, %c0_18] : memref<4x256xf32, #tpu.memory_space<vmem>>, vector<1x256xf32>
    %c0_19 = arith.constant 0 : index
    %c0_20 = arith.constant 0 : index
    %44 = vector.load %arg6[%c0_19, %c0_20] : memref<256x128xbf16, #tpu.memory_space<vmem>>, vector<256x64xbf16>
    %45 = vector.extract_strided_slice %0 {offsets = [12, 0], sizes = [1, 64], strides = [1, 1]} : vector<40x64xf32> to vector<1x64xf32>
    %cst_21 = arith.constant dense<0.000000e+00> : vector<20xf32>
    %46 = vector.multi_reduction <add>, %36, %cst_21 [1] : vector<20x64xf32> to vector<20xf32>
    %47 = vector.shape_cast %46 : vector<20xf32> to vector<20x1xf32>
    %cst_22 = arith.constant 6.400000e+01 : f32
    %48 = vector.broadcast %cst_22 : f32 to vector<20x1xf32>
    %49 = arith.divf %47, %48 : vector<20x1xf32>
    %50 = vector.broadcast %49 : vector<20x1xf32> to vector<20x64xf32>
    %51 = arith.subf %36, %50 : vector<20x64xf32>
    %52 = arith.mulf %51, %51 : vector<20x64xf32>
    %cst_23 = arith.constant dense<0.000000e+00> : vector<20xf32>
    %53 = vector.multi_reduction <add>, %52, %cst_23 [1] : vector<20x64xf32> to vector<20xf32>
    %54 = vector.shape_cast %53 : vector<20xf32> to vector<20x1xf32>
    %cst_24 = arith.constant 6.400000e+01 : f32
    %55 = vector.broadcast %cst_24 : f32 to vector<20x1xf32>
    %56 = arith.divf %54, %55 : vector<20x1xf32>
    %cst_25 = arith.constant 9.99999974E-6 : f32
    %57 = vector.broadcast %cst_25 : f32 to vector<20x1xf32>
    %58 = arith.addf %56, %57 : vector<20x1xf32>
    %59 = math.rsqrt %58 : vector<20x1xf32>
    %60 = vector.broadcast %59 : vector<20x1xf32> to vector<20x64xf32>
    %61 = arith.mulf %51, %60 : vector<20x64xf32>
    %62 = vector.broadcast %37 : vector<1x64xf32> to vector<20x64xf32>
    %63 = arith.mulf %61, %62 : vector<20x64xf32>
    %64 = vector.broadcast %38 : vector<1x64xf32> to vector<20x64xf32>
    %65 = arith.addf %63, %64 : vector<20x64xf32>
    %66 = arith.truncf %65 : vector<20x64xf32> to vector<20x64xbf16>
    %cst_26 = arith.constant dense<0.000000e+00> : vector<20x192xf32>
    %67 = tpu.matmul %66, %3, %cst_26 {dimension_numbers = #tpu.dot_dimension_numbers<[1], [0], [0], [1], [0, 0, 1, 1], [], []>} : vector<20x64xbf16>, vector<64x192xbf16>, vector<20x192xf32> -> vector<20x192xf32>
    %68 = vector.broadcast %39 : vector<1x192xf32> to vector<20x192xf32>
    %69 = arith.addf %67, %68 : vector<20x192xf32>
    %70 = vector.shape_cast %69 : vector<20x192xf32> to vector<4x5x192xf32>
    %cst_27 = arith.constant 0.000000e+00 : f32
    %71 = vector.broadcast %cst_27 : f32 to vector<20x64xf32>
    %72 = vector.extract_strided_slice %70 {offsets = [0, 0, 0], sizes = [4, 5, 16], strides = [1, 1, 1]} : vector<4x5x192xf32> to vector<4x5x16xf32>
    %73 = arith.truncf %72 : vector<4x5x16xf32> to vector<4x5x16xbf16>
    %74 = vector.extract_strided_slice %70 {offsets = [0, 0, 64], sizes = [4, 5, 16], strides = [1, 1, 1]} : vector<4x5x192xf32> to vector<4x5x16xf32>
    %75 = arith.truncf %74 : vector<4x5x16xf32> to vector<4x5x16xbf16>
    %76 = vector.extract_strided_slice %70 {offsets = [0, 0, 128], sizes = [4, 5, 16], strides = [1, 1, 1]} : vector<4x5x192xf32> to vector<4x5x16xf32>
    %77 = arith.truncf %76 : vector<4x5x16xf32> to vector<4x5x16xbf16>
    "tpu.trace_start"() <{level = 10 : i32, message = "bqd,bkd->bqk"}> : () -> ()
    %cst_28 = arith.constant dense<0.000000e+00> : vector<4x5x5xf32>
    %78 = tpu.matmul %73, %75, %cst_28 {dimension_numbers = #tpu.dot_dimension_numbers<[2], [2], [1], [1], [0, 0, 0, 1, 1, 1], [0], [0]>} : vector<4x5x16xbf16>, vector<4x5x16xbf16>, vector<4x5x5xf32> -> vector<4x5x5xf32>
    "tpu.trace_stop"() : () -> ()
    %cst_29 = arith.constant dense<0xFF800000> : vector<4x5xf32>
    %79 = vector.multi_reduction <maximumf>, %78, %cst_29 [2] : vector<4x5x5xf32> to vector<4x5xf32>
    %80 = vector.shape_cast %79 : vector<4x5xf32> to vector<4x5x1xf32>
    %81 = vector.broadcast %80 : vector<4x5x1xf32> to vector<4x5x5xf32>
    %82 = arith.subf %78, %81 : vector<4x5x5xf32>
    %83 = math.exp %82 : vector<4x5x5xf32>
    %cst_30 = arith.constant dense<0.000000e+00> : vector<4x5xf32>
    %84 = vector.multi_reduction <add>, %83, %cst_30 [2] : vector<4x5x5xf32> to vector<4x5xf32>
    %85 = vector.shape_cast %84 : vector<4x5xf32> to vector<4x5x1xf32>
    %86 = tpu.reciprocal %85 {approx = true} : vector<4x5x1xf32> -> vector<4x5x1xf32>
    %87 = vector.broadcast %86 : vector<4x5x1xf32> to vector<4x5x5xf32>
    %88 = arith.mulf %83, %87 : vector<4x5x5xf32>
    %89 = arith.truncf %88 : vector<4x5x5xf32> to vector<4x5x5xbf16>
    "tpu.trace_start"() <{level = 10 : i32, message = "bqk,bkd->bqd"}> : () -> ()
    %cst_31 = arith.constant dense<0.000000e+00> : vector<4x5x16xf32>
    %90 = tpu.matmul %89, %77, %cst_31 {dimension_numbers = #tpu.dot_dimension_numbers<[2], [1], [1], [2], [0, 0, 0, 1, 1, 2], [0], [0]>} : vector<4x5x5xbf16>, vector<4x5x16xbf16>, vector<4x5x16xf32> -> vector<4x5x16xf32>
    "tpu.trace_stop"() : () -> ()
    %91 = vector.shape_cast %90 : vector<4x5x16xf32> to vector<20x16xf32>
    %92 = arith.truncf %91 : vector<20x16xf32> to vector<20x16xbf16>
    %93 = vector.extract_strided_slice %4 {offsets = [0, 0], sizes = [16, 64], strides = [1, 1]} : vector<64x64xbf16> to vector<16x64xbf16>
    %cst_32 = arith.constant dense<0.000000e+00> : vector<20x64xf32>
    %94 = tpu.matmul %92, %93, %cst_32 {dimension_numbers = #tpu.dot_dimension_numbers<[1], [0], [0], [1], [0, 0, 1, 1], [], []>} : vector<20x16xbf16>, vector<16x64xbf16>, vector<20x64xf32> -> vector<20x64xf32>
    %95 = arith.addf %71, %94 : vector<20x64xf32>
    %96 = vector.extract_strided_slice %70 {offsets = [0, 0, 16], sizes = [4, 5, 16], strides = [1, 1, 1]} : vector<4x5x192xf32> to vector<4x5x16xf32>
    %97 = arith.truncf %96 : vector<4x5x16xf32> to vector<4x5x16xbf16>
    %98 = vector.extract_strided_slice %70 {offsets = [0, 0, 80], sizes = [4, 5, 16], strides = [1, 1, 1]} : vector<4x5x192xf32> to vector<4x5x16xf32>
    %99 = arith.truncf %98 : vector<4x5x16xf32> to vector<4x5x16xbf16>
    %100 = vector.extract_strided_slice %70 {offsets = [0, 0, 144], sizes = [4, 5, 16], strides = [1, 1, 1]} : vector<4x5x192xf32> to vector<4x5x16xf32>
    %101 = arith.truncf %100 : vector<4x5x16xf32> to vector<4x5x16xbf16>
    "tpu.trace_start"() <{level = 10 : i32, message = "bqd,bkd->bqk"}> : () -> ()
    %cst_33 = arith.constant dense<0.000000e+00> : vector<4x5x5xf32>
    %102 = tpu.matmul %97, %99, %cst_33 {dimension_numbers = #tpu.dot_dimension_numbers<[2], [2], [1], [1], [0, 0, 0, 1, 1, 1], [0], [0]>} : vector<4x5x16xbf16>, vector<4x5x16xbf16>, vector<4x5x5xf32> -> vector<4x5x5xf32>
    "tpu.trace_stop"() : () -> ()
    %cst_34 = arith.constant dense<0xFF800000> : vector<4x5xf32>
    %103 = vector.multi_reduction <maximumf>, %102, %cst_34 [2] : vector<4x5x5xf32> to vector<4x5xf32>
    %104 = vector.shape_cast %103 : vector<4x5xf32> to vector<4x5x1xf32>
    %105 = vector.broadcast %104 : vector<4x5x1xf32> to vector<4x5x5xf32>
    %106 = arith.subf %102, %105 : vector<4x5x5xf32>
    %107 = math.exp %106 : vector<4x5x5xf32>
    %cst_35 = arith.constant dense<0.000000e+00> : vector<4x5xf32>
    %108 = vector.multi_reduction <add>, %107, %cst_35 [2] : vector<4x5x5xf32> to vector<4x5xf32>
    %109 = vector.shape_cast %108 : vector<4x5xf32> to vector<4x5x1xf32>
    %110 = tpu.reciprocal %109 {approx = true} : vector<4x5x1xf32> -> vector<4x5x1xf32>
    %111 = vector.broadcast %110 : vector<4x5x1xf32> to vector<4x5x5xf32>
    %112 = arith.mulf %107, %111 : vector<4x5x5xf32>
    %113 = arith.truncf %112 : vector<4x5x5xf32> to vector<4x5x5xbf16>
    "tpu.trace_start"() <{level = 10 : i32, message = "bqk,bkd->bqd"}> : () -> ()
    %cst_36 = arith.constant dense<0.000000e+00> : vector<4x5x16xf32>
    %114 = tpu.matmul %113, %101, %cst_36 {dimension_numbers = #tpu.dot_dimension_numbers<[2], [1], [1], [2], [0, 0, 0, 1, 1, 2], [0], [0]>} : vector<4x5x5xbf16>, vector<4x5x16xbf16>, vector<4x5x16xf32> -> vector<4x5x16xf32>
    "tpu.trace_stop"() : () -> ()
    %115 = vector.shape_cast %114 : vector<4x5x16xf32> to vector<20x16xf32>
    %116 = arith.truncf %115 : vector<20x16xf32> to vector<20x16xbf16>
    %117 = vector.extract_strided_slice %4 {offsets = [16, 0], sizes = [16, 64], strides = [1, 1]} : vector<64x64xbf16> to vector<16x64xbf16>
    %cst_37 = arith.constant dense<0.000000e+00> : vector<20x64xf32>
    %118 = tpu.matmul %116, %117, %cst_37 {dimension_numbers = #tpu.dot_dimension_numbers<[1], [0], [0], [1], [0, 0, 1, 1], [], []>} : vector<20x16xbf16>, vector<16x64xbf16>, vector<20x64xf32> -> vector<20x64xf32>
    %119 = arith.addf %95, %118 : vector<20x64xf32>
    %120 = vector.extract_strided_slice %70 {offsets = [0, 0, 32], sizes = [4, 5, 16], strides = [1, 1, 1]} : vector<4x5x192xf32> to vector<4x5x16xf32>
    %121 = arith.truncf %120 : vector<4x5x16xf32> to vector<4x5x16xbf16>
    %122 = vector.extract_strided_slice %70 {offsets = [0, 0, 96], sizes = [4, 5, 16], strides = [1, 1, 1]} : vector<4x5x192xf32> to vector<4x5x16xf32>
    %123 = arith.truncf %122 : vector<4x5x16xf32> to vector<4x5x16xbf16>
    %124 = vector.extract_strided_slice %70 {offsets = [0, 0, 160], sizes = [4, 5, 16], strides = [1, 1, 1]} : vector<4x5x192xf32> to vector<4x5x16xf32>
    %125 = arith.truncf %124 : vector<4x5x16xf32> to vector<4x5x16xbf16>
    "tpu.trace_start"() <{level = 10 : i32, message = "bqd,bkd->bqk"}> : () -> ()
    %cst_38 = arith.constant dense<0.000000e+00> : vector<4x5x5xf32>
    %126 = tpu.matmul %121, %123, %cst_38 {dimension_numbers = #tpu.dot_dimension_numbers<[2], [2], [1], [1], [0, 0, 0, 1, 1, 1], [0], [0]>} : vector<4x5x16xbf16>, vector<4x5x16xbf16>, vector<4x5x5xf32> -> vector<4x5x5xf32>
    "tpu.trace_stop"() : () -> ()
    %cst_39 = arith.constant dense<0xFF800000> : vector<4x5xf32>
    %127 = vector.multi_reduction <maximumf>, %126, %cst_39 [2] : vector<4x5x5xf32> to vector<4x5xf32>
    %128 = vector.shape_cast %127 : vector<4x5xf32> to vector<4x5x1xf32>
    %129 = vector.broadcast %128 : vector<4x5x1xf32> to vector<4x5x5xf32>
    %130 = arith.subf %126, %129 : vector<4x5x5xf32>
    %131 = math.exp %130 : vector<4x5x5xf32>
    %cst_40 = arith.constant dense<0.000000e+00> : vector<4x5xf32>
    %132 = vector.multi_reduction <add>, %131, %cst_40 [2] : vector<4x5x5xf32> to vector<4x5xf32>
    %133 = vector.shape_cast %132 : vector<4x5xf32> to vector<4x5x1xf32>
    %134 = tpu.reciprocal %133 {approx = true} : vector<4x5x1xf32> -> vector<4x5x1xf32>
    %135 = vector.broadcast %134 : vector<4x5x1xf32> to vector<4x5x5xf32>
    %136 = arith.mulf %131, %135 : vector<4x5x5xf32>
    %137 = arith.truncf %136 : vector<4x5x5xf32> to vector<4x5x5xbf16>
    "tpu.trace_start"() <{level = 10 : i32, message = "bqk,bkd->bqd"}> : () -> ()
    %cst_41 = arith.constant dense<0.000000e+00> : vector<4x5x16xf32>
    %138 = tpu.matmul %137, %125, %cst_41 {dimension_numbers = #tpu.dot_dimension_numbers<[2], [1], [1], [2], [0, 0, 0, 1, 1, 2], [0], [0]>} : vector<4x5x5xbf16>, vector<4x5x16xbf16>, vector<4x5x16xf32> -> vector<4x5x16xf32>
    "tpu.trace_stop"() : () -> ()
    %139 = vector.shape_cast %138 : vector<4x5x16xf32> to vector<20x16xf32>
    %140 = arith.truncf %139 : vector<20x16xf32> to vector<20x16xbf16>
    %141 = vector.extract_strided_slice %4 {offsets = [32, 0], sizes = [16, 64], strides = [1, 1]} : vector<64x64xbf16> to vector<16x64xbf16>
    %cst_42 = arith.constant dense<0.000000e+00> : vector<20x64xf32>
    %142 = tpu.matmul %140, %141, %cst_42 {dimension_numbers = #tpu.dot_dimension_numbers<[1], [0], [0], [1], [0, 0, 1, 1], [], []>} : vector<20x16xbf16>, vector<16x64xbf16>, vector<20x64xf32> -> vector<20x64xf32>
    %143 = arith.addf %119, %142 : vector<20x64xf32>
    %144 = vector.extract_strided_slice %70 {offsets = [0, 0, 48], sizes = [4, 5, 16], strides = [1, 1, 1]} : vector<4x5x192xf32> to vector<4x5x16xf32>
    %145 = arith.truncf %144 : vector<4x5x16xf32> to vector<4x5x16xbf16>
    %146 = vector.extract_strided_slice %70 {offsets = [0, 0, 112], sizes = [4, 5, 16], strides = [1, 1, 1]} : vector<4x5x192xf32> to vector<4x5x16xf32>
    %147 = arith.truncf %146 : vector<4x5x16xf32> to vector<4x5x16xbf16>
    %148 = vector.extract_strided_slice %70 {offsets = [0, 0, 176], sizes = [4, 5, 16], strides = [1, 1, 1]} : vector<4x5x192xf32> to vector<4x5x16xf32>
    %149 = arith.truncf %148 : vector<4x5x16xf32> to vector<4x5x16xbf16>
    "tpu.trace_start"() <{level = 10 : i32, message = "bqd,bkd->bqk"}> : () -> ()
    %cst_43 = arith.constant dense<0.000000e+00> : vector<4x5x5xf32>
    %150 = tpu.matmul %145, %147, %cst_43 {dimension_numbers = #tpu.dot_dimension_numbers<[2], [2], [1], [1], [0, 0, 0, 1, 1, 1], [0], [0]>} : vector<4x5x16xbf16>, vector<4x5x16xbf16>, vector<4x5x5xf32> -> vector<4x5x5xf32>
    "tpu.trace_stop"() : () -> ()
    %cst_44 = arith.constant dense<0xFF800000> : vector<4x5xf32>
    %151 = vector.multi_reduction <maximumf>, %150, %cst_44 [2] : vector<4x5x5xf32> to vector<4x5xf32>
    %152 = vector.shape_cast %151 : vector<4x5xf32> to vector<4x5x1xf32>
    %153 = vector.broadcast %152 : vector<4x5x1xf32> to vector<4x5x5xf32>
    %154 = arith.subf %150, %153 : vector<4x5x5xf32>
    %155 = math.exp %154 : vector<4x5x5xf32>
    %cst_45 = arith.constant dense<0.000000e+00> : vector<4x5xf32>
    %156 = vector.multi_reduction <add>, %155, %cst_45 [2] : vector<4x5x5xf32> to vector<4x5xf32>
    %157 = vector.shape_cast %156 : vector<4x5xf32> to vector<4x5x1xf32>
    %158 = tpu.reciprocal %157 {approx = true} : vector<4x5x1xf32> -> vector<4x5x1xf32>
    %159 = vector.broadcast %158 : vector<4x5x1xf32> to vector<4x5x5xf32>
    %160 = arith.mulf %155, %159 : vector<4x5x5xf32>
    %161 = arith.truncf %160 : vector<4x5x5xf32> to vector<4x5x5xbf16>
    "tpu.trace_start"() <{level = 10 : i32, message = "bqk,bkd->bqd"}> : () -> ()
    %cst_46 = arith.constant dense<0.000000e+00> : vector<4x5x16xf32>
    %162 = tpu.matmul %161, %149, %cst_46 {dimension_numbers = #tpu.dot_dimension_numbers<[2], [1], [1], [2], [0, 0, 0, 1, 1, 2], [0], [0]>} : vector<4x5x5xbf16>, vector<4x5x16xbf16>, vector<4x5x16xf32> -> vector<4x5x16xf32>
    "tpu.trace_stop"() : () -> ()
    %163 = vector.shape_cast %162 : vector<4x5x16xf32> to vector<20x16xf32>
    %164 = arith.truncf %163 : vector<20x16xf32> to vector<20x16xbf16>
    %165 = vector.extract_strided_slice %4 {offsets = [48, 0], sizes = [16, 64], strides = [1, 1]} : vector<64x64xbf16> to vector<16x64xbf16>
    %cst_47 = arith.constant dense<0.000000e+00> : vector<20x64xf32>
    %166 = tpu.matmul %164, %165, %cst_47 {dimension_numbers = #tpu.dot_dimension_numbers<[1], [0], [0], [1], [0, 0, 1, 1], [], []>} : vector<20x16xbf16>, vector<16x64xbf16>, vector<20x64xf32> -> vector<20x64xf32>
    %167 = arith.addf %143, %166 : vector<20x64xf32>
    %168 = arith.addf %36, %167 : vector<20x64xf32>
    %169 = vector.broadcast %40 : vector<1x64xf32> to vector<20x64xf32>
    %170 = arith.addf %168, %169 : vector<20x64xf32>
    %cst_48 = arith.constant dense<0.000000e+00> : vector<20xf32>
    %171 = vector.multi_reduction <add>, %170, %cst_48 [1] : vector<20x64xf32> to vector<20xf32>
    %172 = vector.shape_cast %171 : vector<20xf32> to vector<20x1xf32>
    %cst_49 = arith.constant 6.400000e+01 : f32
    %173 = vector.broadcast %cst_49 : f32 to vector<20x1xf32>
    %174 = arith.divf %172, %173 : vector<20x1xf32>
    %175 = vector.broadcast %174 : vector<20x1xf32> to vector<20x64xf32>
    %176 = arith.subf %170, %175 : vector<20x64xf32>
    %177 = arith.mulf %176, %176 : vector<20x64xf32>
    %cst_50 = arith.constant dense<0.000000e+00> : vector<20xf32>
    %178 = vector.multi_reduction <add>, %177, %cst_50 [1] : vector<20x64xf32> to vector<20xf32>
    %179 = vector.shape_cast %178 : vector<20xf32> to vector<20x1xf32>
    %cst_51 = arith.constant 6.400000e+01 : f32
    %180 = vector.broadcast %cst_51 : f32 to vector<20x1xf32>
    %181 = arith.divf %179, %180 : vector<20x1xf32>
    %cst_52 = arith.constant 9.99999974E-6 : f32
    %182 = vector.broadcast %cst_52 : f32 to vector<20x1xf32>
    %183 = arith.addf %181, %182 : vector<20x1xf32>
    %184 = math.rsqrt %183 : vector<20x1xf32>
    %185 = vector.broadcast %184 : vector<20x1xf32> to vector<20x64xf32>
    %186 = arith.mulf %176, %185 : vector<20x64xf32>
    %187 = vector.broadcast %41 : vector<1x64xf32> to vector<20x64xf32>
    %188 = arith.mulf %186, %187 : vector<20x64xf32>
    %189 = vector.broadcast %42 : vector<1x64xf32> to vector<20x64xf32>
    %190 = arith.addf %188, %189 : vector<20x64xf32>
    %191 = arith.truncf %190 : vector<20x64xf32> to vector<20x64xbf16>
    %cst_53 = arith.constant dense<0.000000e+00> : vector<20x256xf32>
    %192 = tpu.matmul %191, %5, %cst_53 {dimension_numbers = #tpu.dot_dimension_numbers<[1], [0], [0], [1], [0, 0, 1, 1], [], []>} : vector<20x64xbf16>, vector<64x256xbf16>, vector<20x256xf32> -> vector<20x256xf32>
    %193 = vector.broadcast %43 : vector<1x256xf32> to vector<20x256xf32>
    %194 = arith.addf %192, %193 : vector<20x256xf32>
    %cst_54 = arith.constant 1.702000e+00 : f32
    %195 = vector.broadcast %cst_54 : f32 to vector<20x256xf32>
    %196 = arith.mulf %195, %194 : vector<20x256xf32>
    %197 = arith.negf %196 : vector<20x256xf32>
    %198 = math.exp %197 : vector<20x256xf32>
    %cst_55 = arith.constant 1.000000e+00 : f32
    %199 = vector.broadcast %cst_55 : f32 to vector<20x256xf32>
    %200 = arith.addf %199, %198 : vector<20x256xf32>
    %201 = arith.divf %199, %200 : vector<20x256xf32>
    %202 = arith.mulf %194, %201 : vector<20x256xf32>
    %203 = arith.truncf %202 : vector<20x256xf32> to vector<20x256xbf16>
    %cst_56 = arith.constant dense<0.000000e+00> : vector<20x64xf32>
    %204 = tpu.matmul %203, %44, %cst_56 {dimension_numbers = #tpu.dot_dimension_numbers<[1], [0], [0], [1], [0, 0, 1, 1], [], []>} : vector<20x256xbf16>, vector<256x64xbf16>, vector<20x64xf32> -> vector<20x64xf32>
    %205 = vector.broadcast %45 : vector<1x64xf32> to vector<20x64xf32>
    %206 = arith.addf %204, %205 : vector<20x64xf32>
    %207 = arith.addf %170, %206 : vector<20x64xf32>
    %208 = tpu.iota {dimensions = array<i32: 0>} : vector<4x20xi32>
    %209 = tpu.iota {dimensions = array<i32: 1>} : vector<4x20xi32>
    %c5_i32 = arith.constant 5 : i32
    %210 = vector.broadcast %c5_i32 : i32 to vector<4x20xi32>
    %211 = arith.muli %208, %210 : vector<4x20xi32>
    %212 = arith.cmpi eq, %209, %211 : vector<4x20xi32>
    %213 = arith.extui %212 : vector<4x20xi1> to vector<4x20xi32>
    %214 = arith.sitofp %213 : vector<4x20xi32> to vector<4x20xf32>
    %cst_57 = arith.constant dense<0.000000e+00> : vector<4x64xf32>
    %215 = tpu.matmul %214, %207, %cst_57 {dimension_numbers = #tpu.dot_dimension_numbers<[1], [0], [0], [1], [0, 0, 1, 1], [], []>} : vector<4x20xf32>, vector<20x64xf32>, vector<4x64xf32> -> vector<4x64xf32>
    %216 = vector.extract_strided_slice %0 {offsets = [13, 0], sizes = [1, 64], strides = [1, 1]} : vector<40x64xf32> to vector<1x64xf32>
    %217 = vector.extract_strided_slice %0 {offsets = [14, 0], sizes = [1, 64], strides = [1, 1]} : vector<40x64xf32> to vector<1x64xf32>
    %cst_58 = arith.constant dense<0.000000e+00> : vector<4xf32>
    %218 = vector.multi_reduction <add>, %215, %cst_58 [1] : vector<4x64xf32> to vector<4xf32>
    %219 = vector.shape_cast %218 : vector<4xf32> to vector<4x1xf32>
    %cst_59 = arith.constant 6.400000e+01 : f32
    %220 = vector.broadcast %cst_59 : f32 to vector<4x1xf32>
    %221 = arith.divf %219, %220 : vector<4x1xf32>
    %222 = vector.broadcast %221 : vector<4x1xf32> to vector<4x64xf32>
    %223 = arith.subf %215, %222 : vector<4x64xf32>
    %224 = arith.mulf %223, %223 : vector<4x64xf32>
    %cst_60 = arith.constant dense<0.000000e+00> : vector<4xf32>
    %225 = vector.multi_reduction <add>, %224, %cst_60 [1] : vector<4x64xf32> to vector<4xf32>
    %226 = vector.shape_cast %225 : vector<4xf32> to vector<4x1xf32>
    %cst_61 = arith.constant 6.400000e+01 : f32
    %227 = vector.broadcast %cst_61 : f32 to vector<4x1xf32>
    %228 = arith.divf %226, %227 : vector<4x1xf32>
    %cst_62 = arith.constant 9.99999974E-6 : f32
    %229 = vector.broadcast %cst_62 : f32 to vector<4x1xf32>
    %230 = arith.addf %228, %229 : vector<4x1xf32>
    %231 = math.rsqrt %230 : vector<4x1xf32>
    %232 = vector.broadcast %231 : vector<4x1xf32> to vector<4x64xf32>
    %233 = arith.mulf %223, %232 : vector<4x64xf32>
    %234 = vector.broadcast %216 : vector<1x64xf32> to vector<4x64xf32>
    %235 = arith.mulf %233, %234 : vector<4x64xf32>
    %236 = vector.broadcast %217 : vector<1x64xf32> to vector<4x64xf32>
    %237 = arith.addf %235, %236 : vector<4x64xf32>
    %238 = arith.truncf %237 : vector<4x64xf32> to vector<4x64xbf16>
    %cst_63 = arith.constant dense<0.000000e+00> : vector<4x64xf32>
    %239 = tpu.matmul %238, %6, %cst_63 {dimension_numbers = #tpu.dot_dimension_numbers<[1], [0], [0], [1], [0, 0, 1, 1], [], []>} : vector<4x64xbf16>, vector<64x64xbf16>, vector<4x64xf32> -> vector<4x64xf32>
    %c0_64 = arith.constant 0 : index
    %c576 = arith.constant 576 : index
    %240 = vector.load %arg5[%c0_64, %c576] : memref<64x1152xbf16, #tpu.memory_space<vmem>>, vector<64x192xbf16>
    %c0_65 = arith.constant 0 : index
    %c768 = arith.constant 768 : index
    %241 = vector.load %arg5[%c0_65, %c768] : memref<64x1152xbf16, #tpu.memory_space<vmem>>, vector<64x64xbf16>
    %c0_66 = arith.constant 0 : index
    %c832 = arith.constant 832 : index
    %242 = vector.load %arg5[%c0_66, %c832] : memref<64x1152xbf16, #tpu.memory_space<vmem>>, vector<64x256xbf16>
    %c0_67 = arith.constant 0 : index
    %c1088 = arith.constant 1088 : index
    %243 = vector.load %arg5[%c0_67, %c1088] : memref<64x1152xbf16, #tpu.memory_space<vmem>>, vector<64x64xbf16>
    %c0_68 = arith.constant 0 : index
    %c0_69 = arith.constant 0 : index
    %c0_70 = arith.constant 0 : index
    %244 = vector.load %arg2[%c0_68, %c0_69, %c0_70] : memref<3x16x64xf32, #tpu.memory_space<vmem>>, vector<3x16x64xf32>
    %245 = vector.extract_strided_slice %0 {offsets = [16, 0], sizes = [16, 64], strides = [1, 1]} : vector<40x64xf32> to vector<16x64xf32>
    %246 = vector.shape_cast %245 : vector<16x64xf32> to vector<1x16x64xf32>
    %247 = vector.broadcast %246 : vector<1x16x64xf32> to vector<3x16x64xf32>
    %248 = arith.addf %244, %247 : vector<3x16x64xf32>
    %249 = tpu.iota {dimensions = array<i32: 0>} : vector<16x16xi32>
    %250 = tpu.iota {dimensions = array<i32: 1>} : vector<16x16xi32>
    %251 = arith.cmpi sle, %250, %249 : vector<16x16xi32>
    %cst_71 = arith.constant 0.000000e+00 : f32
    %cst_72 = arith.constant -1.000000e+30 : f32
    %252 = vector.broadcast %cst_71 : f32 to vector<16x16xf32>
    %253 = vector.broadcast %cst_72 : f32 to vector<16x16xf32>
    %254 = arith.select %251, %252, %253 : vector<16x16xi1>, vector<16x16xf32>
    %255 = vector.shape_cast %248 : vector<3x16x64xf32> to vector<48x64xf32>
    %256 = vector.extract_strided_slice %0 {offsets = [32, 0], sizes = [1, 64], strides = [1, 1]} : vector<40x64xf32> to vector<1x64xf32>
    %257 = vector.extract_strided_slice %0 {offsets = [33, 0], sizes = [1, 64], strides = [1, 1]} : vector<40x64xf32> to vector<1x64xf32>
    %c2 = arith.constant 2 : index
    %c0_73 = arith.constant 0 : index
    %258 = vector.load %arg8[%c2, %c0_73] : memref<4x256xf32, #tpu.memory_space<vmem>>, vector<1x192xf32>
    %259 = vector.extract_strided_slice %0 {offsets = [34, 0], sizes = [1, 64], strides = [1, 1]} : vector<40x64xf32> to vector<1x64xf32>
    %260 = vector.extract_strided_slice %0 {offsets = [35, 0], sizes = [1, 64], strides = [1, 1]} : vector<40x64xf32> to vector<1x64xf32>
    %261 = vector.extract_strided_slice %0 {offsets = [36, 0], sizes = [1, 64], strides = [1, 1]} : vector<40x64xf32> to vector<1x64xf32>
    %c3 = arith.constant 3 : index
    %c0_74 = arith.constant 0 : index
    %262 = vector.load %arg8[%c3, %c0_74] : memref<4x256xf32, #tpu.memory_space<vmem>>, vector<1x256xf32>
    %c0_75 = arith.constant 0 : index
    %c64 = arith.constant 64 : index
    %263 = vector.load %arg6[%c0_75, %c64] : memref<256x128xbf16, #tpu.memory_space<vmem>>, vector<256x64xbf16>
    %264 = vector.extract_strided_slice %0 {offsets = [37, 0], sizes = [1, 64], strides = [1, 1]} : vector<40x64xf32> to vector<1x64xf32>
    %cst_76 = arith.constant dense<0.000000e+00> : vector<48xf32>
    %265 = vector.multi_reduction <add>, %255, %cst_76 [1] : vector<48x64xf32> to vector<48xf32>
    %266 = vector.shape_cast %265 : vector<48xf32> to vector<48x1xf32>
    %cst_77 = arith.constant 6.400000e+01 : f32
    %267 = vector.broadcast %cst_77 : f32 to vector<48x1xf32>
    %268 = arith.divf %266, %267 : vector<48x1xf32>
    %269 = vector.broadcast %268 : vector<48x1xf32> to vector<48x64xf32>
    %270 = arith.subf %255, %269 : vector<48x64xf32>
    %271 = arith.mulf %270, %270 : vector<48x64xf32>
    %cst_78 = arith.constant dense<0.000000e+00> : vector<48xf32>
    %272 = vector.multi_reduction <add>, %271, %cst_78 [1] : vector<48x64xf32> to vector<48xf32>
    %273 = vector.shape_cast %272 : vector<48xf32> to vector<48x1xf32>
    %cst_79 = arith.constant 6.400000e+01 : f32
    %274 = vector.broadcast %cst_79 : f32 to vector<48x1xf32>
    %275 = arith.divf %273, %274 : vector<48x1xf32>
    %cst_80 = arith.constant 9.99999974E-6 : f32
    %276 = vector.broadcast %cst_80 : f32 to vector<48x1xf32>
    %277 = arith.addf %275, %276 : vector<48x1xf32>
    %278 = math.rsqrt %277 : vector<48x1xf32>
    %279 = vector.broadcast %278 : vector<48x1xf32> to vector<48x64xf32>
    %280 = arith.mulf %270, %279 : vector<48x64xf32>
    %281 = vector.broadcast %256 : vector<1x64xf32> to vector<48x64xf32>
    %282 = arith.mulf %280, %281 : vector<48x64xf32>
    %283 = vector.broadcast %257 : vector<1x64xf32> to vector<48x64xf32>
    %284 = arith.addf %282, %283 : vector<48x64xf32>
    %285 = arith.truncf %284 : vector<48x64xf32> to vector<48x64xbf16>
    %cst_81 = arith.constant dense<0.000000e+00> : vector<48x192xf32>
    %286 = tpu.matmul %285, %240, %cst_81 {dimension_numbers = #tpu.dot_dimension_numbers<[1], [0], [0], [1], [0, 0, 1, 1], [], []>} : vector<48x64xbf16>, vector<64x192xbf16>, vector<48x192xf32> -> vector<48x192xf32>
    %287 = vector.broadcast %258 : vector<1x192xf32> to vector<48x192xf32>
    %288 = arith.addf %286, %287 : vector<48x192xf32>
    %289 = vector.shape_cast %288 : vector<48x192xf32> to vector<3x16x192xf32>
    %cst_82 = arith.constant 0.000000e+00 : f32
    %290 = vector.broadcast %cst_82 : f32 to vector<48x64xf32>
    %291 = vector.extract_strided_slice %289 {offsets = [0, 0, 0], sizes = [3, 16, 16], strides = [1, 1, 1]} : vector<3x16x192xf32> to vector<3x16x16xf32>
    %292 = arith.truncf %291 : vector<3x16x16xf32> to vector<3x16x16xbf16>
    %293 = vector.extract_strided_slice %289 {offsets = [0, 0, 64], sizes = [3, 16, 16], strides = [1, 1, 1]} : vector<3x16x192xf32> to vector<3x16x16xf32>
    %294 = arith.truncf %293 : vector<3x16x16xf32> to vector<3x16x16xbf16>
    %295 = vector.extract_strided_slice %289 {offsets = [0, 0, 128], sizes = [3, 16, 16], strides = [1, 1, 1]} : vector<3x16x192xf32> to vector<3x16x16xf32>
    %296 = arith.truncf %295 : vector<3x16x16xf32> to vector<3x16x16xbf16>
    "tpu.trace_start"() <{level = 10 : i32, message = "bqd,bkd->bqk"}> : () -> ()
    %cst_83 = arith.constant dense<0.000000e+00> : vector<3x16x16xf32>
    %297 = tpu.matmul %292, %294, %cst_83 {dimension_numbers = #tpu.dot_dimension_numbers<[2], [2], [1], [1], [0, 0, 0, 1, 1, 1], [0], [0]>} : vector<3x16x16xbf16>, vector<3x16x16xbf16>, vector<3x16x16xf32> -> vector<3x16x16xf32>
    "tpu.trace_stop"() : () -> ()
    %298 = vector.shape_cast %254 : vector<16x16xf32> to vector<1x16x16xf32>
    %299 = vector.broadcast %298 : vector<1x16x16xf32> to vector<3x16x16xf32>
    %300 = arith.addf %297, %299 : vector<3x16x16xf32>
    %cst_84 = arith.constant dense<0xFF800000> : vector<3x16xf32>
    %301 = vector.multi_reduction <maximumf>, %300, %cst_84 [2] : vector<3x16x16xf32> to vector<3x16xf32>
    %302 = vector.shape_cast %301 : vector<3x16xf32> to vector<3x16x1xf32>
    %303 = vector.broadcast %302 : vector<3x16x1xf32> to vector<3x16x16xf32>
    %304 = arith.subf %300, %303 : vector<3x16x16xf32>
    %305 = math.exp %304 : vector<3x16x16xf32>
    %cst_85 = arith.constant dense<0.000000e+00> : vector<3x16xf32>
    %306 = vector.multi_reduction <add>, %305, %cst_85 [2] : vector<3x16x16xf32> to vector<3x16xf32>
    %307 = vector.shape_cast %306 : vector<3x16xf32> to vector<3x16x1xf32>
    %308 = tpu.reciprocal %307 {approx = true} : vector<3x16x1xf32> -> vector<3x16x1xf32>
    %309 = vector.broadcast %308 : vector<3x16x1xf32> to vector<3x16x16xf32>
    %310 = arith.mulf %305, %309 : vector<3x16x16xf32>
    %311 = arith.truncf %310 : vector<3x16x16xf32> to vector<3x16x16xbf16>
    "tpu.trace_start"() <{level = 10 : i32, message = "bqk,bkd->bqd"}> : () -> ()
    %cst_86 = arith.constant dense<0.000000e+00> : vector<3x16x16xf32>
    %312 = tpu.matmul %311, %296, %cst_86 {dimension_numbers = #tpu.dot_dimension_numbers<[2], [1], [1], [2], [0, 0, 0, 1, 1, 2], [0], [0]>} : vector<3x16x16xbf16>, vector<3x16x16xbf16>, vector<3x16x16xf32> -> vector<3x16x16xf32>
    "tpu.trace_stop"() : () -> ()
    %313 = vector.shape_cast %312 : vector<3x16x16xf32> to vector<48x16xf32>
    %314 = arith.truncf %313 : vector<48x16xf32> to vector<48x16xbf16>
    %315 = vector.extract_strided_slice %241 {offsets = [0, 0], sizes = [16, 64], strides = [1, 1]} : vector<64x64xbf16> to vector<16x64xbf16>
    %cst_87 = arith.constant dense<0.000000e+00> : vector<48x64xf32>
    %316 = tpu.matmul %314, %315, %cst_87 {dimension_numbers = #tpu.dot_dimension_numbers<[1], [0], [0], [1], [0, 0, 1, 1], [], []>} : vector<48x16xbf16>, vector<16x64xbf16>, vector<48x64xf32> -> vector<48x64xf32>
    %317 = arith.addf %290, %316 : vector<48x64xf32>
    %318 = vector.extract_strided_slice %289 {offsets = [0, 0, 16], sizes = [3, 16, 16], strides = [1, 1, 1]} : vector<3x16x192xf32> to vector<3x16x16xf32>
    %319 = arith.truncf %318 : vector<3x16x16xf32> to vector<3x16x16xbf16>
    %320 = vector.extract_strided_slice %289 {offsets = [0, 0, 80], sizes = [3, 16, 16], strides = [1, 1, 1]} : vector<3x16x192xf32> to vector<3x16x16xf32>
    %321 = arith.truncf %320 : vector<3x16x16xf32> to vector<3x16x16xbf16>
    %322 = vector.extract_strided_slice %289 {offsets = [0, 0, 144], sizes = [3, 16, 16], strides = [1, 1, 1]} : vector<3x16x192xf32> to vector<3x16x16xf32>
    %323 = arith.truncf %322 : vector<3x16x16xf32> to vector<3x16x16xbf16>
    "tpu.trace_start"() <{level = 10 : i32, message = "bqd,bkd->bqk"}> : () -> ()
    %cst_88 = arith.constant dense<0.000000e+00> : vector<3x16x16xf32>
    %324 = tpu.matmul %319, %321, %cst_88 {dimension_numbers = #tpu.dot_dimension_numbers<[2], [2], [1], [1], [0, 0, 0, 1, 1, 1], [0], [0]>} : vector<3x16x16xbf16>, vector<3x16x16xbf16>, vector<3x16x16xf32> -> vector<3x16x16xf32>
    "tpu.trace_stop"() : () -> ()
    %325 = vector.shape_cast %254 : vector<16x16xf32> to vector<1x16x16xf32>
    %326 = vector.broadcast %325 : vector<1x16x16xf32> to vector<3x16x16xf32>
    %327 = arith.addf %324, %326 : vector<3x16x16xf32>
    %cst_89 = arith.constant dense<0xFF800000> : vector<3x16xf32>
    %328 = vector.multi_reduction <maximumf>, %327, %cst_89 [2] : vector<3x16x16xf32> to vector<3x16xf32>
    %329 = vector.shape_cast %328 : vector<3x16xf32> to vector<3x16x1xf32>
    %330 = vector.broadcast %329 : vector<3x16x1xf32> to vector<3x16x16xf32>
    %331 = arith.subf %327, %330 : vector<3x16x16xf32>
    %332 = math.exp %331 : vector<3x16x16xf32>
    %cst_90 = arith.constant dense<0.000000e+00> : vector<3x16xf32>
    %333 = vector.multi_reduction <add>, %332, %cst_90 [2] : vector<3x16x16xf32> to vector<3x16xf32>
    %334 = vector.shape_cast %333 : vector<3x16xf32> to vector<3x16x1xf32>
    %335 = tpu.reciprocal %334 {approx = true} : vector<3x16x1xf32> -> vector<3x16x1xf32>
    %336 = vector.broadcast %335 : vector<3x16x1xf32> to vector<3x16x16xf32>
    %337 = arith.mulf %332, %336 : vector<3x16x16xf32>
    %338 = arith.truncf %337 : vector<3x16x16xf32> to vector<3x16x16xbf16>
    "tpu.trace_start"() <{level = 10 : i32, message = "bqk,bkd->bqd"}> : () -> ()
    %cst_91 = arith.constant dense<0.000000e+00> : vector<3x16x16xf32>
    %339 = tpu.matmul %338, %323, %cst_91 {dimension_numbers = #tpu.dot_dimension_numbers<[2], [1], [1], [2], [0, 0, 0, 1, 1, 2], [0], [0]>} : vector<3x16x16xbf16>, vector<3x16x16xbf16>, vector<3x16x16xf32> -> vector<3x16x16xf32>
    "tpu.trace_stop"() : () -> ()
    %340 = vector.shape_cast %339 : vector<3x16x16xf32> to vector<48x16xf32>
    %341 = arith.truncf %340 : vector<48x16xf32> to vector<48x16xbf16>
    %342 = vector.extract_strided_slice %241 {offsets = [16, 0], sizes = [16, 64], strides = [1, 1]} : vector<64x64xbf16> to vector<16x64xbf16>
    %cst_92 = arith.constant dense<0.000000e+00> : vector<48x64xf32>
    %343 = tpu.matmul %341, %342, %cst_92 {dimension_numbers = #tpu.dot_dimension_numbers<[1], [0], [0], [1], [0, 0, 1, 1], [], []>} : vector<48x16xbf16>, vector<16x64xbf16>, vector<48x64xf32> -> vector<48x64xf32>
    %344 = arith.addf %317, %343 : vector<48x64xf32>
    %345 = vector.extract_strided_slice %289 {offsets = [0, 0, 32], sizes = [3, 16, 16], strides = [1, 1, 1]} : vector<3x16x192xf32> to vector<3x16x16xf32>
    %346 = arith.truncf %345 : vector<3x16x16xf32> to vector<3x16x16xbf16>
    %347 = vector.extract_strided_slice %289 {offsets = [0, 0, 96], sizes = [3, 16, 16], strides = [1, 1, 1]} : vector<3x16x192xf32> to vector<3x16x16xf32>
    %348 = arith.truncf %347 : vector<3x16x16xf32> to vector<3x16x16xbf16>
    %349 = vector.extract_strided_slice %289 {offsets = [0, 0, 160], sizes = [3, 16, 16], strides = [1, 1, 1]} : vector<3x16x192xf32> to vector<3x16x16xf32>
    %350 = arith.truncf %349 : vector<3x16x16xf32> to vector<3x16x16xbf16>
    "tpu.trace_start"() <{level = 10 : i32, message = "bqd,bkd->bqk"}> : () -> ()
    %cst_93 = arith.constant dense<0.000000e+00> : vector<3x16x16xf32>
    %351 = tpu.matmul %346, %348, %cst_93 {dimension_numbers = #tpu.dot_dimension_numbers<[2], [2], [1], [1], [0, 0, 0, 1, 1, 1], [0], [0]>} : vector<3x16x16xbf16>, vector<3x16x16xbf16>, vector<3x16x16xf32> -> vector<3x16x16xf32>
    "tpu.trace_stop"() : () -> ()
    %352 = vector.shape_cast %254 : vector<16x16xf32> to vector<1x16x16xf32>
    %353 = vector.broadcast %352 : vector<1x16x16xf32> to vector<3x16x16xf32>
    %354 = arith.addf %351, %353 : vector<3x16x16xf32>
    %cst_94 = arith.constant dense<0xFF800000> : vector<3x16xf32>
    %355 = vector.multi_reduction <maximumf>, %354, %cst_94 [2] : vector<3x16x16xf32> to vector<3x16xf32>
    %356 = vector.shape_cast %355 : vector<3x16xf32> to vector<3x16x1xf32>
    %357 = vector.broadcast %356 : vector<3x16x1xf32> to vector<3x16x16xf32>
    %358 = arith.subf %354, %357 : vector<3x16x16xf32>
    %359 = math.exp %358 : vector<3x16x16xf32>
    %cst_95 = arith.constant dense<0.000000e+00> : vector<3x16xf32>
    %360 = vector.multi_reduction <add>, %359, %cst_95 [2] : vector<3x16x16xf32> to vector<3x16xf32>
    %361 = vector.shape_cast %360 : vector<3x16xf32> to vector<3x16x1xf32>
    %362 = tpu.reciprocal %361 {approx = true} : vector<3x16x1xf32> -> vector<3x16x1xf32>
    %363 = vector.broadcast %362 : vector<3x16x1xf32> to vector<3x16x16xf32>
    %364 = arith.mulf %359, %363 : vector<3x16x16xf32>
    %365 = arith.truncf %364 : vector<3x16x16xf32> to vector<3x16x16xbf16>
    "tpu.trace_start"() <{level = 10 : i32, message = "bqk,bkd->bqd"}> : () -> ()
    %cst_96 = arith.constant dense<0.000000e+00> : vector<3x16x16xf32>
    %366 = tpu.matmul %365, %350, %cst_96 {dimension_numbers = #tpu.dot_dimension_numbers<[2], [1], [1], [2], [0, 0, 0, 1, 1, 2], [0], [0]>} : vector<3x16x16xbf16>, vector<3x16x16xbf16>, vector<3x16x16xf32> -> vector<3x16x16xf32>
    "tpu.trace_stop"() : () -> ()
    %367 = vector.shape_cast %366 : vector<3x16x16xf32> to vector<48x16xf32>
    %368 = arith.truncf %367 : vector<48x16xf32> to vector<48x16xbf16>
    %369 = vector.extract_strided_slice %241 {offsets = [32, 0], sizes = [16, 64], strides = [1, 1]} : vector<64x64xbf16> to vector<16x64xbf16>
    %cst_97 = arith.constant dense<0.000000e+00> : vector<48x64xf32>
    %370 = tpu.matmul %368, %369, %cst_97 {dimension_numbers = #tpu.dot_dimension_numbers<[1], [0], [0], [1], [0, 0, 1, 1], [], []>} : vector<48x16xbf16>, vector<16x64xbf16>, vector<48x64xf32> -> vector<48x64xf32>
    %371 = arith.addf %344, %370 : vector<48x64xf32>
    %372 = vector.extract_strided_slice %289 {offsets = [0, 0, 48], sizes = [3, 16, 16], strides = [1, 1, 1]} : vector<3x16x192xf32> to vector<3x16x16xf32>
    %373 = arith.truncf %372 : vector<3x16x16xf32> to vector<3x16x16xbf16>
    %374 = vector.extract_strided_slice %289 {offsets = [0, 0, 112], sizes = [3, 16, 16], strides = [1, 1, 1]} : vector<3x16x192xf32> to vector<3x16x16xf32>
    %375 = arith.truncf %374 : vector<3x16x16xf32> to vector<3x16x16xbf16>
    %376 = vector.extract_strided_slice %289 {offsets = [0, 0, 176], sizes = [3, 16, 16], strides = [1, 1, 1]} : vector<3x16x192xf32> to vector<3x16x16xf32>
    %377 = arith.truncf %376 : vector<3x16x16xf32> to vector<3x16x16xbf16>
    "tpu.trace_start"() <{level = 10 : i32, message = "bqd,bkd->bqk"}> : () -> ()
    %cst_98 = arith.constant dense<0.000000e+00> : vector<3x16x16xf32>
    %378 = tpu.matmul %373, %375, %cst_98 {dimension_numbers = #tpu.dot_dimension_numbers<[2], [2], [1], [1], [0, 0, 0, 1, 1, 1], [0], [0]>} : vector<3x16x16xbf16>, vector<3x16x16xbf16>, vector<3x16x16xf32> -> vector<3x16x16xf32>
    "tpu.trace_stop"() : () -> ()
    %379 = vector.shape_cast %254 : vector<16x16xf32> to vector<1x16x16xf32>
    %380 = vector.broadcast %379 : vector<1x16x16xf32> to vector<3x16x16xf32>
    %381 = arith.addf %378, %380 : vector<3x16x16xf32>
    %cst_99 = arith.constant dense<0xFF800000> : vector<3x16xf32>
    %382 = vector.multi_reduction <maximumf>, %381, %cst_99 [2] : vector<3x16x16xf32> to vector<3x16xf32>
    %383 = vector.shape_cast %382 : vector<3x16xf32> to vector<3x16x1xf32>
    %384 = vector.broadcast %383 : vector<3x16x1xf32> to vector<3x16x16xf32>
    %385 = arith.subf %381, %384 : vector<3x16x16xf32>
    %386 = math.exp %385 : vector<3x16x16xf32>
    %cst_100 = arith.constant dense<0.000000e+00> : vector<3x16xf32>
    %387 = vector.multi_reduction <add>, %386, %cst_100 [2] : vector<3x16x16xf32> to vector<3x16xf32>
    %388 = vector.shape_cast %387 : vector<3x16xf32> to vector<3x16x1xf32>
    %389 = tpu.reciprocal %388 {approx = true} : vector<3x16x1xf32> -> vector<3x16x1xf32>
    %390 = vector.broadcast %389 : vector<3x16x1xf32> to vector<3x16x16xf32>
    %391 = arith.mulf %386, %390 : vector<3x16x16xf32>
    %392 = arith.truncf %391 : vector<3x16x16xf32> to vector<3x16x16xbf16>
    "tpu.trace_start"() <{level = 10 : i32, message = "bqk,bkd->bqd"}> : () -> ()
    %cst_101 = arith.constant dense<0.000000e+00> : vector<3x16x16xf32>
    %393 = tpu.matmul %392, %377, %cst_101 {dimension_numbers = #tpu.dot_dimension_numbers<[2], [1], [1], [2], [0, 0, 0, 1, 1, 2], [0], [0]>} : vector<3x16x16xbf16>, vector<3x16x16xbf16>, vector<3x16x16xf32> -> vector<3x16x16xf32>
    "tpu.trace_stop"() : () -> ()
    %394 = vector.shape_cast %393 : vector<3x16x16xf32> to vector<48x16xf32>
    %395 = arith.truncf %394 : vector<48x16xf32> to vector<48x16xbf16>
    %396 = vector.extract_strided_slice %241 {offsets = [48, 0], sizes = [16, 64], strides = [1, 1]} : vector<64x64xbf16> to vector<16x64xbf16>
    %cst_102 = arith.constant dense<0.000000e+00> : vector<48x64xf32>
    %397 = tpu.matmul %395, %396, %cst_102 {dimension_numbers = #tpu.dot_dimension_numbers<[1], [0], [0], [1], [0, 0, 1, 1], [], []>} : vector<48x16xbf16>, vector<16x64xbf16>, vector<48x64xf32> -> vector<48x64xf32>
    %398 = arith.addf %371, %397 : vector<48x64xf32>
    %399 = arith.addf %255, %398 : vector<48x64xf32>
    %400 = vector.broadcast %259 : vector<1x64xf32> to vector<48x64xf32>
    %401 = arith.addf %399, %400 : vector<48x64xf32>
    %cst_103 = arith.constant dense<0.000000e+00> : vector<48xf32>
    %402 = vector.multi_reduction <add>, %401, %cst_103 [1] : vector<48x64xf32> to vector<48xf32>
    %403 = vector.shape_cast %402 : vector<48xf32> to vector<48x1xf32>
    %cst_104 = arith.constant 6.400000e+01 : f32
    %404 = vector.broadcast %cst_104 : f32 to vector<48x1xf32>
    %405 = arith.divf %403, %404 : vector<48x1xf32>
    %406 = vector.broadcast %405 : vector<48x1xf32> to vector<48x64xf32>
    %407 = arith.subf %401, %406 : vector<48x64xf32>
    %408 = arith.mulf %407, %407 : vector<48x64xf32>
    %cst_105 = arith.constant dense<0.000000e+00> : vector<48xf32>
    %409 = vector.multi_reduction <add>, %408, %cst_105 [1] : vector<48x64xf32> to vector<48xf32>
    %410 = vector.shape_cast %409 : vector<48xf32> to vector<48x1xf32>
    %cst_106 = arith.constant 6.400000e+01 : f32
    %411 = vector.broadcast %cst_106 : f32 to vector<48x1xf32>
    %412 = arith.divf %410, %411 : vector<48x1xf32>
    %cst_107 = arith.constant 9.99999974E-6 : f32
    %413 = vector.broadcast %cst_107 : f32 to vector<48x1xf32>
    %414 = arith.addf %412, %413 : vector<48x1xf32>
    %415 = math.rsqrt %414 : vector<48x1xf32>
    %416 = vector.broadcast %415 : vector<48x1xf32> to vector<48x64xf32>
    %417 = arith.mulf %407, %416 : vector<48x64xf32>
    %418 = vector.broadcast %260 : vector<1x64xf32> to vector<48x64xf32>
    %419 = arith.mulf %417, %418 : vector<48x64xf32>
    %420 = vector.broadcast %261 : vector<1x64xf32> to vector<48x64xf32>
    %421 = arith.addf %419, %420 : vector<48x64xf32>
    %422 = arith.truncf %421 : vector<48x64xf32> to vector<48x64xbf16>
    %cst_108 = arith.constant dense<0.000000e+00> : vector<48x256xf32>
    %423 = tpu.matmul %422, %242, %cst_108 {dimension_numbers = #tpu.dot_dimension_numbers<[1], [0], [0], [1], [0, 0, 1, 1], [], []>} : vector<48x64xbf16>, vector<64x256xbf16>, vector<48x256xf32> -> vector<48x256xf32>
    %424 = vector.broadcast %262 : vector<1x256xf32> to vector<48x256xf32>
    %425 = arith.addf %423, %424 : vector<48x256xf32>
    %cst_109 = arith.constant 1.702000e+00 : f32
    %426 = vector.broadcast %cst_109 : f32 to vector<48x256xf32>
    %427 = arith.mulf %426, %425 : vector<48x256xf32>
    %428 = arith.negf %427 : vector<48x256xf32>
    %429 = math.exp %428 : vector<48x256xf32>
    %cst_110 = arith.constant 1.000000e+00 : f32
    %430 = vector.broadcast %cst_110 : f32 to vector<48x256xf32>
    %431 = arith.addf %430, %429 : vector<48x256xf32>
    %432 = arith.divf %430, %431 : vector<48x256xf32>
    %433 = arith.mulf %425, %432 : vector<48x256xf32>
    %434 = arith.truncf %433 : vector<48x256xf32> to vector<48x256xbf16>
    %cst_111 = arith.constant dense<0.000000e+00> : vector<48x64xf32>
    %435 = tpu.matmul %434, %263, %cst_111 {dimension_numbers = #tpu.dot_dimension_numbers<[1], [0], [0], [1], [0, 0, 1, 1], [], []>} : vector<48x256xbf16>, vector<256x64xbf16>, vector<48x64xf32> -> vector<48x64xf32>
    %436 = vector.broadcast %264 : vector<1x64xf32> to vector<48x64xf32>
    %437 = arith.addf %435, %436 : vector<48x64xf32>
    %438 = arith.addf %401, %437 : vector<48x64xf32>
    %439 = vector.extract_strided_slice %0 {offsets = [38, 0], sizes = [1, 64], strides = [1, 1]} : vector<40x64xf32> to vector<1x64xf32>
    %440 = vector.extract_strided_slice %0 {offsets = [39, 0], sizes = [1, 64], strides = [1, 1]} : vector<40x64xf32> to vector<1x64xf32>
    %cst_112 = arith.constant dense<0.000000e+00> : vector<48xf32>
    %441 = vector.multi_reduction <add>, %438, %cst_112 [1] : vector<48x64xf32> to vector<48xf32>
    %442 = vector.shape_cast %441 : vector<48xf32> to vector<48x1xf32>
    %cst_113 = arith.constant 6.400000e+01 : f32
    %443 = vector.broadcast %cst_113 : f32 to vector<48x1xf32>
    %444 = arith.divf %442, %443 : vector<48x1xf32>
    %445 = vector.broadcast %444 : vector<48x1xf32> to vector<48x64xf32>
    %446 = arith.subf %438, %445 : vector<48x64xf32>
    %447 = arith.mulf %446, %446 : vector<48x64xf32>
    %cst_114 = arith.constant dense<0.000000e+00> : vector<48xf32>
    %448 = vector.multi_reduction <add>, %447, %cst_114 [1] : vector<48x64xf32> to vector<48xf32>
    %449 = vector.shape_cast %448 : vector<48xf32> to vector<48x1xf32>
    %cst_115 = arith.constant 6.400000e+01 : f32
    %450 = vector.broadcast %cst_115 : f32 to vector<48x1xf32>
    %451 = arith.divf %449, %450 : vector<48x1xf32>
    %cst_116 = arith.constant 9.99999974E-6 : f32
    %452 = vector.broadcast %cst_116 : f32 to vector<48x1xf32>
    %453 = arith.addf %451, %452 : vector<48x1xf32>
    %454 = math.rsqrt %453 : vector<48x1xf32>
    %455 = vector.broadcast %454 : vector<48x1xf32> to vector<48x64xf32>
    %456 = arith.mulf %446, %455 : vector<48x64xf32>
    %457 = vector.broadcast %439 : vector<1x64xf32> to vector<48x64xf32>
    %458 = arith.mulf %456, %457 : vector<48x64xf32>
    %459 = vector.broadcast %440 : vector<1x64xf32> to vector<48x64xf32>
    %460 = arith.addf %458, %459 : vector<48x64xf32>
    %c0_117 = arith.constant 0 : index
    %c0_118 = arith.constant 0 : index
    %461 = vector.load %arg3[%c0_117, %c0_118] : memref<3x48xf32, #tpu.memory_space<vmem>>, vector<3x48xf32>
    %cst_119 = arith.constant dense<0.000000e+00> : vector<3x64xf32>
    %462 = tpu.matmul %461, %460, %cst_119 {dimension_numbers = #tpu.dot_dimension_numbers<[1], [0], [0], [1], [0, 0, 1, 1], [], []>} : vector<3x48xf32>, vector<48x64xf32>, vector<3x64xf32> -> vector<3x64xf32>
    %463 = arith.truncf %462 : vector<3x64xf32> to vector<3x64xbf16>
    %cst_120 = arith.constant dense<0.000000e+00> : vector<3x64xf32>
    %464 = tpu.matmul %463, %243, %cst_120 {dimension_numbers = #tpu.dot_dimension_numbers<[1], [0], [0], [1], [0, 0, 1, 1], [], []>} : vector<3x64xbf16>, vector<64x64xbf16>, vector<3x64xf32> -> vector<3x64xf32>
    %465 = arith.mulf %464, %464 : vector<3x64xf32>
    %cst_121 = arith.constant dense<0.000000e+00> : vector<3xf32>
    %466 = vector.multi_reduction <add>, %465, %cst_121 [1] : vector<3x64xf32> to vector<3xf32>
    %467 = vector.shape_cast %466 : vector<3xf32> to vector<3x1xf32>
    %468 = math.rsqrt %467 : vector<3x1xf32>
    %469 = vector.broadcast %468 : vector<3x1xf32> to vector<3x64xf32>
    %470 = arith.mulf %464, %469 : vector<3x64xf32>
    %471 = arith.mulf %239, %239 : vector<4x64xf32>
    %cst_122 = arith.constant dense<0.000000e+00> : vector<4xf32>
    %472 = vector.multi_reduction <add>, %471, %cst_122 [1] : vector<4x64xf32> to vector<4xf32>
    %473 = vector.shape_cast %472 : vector<4xf32> to vector<4x1xf32>
    %474 = math.rsqrt %473 : vector<4x1xf32>
    %475 = vector.broadcast %474 : vector<4x1xf32> to vector<4x64xf32>
    %476 = arith.mulf %239, %475 : vector<4x64xf32>
    %c0_123 = arith.constant 0 : index
    %c0_124 = arith.constant 0 : index
    %477 = memref.load %arg0[%c0_123, %c0_124] : memref<1x1xf32, #tpu.memory_space<smem>>
    %cst_125 = arith.constant dense<0.000000e+00> : vector<4x3xf32>
    %478 = tpu.matmul %476, %470, %cst_125 {dimension_numbers = #tpu.dot_dimension_numbers<[1], [1], [0], [0], [0, 0, 1, 0], [], []>} : vector<4x64xf32>, vector<3x64xf32>, vector<4x3xf32> -> vector<4x3xf32>
    %479 = vector.broadcast %477 : f32 to vector<4x3xf32>
    %480 = arith.mulf %479, %478 : vector<4x3xf32>
    %cst_126 = arith.constant dense<0.000000e+00> : vector<3xf32>
    %481 = vector.multi_reduction <add>, %480, %cst_126 [0] : vector<4x3xf32> to vector<3xf32>
    %482 = vector.shape_cast %481 : vector<3xf32> to vector<1x3xf32>
    %cst_127 = arith.constant 4.000000e+00 : f32
    %483 = vector.broadcast %cst_127 : f32 to vector<1x3xf32>
    %484 = arith.divf %482, %483 : vector<1x3xf32>
    %c0_128 = arith.constant 0 : index
    %c0_129 = arith.constant 0 : index
    %485 = vector.load %arg9[%c0_128, %c0_129] : memref<1x3xf32, #tpu.memory_space<vmem>>, vector<1x3xf32>
    tpu.vector_store %arg9[%c0_128, %c0_129], %484 {strides = array<i32>} : memref<1x3xf32, #tpu.memory_space<vmem>>, vector<1x3xf32>,
    return
  }
}

</mosaic_0001>

<llo_original>
// kernel: clip_ttt_forward.1
$region0: #{clip_ttt_forward.1}
  #allocation0 [shape = 'u32[]', space=smem, size = 0x4, offset = 0x4, fixed_abs, tag = 'smem constant byte address 0x4 - core index']
  #allocation1 [shape = 'u32[72,128]{1,0:T(1,128)}', space=vmem, size = 0x9000, scoped, tag = 'internal scratch']
  #allocation2 [shape = 'f32[1,1]{1,0:T(1,128)S(6)}', space=smem, size = 0x200, scoped, tag = 'scoped memory for clip_ttt_forward.1']
  %s0 = inlined_call_operand.<no memory space> [shape: f32[1,1], index: 0, kind: input, shape index: {}]
  %s1 = inlined_call_operand.vmem [shape: bf16[4,5,769], index: 1, kind: input, shape index: {}]
  %s2 = inlined_call_operand.vmem [shape: f32[3,16,64], index: 2, kind: input, shape index: {}]
  %s3 = inlined_call_operand.vmem [shape: f32[3,48], index: 3, kind: input, shape index: {}]
  %s4 = inlined_call_operand.vmem [shape: bf16[769,64], index: 4, kind: input, shape index: {}]
  %s5 = inlined_call_operand.vmem [shape: bf16[64,1152], index: 5, kind: input, shape index: {}]
  %s6 = inlined_call_operand.vmem [shape: bf16[256,128], index: 6, kind: input, shape index: {}]
  %s7 = inlined_call_operand.vmem [shape: f32[40,64], index: 7, kind: input, shape index: {}]
  %s8 = inlined_call_operand.vmem [shape: f32[4,256], index: 8, kind: input, shape index: {}]
  %s9 = inlined_call_operand.hbm [shape: f32[1,3], index: 9, kind: output, shape index: {}]
  %s10 = sld [smem:[#allocation0]]
  $region46: #{clip_ttt_forward.1} parent=0
    _
  %s12 = ssub.s32 1, %s10
  %s13 = scalar_select 0, %s12, %s10
  %14 = sst [smem:[#allocation2]] %s0
  $region1: #{clip_ttt_forward.1} parent=0
    #allocation3 [shape = 'u8[512]{0}', space=vmem, size = 0x400, scoped, tag = 'output window, operand 0, single buffered']
    #allocation4 [shape = 's32[1]{0}', space=sflag, size = 0x4, scoped, tag = 'scoped memory for clip_ttt_forward.1']
    %15 = vsyncpa [#allocation4], 0
    // Predicated region
    $region2: #{clip_ttt_forward.1} parent=1 // pred_check
      _
    $region3: #{clip_ttt_forward.1} parent=1 // pred_check_branch
      %17 = sbr.rel (0) target = $region5
    $region4: #{clip_ttt_forward.1} parent=1 // pred_region
      _
    $region5: #{clip_ttt_forward.1} parent=1 // pred_fallthru
      _
    // Predicated region
    $region6: #{clip_ttt_forward.1} parent=1 // pred_check
      _
    $region7: #{clip_ttt_forward.1} parent=1 // pred_check_branch
      %19 = sbr.rel (0) target = $region9
    $region8: #{clip_ttt_forward.1} parent=1 // pred_region
      _
    $region9: #{clip_ttt_forward.1} parent=1 // pred_fallthru
      _
    // Predicated region
    $region10: #{clip_ttt_forward.1} parent=1 // pred_check
      _
    $region11: #{clip_ttt_forward.1} parent=1 // pred_check_branch
      %21 = sbr.rel (0) target = $region13
    $region12: #{clip_ttt_forward.1} parent=1 // pred_region
      _
    $region13: #{clip_ttt_forward.1} parent=1 // pred_fallthru
      _
    // Predicated region
    $region14: #{clip_ttt_forward.1} parent=1 // pred_check
      _
    $region15: #{clip_ttt_forward.1} parent=1 // pred_check_branch
      %23 = sbr.rel (0) target = $region17
    $region16: #{clip_ttt_forward.1} parent=1 // pred_region
      _
    $region17: #{clip_ttt_forward.1} parent=1 // pred_fallthru
      _
    // Predicated region
    $region18: #{clip_ttt_forward.1} parent=1 // pred_check
      _
    $region19: #{clip_ttt_forward.1} parent=1 // pred_check_branch
      %25 = sbr.rel (0) target = $region21
    $region20: #{clip_ttt_forward.1} parent=1 // pred_region
      _
    $region21: #{clip_ttt_forward.1} parent=1 // pred_fallthru
      _
    // Predicated region
    $region22: #{clip_ttt_forward.1} parent=1 // pred_check
      _
    $region23: #{clip_ttt_forward.1} parent=1 // pred_check_branch
      %27 = sbr.rel (0) target = $region25
    $region24: #{clip_ttt_forward.1} parent=1 // pred_region
      _
    $region25: #{clip_ttt_forward.1} parent=1 // pred_fallthru
      _
    // Predicated region
    $region26: #{clip_ttt_forward.1} parent=1 // pred_check
      _
    $region27: #{clip_ttt_forward.1} parent=1 // pred_check_branch
      %29 = sbr.rel (0) target = $region29
    $region28: #{clip_ttt_forward.1} parent=1 // pred_region
      _
    $region29: #{clip_ttt_forward.1} parent=1 // pred_fallthru
      _
    // Predicated region
    $region30: #{clip_ttt_forward.1} parent=1 // pred_check
      _
    $region31: #{clip_ttt_forward.1} parent=1 // pred_check_branch
      %31 = sbr.rel (0) target = $region33
    $region32: #{clip_ttt_forward.1} parent=1 // pred_region
      _
    $region33: #{clip_ttt_forward.1} parent=1 // pred_fallthru
      _
    // Predicated region
    $region34: #{clip_ttt_forward.1} parent=1 // pred_check
      _
    $region35: #{clip_ttt_forward.1} parent=1 // pred_check_branch
      %33 = sbr.rel (0) target = $region37
    $region36: #{clip_ttt_forward.1} parent=1 // pred_region
      _
    $region37: #{clip_ttt_forward.1} parent=1 // pred_fallthru
      _
    %v35 = vld [vmem:[%s7] sm:$0xff]
    %v36 = vld [vmem:[%s7 + $0x8] sm:$0xff]
    %v37 = vld [vmem:[%s7 + $0x10] sm:$0xff]
    %v38 = vld [vmem:[%s7 + $0x18] sm:$0xff]
    %v39 = vld [vmem:[%s7 + $0x20] sm:$0xff]
    %v40 = vld [vmem:[%s1] sm:$0x77]
    %v41 = vld [vmem:[%s1 + $0x8] sm:$0x77]
    %v42 = vld [vmem:[%s1 + $0x10] sm:$0x77]
    %v43 = vld [vmem:[%s1 + $0x18] sm:$0x7]
    %v44 = vld [vmem:[%s1 + $0x1c] sm:$0x77]
    %v45 = vld [vmem:[%s1 + $0x24] sm:$0x77]
    %v46 = vld [vmem:[%s1 + $0x2c] sm:$0x77]
    %v47 = vld [vmem:[%s1 + $0x34] sm:$0x7]
    %v48 = vld [vmem:[%s1 + $0x38] sm:$0x77]
    %v49 = vld [vmem:[%s1 + $0x40] sm:$0x77]
    %v50 = vld [vmem:[%s1 + $0x48] sm:$0x77]
    %v51 = vld [vmem:[%s1 + $0x50] sm:$0x7]
    %v52 = vld [vmem:[%s1 + $0x54] sm:$0x77]
    %v53 = vld [vmem:[%s1 + $0x5c] sm:$0x77]
    %v54 = vld [vmem:[%s1 + $0x64] sm:$0x77]
    %v55 = vld [vmem:[%s1 + $0x6c] sm:$0x7]
    %v72 = vrot.slane %v40, 3
    %v73 = vrot.slane %v41, 6
    %v74 = vrot.slane %v41, 1
    %v75 = vrot.slane %v42, 4
    %v76 = vrot.slane %v42, 7
    %v77 = vrot.slane %v43, 2
    %v78 = vrot.slane %v43, 5
    %v79 = vrot.slane %v44, 3
    %v80 = vrot.slane %v45, 6
    %v81 = vrot.slane %v45, 1
    %v82 = vrot.slane %v46, 4
    %v83 = vrot.slane %v46, 7
    %v84 = vrot.slane %v47, 2
    %v85 = vrot.slane %v47, 5
    %v86 = vrot.slane %v48, 3
    %v87 = vrot.slane %v49, 6
    %v88 = vrot.slane %v49, 1
    %v89 = vrot.slane %v50, 4
    %v90 = vrot.slane %v50, 7
    %v91 = vrot.slane %v51, 2
    %v92 = vrot.slane %v51, 5
    %v93 = vrot.slane %v52, 3
    %v94 = vrot.slane %v53, 6
    %v95 = vrot.slane %v53, 1
    %v96 = vrot.slane %v54, 4
    %v97 = vrot.slane %v54, 7
    %v98 = vrot.slane %v55, 2
    %v99 = vrot.slane %v55, 5
    %vm100 = vcmask 1040384
    %v103 = vsel %vm100, %v40, %v72
    %vm104 = vcmask 1042434
    %v107 = vsel %vm104, %v73, %v74
    %vm108 = vcmask 1041408
    %v109 = vsel %vm108, %v103, %v107
    %vm110 = vcmask 1044484
    %v113 = vsel %vm110, %v75, %v76
    %vm114 = vcmask 1046534
    %v117 = vsel %vm114, %v77, %v78
    %vm118 = vcmask 1045508
    %v119 = vsel %vm118, %v113, %v117
    %vm120 = vcmask 1043456
    %v121 = vsel %vm120, %v109, %v119
    %vm123 = vcmask 1041409
    %v124 = vsel %vm123, %v40, %v72
    %vm125 = vcmask 1043459
    %v126 = vsel %vm125, %v73, %v74
    %vm127 = vcmask 1042433
    %v128 = vsel %vm127, %v124, %v126
    %vm129 = vcmask 1045509
    %v130 = vsel %vm129, %v75, %v76
    %vm131 = vcmask 1046528
    %v132 = vsel %vm131, %v78, %v77
    %vm133 = vcmask 1046533
    %v134 = vsel %vm133, %v130, %v132
    %vm135 = vcmask 1044481
    %v136 = vsel %vm135, %v128, %v134
    %v138 = vrot.slane %v136, 1
    %v139 = vsel %vm104, %v40, %v72
    %v140 = vsel %vm110, %v73, %v74
    %vm141 = vcmask 1043458
    %v142 = vsel %vm141, %v139, %v140
    %v143 = vsel %vm114, %v75, %v76
    %v144 = vsel %vm100, %v77, %v78
    %vm145 = vcmask 1045504
    %v146 = vsel %vm145, %v144, %v143
    %vm147 = vcmask 1045506
    %v148 = vsel %vm147, %v142, %v146
    %v150 = vrot.slane %v148, 2
    %v153 = vsel %vm100, %v44, %v79
    %v156 = vsel %vm104, %v80, %v81
    %v157 = vsel %vm108, %v153, %v156
    %v160 = vsel %vm110, %v82, %v83
    %v163 = vsel %vm114, %v84, %v85
    %v164 = vsel %vm118, %v160, %v163
    %v165 = vsel %vm120, %v157, %v164
    %v167 = vsel %vm123, %v44, %v79
    %v168 = vsel %vm125, %v80, %v81
    %v169 = vsel %vm127, %v167, %v168
    %v170 = vsel %vm129, %v82, %v83
    %v171 = vsel %vm131, %v85, %v84
    %v172 = vsel %vm133, %v170, %v171
    %v173 = vsel %vm135, %v169, %v172
    %v175 = vrot.slane %v173, 1
    %v176 = vsel %vm104, %v44, %v79
    %v177 = vsel %vm110, %v80, %v81
    %v178 = vsel %vm141, %v176, %v177
    %v179 = vsel %vm114, %v82, %v83
    %v180 = vsel %vm100, %v84, %v85
    %v181 = vsel %vm145, %v180, %v179
    %v182 = vsel %vm147, %v178, %v181
    %v184 = vrot.slane %v182, 2
    %v187 = vsel %vm100, %v48, %v86
    %v190 = vsel %vm104, %v87, %v88
    %v191 = vsel %vm108, %v187, %v190
    %v194 = vsel %vm110, %v89, %v90
    %v197 = vsel %vm114, %v91, %v92
    %v198 = vsel %vm118, %v194, %v197
    %v199 = vsel %vm120, %v191, %v198
    %v201 = vsel %vm123, %v48, %v86
    %v202 = vsel %vm125, %v87, %v88
    %v203 = vsel %vm127, %v201, %v202
    %v204 = vsel %vm129, %v89, %v90
    %v205 = vsel %vm131, %v92, %v91
    %v206 = vsel %vm133, %v204, %v205
    %v207 = vsel %vm135, %v203, %v206
    %v209 = vrot.slane %v207, 1
    %v210 = vsel %vm104, %v48, %v86
    %v211 = vsel %vm110, %v87, %v88
    %v212 = vsel %vm141, %v210, %v211
    %v213 = vsel %vm114, %v89, %v90
    %v214 = vsel %vm100, %v91, %v92
    %v215 = vsel %vm145, %v214, %v213
    %v216 = vsel %vm147, %v212, %v215
    %v218 = vrot.slane %v216, 2
    %v221 = vsel %vm100, %v52, %v93
    %v224 = vsel %vm104, %v94, %v95
    %v225 = vsel %vm108, %v221, %v224
    %v228 = vsel %vm110, %v96, %v97
    %v231 = vsel %vm114, %v98, %v99
    %v232 = vsel %vm118, %v228, %v231
    %v233 = vsel %vm120, %v225, %v232
    %v235 = vsel %vm123, %v52, %v93
    %v236 = vsel %vm125, %v94, %v95
    %v237 = vsel %vm127, %v235, %v236
    %v238 = vsel %vm129, %v96, %v97
    %v239 = vsel %vm131, %v99, %v98
    %v240 = vsel %vm133, %v238, %v239
    %v241 = vsel %vm135, %v237, %v240
    %v243 = vrot.slane %v241, 1
    %v244 = vsel %vm104, %v52, %v93
    %v245 = vsel %vm110, %v94, %v95
    %v246 = vsel %vm141, %v244, %v245
    %v247 = vsel %vm114, %v96, %v97
    %v248 = vsel %vm100, %v98, %v99
    %v249 = vsel %vm145, %v248, %v247
    %v250 = vsel %vm147, %v246, %v249
    %v252 = vrot.slane %v250, 2
    %v253 = vunpack.i.l.s16 %v121
    %v254 = vunpack.i.h.s16 %v121
    %v255 = vunpack.i.l.s16 %v138
    %v256 = vunpack.i.h.s16 %v138
    %v257 = vunpack.i.l.s16 %v150
    %v258 = vunpack.i.l.s16 %v165
    %v259 = vunpack.i.h.s16 %v165
    %v260 = vunpack.i.l.s16 %v175
    %v261 = vunpack.i.h.s16 %v175
    %v262 = vunpack.i.l.s16 %v184
    %v263 = vunpack.i.l.s16 %v199
    %v264 = vunpack.i.h.s16 %v199
    %v265 = vunpack.i.l.s16 %v209
    %v266 = vunpack.i.h.s16 %v209
    %v267 = vunpack.i.l.s16 %v218
    %v268 = vunpack.i.l.s16 %v233
    %v269 = vunpack.i.h.s16 %v233
    %v270 = vunpack.i.l.s16 %v243
    %v271 = vunpack.i.h.s16 %v243
    %v272 = vunpack.i.l.s16 %v252
    %v273 = vld [vmem:[%s5] sm:$0xff]
    %v274 = vld [vmem:[%s5 + $0x24] sm:$0xff]
    %v275 = vld [vmem:[%s5 + $0x48] sm:$0xff]
    %v276 = vld [vmem:[%s5 + $0x6c] sm:$0xff]
    %v277 = vld [vmem:[%s5 + $0x90] sm:$0xff]
    %v278 = vld [vmem:[%s5 + $0xb4] sm:$0xff]
    %v279 = vld [vmem:[%s5 + $0xd8] sm:$0xff]
    %v280 = vld [vmem:[%s5 + $0xfc] sm:$0xff]
    %v281 = vld [vmem:[%s5 + $0x4] sm:$0xf]
    %v282 = vld [vmem:[%s5 + $0x28] sm:$0xf]
    %v283 = vld [vmem:[%s5 + $0x4c] sm:$0xf]
    %v284 = vld [vmem:[%s5 + $0x70] sm:$0xf]
    %v285 = vld [vmem:[%s5 + $0x94] sm:$0xf]
    %v286 = vld [vmem:[%s5 + $0xb8] sm:$0xf]
    %v287 = vld [vmem:[%s5 + $0xdc] sm:$0xf]
    %v288 = vld [vmem:[%s5 + $0x100] sm:$0xf]
    %v289 = vld [vmem:[%s5 + $0x8] sm:$0xff]
    %v290 = vld [vmem:[%s5 + $0x2c] sm:$0xff]
    %v291 = vld [vmem:[%s5 + $0x50] sm:$0xff]
    %v292 = vld [vmem:[%s5 + $0x74] sm:$0xff]
    %v293 = vld [vmem:[%s5 + $0x98] sm:$0xff]
    %v294 = vld [vmem:[%s5 + $0xbc] sm:$0xff]
    %v295 = vld [vmem:[%s5 + $0xe0] sm:$0xff]
    %v296 = vld [vmem:[%s5 + $0x104] sm:$0xff]
    %v297 = vld [vmem:[%s5 + $0x10] sm:$0xf]
    %v298 = vld [vmem:[%s5 + $0x34] sm:$0xf]
    %v299 = vld [vmem:[%s5 + $0x58] sm:$0xf]
    %v300 = vld [vmem:[%s5 + $0x7c] sm:$0xf]
    %v301 = vld [vmem:[%s5 + $0xa0] sm:$0xf]
    %v302 = vld [vmem:[%s5 + $0xc4] sm:$0xf]
    %v303 = vld [vmem:[%s5 + $0xe8] sm:$0xf]
    %v304 = vld [vmem:[%s5 + $0x10c] sm:$0xf]
    %v305 = vld [vmem:[%s4] sm:$0xf]
    %v306 = vld [vmem:[%s4 + $0x4] sm:$0xf]
    %v307 = vld [vmem:[%s4 + $0x8] sm:$0xf]
    %v308 = vld [vmem:[%s4 + $0xc] sm:$0xf]
    %v309 = vld [vmem:[%s4 + $0x10] sm:$0xf]
    %v310 = vld [vmem:[%s4 + $0x14] sm:$0xf]
    %v311 = vld [vmem:[%s4 + $0x18] sm:$0xf]
    %v312 = vld [vmem:[%s4 + $0x1c] sm:$0xf]
    %v313 = vld [vmem:[%s4 + $0x20] sm:$0xf]
    %v314 = vld [vmem:[%s4 + $0x24] sm:$0xf]
    %v315 = vld [vmem:[%s4 + $0x28] sm:$0xf]
    %v316 = vld [vmem:[%s4 + $0x2c] sm:$0xf]
    %v317 = vld [vmem:[%s4 + $0x30] sm:$0xf]
    %v318 = vld [vmem:[%s4 + $0x34] sm:$0xf]
    %v319 = vld [vmem:[%s4 + $0x38] sm:$0xf]
    %v320 = vld [vmem:[%s4 + $0x3c] sm:$0xf]
    %v321 = vld [vmem:[%s4 + $0x40] sm:$0xf]
    %v322 = vld [vmem:[%s4 + $0x44] sm:$0xf]
    %v323 = vld [vmem:[%s4 + $0x48] sm:$0xf]
    %v324 = vld [vmem:[%s4 + $0x4c] sm:$0xf]
    %v325 = vld [vmem:[%s4 + $0x50] sm:$0xf]
    %v326 = vld [vmem:[%s4 + $0x54] sm:$0xf]
    %v327 = vld [vmem:[%s4 + $0x58] sm:$0xf]
    %v328 = vld [vmem:[%s4 + $0x5c] sm:$0xf]
    %v329 = vld [vmem:[%s4 + $0x60] sm:$0xf]
    %v330 = vld [vmem:[%s4 + $0x64] sm:$0xf]
    %v331 = vld [vmem:[%s4 + $0x68] sm:$0xf]
    %v332 = vld [vmem:[%s4 + $0x6c] sm:$0xf]
    %v333 = vld [vmem:[%s4 + $0x70] sm:$0xf]
    %v334 = vld [vmem:[%s4 + $0x74] sm:$0xf]
    %v335 = vld [vmem:[%s4 + $0x78] sm:$0xf]
    %v336 = vld [vmem:[%s4 + $0x7c] sm:$0xf]
    %v337 = vld [vmem:[%s4 + $0x80] sm:$0xf]
    %v338 = vld [vmem:[%s4 + $0x84] sm:$0xf]
    %v339 = vld [vmem:[%s4 + $0x88] sm:$0xf]
    %v340 = vld [vmem:[%s4 + $0x8c] sm:$0xf]
    %v341 = vld [vmem:[%s4 + $0x90] sm:$0xf]
    %v342 = vld [vmem:[%s4 + $0x94] sm:$0xf]
    %v343 = vld [vmem:[%s4 + $0x98] sm:$0xf]
    %v344 = vld [vmem:[%s4 + $0x9c] sm:$0xf]
    %v345 = vld [vmem:[%s4 + $0xa0] sm:$0xf]
    %v346 = vld [vmem:[%s4 + $0xa4] sm:$0xf]
    %v347 = vld [vmem:[%s4 + $0xa8] sm:$0xf]
    %v348 = vld [vmem:[%s4 + $0xac] sm:$0xf]
    %v349 = vld [vmem:[%s4 + $0xb0] sm:$0xf]
    %v350 = vld [vmem:[%s4 + $0xb4] sm:$0xf]
    %v351 = vld [vmem:[%s4 + $0xb8] sm:$0xf]
    %v352 = vld [vmem:[%s4 + $0xbc] sm:$0xf]
    %v353 = vld [vmem:[%s4 + $0xc0] sm:$0xf]
    %v354 = vld [vmem:[%s4 + $0xc4] sm:$0xf]
    %v355 = vld [vmem:[%s4 + $0xc8] sm:$0xf]
    %v356 = vld [vmem:[%s4 + $0xcc] sm:$0xf]
    %v357 = vld [vmem:[%s4 + $0xd0] sm:$0xf]
    %v358 = vld [vmem:[%s4 + $0xd4] sm:$0xf]
    %v359 = vld [vmem:[%s4 + $0xd8] sm:$0xf]
    %v360 = vld [vmem:[%s4 + $0xdc] sm:$0xf]
    %v361 = vld [vmem:[%s4 + $0xe0] sm:$0xf]
    %v362 = vld [vmem:[%s4 + $0xe4] sm:$0xf]
    %v363 = vld [vmem:[%s4 + $0xe8] sm:$0xf]
    %v364 = vld [vmem:[%s4 + $0xec] sm:$0xf]
    %v365 = vld [vmem:[%s4 + $0xf0] sm:$0xf]
    %v366 = vld [vmem:[%s4 + $0xf4] sm:$0xf]
    %v367 = vld [vmem:[%s4 + $0xf8] sm:$0xf]
    %v368 = vld [vmem:[%s4 + $0xfc] sm:$0xf]
    %v369 = vld [vmem:[%s4 + $0x100] sm:$0xf]
    %v370 = vld [vmem:[%s4 + $0x104] sm:$0xf]
    %v371 = vld [vmem:[%s4 + $0x108] sm:$0xf]
    %v372 = vld [vmem:[%s4 + $0x10c] sm:$0xf]
    %v373 = vld [vmem:[%s4 + $0x110] sm:$0xf]
    %v374 = vld [vmem:[%s4 + $0x114] sm:$0xf]
    %v375 = vld [vmem:[%s4 + $0x118] sm:$0xf]
    %v376 = vld [vmem:[%s4 + $0x11c] sm:$0xf]
    %v377 = vld [vmem:[%s4 + $0x120] sm:$0xf]
    %v378 = vld [vmem:[%s4 + $0x124] sm:$0xf]
    %v379 = vld [vmem:[%s4 + $0x128] sm:$0xf]
    %v380 = vld [vmem:[%s4 + $0x12c] sm:$0xf]
    %v381 = vld [vmem:[%s4 + $0x130] sm:$0xf]
    %v382 = vld [vmem:[%s4 + $0x134] sm:$0xf]
    %v383 = vld [vmem:[%s4 + $0x138] sm:$0xf]
    %v384 = vld [vmem:[%s4 + $0x13c] sm:$0xf]
    %v385 = vld [vmem:[%s4 + $0x140] sm:$0xf]
    %v386 = vld [vmem:[%s4 + $0x144] sm:$0xf]
    %v387 = vld [vmem:[%s4 + $0x148] sm:$0xf]
    %v388 = vld [vmem:[%s4 + $0x14c] sm:$0xf]
    %v389 = vld [vmem:[%s4 + $0x150] sm:$0xf]
    %v390 = vld [vmem:[%s4 + $0x154] sm:$0xf]
    %v391 = vld [vmem:[%s4 + $0x158] sm:$0xf]
    %v392 = vld [vmem:[%s4 + $0x15c] sm:$0xf]
    %v393 = vld [vmem:[%s4 + $0x160] sm:$0xf]
    %v394 = vld [vmem:[%s4 + $0x164] sm:$0xf]
    %v395 = vld [vmem:[%s4 + $0x168] sm:$0xf]
    %v396 = vld [vmem:[%s4 + $0x16c] sm:$0xf]
    %v397 = vld [vmem:[%s4 + $0x170] sm:$0xf]
    %v398 = vld [vmem:[%s4 + $0x174] sm:$0xf]
    %v399 = vld [vmem:[%s4 + $0x178] sm:$0xf]
    %v400 = vld [vmem:[%s4 + $0x17c] sm:$0xf]
    %v401 = vld [vmem:[%s4 + $0x180] sm:$0x1]
    %v402 = vpack.i.b16 %v254, %v253
    %v403 = vpack.i.b16 %v256, %v255
    %v404 = vpack.i.b16 %v258, %v257
    %v405 = vpack.i.b16 %v260, %v259
    %v406 = vpack.i.b16 %v262, %v261
    %v407 = vpack.i.b16 %v264, %v263
    %v408 = vpack.i.b16 %v266, %v265
    %v409 = vpack.i.b16 %v268, %v267
    %v410 = vpack.i.b16 %v270, %v269
    %v411 = vpack.i.b16 %v272, %v271
    %413 = vst [vmem:[#allocation1] ss:$9 sm:$0xff] %v402
    %s415 = scalar_lea.vmem [#allocation1], 1
    %416 = vst [vmem:[%s415] ss:$9 sm:$0xff] %v403
    %s418 = scalar_lea.vmem [#allocation1], 2
    %419 = vst [vmem:[%s418] ss:$9 sm:$0xff] %v404
    %s421 = scalar_lea.vmem [#allocation1], 3
    %422 = vst [vmem:[%s421] ss:$9 sm:$0xff] %v405
    %s424 = scalar_lea.vmem [#allocation1], 4
    %425 = vst [vmem:[%s424] ss:$9 sm:$0xff] %v406
    %s427 = scalar_lea.vmem [#allocation1], 5
    %428 = vst [vmem:[%s427] ss:$9 sm:$0xff] %v407
    %s430 = scalar_lea.vmem [#allocation1], 6
    %431 = vst [vmem:[%s430] ss:$9 sm:$0xff] %v408
    %s433 = scalar_lea.vmem [#allocation1], 7
    %434 = vst [vmem:[%s433] ss:$9 sm:$0xff] %v409
    %v435 = vld [vmem:[#allocation1] sm:$0xff]
    %v436 = vld [vmem:[#allocation1 + $0x9] sm:$0xff]
    %v437 = vld [vmem:[#allocation1 + $0x12] sm:$0xff]
    %v438 = vld [vmem:[#allocation1 + $0x1b] sm:$0xff]
    %v439 = vld [vmem:[#allocation1 + $0x24] sm:$0xff]
    %v440 = vld [vmem:[#allocation1 + $0x2d] sm:$0xff]
    %v441 = vld [vmem:[#allocation1 + $0x36] sm:$0xff]
    %443 = vst [vmem:[#allocation1] ss:$9 sm:$0xff] %v410
    %445 = vst [vmem:[%s415] ss:$9 sm:$0xff] %v411
    %v446 = vld [vmem:[#allocation1] sm:$0xff]
    %v447 = vld [vmem:[#allocation1 + $0x9] sm:$0xff]
    %v448 = vld [vmem:[#allocation1 + $0x12] sm:$0xff]
    %v449 = vld [vmem:[#allocation1 + $0x1b] sm:$0xff]
    %v450 = vld [vmem:[#allocation1 + $0x24] sm:$0xff]
    %v451 = vld [vmem:[#allocation1 + $0x2d] sm:$0xff]
    %v452 = vld [vmem:[#allocation1 + $0x36] sm:$0xff]
    %v562 = vunpack.c.l.b16 %v305
    %v563 = vunpack.c.l.b16 %v306
    %v564 = vunpack.c.l.b16 %v307
    %v565 = vunpack.c.l.b16 %v308
    %v566 = vunpack.c.l.b16 %v309
    %v567 = vunpack.c.l.b16 %v310
    %v568 = vunpack.c.l.b16 %v311
    %v569 = vunpack.c.l.b16 %v312
    %v570 = vunpack.c.l.b16 %v313
    %v571 = vunpack.c.l.b16 %v314
    %v572 = vunpack.c.l.b16 %v315
    %v573 = vunpack.c.l.b16 %v316
    %v574 = vunpack.c.l.b16 %v317
    %v575 = vunpack.c.l.b16 %v318
    %v576 = vunpack.c.l.b16 %v319
    %v577 = vunpack.c.l.b16 %v320
    %v578 = vunpack.c.l.b16 %v321
    %v579 = vunpack.c.l.b16 %v322
    %v580 = vunpack.c.l.b16 %v323
    %v581 = vunpack.c.l.b16 %v324
    %v582 = vunpack.c.l.b16 %v325
    %v583 = vunpack.c.l.b16 %v326
    %v584 = vunpack.c.l.b16 %v327
    %v585 = vunpack.c.l.b16 %v328
    %v586 = vunpack.c.l.b16 %v329
    %v587 = vunpack.c.l.b16 %v330
    %v588 = vunpack.c.l.b16 %v331
    %v589 = vunpack.c.l.b16 %v332
    %v590 = vunpack.c.l.b16 %v333
    %v591 = vunpack.c.l.b16 %v334
    %v592 = vunpack.c.l.b16 %v335
    %v593 = vunpack.c.l.b16 %v336
    %v594 = vunpack.c.l.b16 %v337
    %v595 = vunpack.c.l.b16 %v338
    %v596 = vunpack.c.l.b16 %v339
    %v597 = vunpack.c.l.b16 %v340
    %v598 = vunpack.c.l.b16 %v341
    %v599 = vunpack.c.l.b16 %v342
    %v600 = vunpack.c.l.b16 %v343
    %v601 = vunpack.c.l.b16 %v344
    %v602 = vunpack.c.l.b16 %v345
    %v603 = vunpack.c.l.b16 %v346
    %v604 = vunpack.c.l.b16 %v347
    %v605 = vunpack.c.l.b16 %v348
    %v606 = vunpack.c.l.b16 %v349
    %v607 = vunpack.c.l.b16 %v350
    %v608 = vunpack.c.l.b16 %v351
    %v609 = vunpack.c.l.b16 %v352
    %v610 = vunpack.c.l.b16 %v353
    %v611 = vunpack.c.l.b16 %v354
    %v612 = vunpack.c.l.b16 %v355
    %v613 = vunpack.c.l.b16 %v356
    %v614 = vunpack.c.l.b16 %v357
    %v615 = vunpack.c.l.b16 %v358
    %v616 = vunpack.c.l.b16 %v359
    %v617 = vunpack.c.l.b16 %v360
    %v618 = vunpack.c.l.b16 %v361
    %v619 = vunpack.c.l.b16 %v362
    %v620 = vunpack.c.l.b16 %v363
    %v621 = vunpack.c.l.b16 %v364
    %v622 = vunpack.c.l.b16 %v365
    %v623 = vunpack.c.l.b16 %v366
    %v624 = vunpack.c.l.b16 %v367
    %v625 = vunpack.c.l.b16 %v368
    %v626 = vunpack.c.l.b16 %v369
    %v627 = vunpack.c.l.b16 %v370
    %v628 = vunpack.c.l.b16 %v371
    %v629 = vunpack.c.l.b16 %v372
    %v630 = vunpack.c.l.b16 %v373
    %v631 = vunpack.c.l.b16 %v374
    %v632 = vunpack.c.l.b16 %v375
    %v633 = vunpack.c.l.b16 %v376
    %v634 = vunpack.c.l.b16 %v377
    %v635 = vunpack.c.l.b16 %v378
    %v636 = vunpack.c.l.b16 %v379
    %v637 = vunpack.c.l.b16 %v380
    %v638 = vunpack.c.l.b16 %v381
    %v639 = vunpack.c.l.b16 %v382
    %v640 = vunpack.c.l.b16 %v383
    %v641 = vunpack.c.l.b16 %v384
    %v642 = vunpack.c.l.b16 %v385
    %v643 = vunpack.c.l.b16 %v386
    %v644 = vunpack.c.l.b16 %v387
    %v645 = vunpack.c.l.b16 %v388
    %v646 = vunpack.c.l.b16 %v389
    %v647 = vunpack.c.l.b16 %v390
    %v648 = vunpack.c.l.b16 %v391
    %v649 = vunpack.c.l.b16 %v392
    %v650 = vunpack.c.l.b16 %v393
    %v651 = vunpack.c.l.b16 %v394
    %v652 = vunpack.c.l.b16 %v395
    %v653 = vunpack.c.l.b16 %v396
    %v654 = vunpack.c.l.b16 %v397
    %v655 = vunpack.c.l.b16 %v398
    %v656 = vunpack.c.l.b16 %v399
    %v657 = vunpack.c.l.b16 %v400
    %v658 = vunpack.c.l.b16 %v401
    %v659 = vpack.c.b16 %v563, %v562
    %v660 = vpack.c.b16 %v565, %v564
    %v661 = vpack.c.b16 %v567, %v566
    %v662 = vpack.c.b16 %v569, %v568
    %v663 = vpack.c.b16 %v571, %v570
    %v664 = vpack.c.b16 %v573, %v572
    %v665 = vpack.c.b16 %v575, %v574
    %v666 = vpack.c.b16 %v577, %v576
    %v667 = vpack.c.b16 %v579, %v578
    %v668 = vpack.c.b16 %v581, %v580
    %v669 = vpack.c.b16 %v583, %v582
    %v670 = vpack.c.b16 %v585, %v584
    %v671 = vpack.c.b16 %v587, %v586
    %v672 = vpack.c.b16 %v589, %v588
    %v673 = vpack.c.b16 %v591, %v590
    %v674 = vpack.c.b16 %v593, %v592
    %v675 = vpack.c.b16 %v595, %v594
    %v676 = vpack.c.b16 %v597, %v596
    %v677 = vpack.c.b16 %v599, %v598
    %v678 = vpack.c.b16 %v601, %v600
    %v679 = vpack.c.b16 %v603, %v602
    %v680 = vpack.c.b16 %v605, %v604
    %v681 = vpack.c.b16 %v607, %v606
    %v682 = vpack.c.b16 %v609, %v608
    %v683 = vpack.c.b16 %v611, %v610
    %v684 = vpack.c.b16 %v613, %v612
    %v685 = vpack.c.b16 %v615, %v614
    %v686 = vpack.c.b16 %v617, %v616
    %v687 = vpack.c.b16 %v619, %v618
    %v688 = vpack.c.b16 %v621, %v620
    %v689 = vpack.c.b16 %v623, %v622
    %v690 = vpack.c.b16 %v625, %v624
    %v691 = vpack.c.b16 %v627, %v626
    %v692 = vpack.c.b16 %v629, %v628
    %v693 = vpack.c.b16 %v631, %v630
    %v694 = vpack.c.b16 %v633, %v632
    %v695 = vpack.c.b16 %v635, %v634
    %v696 = vpack.c.b16 %v637, %v636
    %v697 = vpack.c.b16 %v639, %v638
    %v698 = vpack.c.b16 %v641, %v640
    %v699 = vpack.c.b16 %v643, %v642
    %v700 = vpack.c.b16 %v645, %v644
    %v701 = vpack.c.b16 %v647, %v646
    %v702 = vpack.c.b16 %v649, %v648
    %v703 = vpack.c.b16 %v651, %v650
    %v704 = vpack.c.b16 %v653, %v652
    %v705 = vpack.c.b16 %v655, %v654
    %v706 = vpack.c.b16 %v657, %v656
    %v707 = vpack.c.b16 %v658, %v658
    %vm756 = vcmask 7168
    %v757 = vsel %vm756, %v441, 0
    %v759 = vsel %vm756, %v452, 0
    %v761 = vsel 0, 4294967295, 65535
    %v762 = vsel %vm100, %v761, 0
    %v764 = vand.u32 %v707, %v762
    %766 = vmatpush.bf16.msra.mxu0 %v666
    %767 = vmatpush.bf16.msra.mxu0 %v665
    %768 = vmatpush.bf16.msra.mxu0 %v664
    %769 = vmatpush.bf16.msra.mxu0 %v663
    %770 = vmatpush.bf16.msra.mxu0 %v662
    %771 = vmatpush.bf16.msra.mxu0 %v661
    %772 = vmatpush.bf16.msra.mxu0 %v660
    %773 = vmatpush.bf16.msra.mxu0 %v659
    %774 = vmatmul.bf16.gmra.mxu0 %v435
    %v775 = vpop.f32.mrf.mxu0
    %v776 = vadd.f32 0.0, %v775
    %v777 = vpop.f32.mrf.mxu0
    %v778 = vadd.f32 0.0, %v777
    %779 = vmatmul.bf16.gmra.mxu0 %v446
    %v780 = vpop.f32.mrf.mxu0
    %v781 = vadd.f32 0.0, %v780
    %v782 = vpop.f32.mrf.mxu0
    %783 = vdwg.mxu0
    %784 = vmatpush.bf16.msra.mxu0 %v674
    %785 = vmatpush.bf16.msra.mxu0 %v673
    %786 = vmatpush.bf16.msra.mxu0 %v672
    %787 = vmatpush.bf16.msra.mxu0 %v671
    %788 = vmatpush.bf16.msra.mxu0 %v670
    %789 = vmatpush.bf16.msra.mxu0 %v669
    %790 = vmatpush.bf16.msra.mxu0 %v668
    %791 = vmatpush.bf16.msra.mxu0 %v667
    %792 = vmatmul.bf16.gmra.mxu0 %v436
    %v793 = vpop.f32.mrf.mxu0
    %v794 = vadd.f32 %v776, %v793
    %v795 = vpop.f32.mrf.mxu0
    %v796 = vadd.f32 %v778, %v795
    %797 = vmatmul.bf16.gmra.mxu0 %v447
    %v798 = vpop.f32.mrf.mxu0
    %v799 = vadd.f32 %v781, %v798
    %v800 = vpop.f32.mrf.mxu0
    %801 = vdwg.mxu0
    %802 = vmatpush.bf16.msra.mxu0 %v682
    %803 = vmatpush.bf16.msra.mxu0 %v681
    %804 = vmatpush.bf16.msra.mxu0 %v680
    %805 = vmatpush.bf16.msra.mxu0 %v679
    %806 = vmatpush.bf16.msra.mxu0 %v678
    %807 = vmatpush.bf16.msra.mxu0 %v677
    %808 = vmatpush.bf16.msra.mxu0 %v676
    %809 = vmatpush.bf16.msra.mxu0 %v675
    %810 = vmatmul.bf16.gmra.mxu0 %v437
    %v811 = vpop.f32.mrf.mxu0
    %v812 = vadd.f32 %v794, %v811
    %v813 = vpop.f32.mrf.mxu0
    %v814 = vadd.f32 %v796, %v813
    %815 = vmatmul.bf16.gmra.mxu0 %v448
    %v816 = vpop.f32.mrf.mxu0
    %v817 = vadd.f32 %v799, %v816
    %v818 = vpop.f32.mrf.mxu0
    %819 = vdwg.mxu0
    %820 = vmatpush.bf16.msra.mxu0 %v690
    %821 = vmatpush.bf16.msra.mxu0 %v689
    %822 = vmatpush.bf16.msra.mxu0 %v688
    %823 = vmatpush.bf16.msra.mxu0 %v687
    %824 = vmatpush.bf16.msra.mxu0 %v686
    %825 = vmatpush.bf16.msra.mxu0 %v685
    %826 = vmatpush.bf16.msra.mxu0 %v684
    %827 = vmatpush.bf16.msra.mxu0 %v683
    %828 = vmatmul.bf16.gmra.mxu0 %v438
    %v829 = vpop.f32.mrf.mxu0
    %v830 = vadd.f32 %v812, %v829
    %v831 = vpop.f32.mrf.mxu0
    %v832 = vadd.f32 %v814, %v831
    %833 = vmatmul.bf16.gmra.mxu0 %v449
    %v834 = vpop.f32.mrf.mxu0
    %v835 = vadd.f32 %v817, %v834
    %v836 = vpop.f32.mrf.mxu0
    %837 = vdwg.mxu0
    %838 = vmatpush.bf16.msra.mxu0 %v698
    %839 = vmatpush.bf16.msra.mxu0 %v697
    %840 = vmatpush.bf16.msra.mxu0 %v696
    %841 = vmatpush.bf16.msra.mxu0 %v695
    %842 = vmatpush.bf16.msra.mxu0 %v694
    %843 = vmatpush.bf16.msra.mxu0 %v693
    %844 = vmatpush.bf16.msra.mxu0 %v692
    %845 = vmatpush.bf16.msra.mxu0 %v691
    %846 = vmatmul.bf16.gmra.mxu0 %v439
    %v847 = vpop.f32.mrf.mxu0
    %v848 = vadd.f32 %v830, %v847
    %v849 = vpop.f32.mrf.mxu0
    %v850 = vadd.f32 %v832, %v849
    %851 = vmatmul.bf16.gmra.mxu0 %v450
    %v852 = vpop.f32.mrf.mxu0
    %v853 = vadd.f32 %v835, %v852
    %v854 = vpop.f32.mrf.mxu0
    %855 = vdwg.mxu0
    %856 = vmatpush.bf16.msra.mxu0 %v706
    %857 = vmatpush.bf16.msra.mxu0 %v705
    %858 = vmatpush.bf16.msra.mxu0 %v704
    %859 = vmatpush.bf16.msra.mxu0 %v703
    %860 = vmatpush.bf16.msra.mxu0 %v702
    %861 = vmatpush.bf16.msra.mxu0 %v701
    %862 = vmatpush.bf16.msra.mxu0 %v700
    %863 = vmatpush.bf16.msra.mxu0 %v699
    %864 = vmatmul.bf16.gmra.mxu0 %v440
    %v865 = vpop.f32.mrf.mxu0
    %v866 = vadd.f32 %v848, %v865
    %v867 = vpop.f32.mrf.mxu0
    %v868 = vadd.f32 %v850, %v867
    %869 = vmatmul.bf16.gmra.mxu0 %v451
    %v870 = vpop.f32.mrf.mxu0
    %v871 = vadd.f32 %v853, %v870
    %v872 = vpop.f32.mrf.mxu0
    %873 = vdwg.mxu0
    %874 = vmatpush.bf16.msra.mxu0 0
    %875 = vmatpush.bf16.msra.mxu0 0
    %876 = vmatpush.bf16.msra.mxu0 0
    %877 = vmatpush.bf16.msra.mxu0 0
    %878 = vmatpush.bf16.msra.mxu0 0
    %879 = vmatpush.bf16.msra.mxu0 0
    %880 = vmatpush.bf16.msra.mxu0 0
    %881 = vmatpush.bf16.msra.mxu0 %v764
    %882 = vmatmul.bf16.gmra.mxu0 %v757
    %v883 = vpop.f32.mrf.mxu0
    %v884 = vadd.f32 %v866, %v883
    %v885 = vpop.f32.mrf.mxu0
    %v886 = vadd.f32 %v868, %v885
    %887 = vmatmul.bf16.gmra.mxu0 %v759
    %v888 = vpop.f32.mrf.mxu0
    %v889 = vadd.f32 %v871, %v888
    %v890 = vpop.f32.mrf.mxu0
    %891 = vdwg.mxu0
    %v895 = vrot.slane %v884, 1
    %v896 = vrot.slane %v884, 2
    %v897 = vrot.slane %v884, 3
    %v898 = vrot.slane %v884, 4
    %v899 = vrot.slane %v884, 5
    %v900 = vrot.slane %v884, 6
    %v901 = vrot.slane %v884, 7
    %v902 = vrot.slane %v886, 1
    %v903 = vrot.slane %v886, 2
    %v904 = vrot.slane %v886, 3
    %v905 = vrot.slane %v886, 4
    %v906 = vrot.slane %v886, 5
    %v907 = vrot.slane %v886, 6
    %v908 = vrot.slane %v886, 7
    %v909 = vrot.slane %v889, 1
    %v910 = vrot.slane %v889, 2
    %v911 = vrot.slane %v889, 3
    %v930 = vrot.slane %v35, 1
    %v931 = vrot.slane %v35, 2
    %v932 = vrot.slane %v35, 3
    %v933 = vrot.slane %v35, 4
    %v938 = vadd.f32 %v884, %v35
    %v939 = vadd.f32 %v895, %v930
    %v940 = vadd.f32 %v896, %v931
    %v941 = vadd.f32 %v897, %v932
    %v942 = vadd.f32 %v898, %v933
    %v943 = vadd.f32 %v899, %v35
    %v944 = vadd.f32 %v900, %v930
    %v945 = vadd.f32 %v901, %v931
    %v946 = vadd.f32 %v886, %v932
    %v947 = vadd.f32 %v902, %v933
    %v948 = vadd.f32 %v903, %v35
    %v949 = vadd.f32 %v904, %v930
    %v950 = vadd.f32 %v905, %v931
    %v951 = vadd.f32 %v906, %v932
    %v952 = vadd.f32 %v907, %v933
    %v953 = vadd.f32 %v908, %v35
    %v954 = vadd.f32 %v889, %v930
    %v955 = vadd.f32 %v909, %v931
    %v956 = vadd.f32 %v910, %v932
    %v957 = vadd.f32 %v911, %v933
    %978 = vst [vmem:[#allocation1] ss:$9 sm:$0xff] %v938
    %s979 = scalar_lea.vmem [#allocation1], 1
    %980 = vst [vmem:[%s979] ss:$9 sm:$0xff] %v939
    %s981 = scalar_lea.vmem [#allocation1], 2
    %982 = vst [vmem:[%s981] ss:$9 sm:$0xff] %v940
    %s983 = scalar_lea.vmem [#allocation1], 3
    %984 = vst [vmem:[%s983] ss:$9 sm:$0xff] %v941
    %s985 = scalar_lea.vmem [#allocation1], 4
    %986 = vst [vmem:[%s985] ss:$9 sm:$0xff] %v942
    %s987 = scalar_lea.vmem [#allocation1], 5
    %988 = vst [vmem:[%s987] ss:$9 sm:$0xff] %v943
    %s989 = scalar_lea.vmem [#allocation1], 6
    %990 = vst [vmem:[%s989] ss:$9 sm:$0xff] %v944
    %s991 = scalar_lea.vmem [#allocation1], 7
    %992 = vst [vmem:[%s991] ss:$9 sm:$0xff] %v945
    %v993 = vld [vmem:[#allocation1] sm:$0xff]
    %994 = vst [vmem:[#allocation1] ss:$9 sm:$0xff] %v946
    %995 = vst [vmem:[%s979] ss:$9 sm:$0xff] %v947
    %996 = vst [vmem:[%s981] ss:$9 sm:$0xff] %v948
    %997 = vst [vmem:[%s983] ss:$9 sm:$0xff] %v949
    %998 = vst [vmem:[%s985] ss:$9 sm:$0xff] %v950
    %999 = vst [vmem:[%s987] ss:$9 sm:$0xff] %v951
    %1000 = vst [vmem:[%s989] ss:$9 sm:$0xff] %v952
    %1001 = vst [vmem:[%s991] ss:$9 sm:$0xff] %v953
    %v1002 = vld [vmem:[#allocation1] sm:$0xff]
    %1003 = vst [vmem:[#allocation1] ss:$9 sm:$0xff] %v954
    %1004 = vst [vmem:[%s979] ss:$9 sm:$0xff] %v955
    %1005 = vst [vmem:[%s981] ss:$9 sm:$0xff] %v956
    %1006 = vst [vmem:[%s983] ss:$9 sm:$0xff] %v957
    %v1007 = vld [vmem:[#allocation1] sm:$0xff]
    %vm1011 = vcmask 523264
    %v1012 = vsel %vm1011, %v993, 0.0
    %1013 = vadd.xlane.f32.xlu0 %v1012
    %v1014 = vpop.xlane.xlu0 %1013
    %v1015 = vsel %vm1011, %v1002, 0.0
    %1016 = vadd.xlane.f32.xlu0 %v1015
    %v1017 = vpop.xlane.xlu0 %1016
    %vm1018 = vcmask 519168
    %v1019 = vsel %vm1018, %v1007, 0.0
    %1020 = vadd.xlane.f32.xlu0 %v1019
    %v1021 = vpop.xlane.xlu0 %1020
    %v1022 = vrcp.pop 64.0
    %v1023 = vmul.f32 64.0, %v1022
    %v1024 = vsub.f32 1.0, %v1023
    %v1025 = vmul.f32 %v1022, %v1024
    %v1026 = vadd.f32 %v1022, %v1025
    %vm1027 = vweird.f32 %v1022
    %v1028 = vsel %vm1027, %v1022, %v1026
    %v1029 = vmul.f32 %v1014, %v1028
    %v1030 = vmul.f32 %v1017, %v1028
    %v1031 = vmul.f32 %v1021, %v1028
    %v1035 = vperm.slane %v1029, 0
    %v1036 = vperm.slane %v1029, 1
    %v1037 = vperm.slane %v1029, 2
    %v1038 = vperm.slane %v1029, 3
    %v1039 = vperm.slane %v1029, 4
    %v1040 = vperm.slane %v1029, 5
    %v1041 = vperm.slane %v1029, 6
    %v1042 = vperm.slane %v1029, 7
    %v1043 = vperm.slane %v1030, 0
    %v1044 = vperm.slane %v1030, 1
    %v1045 = vperm.slane %v1030, 2
    %v1046 = vperm.slane %v1030, 3
    %v1047 = vperm.slane %v1030, 4
    %v1048 = vperm.slane %v1030, 5
    %v1049 = vperm.slane %v1030, 6
    %v1050 = vperm.slane %v1030, 7
    %v1051 = vperm.slane %v1031, 0
    %v1052 = vperm.slane %v1031, 1
    %v1053 = vperm.slane %v1031, 2
    %v1054 = vperm.slane %v1031, 3
    %v1075 = vsub.f32 %v938, %v1035
    %v1076 = vsub.f32 %v939, %v1036
    %v1077 = vsub.f32 %v940, %v1037
    %v1078 = vsub.f32 %v941, %v1038
    %v1079 = vsub.f32 %v942, %v1039
    %v1080 = vsub.f32 %v943, %v1040
    %v1081 = vsub.f32 %v944, %v1041
    %v1082 = vsub.f32 %v945, %v1042
    %v1083 = vsub.f32 %v946, %v1043
    %v1084 = vsub.f32 %v947, %v1044
    %v1085 = vsub.f32 %v948, %v1045
    %v1086 = vsub.f32 %v949, %v1046
    %v1087 = vsub.f32 %v950, %v1047
    %v1088 = vsub.f32 %v951, %v1048
    %v1089 = vsub.f32 %v952, %v1049
    %v1090 = vsub.f32 %v953, %v1050
    %v1091 = vsub.f32 %v954, %v1051
    %v1092 = vsub.f32 %v955, %v1052
    %v1093 = vsub.f32 %v956, %v1053
    %v1094 = vsub.f32 %v957, %v1054
    %v1095 = vmul.f32 %v1075, %v1075
    %v1096 = vmul.f32 %v1076, %v1076
    %v1097 = vmul.f32 %v1077, %v1077
    %v1098 = vmul.f32 %v1078, %v1078
    %v1099 = vmul.f32 %v1079, %v1079
    %v1100 = vmul.f32 %v1080, %v1080
    %v1101 = vmul.f32 %v1081, %v1081
    %v1102 = vmul.f32 %v1082, %v1082
    %v1103 = vmul.f32 %v1083, %v1083
    %v1104 = vmul.f32 %v1084, %v1084
    %v1105 = vmul.f32 %v1085, %v1085
    %v1106 = vmul.f32 %v1086, %v1086
    %v1107 = vmul.f32 %v1087, %v1087
    %v1108 = vmul.f32 %v1088, %v1088
    %v1109 = vmul.f32 %v1089, %v1089
    %v1110 = vmul.f32 %v1090, %v1090
    %v1111 = vmul.f32 %v1091, %v1091
    %v1112 = vmul.f32 %v1092, %v1092
    %v1113 = vmul.f32 %v1093, %v1093
    %v1114 = vmul.f32 %v1094, %v1094
    %1135 = vst [vmem:[#allocation1] ss:$9 sm:$0xff] %v1095
    %s1136 = scalar_lea.vmem [#allocation1], 1
    %1137 = vst [vmem:[%s1136] ss:$9 sm:$0xff] %v1096
    %s1138 = scalar_lea.vmem [#allocation1], 2
    %1139 = vst [vmem:[%s1138] ss:$9 sm:$0xff] %v1097
    %s1140 = scalar_lea.vmem [#allocation1], 3
    %1141 = vst [vmem:[%s1140] ss:$9 sm:$0xff] %v1098
    %s1142 = scalar_lea.vmem [#allocation1], 4
    %1143 = vst [vmem:[%s1142] ss:$9 sm:$0xff] %v1099
    %s1144 = scalar_lea.vmem [#allocation1], 5
    %1145 = vst [vmem:[%s1144] ss:$9 sm:$0xff] %v1100
    %s1146 = scalar_lea.vmem [#allocation1], 6
    %1147 = vst [vmem:[%s1146] ss:$9 sm:$0xff] %v1101
    %s1148 = scalar_lea.vmem [#allocation1], 7
    %1149 = vst [vmem:[%s1148] ss:$9 sm:$0xff] %v1102
    %v1150 = vld [vmem:[#allocation1] sm:$0xff]
    %1151 = vst [vmem:[#allocation1] ss:$9 sm:$0xff] %v1103
    %1152 = vst [vmem:[%s1136] ss:$9 sm:$0xff] %v1104
    %1153 = vst [vmem:[%s1138] ss:$9 sm:$0xff] %v1105
    %1154 = vst [vmem:[%s1140] ss:$9 sm:$0xff] %v1106
    %1155 = vst [vmem:[%s1142] ss:$9 sm:$0xff] %v1107
    %1156 = vst [vmem:[%s1144] ss:$9 sm:$0xff] %v1108
    %1157 = vst [vmem:[%s1146] ss:$9 sm:$0xff] %v1109
    %1158 = vst [vmem:[%s1148] ss:$9 sm:$0xff] %v1110
    %v1159 = vld [vmem:[#allocation1] sm:$0xff]
    %1160 = vst [vmem:[#allocation1] ss:$9 sm:$0xff] %v1111
    %1161 = vst [vmem:[%s1136] ss:$9 sm:$0xff] %v1112
    %1162 = vst [vmem:[%s1138] ss:$9 sm:$0xff] %v1113
    %1163 = vst [vmem:[%s1140] ss:$9 sm:$0xff] %v1114
    %v1164 = vld [vmem:[#allocation1] sm:$0xff]
    %v1168 = vsel %vm1011, %v1150, 0.0
    %1169 = vadd.xlane.f32.xlu0 %v1168
    %v1170 = vpop.xlane.xlu0 %1169
    %v1171 = vsel %vm1011, %v1159, 0.0
    %1172 = vadd.xlane.f32.xlu0 %v1171
    %v1173 = vpop.xlane.xlu0 %1172
    %v1174 = vsel %vm1018, %v1164, 0.0
    %1175 = vadd.xlane.f32.xlu0 %v1174
    %v1176 = vpop.xlane.xlu0 %1175
    %v1177 = vmul.f32 %v1170, %v1028
    %v1178 = vmul.f32 %v1173, %v1028
    %v1179 = vmul.f32 %v1176, %v1028
    %v1180 = vadd.f32 %v1177, 1e-05
    %v1181 = vadd.f32 %v1178, 1e-05
    %v1182 = vadd.f32 %v1179, 1e-05
    %v1183 = vrsqrt.pop %v1180
    %v1184 = vmul.f32 %v1183, %v1180
    %v1185 = vmul.f32 %v1184, %v1183
    %v1186 = vmul.f32 0.5, %v1185
    %v1187 = vsub.f32 1.5, %v1186
    %v1188 = vmul.f32 %v1183, %v1187
    %vm1189 = vweird.f32 %v1180
    %vm1190 = vweird.f32 %v1183
    %vm1191 = vmor %vm1189, %vm1190
    %v1192 = vsel %vm1191, %v1183, %v1188
    %v1193 = vrsqrt.pop %v1181
    %v1194 = vmul.f32 %v1193, %v1181
    %v1195 = vmul.f32 %v1194, %v1193
    %v1196 = vmul.f32 0.5, %v1195
    %v1197 = vsub.f32 1.5, %v1196
    %v1198 = vmul.f32 %v1193, %v1197
    %vm1199 = vweird.f32 %v1181
    %vm1200 = vweird.f32 %v1193
    %vm1201 = vmor %vm1199, %vm1200
    %v1202 = vsel %vm1201, %v1193, %v1198
    %v1203 = vrsqrt.pop %v1182
    %v1204 = vmul.f32 %v1203, %v1182
    %v1205 = vmul.f32 %v1204, %v1203
    %v1206 = vmul.f32 0.5, %v1205
    %v1207 = vsub.f32 1.5, %v1206
    %v1208 = vmul.f32 %v1203, %v1207
    %vm1209 = vweird.f32 %v1182
    %vm1210 = vweird.f32 %v1203
    %vm1211 = vmor %vm1209, %vm1210
    %v1212 = vsel %vm1211, %v1203, %v1208
    %v1216 = vperm.slane %v1192, 0
    %v1217 = vperm.slane %v1192, 1
    %v1218 = vperm.slane %v1192, 2
    %v1219 = vperm.slane %v1192, 3
    %v1220 = vperm.slane %v1192, 4
    %v1221 = vperm.slane %v1192, 5
    %v1222 = vperm.slane %v1192, 6
    %v1223 = vperm.slane %v1192, 7
    %v1224 = vperm.slane %v1202, 0
    %v1225 = vperm.slane %v1202, 1
    %v1226 = vperm.slane %v1202, 2
    %v1227 = vperm.slane %v1202, 3
    %v1228 = vperm.slane %v1202, 4
    %v1229 = vperm.slane %v1202, 5
    %v1230 = vperm.slane %v1202, 6
    %v1231 = vperm.slane %v1202, 7
    %v1232 = vperm.slane %v1212, 0
    %v1233 = vperm.slane %v1212, 1
    %v1234 = vperm.slane %v1212, 2
    %v1235 = vperm.slane %v1212, 3
    %v1256 = vmul.f32 %v1075, %v1216
    %v1257 = vmul.f32 %v1076, %v1217
    %v1258 = vmul.f32 %v1077, %v1218
    %v1259 = vmul.f32 %v1078, %v1219
    %v1260 = vmul.f32 %v1079, %v1220
    %v1261 = vmul.f32 %v1080, %v1221
    %v1262 = vmul.f32 %v1081, %v1222
    %v1263 = vmul.f32 %v1082, %v1223
    %v1264 = vmul.f32 %v1083, %v1224
    %v1265 = vmul.f32 %v1084, %v1225
    %v1266 = vmul.f32 %v1085, %v1226
    %v1267 = vmul.f32 %v1086, %v1227
    %v1268 = vmul.f32 %v1087, %v1228
    %v1269 = vmul.f32 %v1088, %v1229
    %v1270 = vmul.f32 %v1089, %v1230
    %v1271 = vmul.f32 %v1090, %v1231
    %v1272 = vmul.f32 %v1091, %v1232
    %v1273 = vmul.f32 %v1092, %v1233
    %v1274 = vmul.f32 %v1093, %v1234
    %v1275 = vmul.f32 %v1094, %v1235
    %v1276 = vperm.slane %v35, 5
    %v1278 = vrot.slane %v1276, 1
    %v1279 = vrot.slane %v1276, 2
    %v1280 = vrot.slane %v1276, 3
    %v1281 = vrot.slane %v1276, 4
    %v1282 = vrot.slane %v1276, 5
    %v1283 = vrot.slane %v1276, 6
    %v1284 = vrot.slane %v1276, 7
    %v1292 = vmul.f32 %v1256, %v1276
    %v1293 = vmul.f32 %v1257, %v1278
    %v1294 = vmul.f32 %v1258, %v1279
    %v1295 = vmul.f32 %v1259, %v1280
    %v1296 = vmul.f32 %v1260, %v1281
    %v1297 = vmul.f32 %v1261, %v1282
    %v1298 = vmul.f32 %v1262, %v1283
    %v1299 = vmul.f32 %v1263, %v1284
    %v1300 = vmul.f32 %v1264, %v1276
    %v1301 = vmul.f32 %v1265, %v1278
    %v1302 = vmul.f32 %v1266, %v1279
    %v1303 = vmul.f32 %v1267, %v1280
    %v1304 = vmul.f32 %v1268, %v1281
    %v1305 = vmul.f32 %v1269, %v1282
    %v1306 = vmul.f32 %v1270, %v1283
    %v1307 = vmul.f32 %v1271, %v1284
    %v1308 = vmul.f32 %v1272, %v1276
    %v1309 = vmul.f32 %v1273, %v1278
    %v1310 = vmul.f32 %v1274, %v1279
    %v1311 = vmul.f32 %v1275, %v1280
    %v1312 = vperm.slane %v35, 6
    %v1314 = vrot.slane %v1312, 1
    %v1315 = vrot.slane %v1312, 2
    %v1316 = vrot.slane %v1312, 3
    %v1317 = vrot.slane %v1312, 4
    %v1318 = vrot.slane %v1312, 5
    %v1319 = vrot.slane %v1312, 6
    %v1320 = vrot.slane %v1312, 7
    %v1328 = vadd.f32 %v1292, %v1312
    %v1329 = vadd.f32 %v1293, %v1314
    %v1330 = vadd.f32 %v1294, %v1315
    %v1331 = vadd.f32 %v1295, %v1316
    %v1332 = vadd.f32 %v1296, %v1317
    %v1333 = vadd.f32 %v1297, %v1318
    %v1334 = vadd.f32 %v1298, %v1319
    %v1335 = vadd.f32 %v1299, %v1320
    %v1336 = vadd.f32 %v1300, %v1312
    %v1337 = vadd.f32 %v1301, %v1314
    %v1338 = vadd.f32 %v1302, %v1315
    %v1339 = vadd.f32 %v1303, %v1316
    %v1340 = vadd.f32 %v1304, %v1317
    %v1341 = vadd.f32 %v1305, %v1318
    %v1342 = vadd.f32 %v1306, %v1319
    %v1343 = vadd.f32 %v1307, %v1320
    %v1344 = vadd.f32 %v1308, %v1312
    %v1345 = vadd.f32 %v1309, %v1314
    %v1346 = vadd.f32 %v1310, %v1315
    %v1347 = vadd.f32 %v1311, %v1316
    %v1348 = vld [vmem:[%s8] ss:$4 sm:$0x3]
    %s1349 = scalar_lea.vmem %s8, 1
    %v1350 = vld [vmem:[%s1349] ss:$4 sm:$0x3]
    %v1351 = vld [vmem:[%s6] sm:$0xf]
    %v1352 = vld [vmem:[%s6 + $0x4] sm:$0xf]
    %v1353 = vld [vmem:[%s6 + $0x8] sm:$0xf]
    %v1354 = vld [vmem:[%s6 + $0xc] sm:$0xf]
    %v1355 = vld [vmem:[%s6 + $0x10] sm:$0xf]
    %v1356 = vld [vmem:[%s6 + $0x14] sm:$0xf]
    %v1357 = vld [vmem:[%s6 + $0x18] sm:$0xf]
    %v1358 = vld [vmem:[%s6 + $0x1c] sm:$0xf]
    %v1359 = vld [vmem:[%s6 + $0x20] sm:$0xf]
    %v1360 = vld [vmem:[%s6 + $0x24] sm:$0xf]
    %v1361 = vld [vmem:[%s6 + $0x28] sm:$0xf]
    %v1362 = vld [vmem:[%s6 + $0x2c] sm:$0xf]
    %v1363 = vld [vmem:[%s6 + $0x30] sm:$0xf]
    %v1364 = vld [vmem:[%s6 + $0x34] sm:$0xf]
    %v1365 = vld [vmem:[%s6 + $0x38] sm:$0xf]
    %v1366 = vld [vmem:[%s6 + $0x3c] sm:$0xf]
    %v1367 = vld [vmem:[%s6 + $0x40] sm:$0xf]
    %v1368 = vld [vmem:[%s6 + $0x44] sm:$0xf]
    %v1369 = vld [vmem:[%s6 + $0x48] sm:$0xf]
    %v1370 = vld [vmem:[%s6 + $0x4c] sm:$0xf]
    %v1371 = vld [vmem:[%s6 + $0x50] sm:$0xf]
    %v1372 = vld [vmem:[%s6 + $0x54] sm:$0xf]
    %v1373 = vld [vmem:[%s6 + $0x58] sm:$0xf]
    %v1374 = vld [vmem:[%s6 + $0x5c] sm:$0xf]
    %v1375 = vld [vmem:[%s6 + $0x60] sm:$0xf]
    %v1376 = vld [vmem:[%s6 + $0x64] sm:$0xf]
    %v1377 = vld [vmem:[%s6 + $0x68] sm:$0xf]
    %v1378 = vld [vmem:[%s6 + $0x6c] sm:$0xf]
    %v1379 = vld [vmem:[%s6 + $0x70] sm:$0xf]
    %v1380 = vld [vmem:[%s6 + $0x74] sm:$0xf]
    %v1381 = vld [vmem:[%s6 + $0x78] sm:$0xf]
    %v1382 = vld [vmem:[%s6 + $0x7c] sm:$0xf]
    %1403 = vst [vmem:[#allocation1] ss:$9 sm:$0xff] %v1328
    %s1404 = scalar_lea.vmem [#allocation1], 1
    %1405 = vst [vmem:[%s1404] ss:$9 sm:$0xff] %v1329
    %s1406 = scalar_lea.vmem [#allocation1], 2
    %1407 = vst [vmem:[%s1406] ss:$9 sm:$0xff] %v1330
    %s1408 = scalar_lea.vmem [#allocation1], 3
    %1409 = vst [vmem:[%s1408] ss:$9 sm:$0xff] %v1331
    %s1410 = scalar_lea.vmem [#allocation1], 4
    %1411 = vst [vmem:[%s1410] ss:$9 sm:$0xff] %v1332
    %s1412 = scalar_lea.vmem [#allocation1], 5
    %1413 = vst [vmem:[%s1412] ss:$9 sm:$0xff] %v1333
    %s1414 = scalar_lea.vmem [#allocation1], 6
    %1415 = vst [vmem:[%s1414] ss:$9 sm:$0xff] %v1334
    %s1416 = scalar_lea.vmem [#allocation1], 7
    %1417 = vst [vmem:[%s1416] ss:$9 sm:$0xff] %v1335
    %v1418 = vld [vmem:[#allocation1] sm:$0xff]
    %1419 = vst [vmem:[#allocation1] ss:$9 sm:$0xff] %v1336
    %1420 = vst [vmem:[%s1404] ss:$9 sm:$0xff] %v1337
    %1421 = vst [vmem:[%s1406] ss:$9 sm:$0xff] %v1338
    %1422 = vst [vmem:[%s1408] ss:$9 sm:$0xff] %v1339
    %1423 = vst [vmem:[%s1410] ss:$9 sm:$0xff] %v1340
    %1424 = vst [vmem:[%s1412] ss:$9 sm:$0xff] %v1341
    %1425 = vst [vmem:[%s1414] ss:$9 sm:$0xff] %v1342
    %1426 = vst [vmem:[%s1416] ss:$9 sm:$0xff] %v1343
    %v1427 = vld [vmem:[#allocation1] sm:$0xff]
    %1428 = vst [vmem:[#allocation1] ss:$9 sm:$0xff] %v1344
    %1429 = vst [vmem:[%s1404] ss:$9 sm:$0xff] %v1345
    %1430 = vst [vmem:[%s1406] ss:$9 sm:$0xff] %v1346
    %1431 = vst [vmem:[%s1408] ss:$9 sm:$0xff] %v1347
    %v1432 = vld [vmem:[#allocation1] sm:$0xff]
    %v1436 = vsel %vm1011, %v1418, 0.0
    %1437 = vadd.xlane.f32.xlu0 %v1436
    %v1438 = vpop.xlane.xlu0 %1437
    %v1439 = vsel %vm1011, %v1427, 0.0
    %1440 = vadd.xlane.f32.xlu0 %v1439
    %v1441 = vpop.xlane.xlu0 %1440
    %v1442 = vsel %vm1018, %v1432, 0.0
    %1443 = vadd.xlane.f32.xlu0 %v1442
    %v1444 = vpop.xlane.xlu0 %1443
    %v1445 = vmul.f32 %v1438, %v1028
    %v1446 = vmul.f32 %v1441, %v1028
    %v1447 = vmul.f32 %v1444, %v1028
    %v1451 = vperm.slane %v1445, 0
    %v1452 = vperm.slane %v1445, 1
    %v1453 = vperm.slane %v1445, 2
    %v1454 = vperm.slane %v1445, 3
    %v1455 = vperm.slane %v1445, 4
    %v1456 = vperm.slane %v1445, 5
    %v1457 = vperm.slane %v1445, 6
    %v1458 = vperm.slane %v1445, 7
    %v1459 = vperm.slane %v1446, 0
    %v1460 = vperm.slane %v1446, 1
    %v1461 = vperm.slane %v1446, 2
    %v1462 = vperm.slane %v1446, 3
    %v1463 = vperm.slane %v1446, 4
    %v1464 = vperm.slane %v1446, 5
    %v1465 = vperm.slane %v1446, 6
    %v1466 = vperm.slane %v1446, 7
    %v1467 = vperm.slane %v1447, 0
    %v1468 = vperm.slane %v1447, 1
    %v1469 = vperm.slane %v1447, 2
    %v1470 = vperm.slane %v1447, 3
    %v1491 = vsub.f32 %v1328, %v1451
    %v1492 = vsub.f32 %v1329, %v1452
    %v1493 = vsub.f32 %v1330, %v1453
    %v1494 = vsub.f32 %v1331, %v1454
    %v1495 = vsub.f32 %v1332, %v1455
    %v1496 = vsub.f32 %v1333, %v1456
    %v1497 = vsub.f32 %v1334, %v1457
    %v1498 = vsub.f32 %v1335, %v1458
    %v1499 = vsub.f32 %v1336, %v1459
    %v1500 = vsub.f32 %v1337, %v1460
    %v1501 = vsub.f32 %v1338, %v1461
    %v1502 = vsub.f32 %v1339, %v1462
    %v1503 = vsub.f32 %v1340, %v1463
    %v1504 = vsub.f32 %v1341, %v1464
    %v1505 = vsub.f32 %v1342, %v1465
    %v1506 = vsub.f32 %v1343, %v1466
    %v1507 = vsub.f32 %v1344, %v1467
    %v1508 = vsub.f32 %v1345, %v1468
    %v1509 = vsub.f32 %v1346, %v1469
    %v1510 = vsub.f32 %v1347, %v1470
    %v1511 = vmul.f32 %v1491, %v1491
    %v1512 = vmul.f32 %v1492, %v1492
    %v1513 = vmul.f32 %v1493, %v1493
    %v1514 = vmul.f32 %v1494, %v1494
    %v1515 = vmul.f32 %v1495, %v1495
    %v1516 = vmul.f32 %v1496, %v1496
    %v1517 = vmul.f32 %v1497, %v1497
    %v1518 = vmul.f32 %v1498, %v1498
    %v1519 = vmul.f32 %v1499, %v1499
    %v1520 = vmul.f32 %v1500, %v1500
    %v1521 = vmul.f32 %v1501, %v1501
    %v1522 = vmul.f32 %v1502, %v1502
    %v1523 = vmul.f32 %v1503, %v1503
    %v1524 = vmul.f32 %v1504, %v1504
    %v1525 = vmul.f32 %v1505, %v1505
    %v1526 = vmul.f32 %v1506, %v1506
    %v1527 = vmul.f32 %v1507, %v1507
    %v1528 = vmul.f32 %v1508, %v1508
    %v1529 = vmul.f32 %v1509, %v1509
    %v1530 = vmul.f32 %v1510, %v1510
    %1551 = vst [vmem:[#allocation1] ss:$9 sm:$0xff] %v1511
    %s1552 = scalar_lea.vmem [#allocation1], 1
    %1553 = vst [vmem:[%s1552] ss:$9 sm:$0xff] %v1512
    %s1554 = scalar_lea.vmem [#allocation1], 2
    %1555 = vst [vmem:[%s1554] ss:$9 sm:$0xff] %v1513
    %s1556 = scalar_lea.vmem [#allocation1], 3
    %1557 = vst [vmem:[%s1556] ss:$9 sm:$0xff] %v1514
    %s1558 = scalar_lea.vmem [#allocation1], 4
    %1559 = vst [vmem:[%s1558] ss:$9 sm:$0xff] %v1515
    %s1560 = scalar_lea.vmem [#allocation1], 5
    %1561 = vst [vmem:[%s1560] ss:$9 sm:$0xff] %v1516
    %s1562 = scalar_lea.vmem [#allocation1], 6
    %1563 = vst [vmem:[%s1562] ss:$9 sm:$0xff] %v1517
    %s1564 = scalar_lea.vmem [#allocation1], 7
    %1565 = vst [vmem:[%s1564] ss:$9 sm:$0xff] %v1518
    %v1566 = vld [vmem:[#allocation1] sm:$0xff]
    %1567 = vst [vmem:[#allocation1] ss:$9 sm:$0xff] %v1519
    %1568 = vst [vmem:[%s1552] ss:$9 sm:$0xff] %v1520
    %1569 = vst [vmem:[%s1554] ss:$9 sm:$0xff] %v1521
    %1570 = vst [vmem:[%s1556] ss:$9 sm:$0xff] %v1522
    %1571 = vst [vmem:[%s1558] ss:$9 sm:$0xff] %v1523
    %1572 = vst [vmem:[%s1560] ss:$9 sm:$0xff] %v1524
    %1573 = vst [vmem:[%s1562] ss:$9 sm:$0xff] %v1525
    %1574 = vst [vmem:[%s1564] ss:$9 sm:$0xff] %v1526
    %v1575 = vld [vmem:[#allocation1] sm:$0xff]
    %1576 = vst [vmem:[#allocation1] ss:$9 sm:$0xff] %v1527
    %1577 = vst [vmem:[%s1552] ss:$9 sm:$0xff] %v1528
    %1578 = vst [vmem:[%s1554] ss:$9 sm:$0xff] %v1529
    %1579 = vst [vmem:[%s1556] ss:$9 sm:$0xff] %v1530
    %v1580 = vld [vmem:[#allocation1] sm:$0xff]
    %v1584 = vsel %vm1011, %v1566, 0.0
    %1585 = vadd.xlane.f32.xlu0 %v1584
    %v1586 = vpop.xlane.xlu0 %1585
    %v1587 = vsel %vm1011, %v1575, 0.0
    %1588 = vadd.xlane.f32.xlu0 %v1587
    %v1589 = vpop.xlane.xlu0 %1588
    %v1590 = vsel %vm1018, %v1580, 0.0
    %1591 = vadd.xlane.f32.xlu0 %v1590
    %v1592 = vpop.xlane.xlu0 %1591
    %v1593 = vmul.f32 %v1586, %v1028
    %v1594 = vmul.f32 %v1589, %v1028
    %v1595 = vmul.f32 %v1592, %v1028
    %v1596 = vadd.f32 %v1593, 1e-05
    %v1597 = vadd.f32 %v1594, 1e-05
    %v1598 = vadd.f32 %v1595, 1e-05
    %v1599 = vrsqrt.pop %v1596
    %v1600 = vmul.f32 %v1599, %v1596
    %v1601 = vmul.f32 %v1600, %v1599
    %v1602 = vmul.f32 0.5, %v1601
    %v1603 = vsub.f32 1.5, %v1602
    %v1604 = vmul.f32 %v1599, %v1603
    %vm1605 = vweird.f32 %v1596
    %vm1606 = vweird.f32 %v1599
    %vm1607 = vmor %vm1605, %vm1606
    %v1608 = vsel %vm1607, %v1599, %v1604
    %v1609 = vrsqrt.pop %v1597
    %v1610 = vmul.f32 %v1609, %v1597
    %v1611 = vmul.f32 %v1610, %v1609
    %v1612 = vmul.f32 0.5, %v1611
    %v1613 = vsub.f32 1.5, %v1612
    %v1614 = vmul.f32 %v1609, %v1613
    %vm1615 = vweird.f32 %v1597
    %vm1616 = vweird.f32 %v1609
    %vm1617 = vmor %vm1615, %vm1616
    %v1618 = vsel %vm1617, %v1609, %v1614
    %v1619 = vrsqrt.pop %v1598
    %v1620 = vmul.f32 %v1619, %v1598
    %v1621 = vmul.f32 %v1620, %v1619
    %v1622 = vmul.f32 0.5, %v1621
    %v1623 = vsub.f32 1.5, %v1622
    %v1624 = vmul.f32 %v1619, %v1623
    %vm1625 = vweird.f32 %v1598
    %vm1626 = vweird.f32 %v1619
    %vm1627 = vmor %vm1625, %vm1626
    %v1628 = vsel %vm1627, %v1619, %v1624
    %v1632 = vperm.slane %v1608, 0
    %v1633 = vperm.slane %v1608, 1
    %v1634 = vperm.slane %v1608, 2
    %v1635 = vperm.slane %v1608, 3
    %v1636 = vperm.slane %v1608, 4
    %v1637 = vperm.slane %v1608, 5
    %v1638 = vperm.slane %v1608, 6
    %v1639 = vperm.slane %v1608, 7
    %v1640 = vperm.slane %v1618, 0
    %v1641 = vperm.slane %v1618, 1
    %v1642 = vperm.slane %v1618, 2
    %v1643 = vperm.slane %v1618, 3
    %v1644 = vperm.slane %v1618, 4
    %v1645 = vperm.slane %v1618, 5
    %v1646 = vperm.slane %v1618, 6
    %v1647 = vperm.slane %v1618, 7
    %v1648 = vperm.slane %v1628, 0
    %v1649 = vperm.slane %v1628, 1
    %v1650 = vperm.slane %v1628, 2
    %v1651 = vperm.slane %v1628, 3
    %v1672 = vmul.f32 %v1491, %v1632
    %v1673 = vmul.f32 %v1492, %v1633
    %v1674 = vmul.f32 %v1493, %v1634
    %v1675 = vmul.f32 %v1494, %v1635
    %v1676 = vmul.f32 %v1495, %v1636
    %v1677 = vmul.f32 %v1496, %v1637
    %v1678 = vmul.f32 %v1497, %v1638
    %v1679 = vmul.f32 %v1498, %v1639
    %v1680 = vmul.f32 %v1499, %v1640
    %v1681 = vmul.f32 %v1500, %v1641
    %v1682 = vmul.f32 %v1501, %v1642
    %v1683 = vmul.f32 %v1502, %v1643
    %v1684 = vmul.f32 %v1503, %v1644
    %v1685 = vmul.f32 %v1504, %v1645
    %v1686 = vmul.f32 %v1505, %v1646
    %v1687 = vmul.f32 %v1506, %v1647
    %v1688 = vmul.f32 %v1507, %v1648
    %v1689 = vmul.f32 %v1508, %v1649
    %v1690 = vmul.f32 %v1509, %v1650
    %v1691 = vmul.f32 %v1510, %v1651
    %v1692 = vperm.slane %v35, 7
    %v1694 = vrot.slane %v1692, 1
    %v1695 = vrot.slane %v1692, 2
    %v1696 = vrot.slane %v1692, 3
    %v1697 = vrot.slane %v1692, 4
    %v1698 = vrot.slane %v1692, 5
    %v1699 = vrot.slane %v1692, 6
    %v1700 = vrot.slane %v1692, 7
    %v1708 = vmul.f32 %v1672, %v1692
    %v1709 = vmul.f32 %v1673, %v1694
    %v1710 = vmul.f32 %v1674, %v1695
    %v1711 = vmul.f32 %v1675, %v1696
    %v1712 = vmul.f32 %v1676, %v1697
    %v1713 = vmul.f32 %v1677, %v1698
    %v1714 = vmul.f32 %v1678, %v1699
    %v1715 = vmul.f32 %v1679, %v1700
    %v1716 = vmul.f32 %v1680, %v1692
    %v1717 = vmul.f32 %v1681, %v1694
    %v1718 = vmul.f32 %v1682, %v1695
    %v1719 = vmul.f32 %v1683, %v1696
    %v1720 = vmul.f32 %v1684, %v1697
    %v1721 = vmul.f32 %v1685, %v1698
    %v1722 = vmul.f32 %v1686, %v1699
    %v1723 = vmul.f32 %v1687, %v1700
    %v1724 = vmul.f32 %v1688, %v1692
    %v1725 = vmul.f32 %v1689, %v1694
    %v1726 = vmul.f32 %v1690, %v1695
    %v1727 = vmul.f32 %v1691, %v1696
    %v1728 = vperm.slane %v36, 0
    %v1730 = vrot.slane %v1728, 1
    %v1731 = vrot.slane %v1728, 2
    %v1732 = vrot.slane %v1728, 3
    %v1733 = vrot.slane %v1728, 4
    %v1734 = vrot.slane %v1728, 5
    %v1735 = vrot.slane %v1728, 6
    %v1736 = vrot.slane %v1728, 7
    %v1744 = vadd.f32 %v1708, %v1728
    %v1745 = vadd.f32 %v1709, %v1730
    %v1746 = vadd.f32 %v1710, %v1731
    %v1747 = vadd.f32 %v1711, %v1732
    %v1748 = vadd.f32 %v1712, %v1733
    %v1749 = vadd.f32 %v1713, %v1734
    %v1750 = vadd.f32 %v1714, %v1735
    %v1751 = vadd.f32 %v1715, %v1736
    %v1752 = vadd.f32 %v1716, %v1728
    %v1753 = vadd.f32 %v1717, %v1730
    %v1754 = vadd.f32 %v1718, %v1731
    %v1755 = vadd.f32 %v1719, %v1732
    %v1756 = vadd.f32 %v1720, %v1733
    %v1757 = vadd.f32 %v1721, %v1734
    %v1758 = vadd.f32 %v1722, %v1735
    %v1759 = vadd.f32 %v1723, %v1736
    %v1760 = vadd.f32 %v1724, %v1728
    %v1761 = vadd.f32 %v1725, %v1730
    %v1762 = vadd.f32 %v1726, %v1731
    %v1763 = vadd.f32 %v1727, %v1732
    %1784 = vst [vmem:[#allocation1] ss:$9 sm:$0xff] %v1744
    %s1785 = scalar_lea.vmem [#allocation1], 1
    %1786 = vst [vmem:[%s1785] ss:$9 sm:$0xff] %v1745
    %s1787 = scalar_lea.vmem [#allocation1], 2
    %1788 = vst [vmem:[%s1787] ss:$9 sm:$0xff] %v1746
    %s1789 = scalar_lea.vmem [#allocation1], 3
    %1790 = vst [vmem:[%s1789] ss:$9 sm:$0xff] %v1747
    %s1791 = scalar_lea.vmem [#allocation1], 4
    %1792 = vst [vmem:[%s1791] ss:$9 sm:$0xff] %v1748
    %s1793 = scalar_lea.vmem [#allocation1], 5
    %1794 = vst [vmem:[%s1793] ss:$9 sm:$0xff] %v1749
    %s1795 = scalar_lea.vmem [#allocation1], 6
    %1796 = vst [vmem:[%s1795] ss:$9 sm:$0xff] %v1750
    %s1797 = scalar_lea.vmem [#allocation1], 7
    %1798 = vst [vmem:[%s1797] ss:$9 sm:$0xff] %v1751
    %v1799 = vld [vmem:[#allocation1] sm:$0xff]
    %1800 = vst [vmem:[#allocation1] ss:$9 sm:$0xff] %v1752
    %1801 = vst [vmem:[%s1785] ss:$9 sm:$0xff] %v1753
    %1802 = vst [vmem:[%s1787] ss:$9 sm:$0xff] %v1754
    %1803 = vst [vmem:[%s1789] ss:$9 sm:$0xff] %v1755
    %1804 = vst [vmem:[%s1791] ss:$9 sm:$0xff] %v1756
    %1805 = vst [vmem:[%s1793] ss:$9 sm:$0xff] %v1757
    %1806 = vst [vmem:[%s1795] ss:$9 sm:$0xff] %v1758
    %1807 = vst [vmem:[%s1797] ss:$9 sm:$0xff] %v1759
    %v1808 = vld [vmem:[#allocation1] sm:$0xff]
    %1809 = vst [vmem:[#allocation1] ss:$9 sm:$0xff] %v1760
    %1810 = vst [vmem:[%s1785] ss:$9 sm:$0xff] %v1761
    %1811 = vst [vmem:[%s1787] ss:$9 sm:$0xff] %v1762
    %1812 = vst [vmem:[%s1789] ss:$9 sm:$0xff] %v1763
    %v1813 = vld [vmem:[#allocation1] sm:$0xff]
    %v1817 = vpack.c.bf16 %v1808, %v1799
    %v1818 = vpack.c.bf16 %v1813, %v1813
    %v1820 = vperm.slane %v1348, 0
    %v1821 = vperm.slane %v1348, 1
    %v1832 = vunpack.c.l.b16 %v273
    %v1833 = vunpack.c.h.b16 %v273
    %v1834 = vunpack.c.l.b16 %v274
    %v1835 = vunpack.c.h.b16 %v274
    %v1836 = vunpack.c.l.b16 %v275
    %v1837 = vunpack.c.h.b16 %v275
    %v1838 = vunpack.c.l.b16 %v276
    %v1839 = vunpack.c.h.b16 %v276
    %v1840 = vunpack.c.l.b16 %v277
    %v1841 = vunpack.c.h.b16 %v277
    %v1842 = vunpack.c.l.b16 %v278
    %v1843 = vunpack.c.h.b16 %v278
    %v1844 = vunpack.c.l.b16 %v279
    %v1845 = vunpack.c.h.b16 %v279
    %v1846 = vunpack.c.l.b16 %v280
    %v1847 = vunpack.c.h.b16 %v280
    %v1848 = vpack.c.b16 %v1834, %v1832
    %v1849 = vpack.c.b16 %v1835, %v1833
    %v1850 = vpack.c.b16 %v1838, %v1836
    %v1851 = vpack.c.b16 %v1839, %v1837
    %v1852 = vpack.c.b16 %v1842, %v1840
    %v1853 = vpack.c.b16 %v1843, %v1841
    %v1854 = vpack.c.b16 %v1846, %v1844
    %v1855 = vpack.c.b16 %v1847, %v1845
    %v1865 = vsel %vm1011, %v1817, 0
    %v1868 = vsel %vm1011, %v1818, 0
    %1870 = vmatpush.bf16.msra.mxu0 0
    %1871 = vmatpush.bf16.msra.mxu0 0
    %1872 = vmatpush.bf16.msra.mxu0 0
    %1873 = vmatpush.bf16.msra.mxu0 0
    %1874 = vmatpush.bf16.msra.mxu0 %v1854
    %1875 = vmatpush.bf16.msra.mxu0 %v1852
    %1876 = vmatpush.bf16.msra.mxu0 %v1850
    %1877 = vmatpush.bf16.msra.mxu0 %v1848
    %1878 = vmatmul.bf16.gmra.mxu0 %v1865
    %v1879 = vpop.f32.mrf.mxu0
    %v1880 = vadd.f32 %v1820, %v1879
    %v1881 = vpop.f32.mrf.mxu0
    %v1882 = vadd.f32 %v1820, %v1881
    %1883 = vmatmul.bf16.gmra.mxu0 %v1868
    %v1884 = vpop.f32.mrf.mxu0
    %v1885 = vadd.f32 %v1820, %v1884
    %v1886 = vpop.f32.mrf.mxu0
    %1887 = vdwg.mxu0
    %1888 = vmatpush.bf16.msra.mxu0 0
    %1889 = vmatpush.bf16.msra.mxu0 0
    %1890 = vmatpush.bf16.msra.mxu0 0
    %1891 = vmatpush.bf16.msra.mxu0 0
    %1892 = vmatpush.bf16.msra.mxu0 %v1855
    %1893 = vmatpush.bf16.msra.mxu0 %v1853
    %1894 = vmatpush.bf16.msra.mxu0 %v1851
    %1895 = vmatpush.bf16.msra.mxu0 %v1849
    %1896 = vmatmul.bf16.gmra.mxu0 %v1865
    %v1897 = vpop.f32.mrf.mxu0
    %v1898 = vadd.f32 %v1821, %v1897
    %v1899 = vpop.f32.mrf.mxu0
    %v1900 = vadd.f32 %v1821, %v1899
    %1901 = vmatmul.bf16.gmra.mxu0 %v1868
    %v1902 = vpop.f32.mrf.mxu0
    %v1903 = vadd.f32 %v1821, %v1902
    %v1904 = vpop.f32.mrf.mxu0
    %1905 = vdwg.mxu0
    %v1912 = vrot.slane %v1898, 7
    %v1913 = vrot.slane %v1900, 7
    %v1914 = vrot.slane %v1903, 7
    %v1915 = vsel %vm100, %v1880, %v1912
    %v1916 = vsel %vm123, %v1880, %v1912
    %v1917 = vrot.slane %v1916, 1
    %v1918 = vsel %vm104, %v1880, %v1912
    %v1919 = vrot.slane %v1918, 2
    %v1920 = vsel %vm125, %v1880, %v1912
    %v1921 = vrot.slane %v1920, 3
    %v1922 = vsel %vm110, %v1880, %v1912
    %v1923 = vrot.slane %v1922, 4
    %v1924 = vsel %vm129, %v1880, %v1912
    %v1925 = vrot.slane %v1924, 5
    %v1926 = vsel %vm114, %v1880, %v1912
    %v1927 = vrot.slane %v1926, 6
    %v1928 = vsel %vm131, %v1912, %v1880
    %v1929 = vrot.slane %v1928, 7
    %v1930 = vsel %vm100, %v1882, %v1913
    %v1931 = vsel %vm123, %v1882, %v1913
    %v1932 = vrot.slane %v1931, 1
    %v1933 = vsel %vm104, %v1882, %v1913
    %v1934 = vrot.slane %v1933, 2
    %v1935 = vsel %vm125, %v1882, %v1913
    %v1936 = vrot.slane %v1935, 3
    %v1937 = vsel %vm110, %v1882, %v1913
    %v1938 = vrot.slane %v1937, 4
    %v1939 = vsel %vm129, %v1882, %v1913
    %v1940 = vrot.slane %v1939, 5
    %v1941 = vsel %vm114, %v1882, %v1913
    %v1942 = vrot.slane %v1941, 6
    %v1943 = vsel %vm131, %v1913, %v1882
    %v1944 = vrot.slane %v1943, 7
    %v1945 = vsel %vm100, %v1885, %v1914
    %v1946 = vsel %vm123, %v1885, %v1914
    %v1947 = vrot.slane %v1946, 1
    %v1948 = vsel %vm104, %v1885, %v1914
    %v1949 = vrot.slane %v1948, 2
    %v1950 = vsel %vm125, %v1885, %v1914
    %v1951 = vrot.slane %v1950, 3
    %1952 = vst [vmem:[#allocation1] ss:$9 sm:$0xff] %v1915
    %s1953 = scalar_lea.vmem [#allocation1], 1
    %1954 = vst [vmem:[%s1953] ss:$9 sm:$0xff] %v1917
    %s1955 = scalar_lea.vmem [#allocation1], 2
    %1956 = vst [vmem:[%s1955] ss:$9 sm:$0xff] %v1919
    %s1957 = scalar_lea.vmem [#allocation1], 3
    %1958 = vst [vmem:[%s1957] ss:$9 sm:$0xff] %v1921
    %s1959 = scalar_lea.vmem [#allocation1], 4
    %1960 = vst [vmem:[%s1959] ss:$9 sm:$0xff] %v1923
    %v1961 = vld [vmem:[#allocation1] sm:$0xff]
    %1962 = vst [vmem:[#allocation1] ss:$9 sm:$0xff] %v1925
    %1963 = vst [vmem:[%s1953] ss:$9 sm:$0xff] %v1927
    %1964 = vst [vmem:[%s1955] ss:$9 sm:$0xff] %v1929
    %1965 = vst [vmem:[%s1957] ss:$9 sm:$0xff] %v1930
    %1966 = vst [vmem:[%s1959] ss:$9 sm:$0xff] %v1932
    %v1967 = vld [vmem:[#allocation1] sm:$0xff]
    %1968 = vst [vmem:[#allocation1] ss:$9 sm:$0xff] %v1934
    %1969 = vst [vmem:[%s1953] ss:$9 sm:$0xff] %v1936
    %1970 = vst [vmem:[%s1955] ss:$9 sm:$0xff] %v1938
    %1971 = vst [vmem:[%s1957] ss:$9 sm:$0xff] %v1940
    %1972 = vst [vmem:[%s1959] ss:$9 sm:$0xff] %v1942
    %v1973 = vld [vmem:[#allocation1] sm:$0xff]
    %1974 = vst [vmem:[#allocation1] ss:$9 sm:$0xff] %v1944
    %1975 = vst [vmem:[%s1953] ss:$9 sm:$0xff] %v1945
    %1976 = vst [vmem:[%s1955] ss:$9 sm:$0xff] %v1947
    %1977 = vst [vmem:[%s1957] ss:$9 sm:$0xff] %v1949
    %1978 = vst [vmem:[%s1959] ss:$9 sm:$0xff] %v1951
    %v1979 = vld [vmem:[#allocation1] sm:$0xff]
    %v1984 = vpack.c.bf16 %v1961, %v1961
    %v1985 = vpack.c.bf16 %v1967, %v1967
    %v1986 = vpack.c.bf16 %v1973, %v1973
    %v1987 = vpack.c.bf16 %v1979, %v1979
    %1988 = vst [vmem:[#allocation1] ss:$9 sm:$0xff] %v1915
    %s1989 = scalar_lea.vmem [#allocation1], 1
    %1990 = vst [vmem:[%s1989] ss:$9 sm:$0xff] %v1917
    %s1991 = scalar_lea.vmem [#allocation1], 2
    %1992 = vst [vmem:[%s1991] ss:$9 sm:$0xff] %v1919
    %s1993 = scalar_lea.vmem [#allocation1], 3
    %1994 = vst [vmem:[%s1993] ss:$9 sm:$0xff] %v1921
    %s1995 = scalar_lea.vmem [#allocation1], 4
    %1996 = vst [vmem:[%s1995] ss:$9 sm:$0xff] %v1923
    %v1997 = vld [vmem:[#allocation1] sm:$0xff]
    %1998 = vst [vmem:[#allocation1] ss:$9 sm:$0xff] %v1925
    %1999 = vst [vmem:[%s1989] ss:$9 sm:$0xff] %v1927
    %2000 = vst [vmem:[%s1991] ss:$9 sm:$0xff] %v1929
    %2001 = vst [vmem:[%s1993] ss:$9 sm:$0xff] %v1930
    %2002 = vst [vmem:[%s1995] ss:$9 sm:$0xff] %v1932
    %v2003 = vld [vmem:[#allocation1] sm:$0xff]
    %2004 = vst [vmem:[#allocation1] ss:$9 sm:$0xff] %v1934
    %2005 = vst [vmem:[%s1989] ss:$9 sm:$0xff] %v1936
    %2006 = vst [vmem:[%s1991] ss:$9 sm:$0xff] %v1938
    %2007 = vst [vmem:[%s1993] ss:$9 sm:$0xff] %v1940
    %2008 = vst [vmem:[%s1995] ss:$9 sm:$0xff] %v1942
    %v2009 = vld [vmem:[#allocation1] sm:$0xff]
    %2010 = vst [vmem:[#allocation1] ss:$9 sm:$0xff] %v1944
    %2011 = vst [vmem:[%s1989] ss:$9 sm:$0xff] %v1945
    %2012 = vst [vmem:[%s1991] ss:$9 sm:$0xff] %v1947
    %2013 = vst [vmem:[%s1993] ss:$9 sm:$0xff] %v1949
    %2014 = vst [vmem:[%s1995] ss:$9 sm:$0xff] %v1951
    %v2015 = vld [vmem:[#allocation1] sm:$0xff]
    %v2020 = vpack.c.bf16 %v1997, %v1997
    %v2021 = vpack.c.bf16 %v2003, %v2003
    %v2022 = vpack.c.bf16 %v2009, %v2009
    %v2023 = vpack.c.bf16 %v2015, %v2015
    %2024 = vst [vmem:[#allocation1] ss:$9 sm:$0xff] %v1915
    %s2025 = scalar_lea.vmem [#allocation1], 1
    %2026 = vst [vmem:[%s2025] ss:$9 sm:$0xff] %v1917
    %s2027 = scalar_lea.vmem [#allocation1], 2
    %2028 = vst [vmem:[%s2027] ss:$9 sm:$0xff] %v1919
    %s2029 = scalar_lea.vmem [#allocation1], 3
    %2030 = vst [vmem:[%s2029] ss:$9 sm:$0xff] %v1921
    %s2031 = scalar_lea.vmem [#allocation1], 4
    %2032 = vst [vmem:[%s2031] ss:$9 sm:$0xff] %v1923
    %v2033 = vld [vmem:[#allocation1 + $0x9] sm:$0xff]
    %2034 = vst [vmem:[#allocation1] ss:$9 sm:$0xff] %v1925
    %2035 = vst [vmem:[%s2025] ss:$9 sm:$0xff] %v1927
    %2036 = vst [vmem:[%s2027] ss:$9 sm:$0xff] %v1929
    %2037 = vst [vmem:[%s2029] ss:$9 sm:$0xff] %v1930
    %2038 = vst [vmem:[%s2031] ss:$9 sm:$0xff] %v1932
    %v2039 = vld [vmem:[#allocation1 + $0x9] sm:$0xff]
    %2040 = vst [vmem:[#allocation1] ss:$9 sm:$0xff] %v1934
    %2041 = vst [vmem:[%s2025] ss:$9 sm:$0xff] %v1936
    %2042 = vst [vmem:[%s2027] ss:$9 sm:$0xff] %v1938
    %2043 = vst [vmem:[%s2029] ss:$9 sm:$0xff] %v1940
    %2044 = vst [vmem:[%s2031] ss:$9 sm:$0xff] %v1942
    %v2045 = vld [vmem:[#allocation1 + $0x9] sm:$0xff]
    %2046 = vst [vmem:[#allocation1] ss:$9 sm:$0xff] %v1944
    %2047 = vst [vmem:[%s2025] ss:$9 sm:$0xff] %v1945
    %2048 = vst [vmem:[%s2027] ss:$9 sm:$0xff] %v1947
    %2049 = vst [vmem:[%s2029] ss:$9 sm:$0xff] %v1949
    %2050 = vst [vmem:[%s2031] ss:$9 sm:$0xff] %v1951
    %v2051 = vld [vmem:[#allocation1 + $0x9] sm:$0xff]
    %v2056 = vpack.c.bf16 %v2033, %v2033
    %v2057 = vpack.c.bf16 %v2039, %v2039
    %v2058 = vpack.c.bf16 %v2045, %v2045
    %v2059 = vpack.c.bf16 %v2051, %v2051
    %v2061 = vunpack.c.l.b16 %v2020
    %v2062 = vpack.c.b16 %v2061, %v2061
    %2063 = vrot.lane.b32.xlu0 %v2062, 64
    %v2064 = vpop.permute.xlu0 %2063
    %vm2065 = vcmask 130048
    %v2067 = vsel %vm2065, %v1984, 0
    %v2070 = vsel %vm2065, %v2064, 0
    %2072 = vmatpush.bf16.xpose.msra.mxu0 0
    %2073 = vmatpush.bf16.xpose.msra.mxu0 0
    %2074 = vmatpush.bf16.xpose.msra.mxu0 0
    %2075 = vmatpush.bf16.xpose.msra.mxu0 0
    %2076 = vmatpush.bf16.xpose.msra.mxu0 0
    %2077 = vmatpush.bf16.xpose.msra.mxu0 0
    %2078 = vmatpush.bf16.xpose.msra.mxu0 0
    %2079 = vmatpush.bf16.xpose.msra.mxu0 %v2070
    %2080 = vmatmul.bf16.gmra.mxu0 %v2067
    %v2081 = vpop.f32.mrf.mxu0
    %v2082 = vadd.f32 0.0, %v2081
    %v2083 = vpop.f32.mrf.mxu0
    %2084 = vdwg.mxu0
    %v2086 = vunpack.c.l.b16 %v2021
    %v2087 = vpack.c.b16 %v2086, %v2086
    %2088 = vrot.lane.b32.xlu0 %v2087, 64
    %v2089 = vpop.permute.xlu0 %2088
    %v2091 = vsel %vm2065, %v1985, 0
    %v2094 = vsel %vm2065, %v2089, 0
    %2096 = vmatpush.bf16.xpose.msra.mxu0 0
    %2097 = vmatpush.bf16.xpose.msra.mxu0 0
    %2098 = vmatpush.bf16.xpose.msra.mxu0 0
    %2099 = vmatpush.bf16.xpose.msra.mxu0 0
    %2100 = vmatpush.bf16.xpose.msra.mxu0 0
    %2101 = vmatpush.bf16.xpose.msra.mxu0 0
    %2102 = vmatpush.bf16.xpose.msra.mxu0 0
    %2103 = vmatpush.bf16.xpose.msra.mxu0 %v2094
    %2104 = vmatmul.bf16.gmra.mxu0 %v2091
    %v2105 = vpop.f32.mrf.mxu0
    %v2106 = vadd.f32 0.0, %v2105
    %v2107 = vpop.f32.mrf.mxu0
    %2108 = vdwg.mxu0
    %v2110 = vunpack.c.l.b16 %v2022
    %v2111 = vpack.c.b16 %v2110, %v2110
    %2112 = vrot.lane.b32.xlu0 %v2111, 64
    %v2113 = vpop.permute.xlu0 %2112
    %v2115 = vsel %vm2065, %v1986, 0
    %v2118 = vsel %vm2065, %v2113, 0
    %2120 = vmatpush.bf16.xpose.msra.mxu0 0
    %2121 = vmatpush.bf16.xpose.msra.mxu0 0
    %2122 = vmatpush.bf16.xpose.msra.mxu0 0
    %2123 = vmatpush.bf16.xpose.msra.mxu0 0
    %2124 = vmatpush.bf16.xpose.msra.mxu0 0
    %2125 = vmatpush.bf16.xpose.msra.mxu0 0
    %2126 = vmatpush.bf16.xpose.msra.mxu0 0
    %2127 = vmatpush.bf16.xpose.msra.mxu0 %v2118
    %2128 = vmatmul.bf16.gmra.mxu0 %v2115
    %v2129 = vpop.f32.mrf.mxu0
    %v2130 = vadd.f32 0.0, %v2129
    %v2131 = vpop.f32.mrf.mxu0
    %2132 = vdwg.mxu0
    %v2134 = vunpack.c.l.b16 %v2023
    %v2135 = vpack.c.b16 %v2134, %v2134
    %2136 = vrot.lane.b32.xlu0 %v2135, 64
    %v2137 = vpop.permute.xlu0 %2136
    %v2139 = vsel %vm2065, %v1987, 0
    %v2142 = vsel %vm2065, %v2137, 0
    %2144 = vmatpush.bf16.xpose.msra.mxu0 0
    %2145 = vmatpush.bf16.xpose.msra.mxu0 0
    %2146 = vmatpush.bf16.xpose.msra.mxu0 0
    %2147 = vmatpush.bf16.xpose.msra.mxu0 0
    %2148 = vmatpush.bf16.xpose.msra.mxu0 0
    %2149 = vmatpush.bf16.xpose.msra.mxu0 0
    %2150 = vmatpush.bf16.xpose.msra.mxu0 0
    %2151 = vmatpush.bf16.xpose.msra.mxu0 %v2142
    %2152 = vmatmul.bf16.gmra.mxu0 %v2139
    %v2153 = vpop.f32.mrf.mxu0
    %v2154 = vadd.f32 0.0, %v2153
    %v2155 = vpop.f32.mrf.mxu0
    %2156 = vdwg.mxu0
    %vm2157 = vcmask 36864
    %v2158 = vsel %vm2157, %v2082, -inf
    %2159 = vmax.xlane.f32.xlu0 %v2158
    %v2160 = vpop.xlane.xlu0 %2159
    %v2161 = vsel %vm2157, %v2106, -inf
    %2162 = vmax.xlane.f32.xlu0 %v2161
    %v2163 = vpop.xlane.xlu0 %2162
    %v2164 = vsel %vm2157, %v2130, -inf
    %2165 = vmax.xlane.f32.xlu0 %v2164
    %v2166 = vpop.xlane.xlu0 %2165
    %v2167 = vsel %vm2157, %v2154, -inf
    %2168 = vmax.xlane.f32.xlu0 %v2167
    %v2169 = vpop.xlane.xlu0 %2168
    %v2170 = vsub.f32 %v2082, %v2160
    %v2171 = vsub.f32 %v2106, %v2163
    %v2172 = vsub.f32 %v2130, %v2166
    %v2173 = vsub.f32 %v2154, %v2169
    %v2174 = vmul.f32 %v2170, 1.442695
    %v2175 = vpow.pop %v2174
    %v2176 = vmul.f32 %v2171, 1.442695
    %v2177 = vpow.pop %v2176
    %v2178 = vmul.f32 %v2172, 1.442695
    %v2179 = vpow.pop %v2178
    %v2180 = vmul.f32 %v2173, 1.442695
    %v2181 = vpow.pop %v2180
    %v2182 = vsel %vm2157, %v2175, 0.0
    %2183 = vadd.xlane.f32.xlu0 %v2182
    %v2184 = vpop.xlane.xlu0 %2183
    %v2185 = vsel %vm2157, %v2177, 0.0
    %2186 = vadd.xlane.f32.xlu0 %v2185
    %v2187 = vpop.xlane.xlu0 %2186
    %v2188 = vsel %vm2157, %v2179, 0.0
    %2189 = vadd.xlane.f32.xlu0 %v2188
    %v2190 = vpop.xlane.xlu0 %2189
    %v2191 = vsel %vm2157, %v2181, 0.0
    %2192 = vadd.xlane.f32.xlu0 %v2191
    %v2193 = vpop.xlane.xlu0 %2192
    %v2194 = vrcp.pop %v2184
    %v2195 = vrcp.pop %v2187
    %v2196 = vrcp.pop %v2190
    %v2197 = vrcp.pop %v2193
    %v2198 = vmul.f32 %v2175, %v2194
    %v2199 = vmul.f32 %v2177, %v2195
    %v2200 = vmul.f32 %v2179, %v2196
    %v2201 = vmul.f32 %v2181, %v2197
    %v2202 = vpack.c.bf16 %v2198, %v2198
    %v2203 = vpack.c.bf16 %v2199, %v2199
    %v2204 = vpack.c.bf16 %v2200, %v2200
    %v2205 = vpack.c.bf16 %v2201, %v2201
    %vm2206 = vcmask 39936
    %v2208 = vsel %vm2206, %v2202, 0
    %vm2210 = vcmask 1042432
    %v2211 = vsel %vm108, 4294967295, 65535
    %v2212 = vsel %vm2210, %v2211, 0
    %v2214 = vand.u32 %v2056, %v2212
    %2216 = vmatpush.bf16.msra.mxu0 0
    %2217 = vmatpush.bf16.msra.mxu0 0
    %2218 = vmatpush.bf16.msra.mxu0 0
    %2219 = vmatpush.bf16.msra.mxu0 0
    %2220 = vmatpush.bf16.msra.mxu0 0
    %2221 = vmatpush.bf16.msra.mxu0 0
    %2222 = vmatpush.bf16.msra.mxu0 0
    %2223 = vmatpush.bf16.msra.mxu0 %v2214
    %2224 = vmatmul.bf16.gmra.mxu0 %v2208
    %v2225 = vpop.f32.mrf.mxu0
    %v2226 = vadd.f32 0.0, %v2225
    %v2227 = vpop.f32.mrf.mxu0
    %2228 = vdwg.mxu0
    %v2230 = vsel %vm2206, %v2203, 0
    %v2233 = vand.u32 %v2057, %v2212
    %2235 = vmatpush.bf16.msra.mxu0 0
    %2236 = vmatpush.bf16.msra.mxu0 0
    %2237 = vmatpush.bf16.msra.mxu0 0
    %2238 = vmatpush.bf16.msra.mxu0 0
    %2239 = vmatpush.bf16.msra.mxu0 0
    %2240 = vmatpush.bf16.msra.mxu0 0
    %2241 = vmatpush.bf16.msra.mxu0 0
    %2242 = vmatpush.bf16.msra.mxu0 %v2233
    %2243 = vmatmul.bf16.gmra.mxu0 %v2230
    %v2244 = vpop.f32.mrf.mxu0
    %v2245 = vadd.f32 0.0, %v2244
    %v2246 = vpop.f32.mrf.mxu0
    %2247 = vdwg.mxu0
    %v2249 = vsel %vm2206, %v2204, 0
    %v2252 = vand.u32 %v2058, %v2212
    %2254 = vmatpush.bf16.msra.mxu0 0
    %2255 = vmatpush.bf16.msra.mxu0 0
    %2256 = vmatpush.bf16.msra.mxu0 0
    %2257 = vmatpush.bf16.msra.mxu0 0
    %2258 = vmatpush.bf16.msra.mxu0 0
    %2259 = vmatpush.bf16.msra.mxu0 0
    %2260 = vmatpush.bf16.msra.mxu0 0
    %2261 = vmatpush.bf16.msra.mxu0 %v2252
    %2262 = vmatmul.bf16.gmra.mxu0 %v2249
    %v2263 = vpop.f32.mrf.mxu0
    %v2264 = vadd.f32 0.0, %v2263
    %v2265 = vpop.f32.mrf.mxu0
    %2266 = vdwg.mxu0
    %v2268 = vsel %vm2206, %v2205, 0
    %v2271 = vand.u32 %v2059, %v2212
    %2273 = vmatpush.bf16.msra.mxu0 0
    %2274 = vmatpush.bf16.msra.mxu0 0
    %2275 = vmatpush.bf16.msra.mxu0 0
    %2276 = vmatpush.bf16.msra.mxu0 0
    %2277 = vmatpush.bf16.msra.mxu0 0
    %2278 = vmatpush.bf16.msra.mxu0 0
    %2279 = vmatpush.bf16.msra.mxu0 0
    %2280 = vmatpush.bf16.msra.mxu0 %v2271
    %2281 = vmatmul.bf16.gmra.mxu0 %v2268
    %v2282 = vpop.f32.mrf.mxu0
    %v2283 = vadd.f32 0.0, %v2282
    %v2284 = vpop.f32.mrf.mxu0
    %2285 = vdwg.mxu0
    %v2290 = vrot.slane %v2226, 1
    %v2291 = vrot.slane %v2226, 2
    %v2292 = vrot.slane %v2226, 3
    %v2293 = vrot.slane %v2226, 4
    %v2294 = vrot.slane %v2245, 1
    %v2295 = vrot.slane %v2245, 2
    %v2296 = vrot.slane %v2245, 3
    %v2297 = vrot.slane %v2245, 4
    %v2298 = vrot.slane %v2264, 1
    %v2299 = vrot.slane %v2264, 2
    %v2300 = vrot.slane %v2264, 3
    %v2301 = vrot.slane %v2264, 4
    %v2302 = vrot.slane %v2283, 1
    %v2303 = vrot.slane %v2283, 2
    %v2304 = vrot.slane %v2283, 3
    %v2305 = vrot.slane %v2283, 4
    %2306 = vst [vmem:[#allocation1] ss:$9 sm:$0xff] %v2226
    %s2307 = scalar_lea.vmem [#allocation1], 1
    %2308 = vst [vmem:[%s2307] ss:$9 sm:$0xff] %v2290
    %s2309 = scalar_lea.vmem [#allocation1], 2
    %2310 = vst [vmem:[%s2309] ss:$9 sm:$0xff] %v2291
    %s2311 = scalar_lea.vmem [#allocation1], 3
    %2312 = vst [vmem:[%s2311] ss:$9 sm:$0xff] %v2292
    %s2313 = scalar_lea.vmem [#allocation1], 4
    %2314 = vst [vmem:[%s2313] ss:$9 sm:$0xff] %v2293
    %s2315 = scalar_lea.vmem [#allocation1], 5
    %2316 = vst [vmem:[%s2315] ss:$9 sm:$0xff] %v2245
    %s2317 = scalar_lea.vmem [#allocation1], 6
    %2318 = vst [vmem:[%s2317] ss:$9 sm:$0xff] %v2294
    %s2319 = scalar_lea.vmem [#allocation1], 7
    %2320 = vst [vmem:[%s2319] ss:$9 sm:$0xff] %v2295
    %v2321 = vld [vmem:[#allocation1] sm:$0xff]
    %2322 = vst [vmem:[#allocation1] ss:$9 sm:$0xff] %v2296
    %2323 = vst [vmem:[%s2307] ss:$9 sm:$0xff] %v2297
    %2324 = vst [vmem:[%s2309] ss:$9 sm:$0xff] %v2264
    %2325 = vst [vmem:[%s2311] ss:$9 sm:$0xff] %v2298
    %2326 = vst [vmem:[%s2313] ss:$9 sm:$0xff] %v2299
    %2327 = vst [vmem:[%s2315] ss:$9 sm:$0xff] %v2300
    %2328 = vst [vmem:[%s2317] ss:$9 sm:$0xff] %v2301
    %2329 = vst [vmem:[%s2319] ss:$9 sm:$0xff] %v2283
    %v2330 = vld [vmem:[#allocation1] sm:$0xff]
    %2331 = vst [vmem:[#allocation1] ss:$9 sm:$0xff] %v2302
    %2332 = vst [vmem:[%s2307] ss:$9 sm:$0xff] %v2303
    %2333 = vst [vmem:[%s2309] ss:$9 sm:$0xff] %v2304
    %2334 = vst [vmem:[%s2311] ss:$9 sm:$0xff] %v2305
    %v2335 = vld [vmem:[#allocation1] sm:$0xff]
    %v2339 = vpack.c.bf16 %v2330, %v2321
    %v2340 = vpack.c.bf16 %v2335, %v2335
    %2341 = vst [vmem:[#allocation1] ss:$9 sm:$0xff] %v1915
    %s2342 = scalar_lea.vmem [#allocation1], 1
    %2343 = vst [vmem:[%s2342] ss:$9 sm:$0xff] %v1917
    %s2344 = scalar_lea.vmem [#allocation1], 2
    %2345 = vst [vmem:[%s2344] ss:$9 sm:$0xff] %v1919
    %s2346 = scalar_lea.vmem [#allocation1], 3
    %2347 = vst [vmem:[%s2346] ss:$9 sm:$0xff] %v1921
    %s2348 = scalar_lea.vmem [#allocation1], 4
    %2349 = vst [vmem:[%s2348] ss:$9 sm:$0xff] %v1923
    %v2350 = vld [vmem:[#allocation1] sm:$0xff]
    %2351 = vst [vmem:[#allocation1] ss:$9 sm:$0xff] %v1925
    %2352 = vst [vmem:[%s2342] ss:$9 sm:$0xff] %v1927
    %2353 = vst [vmem:[%s2344] ss:$9 sm:$0xff] %v1929
    %2354 = vst [vmem:[%s2346] ss:$9 sm:$0xff] %v1930
    %2355 = vst [vmem:[%s2348] ss:$9 sm:$0xff] %v1932
    %v2356 = vld [vmem:[#allocation1] sm:$0xff]
    %2357 = vst [vmem:[#allocation1] ss:$9 sm:$0xff] %v1934
    %2358 = vst [vmem:[%s2342] ss:$9 sm:$0xff] %v1936
    %2359 = vst [vmem:[%s2344] ss:$9 sm:$0xff] %v1938
    %2360 = vst [vmem:[%s2346] ss:$9 sm:$0xff] %v1940
    %2361 = vst [vmem:[%s2348] ss:$9 sm:$0xff] %v1942
    %v2362 = vld [vmem:[#allocation1] sm:$0xff]
    %2363 = vst [vmem:[#allocation1] ss:$9 sm:$0xff] %v1944
    %2364 = vst [vmem:[%s2342] ss:$9 sm:$0xff] %v1945
    %2365 = vst [vmem:[%s2344] ss:$9 sm:$0xff] %v1947
    %2366 = vst [vmem:[%s2346] ss:$9 sm:$0xff] %v1949
    %2367 = vst [vmem:[%s2348] ss:$9 sm:$0xff] %v1951
    %v2368 = vld [vmem:[#allocation1] sm:$0xff]
    %v2373 = vpack.c.bf16 %v2350, %v2350
    %v2374 = vpack.c.bf16 %v2356, %v2356
    %v2375 = vpack.c.bf16 %v2362, %v2362
    %v2376 = vpack.c.bf16 %v2368, %v2368
    %2377 = vst [vmem:[#allocation1] ss:$9 sm:$0xff] %v1915
    %s2378 = scalar_lea.vmem [#allocation1], 1
    %2379 = vst [vmem:[%s2378] ss:$9 sm:$0xff] %v1917
    %s2380 = scalar_lea.vmem [#allocation1], 2
    %2381 = vst [vmem:[%s2380] ss:$9 sm:$0xff] %v1919
    %s2382 = scalar_lea.vmem [#allocation1], 3
    %2383 = vst [vmem:[%s2382] ss:$9 sm:$0xff] %v1921
    %s2384 = scalar_lea.vmem [#allocation1], 4
    %2385 = vst [vmem:[%s2384] ss:$9 sm:$0xff] %v1923
    %v2386 = vld [vmem:[#allocation1] sm:$0xff]
    %2387 = vst [vmem:[#allocation1] ss:$9 sm:$0xff] %v1925
    %2388 = vst [vmem:[%s2378] ss:$9 sm:$0xff] %v1927
    %2389 = vst [vmem:[%s2380] ss:$9 sm:$0xff] %v1929
    %2390 = vst [vmem:[%s2382] ss:$9 sm:$0xff] %v1930
    %2391 = vst [vmem:[%s2384] ss:$9 sm:$0xff] %v1932
    %v2392 = vld [vmem:[#allocation1] sm:$0xff]
    %2393 = vst [vmem:[#allocation1] ss:$9 sm:$0xff] %v1934
    %2394 = vst [vmem:[%s2378] ss:$9 sm:$0xff] %v1936
    %2395 = vst [vmem:[%s2380] ss:$9 sm:$0xff] %v1938
    %2396 = vst [vmem:[%s2382] ss:$9 sm:$0xff] %v1940
    %2397 = vst [vmem:[%s2384] ss:$9 sm:$0xff] %v1942
    %v2398 = vld [vmem:[#allocation1] sm:$0xff]
    %2399 = vst [vmem:[#allocation1] ss:$9 sm:$0xff] %v1944
    %2400 = vst [vmem:[%s2378] ss:$9 sm:$0xff] %v1945
    %2401 = vst [vmem:[%s2380] ss:$9 sm:$0xff] %v1947
    %2402 = vst [vmem:[%s2382] ss:$9 sm:$0xff] %v1949
    %2403 = vst [vmem:[%s2384] ss:$9 sm:$0xff] %v1951
    %v2404 = vld [vmem:[#allocation1] sm:$0xff]
    %v2409 = vpack.c.bf16 %v2386, %v2386
    %v2410 = vpack.c.bf16 %v2392, %v2392
    %v2411 = vpack.c.bf16 %v2398, %v2398
    %v2412 = vpack.c.bf16 %v2404, %v2404
    %2413 = vst [vmem:[#allocation1] ss:$9 sm:$0xff] %v1915
    %s2414 = scalar_lea.vmem [#allocation1], 1
    %2415 = vst [vmem:[%s2414] ss:$9 sm:$0xff] %v1917
    %s2416 = scalar_lea.vmem [#allocation1], 2
    %2417 = vst [vmem:[%s2416] ss:$9 sm:$0xff] %v1919
    %s2418 = scalar_lea.vmem [#allocation1], 3
    %2419 = vst [vmem:[%s2418] ss:$9 sm:$0xff] %v1921
    %s2420 = scalar_lea.vmem [#allocation1], 4
    %2421 = vst [vmem:[%s2420] ss:$9 sm:$0xff] %v1923
    %v2422 = vld [vmem:[#allocation1 + $0x9] sm:$0xff]
    %2423 = vst [vmem:[#allocation1] ss:$9 sm:$0xff] %v1925
    %2424 = vst [vmem:[%s2414] ss:$9 sm:$0xff] %v1927
    %2425 = vst [vmem:[%s2416] ss:$9 sm:$0xff] %v1929
    %2426 = vst [vmem:[%s2418] ss:$9 sm:$0xff] %v1930
    %2427 = vst [vmem:[%s2420] ss:$9 sm:$0xff] %v1932
    %v2428 = vld [vmem:[#allocation1 + $0x9] sm:$0xff]
    %2429 = vst [vmem:[#allocation1] ss:$9 sm:$0xff] %v1934
    %2430 = vst [vmem:[%s2414] ss:$9 sm:$0xff] %v1936
    %2431 = vst [vmem:[%s2416] ss:$9 sm:$0xff] %v1938
    %2432 = vst [vmem:[%s2418] ss:$9 sm:$0xff] %v1940
    %2433 = vst [vmem:[%s2420] ss:$9 sm:$0xff] %v1942
    %v2434 = vld [vmem:[#allocation1 + $0x9] sm:$0xff]
    %2435 = vst [vmem:[#allocation1] ss:$9 sm:$0xff] %v1944
    %2436 = vst [vmem:[%s2414] ss:$9 sm:$0xff] %v1945
    %2437 = vst [vmem:[%s2416] ss:$9 sm:$0xff] %v1947
    %2438 = vst [vmem:[%s2418] ss:$9 sm:$0xff] %v1949
    %2439 = vst [vmem:[%s2420] ss:$9 sm:$0xff] %v1951
    %v2440 = vld [vmem:[#allocation1 + $0x9] sm:$0xff]
    %2441 = vrot.lane.b32.xlu0 %v2422, 112
    %v2442 = vpop.permute.xlu0 %2441
    %2443 = vrot.lane.b32.xlu0 %v2428, 112
    %v2444 = vpop.permute.xlu0 %2443
    %2445 = vrot.lane.b32.xlu0 %v2434, 112
    %v2446 = vpop.permute.xlu0 %2445
    %2447 = vrot.lane.b32.xlu0 %v2440, 112
    %v2448 = vpop.permute.xlu0 %2447
    %v2453 = vpack.c.bf16 %v2442, %v2442
    %v2454 = vpack.c.bf16 %v2444, %v2444
    %v2455 = vpack.c.bf16 %v2446, %v2446
    %v2456 = vpack.c.bf16 %v2448, %v2448
    %v2458 = vunpack.c.l.b16 %v2373
    %v2459 = vpack.c.b16 %v2458, %v2458
    %2460 = vrot.lane.b32.xlu0 %v2459, 112
    %v2461 = vpop.permute.xlu0 %2460
    %v2463 = vunpack.c.l.b16 %v2409
    %v2464 = vpack.c.b16 %v2463, %v2463
    %2465 = vrot.lane.b32.xlu0 %v2464, 48
    %v2466 = vpop.permute.xlu0 %2465
    %v2468 = vsel %vm2065, %v2461, 0
    %v2471 = vsel %vm2065, %v2466, 0
    %2473 = vmatpush.bf16.xpose.msra.mxu0 0
    %2474 = vmatpush.bf16.xpose.msra.mxu0 0
    %2475 = vmatpush.bf16.xpose.msra.mxu0 0
    %2476 = vmatpush.bf16.xpose.msra.mxu0 0
    %2477 = vmatpush.bf16.xpose.msra.mxu0 0
    %2478 = vmatpush.bf16.xpose.msra.mxu0 0
    %2479 = vmatpush.bf16.xpose.msra.mxu0 0
    %2480 = vmatpush.bf16.xpose.msra.mxu0 %v2471
    %2481 = vmatmul.bf16.gmra.mxu0 %v2468
    %v2482 = vpop.f32.mrf.mxu0
    %v2483 = vadd.f32 0.0, %v2482
    %v2484 = vpop.f32.mrf.mxu0
    %2485 = vdwg.mxu0
    %v2487 = vunpack.c.l.b16 %v2374
    %v2488 = vpack.c.b16 %v2487, %v2487
    %2489 = vrot.lane.b32.xlu0 %v2488, 112
    %v2490 = vpop.permute.xlu0 %2489
    %v2492 = vunpack.c.l.b16 %v2410
    %v2493 = vpack.c.b16 %v2492, %v2492
    %2494 = vrot.lane.b32.xlu0 %v2493, 48
    %v2495 = vpop.permute.xlu0 %2494
    %v2497 = vsel %vm2065, %v2490, 0
    %v2500 = vsel %vm2065, %v2495, 0
    %2502 = vmatpush.bf16.xpose.msra.mxu0 0
    %2503 = vmatpush.bf16.xpose.msra.mxu0 0
    %2504 = vmatpush.bf16.xpose.msra.mxu0 0
    %2505 = vmatpush.bf16.xpose.msra.mxu0 0
    %2506 = vmatpush.bf16.xpose.msra.mxu0 0
    %2507 = vmatpush.bf16.xpose.msra.mxu0 0
    %2508 = vmatpush.bf16.xpose.msra.mxu0 0
    %2509 = vmatpush.bf16.xpose.msra.mxu0 %v2500
    %2510 = vmatmul.bf16.gmra.mxu0 %v2497
    %v2511 = vpop.f32.mrf.mxu0
    %v2512 = vadd.f32 0.0, %v2511
    %v2513 = vpop.f32.mrf.mxu0
    %2514 = vdwg.mxu0
    %v2516 = vunpack.c.l.b16 %v2375
    %v2517 = vpack.c.b16 %v2516, %v2516
    %2518 = vrot.lane.b32.xlu0 %v2517, 112
    %v2519 = vpop.permute.xlu0 %2518
    %v2521 = vunpack.c.l.b16 %v2411
    %v2522 = vpack.c.b16 %v2521, %v2521
    %2523 = vrot.lane.b32.xlu0 %v2522, 48
    %v2524 = vpop.permute.xlu0 %2523
    %v2526 = vsel %vm2065, %v2519, 0
    %v2529 = vsel %vm2065, %v2524, 0
    %2531 = vmatpush.bf16.xpose.msra.mxu0 0
    %2532 = vmatpush.bf16.xpose.msra.mxu0 0
    %2533 = vmatpush.bf16.xpose.msra.mxu0 0
    %2534 = vmatpush.bf16.xpose.msra.mxu0 0
    %2535 = vmatpush.bf16.xpose.msra.mxu0 0
    %2536 = vmatpush.bf16.xpose.msra.mxu0 0
    %2537 = vmatpush.bf16.xpose.msra.mxu0 0
    %2538 = vmatpush.bf16.xpose.msra.mxu0 %v2529
    %2539 = vmatmul.bf16.gmra.mxu0 %v2526
    %v2540 = vpop.f32.mrf.mxu0
    %v2541 = vadd.f32 0.0, %v2540
    %v2542 = vpop.f32.mrf.mxu0
    %2543 = vdwg.mxu0
    %v2545 = vunpack.c.l.b16 %v2376
    %v2546 = vpack.c.b16 %v2545, %v2545
    %2547 = vrot.lane.b32.xlu0 %v2546, 112
    %v2548 = vpop.permute.xlu0 %2547
    %v2550 = vunpack.c.l.b16 %v2412
    %v2551 = vpack.c.b16 %v2550, %v2550
    %2552 = vrot.lane.b32.xlu0 %v2551, 48
    %v2553 = vpop.permute.xlu0 %2552
    %v2555 = vsel %vm2065, %v2548, 0
    %v2558 = vsel %vm2065, %v2553, 0
    %2560 = vmatpush.bf16.xpose.msra.mxu0 0
    %2561 = vmatpush.bf16.xpose.msra.mxu0 0
    %2562 = vmatpush.bf16.xpose.msra.mxu0 0
    %2563 = vmatpush.bf16.xpose.msra.mxu0 0
    %2564 = vmatpush.bf16.xpose.msra.mxu0 0
    %2565 = vmatpush.bf16.xpose.msra.mxu0 0
    %2566 = vmatpush.bf16.xpose.msra.mxu0 0
    %2567 = vmatpush.bf16.xpose.msra.mxu0 %v2558
    %2568 = vmatmul.bf16.gmra.mxu0 %v2555
    %v2569 = vpop.f32.mrf.mxu0
    %v2570 = vadd.f32 0.0, %v2569
    %v2571 = vpop.f32.mrf.mxu0
    %2572 = vdwg.mxu0
    %v2573 = vsel %vm2157, %v2483, -inf
    %2574 = vmax.xlane.f32.xlu0 %v2573
    %v2575 = vpop.xlane.xlu0 %2574
    %v2576 = vsel %vm2157, %v2512, -inf
    %2577 = vmax.xlane.f32.xlu0 %v2576
    %v2578 = vpop.xlane.xlu0 %2577
    %v2579 = vsel %vm2157, %v2541, -inf
    %2580 = vmax.xlane.f32.xlu0 %v2579
    %v2581 = vpop.xlane.xlu0 %2580
    %v2582 = vsel %vm2157, %v2570, -inf
    %2583 = vmax.xlane.f32.xlu0 %v2582
    %v2584 = vpop.xlane.xlu0 %2583
    %v2585 = vsub.f32 %v2483, %v2575
    %v2586 = vsub.f32 %v2512, %v2578
    %v2587 = vsub.f32 %v2541, %v2581
    %v2588 = vsub.f32 %v2570, %v2584
    %v2589 = vmul.f32 %v2585, 1.442695
    %v2590 = vpow.pop %v2589
    %v2591 = vmul.f32 %v2586, 1.442695
    %v2592 = vpow.pop %v2591
    %v2593 = vmul.f32 %v2587, 1.442695
    %v2594 = vpow.pop %v2593
    %v2595 = vmul.f32 %v2588, 1.442695
    %v2596 = vpow.pop %v2595
    %v2597 = vsel %vm2157, %v2590, 0.0
    %2598 = vadd.xlane.f32.xlu0 %v2597
    %v2599 = vpop.xlane.xlu0 %2598
    %v2600 = vsel %vm2157, %v2592, 0.0
    %2601 = vadd.xlane.f32.xlu0 %v2600
    %v2602 = vpop.xlane.xlu0 %2601
    %v2603 = vsel %vm2157, %v2594, 0.0
    %2604 = vadd.xlane.f32.xlu0 %v2603
    %v2605 = vpop.xlane.xlu0 %2604
    %v2606 = vsel %vm2157, %v2596, 0.0
    %2607 = vadd.xlane.f32.xlu0 %v2606
    %v2608 = vpop.xlane.xlu0 %2607
    %v2609 = vrcp.pop %v2599
    %v2610 = vrcp.pop %v2602
    %v2611 = vrcp.pop %v2605
    %v2612 = vrcp.pop %v2608
    %v2613 = vmul.f32 %v2590, %v2609
    %v2614 = vmul.f32 %v2592, %v2610
    %v2615 = vmul.f32 %v2594, %v2611
    %v2616 = vmul.f32 %v2596, %v2612
    %v2617 = vpack.c.bf16 %v2613, %v2613
    %v2618 = vpack.c.bf16 %v2614, %v2614
    %v2619 = vpack.c.bf16 %v2615, %v2615
    %v2620 = vpack.c.bf16 %v2616, %v2616
    %v2622 = vsel %vm2206, %v2617, 0
    %v2625 = vand.u32 %v2453, %v2212
    %2627 = vmatpush.bf16.msra.mxu0 0
    %2628 = vmatpush.bf16.msra.mxu0 0
    %2629 = vmatpush.bf16.msra.mxu0 0
    %2630 = vmatpush.bf16.msra.mxu0 0
    %2631 = vmatpush.bf16.msra.mxu0 0
    %2632 = vmatpush.bf16.msra.mxu0 0
    %2633 = vmatpush.bf16.msra.mxu0 0
    %2634 = vmatpush.bf16.msra.mxu0 %v2625
    %2635 = vmatmul.bf16.gmra.mxu0 %v2622
    %v2636 = vpop.f32.mrf.mxu0
    %v2637 = vadd.f32 0.0, %v2636
    %v2638 = vpop.f32.mrf.mxu0
    %2639 = vdwg.mxu0
    %v2641 = vsel %vm2206, %v2618, 0
    %v2644 = vand.u32 %v2454, %v2212
    %2646 = vmatpush.bf16.msra.mxu0 0
    %2647 = vmatpush.bf16.msra.mxu0 0
    %2648 = vmatpush.bf16.msra.mxu0 0
    %2649 = vmatpush.bf16.msra.mxu0 0
    %2650 = vmatpush.bf16.msra.mxu0 0
    %2651 = vmatpush.bf16.msra.mxu0 0
    %2652 = vmatpush.bf16.msra.mxu0 0
    %2653 = vmatpush.bf16.msra.mxu0 %v2644
    %2654 = vmatmul.bf16.gmra.mxu0 %v2641
    %v2655 = vpop.f32.mrf.mxu0
    %v2656 = vadd.f32 0.0, %v2655
    %v2657 = vpop.f32.mrf.mxu0
    %2658 = vdwg.mxu0
    %v2660 = vsel %vm2206, %v2619, 0
    %v2663 = vand.u32 %v2455, %v2212
    %2665 = vmatpush.bf16.msra.mxu0 0
    %2666 = vmatpush.bf16.msra.mxu0 0
    %2667 = vmatpush.bf16.msra.mxu0 0
    %2668 = vmatpush.bf16.msra.mxu0 0
    %2669 = vmatpush.bf16.msra.mxu0 0
    %2670 = vmatpush.bf16.msra.mxu0 0
    %2671 = vmatpush.bf16.msra.mxu0 0
    %2672 = vmatpush.bf16.msra.mxu0 %v2663
    %2673 = vmatmul.bf16.gmra.mxu0 %v2660
    %v2674 = vpop.f32.mrf.mxu0
    %v2675 = vadd.f32 0.0, %v2674
    %v2676 = vpop.f32.mrf.mxu0
    %2677 = vdwg.mxu0
    %v2679 = vsel %vm2206, %v2620, 0
    %v2682 = vand.u32 %v2456, %v2212
    %2684 = vmatpush.bf16.msra.mxu0 0
    %2685 = vmatpush.bf16.msra.mxu0 0
    %2686 = vmatpush.bf16.msra.mxu0 0
    %2687 = vmatpush.bf16.msra.mxu0 0
    %2688 = vmatpush.bf16.msra.mxu0 0
    %2689 = vmatpush.bf16.msra.mxu0 0
    %2690 = vmatpush.bf16.msra.mxu0 0
    %2691 = vmatpush.bf16.msra.mxu0 %v2682
    %2692 = vmatmul.bf16.gmra.mxu0 %v2679
    %v2693 = vpop.f32.mrf.mxu0
    %v2694 = vadd.f32 0.0, %v2693
    %v2695 = vpop.f32.mrf.mxu0
    %2696 = vdwg.mxu0
    %v2701 = vrot.slane %v2637, 1
    %v2702 = vrot.slane %v2637, 2
    %v2703 = vrot.slane %v2637, 3
    %v2704 = vrot.slane %v2637, 4
    %v2705 = vrot.slane %v2656, 1
    %v2706 = vrot.slane %v2656, 2
    %v2707 = vrot.slane %v2656, 3
    %v2708 = vrot.slane %v2656, 4
    %v2709 = vrot.slane %v2675, 1
    %v2710 = vrot.slane %v2675, 2
    %v2711 = vrot.slane %v2675, 3
    %v2712 = vrot.slane %v2675, 4
    %v2713 = vrot.slane %v2694, 1
    %v2714 = vrot.slane %v2694, 2
    %v2715 = vrot.slane %v2694, 3
    %v2716 = vrot.slane %v2694, 4
    %2717 = vst [vmem:[#allocation1] ss:$9 sm:$0xff] %v2637
    %s2718 = scalar_lea.vmem [#allocation1], 1
    %2719 = vst [vmem:[%s2718] ss:$9 sm:$0xff] %v2701
    %s2720 = scalar_lea.vmem [#allocation1], 2
    %2721 = vst [vmem:[%s2720] ss:$9 sm:$0xff] %v2702
    %s2722 = scalar_lea.vmem [#allocation1], 3
    %2723 = vst [vmem:[%s2722] ss:$9 sm:$0xff] %v2703
    %s2724 = scalar_lea.vmem [#allocation1], 4
    %2725 = vst [vmem:[%s2724] ss:$9 sm:$0xff] %v2704
    %s2726 = scalar_lea.vmem [#allocation1], 5
    %2727 = vst [vmem:[%s2726] ss:$9 sm:$0xff] %v2656
    %s2728 = scalar_lea.vmem [#allocation1], 6
    %2729 = vst [vmem:[%s2728] ss:$9 sm:$0xff] %v2705
    %s2730 = scalar_lea.vmem [#allocation1], 7
    %2731 = vst [vmem:[%s2730] ss:$9 sm:$0xff] %v2706
    %v2732 = vld [vmem:[#allocation1] sm:$0xff]
    %2733 = vst [vmem:[#allocation1] ss:$9 sm:$0xff] %v2707
    %2734 = vst [vmem:[%s2718] ss:$9 sm:$0xff] %v2708
    %2735 = vst [vmem:[%s2720] ss:$9 sm:$0xff] %v2675
    %2736 = vst [vmem:[%s2722] ss:$9 sm:$0xff] %v2709
    %2737 = vst [vmem:[%s2724] ss:$9 sm:$0xff] %v2710
    %2738 = vst [vmem:[%s2726] ss:$9 sm:$0xff] %v2711
    %2739 = vst [vmem:[%s2728] ss:$9 sm:$0xff] %v2712
    %2740 = vst [vmem:[%s2730] ss:$9 sm:$0xff] %v2694
    %v2741 = vld [vmem:[#allocation1] sm:$0xff]
    %2742 = vst [vmem:[#allocation1] ss:$9 sm:$0xff] %v2713
    %2743 = vst [vmem:[%s2718] ss:$9 sm:$0xff] %v2714
    %2744 = vst [vmem:[%s2720] ss:$9 sm:$0xff] %v2715
    %2745 = vst [vmem:[%s2722] ss:$9 sm:$0xff] %v2716
    %v2746 = vld [vmem:[#allocation1] sm:$0xff]
    %v2750 = vpack.c.bf16 %v2741, %v2732
    %v2751 = vpack.c.bf16 %v2746, %v2746
    %v2754 = vunpack.c.l.b16 %v283
    %v2755 = vunpack.c.l.b16 %v284
    %v2756 = vpack.c.b16 %v2755, %v2754
    %2757 = vrot.lane.b32.xlu0 %v2756, 64
    %v2758 = vpop.permute.xlu0 %2757
    %v2761 = vsel %vm2065, %v2750, 0
    %v2764 = vsel %vm2065, %v2751, 0
    %2766 = vmatpush.bf16.msra.mxu0 0
    %2767 = vmatpush.bf16.msra.mxu0 0
    %2768 = vmatpush.bf16.msra.mxu0 0
    %2769 = vmatpush.bf16.msra.mxu0 0
    %2770 = vmatpush.bf16.msra.mxu0 0
    %2771 = vmatpush.bf16.msra.mxu0 0
    %2772 = vmatpush.bf16.msra.mxu0 0
    %2773 = vmatpush.bf16.msra.mxu0 %v2758
    %2774 = vmatmul.bf16.gmra.mxu0 %v2761
    %v2775 = vpop.f32.mrf.mxu0
    %v2776 = vadd.f32 0.0, %v2775
    %v2777 = vpop.f32.mrf.mxu0
    %v2778 = vadd.f32 0.0, %v2777
    %2779 = vmatmul.bf16.gmra.mxu0 %v2764
    %v2780 = vpop.f32.mrf.mxu0
    %v2781 = vadd.f32 0.0, %v2780
    %v2782 = vpop.f32.mrf.mxu0
    %2783 = vdwg.mxu0
    %v2786 = vunpack.c.l.b16 %v281
    %v2787 = vunpack.c.l.b16 %v282
    %v2788 = vpack.c.b16 %v2787, %v2786
    %2789 = vrot.lane.b32.xlu0 %v2788, 64
    %v2790 = vpop.permute.xlu0 %2789
    %v2793 = vsel %vm2065, %v2339, 0
    %v2796 = vsel %vm2065, %v2340, 0
    %2798 = vmatpush.bf16.msra.mxu0 0
    %2799 = vmatpush.bf16.msra.mxu0 0
    %2800 = vmatpush.bf16.msra.mxu0 0
    %2801 = vmatpush.bf16.msra.mxu0 0
    %2802 = vmatpush.bf16.msra.mxu0 0
    %2803 = vmatpush.bf16.msra.mxu0 0
    %2804 = vmatpush.bf16.msra.mxu0 0
    %2805 = vmatpush.bf16.msra.mxu0 %v2790
    %2806 = vmatmul.bf16.gmra.mxu0 %v2793
    %v2807 = vpop.f32.mrf.mxu0
    %v2808 = vadd.f32 %v2776, %v2807
    %v2809 = vpop.f32.mrf.mxu0
    %v2810 = vadd.f32 %v2778, %v2809
    %2811 = vmatmul.bf16.gmra.mxu0 %v2796
    %v2812 = vpop.f32.mrf.mxu0
    %v2813 = vadd.f32 %v2781, %v2812
    %v2814 = vpop.f32.mrf.mxu0
    %2815 = vdwg.mxu0
    %2816 = vst [vmem:[#allocation1] ss:$9 sm:$0xff] %v1915
    %s2817 = scalar_lea.vmem [#allocation1], 1
    %2818 = vst [vmem:[%s2817] ss:$9 sm:$0xff] %v1917
    %s2819 = scalar_lea.vmem [#allocation1], 2
    %2820 = vst [vmem:[%s2819] ss:$9 sm:$0xff] %v1919
    %s2821 = scalar_lea.vmem [#allocation1], 3
    %2822 = vst [vmem:[%s2821] ss:$9 sm:$0xff] %v1921
    %s2823 = scalar_lea.vmem [#allocation1], 4
    %2824 = vst [vmem:[%s2823] ss:$9 sm:$0xff] %v1923
    %v2825 = vld [vmem:[#allocation1] sm:$0xff]
    %2826 = vst [vmem:[#allocation1] ss:$9 sm:$0xff] %v1925
    %2827 = vst [vmem:[%s2817] ss:$9 sm:$0xff] %v1927
    %2828 = vst [vmem:[%s2819] ss:$9 sm:$0xff] %v1929
    %2829 = vst [vmem:[%s2821] ss:$9 sm:$0xff] %v1930
    %2830 = vst [vmem:[%s2823] ss:$9 sm:$0xff] %v1932
    %v2831 = vld [vmem:[#allocation1] sm:$0xff]
    %2832 = vst [vmem:[#allocation1] ss:$9 sm:$0xff] %v1934
    %2833 = vst [vmem:[%s2817] ss:$9 sm:$0xff] %v1936
    %2834 = vst [vmem:[%s2819] ss:$9 sm:$0xff] %v1938
    %2835 = vst [vmem:[%s2821] ss:$9 sm:$0xff] %v1940
    %2836 = vst [vmem:[%s2823] ss:$9 sm:$0xff] %v1942
    %v2837 = vld [vmem:[#allocation1] sm:$0xff]
    %2838 = vst [vmem:[#allocation1] ss:$9 sm:$0xff] %v1944
    %2839 = vst [vmem:[%s2817] ss:$9 sm:$0xff] %v1945
    %2840 = vst [vmem:[%s2819] ss:$9 sm:$0xff] %v1947
    %2841 = vst [vmem:[%s2821] ss:$9 sm:$0xff] %v1949
    %2842 = vst [vmem:[%s2823] ss:$9 sm:$0xff] %v1951
    %v2843 = vld [vmem:[#allocation1] sm:$0xff]
    %v2848 = vpack.c.bf16 %v2825, %v2825
    %v2849 = vpack.c.bf16 %v2831, %v2831
    %v2850 = vpack.c.bf16 %v2837, %v2837
    %v2851 = vpack.c.bf16 %v2843, %v2843
    %2852 = vst [vmem:[#allocation1] ss:$9 sm:$0xff] %v1915
    %s2853 = scalar_lea.vmem [#allocation1], 1
    %2854 = vst [vmem:[%s2853] ss:$9 sm:$0xff] %v1917
    %s2855 = scalar_lea.vmem [#allocation1], 2
    %2856 = vst [vmem:[%s2855] ss:$9 sm:$0xff] %v1919
    %s2857 = scalar_lea.vmem [#allocation1], 3
    %2858 = vst [vmem:[%s2857] ss:$9 sm:$0xff] %v1921
    %s2859 = scalar_lea.vmem [#allocation1], 4
    %2860 = vst [vmem:[%s2859] ss:$9 sm:$0xff] %v1923
    %v2861 = vld [vmem:[#allocation1] sm:$0xff]
    %2862 = vst [vmem:[#allocation1] ss:$9 sm:$0xff] %v1925
    %2863 = vst [vmem:[%s2853] ss:$9 sm:$0xff] %v1927
    %2864 = vst [vmem:[%s2855] ss:$9 sm:$0xff] %v1929
    %2865 = vst [vmem:[%s2857] ss:$9 sm:$0xff] %v1930
    %2866 = vst [vmem:[%s2859] ss:$9 sm:$0xff] %v1932
    %v2867 = vld [vmem:[#allocation1] sm:$0xff]
    %2868 = vst [vmem:[#allocation1] ss:$9 sm:$0xff] %v1934
    %2869 = vst [vmem:[%s2853] ss:$9 sm:$0xff] %v1936
    %2870 = vst [vmem:[%s2855] ss:$9 sm:$0xff] %v1938
    %2871 = vst [vmem:[%s2857] ss:$9 sm:$0xff] %v1940
    %2872 = vst [vmem:[%s2859] ss:$9 sm:$0xff] %v1942
    %v2873 = vld [vmem:[#allocation1] sm:$0xff]
    %2874 = vst [vmem:[#allocation1] ss:$9 sm:$0xff] %v1944
    %2875 = vst [vmem:[%s2853] ss:$9 sm:$0xff] %v1945
    %2876 = vst [vmem:[%s2855] ss:$9 sm:$0xff] %v1947
    %2877 = vst [vmem:[%s2857] ss:$9 sm:$0xff] %v1949
    %2878 = vst [vmem:[%s2859] ss:$9 sm:$0xff] %v1951
    %v2879 = vld [vmem:[#allocation1] sm:$0xff]
    %v2884 = vpack.c.bf16 %v2861, %v2861
    %v2885 = vpack.c.bf16 %v2867, %v2867
    %v2886 = vpack.c.bf16 %v2873, %v2873
    %v2887 = vpack.c.bf16 %v2879, %v2879
    %2888 = vst [vmem:[#allocation1] ss:$9 sm:$0xff] %v1915
    %s2889 = scalar_lea.vmem [#allocation1], 1
    %2890 = vst [vmem:[%s2889] ss:$9 sm:$0xff] %v1917
    %s2891 = scalar_lea.vmem [#allocation1], 2
    %2892 = vst [vmem:[%s2891] ss:$9 sm:$0xff] %v1919
    %s2893 = scalar_lea.vmem [#allocation1], 3
    %2894 = vst [vmem:[%s2893] ss:$9 sm:$0xff] %v1921
    %s2895 = scalar_lea.vmem [#allocation1], 4
    %2896 = vst [vmem:[%s2895] ss:$9 sm:$0xff] %v1923
    %v2897 = vld [vmem:[#allocation1 + $0x9] sm:$0xff]
    %2898 = vst [vmem:[#allocation1] ss:$9 sm:$0xff] %v1925
    %2899 = vst [vmem:[%s2889] ss:$9 sm:$0xff] %v1927
    %2900 = vst [vmem:[%s2891] ss:$9 sm:$0xff] %v1929
    %2901 = vst [vmem:[%s2893] ss:$9 sm:$0xff] %v1930
    %2902 = vst [vmem:[%s2895] ss:$9 sm:$0xff] %v1932
    %v2903 = vld [vmem:[#allocation1 + $0x9] sm:$0xff]
    %2904 = vst [vmem:[#allocation1] ss:$9 sm:$0xff] %v1934
    %2905 = vst [vmem:[%s2889] ss:$9 sm:$0xff] %v1936
    %2906 = vst [vmem:[%s2891] ss:$9 sm:$0xff] %v1938
    %2907 = vst [vmem:[%s2893] ss:$9 sm:$0xff] %v1940
    %2908 = vst [vmem:[%s2895] ss:$9 sm:$0xff] %v1942
    %v2909 = vld [vmem:[#allocation1 + $0x9] sm:$0xff]
    %2910 = vst [vmem:[#allocation1] ss:$9 sm:$0xff] %v1944
    %2911 = vst [vmem:[%s2889] ss:$9 sm:$0xff] %v1945
    %2912 = vst [vmem:[%s2891] ss:$9 sm:$0xff] %v1947
    %2913 = vst [vmem:[%s2893] ss:$9 sm:$0xff] %v1949
    %2914 = vst [vmem:[%s2895] ss:$9 sm:$0xff] %v1951
    %v2915 = vld [vmem:[#allocation1 + $0x9] sm:$0xff]
    %2916 = vrot.lane.b32.xlu0 %v2897, 96
    %v2917 = vpop.permute.xlu0 %2916
    %2918 = vrot.lane.b32.xlu0 %v2903, 96
    %v2919 = vpop.permute.xlu0 %2918
    %2920 = vrot.lane.b32.xlu0 %v2909, 96
    %v2921 = vpop.permute.xlu0 %2920
    %2922 = vrot.lane.b32.xlu0 %v2915, 96
    %v2923 = vpop.permute.xlu0 %2922
    %v2928 = vpack.c.bf16 %v2917, %v2917
    %v2929 = vpack.c.bf16 %v2919, %v2919
    %v2930 = vpack.c.bf16 %v2921, %v2921
    %v2931 = vpack.c.bf16 %v2923, %v2923
    %v2933 = vunpack.c.l.b16 %v2848
    %v2934 = vpack.c.b16 %v2933, %v2933
    %2935 = vrot.lane.b32.xlu0 %v2934, 96
    %v2936 = vpop.permute.xlu0 %2935
    %v2938 = vunpack.c.l.b16 %v2884
    %v2939 = vpack.c.b16 %v2938, %v2938
    %2940 = vrot.lane.b32.xlu0 %v2939, 32
    %v2941 = vpop.permute.xlu0 %2940
    %v2943 = vsel %vm2065, %v2936, 0
    %v2946 = vsel %vm2065, %v2941, 0
    %2948 = vmatpush.bf16.xpose.msra.mxu0 0
    %2949 = vmatpush.bf16.xpose.msra.mxu0 0
    %2950 = vmatpush.bf16.xpose.msra.mxu0 0
    %2951 = vmatpush.bf16.xpose.msra.mxu0 0
    %2952 = vmatpush.bf16.xpose.msra.mxu0 0
    %2953 = vmatpush.bf16.xpose.msra.mxu0 0
    %2954 = vmatpush.bf16.xpose.msra.mxu0 0
    %2955 = vmatpush.bf16.xpose.msra.mxu0 %v2946
    %2956 = vmatmul.bf16.gmra.mxu0 %v2943
    %v2957 = vpop.f32.mrf.mxu0
    %v2958 = vadd.f32 0.0, %v2957
    %v2959 = vpop.f32.mrf.mxu0
    %2960 = vdwg.mxu0
    %v2962 = vunpack.c.l.b16 %v2849
    %v2963 = vpack.c.b16 %v2962, %v2962
    %2964 = vrot.lane.b32.xlu0 %v2963, 96
    %v2965 = vpop.permute.xlu0 %2964
    %v2967 = vunpack.c.l.b16 %v2885
    %v2968 = vpack.c.b16 %v2967, %v2967
    %2969 = vrot.lane.b32.xlu0 %v2968, 32
    %v2970 = vpop.permute.xlu0 %2969
    %v2972 = vsel %vm2065, %v2965, 0
    %v2975 = vsel %vm2065, %v2970, 0
    %2977 = vmatpush.bf16.xpose.msra.mxu0 0
    %2978 = vmatpush.bf16.xpose.msra.mxu0 0
    %2979 = vmatpush.bf16.xpose.msra.mxu0 0
    %2980 = vmatpush.bf16.xpose.msra.mxu0 0
    %2981 = vmatpush.bf16.xpose.msra.mxu0 0
    %2982 = vmatpush.bf16.xpose.msra.mxu0 0
    %2983 = vmatpush.bf16.xpose.msra.mxu0 0
    %2984 = vmatpush.bf16.xpose.msra.mxu0 %v2975
    %2985 = vmatmul.bf16.gmra.mxu0 %v2972
    %v2986 = vpop.f32.mrf.mxu0
    %v2987 = vadd.f32 0.0, %v2986
    %v2988 = vpop.f32.mrf.mxu0
    %2989 = vdwg.mxu0
    %v2991 = vunpack.c.l.b16 %v2850
    %v2992 = vpack.c.b16 %v2991, %v2991
    %2993 = vrot.lane.b32.xlu0 %v2992, 96
    %v2994 = vpop.permute.xlu0 %2993
    %v2996 = vunpack.c.l.b16 %v2886
    %v2997 = vpack.c.b16 %v2996, %v2996
    %2998 = vrot.lane.b32.xlu0 %v2997, 32
    %v2999 = vpop.permute.xlu0 %2998
    %v3001 = vsel %vm2065, %v2994, 0
    %v3004 = vsel %vm2065, %v2999, 0
    %3006 = vmatpush.bf16.xpose.msra.mxu0 0
    %3007 = vmatpush.bf16.xpose.msra.mxu0 0
    %3008 = vmatpush.bf16.xpose.msra.mxu0 0
    %3009 = vmatpush.bf16.xpose.msra.mxu0 0
    %3010 = vmatpush.bf16.xpose.msra.mxu0 0
    %3011 = vmatpush.bf16.xpose.msra.mxu0 0
    %3012 = vmatpush.bf16.xpose.msra.mxu0 0
    %3013 = vmatpush.bf16.xpose.msra.mxu0 %v3004
    %3014 = vmatmul.bf16.gmra.mxu0 %v3001
    %v3015 = vpop.f32.mrf.mxu0
    %v3016 = vadd.f32 0.0, %v3015
    %v3017 = vpop.f32.mrf.mxu0
    %3018 = vdwg.mxu0
    %v3020 = vunpack.c.l.b16 %v2851
    %v3021 = vpack.c.b16 %v3020, %v3020
    %3022 = vrot.lane.b32.xlu0 %v3021, 96
    %v3023 = vpop.permute.xlu0 %3022
    %v3025 = vunpack.c.l.b16 %v2887
    %v3026 = vpack.c.b16 %v3025, %v3025
    %3027 = vrot.lane.b32.xlu0 %v3026, 32
    %v3028 = vpop.permute.xlu0 %3027
    %v3030 = vsel %vm2065, %v3023, 0
    %v3033 = vsel %vm2065, %v3028, 0
    %3035 = vmatpush.bf16.xpose.msra.mxu0 0
    %3036 = vmatpush.bf16.xpose.msra.mxu0 0
    %3037 = vmatpush.bf16.xpose.msra.mxu0 0
    %3038 = vmatpush.bf16.xpose.msra.mxu0 0
    %3039 = vmatpush.bf16.xpose.msra.mxu0 0
    %3040 = vmatpush.bf16.xpose.msra.mxu0 0
    %3041 = vmatpush.bf16.xpose.msra.mxu0 0
    %3042 = vmatpush.bf16.xpose.msra.mxu0 %v3033
    %3043 = vmatmul.bf16.gmra.mxu0 %v3030
    %v3044 = vpop.f32.mrf.mxu0
    %v3045 = vadd.f32 0.0, %v3044
    %v3046 = vpop.f32.mrf.mxu0
    %3047 = vdwg.mxu0
    %v3048 = vsel %vm2157, %v2958, -inf
    %3049 = vmax.xlane.f32.xlu0 %v3048
    %v3050 = vpop.xlane.xlu0 %3049
    %v3051 = vsel %vm2157, %v2987, -inf
    %3052 = vmax.xlane.f32.xlu0 %v3051
    %v3053 = vpop.xlane.xlu0 %3052
    %v3054 = vsel %vm2157, %v3016, -inf
    %3055 = vmax.xlane.f32.xlu0 %v3054
    %v3056 = vpop.xlane.xlu0 %3055
    %v3057 = vsel %vm2157, %v3045, -inf
    %3058 = vmax.xlane.f32.xlu0 %v3057
    %v3059 = vpop.xlane.xlu0 %3058
    %v3060 = vsub.f32 %v2958, %v3050
    %v3061 = vsub.f32 %v2987, %v3053
    %v3062 = vsub.f32 %v3016, %v3056
    %v3063 = vsub.f32 %v3045, %v3059
    %v3064 = vmul.f32 %v3060, 1.442695
    %v3065 = vpow.pop %v3064
    %v3066 = vmul.f32 %v3061, 1.442695
    %v3067 = vpow.pop %v3066
    %v3068 = vmul.f32 %v3062, 1.442695
    %v3069 = vpow.pop %v3068
    %v3070 = vmul.f32 %v3063, 1.442695
    %v3071 = vpow.pop %v3070
    %v3072 = vsel %vm2157, %v3065, 0.0
    %3073 = vadd.xlane.f32.xlu0 %v3072
    %v3074 = vpop.xlane.xlu0 %3073
    %v3075 = vsel %vm2157, %v3067, 0.0
    %3076 = vadd.xlane.f32.xlu0 %v3075
    %v3077 = vpop.xlane.xlu0 %3076
    %v3078 = vsel %vm2157, %v3069, 0.0
    %3079 = vadd.xlane.f32.xlu0 %v3078
    %v3080 = vpop.xlane.xlu0 %3079
    %v3081 = vsel %vm2157, %v3071, 0.0
    %3082 = vadd.xlane.f32.xlu0 %v3081
    %v3083 = vpop.xlane.xlu0 %3082
    %v3084 = vrcp.pop %v3074
    %v3085 = vrcp.pop %v3077
    %v3086 = vrcp.pop %v3080
    %v3087 = vrcp.pop %v3083
    %v3088 = vmul.f32 %v3065, %v3084
    %v3089 = vmul.f32 %v3067, %v3085
    %v3090 = vmul.f32 %v3069, %v3086
    %v3091 = vmul.f32 %v3071, %v3087
    %v3092 = vpack.c.bf16 %v3088, %v3088
    %v3093 = vpack.c.bf16 %v3089, %v3089
    %v3094 = vpack.c.bf16 %v3090, %v3090
    %v3095 = vpack.c.bf16 %v3091, %v3091
    %v3097 = vsel %vm2206, %v3092, 0
    %v3100 = vand.u32 %v2928, %v2212
    %3102 = vmatpush.bf16.msra.mxu0 0
    %3103 = vmatpush.bf16.msra.mxu0 0
    %3104 = vmatpush.bf16.msra.mxu0 0
    %3105 = vmatpush.bf16.msra.mxu0 0
    %3106 = vmatpush.bf16.msra.mxu0 0
    %3107 = vmatpush.bf16.msra.mxu0 0
    %3108 = vmatpush.bf16.msra.mxu0 0
    %3109 = vmatpush.bf16.msra.mxu0 %v3100
    %3110 = vmatmul.bf16.gmra.mxu0 %v3097
    %v3111 = vpop.f32.mrf.mxu0
    %v3112 = vadd.f32 0.0, %v3111
    %v3113 = vpop.f32.mrf.mxu0
    %3114 = vdwg.mxu0
    %v3116 = vsel %vm2206, %v3093, 0
    %v3119 = vand.u32 %v2929, %v2212
    %3121 = vmatpush.bf16.msra.mxu0 0
    %3122 = vmatpush.bf16.msra.mxu0 0
    %3123 = vmatpush.bf16.msra.mxu0 0
    %3124 = vmatpush.bf16.msra.mxu0 0
    %3125 = vmatpush.bf16.msra.mxu0 0
    %3126 = vmatpush.bf16.msra.mxu0 0
    %3127 = vmatpush.bf16.msra.mxu0 0
    %3128 = vmatpush.bf16.msra.mxu0 %v3119
    %3129 = vmatmul.bf16.gmra.mxu0 %v3116
    %v3130 = vpop.f32.mrf.mxu0
    %v3131 = vadd.f32 0.0, %v3130
    %v3132 = vpop.f32.mrf.mxu0
    %3133 = vdwg.mxu0
    %v3135 = vsel %vm2206, %v3094, 0
    %v3138 = vand.u32 %v2930, %v2212
    %3140 = vmatpush.bf16.msra.mxu0 0
    %3141 = vmatpush.bf16.msra.mxu0 0
    %3142 = vmatpush.bf16.msra.mxu0 0
    %3143 = vmatpush.bf16.msra.mxu0 0
    %3144 = vmatpush.bf16.msra.mxu0 0
    %3145 = vmatpush.bf16.msra.mxu0 0
    %3146 = vmatpush.bf16.msra.mxu0 0
    %3147 = vmatpush.bf16.msra.mxu0 %v3138
    %3148 = vmatmul.bf16.gmra.mxu0 %v3135
    %v3149 = vpop.f32.mrf.mxu0
    %v3150 = vadd.f32 0.0, %v3149
    %v3151 = vpop.f32.mrf.mxu0
    %3152 = vdwg.mxu0
    %v3154 = vsel %vm2206, %v3095, 0
    %v3157 = vand.u32 %v2931, %v2212
    %3159 = vmatpush.bf16.msra.mxu0 0
    %3160 = vmatpush.bf16.msra.mxu0 0
    %3161 = vmatpush.bf16.msra.mxu0 0
    %3162 = vmatpush.bf16.msra.mxu0 0
    %3163 = vmatpush.bf16.msra.mxu0 0
    %3164 = vmatpush.bf16.msra.mxu0 0
    %3165 = vmatpush.bf16.msra.mxu0 0
    %3166 = vmatpush.bf16.msra.mxu0 %v3157
    %3167 = vmatmul.bf16.gmra.mxu0 %v3154
    %v3168 = vpop.f32.mrf.mxu0
    %v3169 = vadd.f32 0.0, %v3168
    %v3170 = vpop.f32.mrf.mxu0
    %3171 = vdwg.mxu0
    %v3176 = vrot.slane %v3112, 1
    %v3177 = vrot.slane %v3112, 2
    %v3178 = vrot.slane %v3112, 3
    %v3179 = vrot.slane %v3112, 4
    %v3180 = vrot.slane %v3131, 1
    %v3181 = vrot.slane %v3131, 2
    %v3182 = vrot.slane %v3131, 3
    %v3183 = vrot.slane %v3131, 4
    %v3184 = vrot.slane %v3150, 1
    %v3185 = vrot.slane %v3150, 2
    %v3186 = vrot.slane %v3150, 3
    %v3187 = vrot.slane %v3150, 4
    %v3188 = vrot.slane %v3169, 1
    %v3189 = vrot.slane %v3169, 2
    %v3190 = vrot.slane %v3169, 3
    %v3191 = vrot.slane %v3169, 4
    %3192 = vst [vmem:[#allocation1] ss:$9 sm:$0xff] %v3112
    %s3193 = scalar_lea.vmem [#allocation1], 1
    %3194 = vst [vmem:[%s3193] ss:$9 sm:$0xff] %v3176
    %s3195 = scalar_lea.vmem [#allocation1], 2
    %3196 = vst [vmem:[%s3195] ss:$9 sm:$0xff] %v3177
    %s3197 = scalar_lea.vmem [#allocation1], 3
    %3198 = vst [vmem:[%s3197] ss:$9 sm:$0xff] %v3178
    %s3199 = scalar_lea.vmem [#allocation1], 4
    %3200 = vst [vmem:[%s3199] ss:$9 sm:$0xff] %v3179
    %s3201 = scalar_lea.vmem [#allocation1], 5
    %3202 = vst [vmem:[%s3201] ss:$9 sm:$0xff] %v3131
    %s3203 = scalar_lea.vmem [#allocation1], 6
    %3204 = vst [vmem:[%s3203] ss:$9 sm:$0xff] %v3180
    %s3205 = scalar_lea.vmem [#allocation1], 7
    %3206 = vst [vmem:[%s3205] ss:$9 sm:$0xff] %v3181
    %v3207 = vld [vmem:[#allocation1] sm:$0xff]
    %3208 = vst [vmem:[#allocation1] ss:$9 sm:$0xff] %v3182
    %3209 = vst [vmem:[%s3193] ss:$9 sm:$0xff] %v3183
    %3210 = vst [vmem:[%s3195] ss:$9 sm:$0xff] %v3150
    %3211 = vst [vmem:[%s3197] ss:$9 sm:$0xff] %v3184
    %3212 = vst [vmem:[%s3199] ss:$9 sm:$0xff] %v3185
    %3213 = vst [vmem:[%s3201] ss:$9 sm:$0xff] %v3186
    %3214 = vst [vmem:[%s3203] ss:$9 sm:$0xff] %v3187
    %3215 = vst [vmem:[%s3205] ss:$9 sm:$0xff] %v3169
    %v3216 = vld [vmem:[#allocation1] sm:$0xff]
    %3217 = vst [vmem:[#allocation1] ss:$9 sm:$0xff] %v3188
    %3218 = vst [vmem:[%s3193] ss:$9 sm:$0xff] %v3189
    %3219 = vst [vmem:[%s3195] ss:$9 sm:$0xff] %v3190
    %3220 = vst [vmem:[%s3197] ss:$9 sm:$0xff] %v3191
    %v3221 = vld [vmem:[#allocation1] sm:$0xff]
    %v3225 = vpack.c.bf16 %v3216, %v3207
    %v3226 = vpack.c.bf16 %v3221, %v3221
    %v3229 = vunpack.c.l.b16 %v285
    %v3230 = vunpack.c.l.b16 %v286
    %v3231 = vpack.c.b16 %v3230, %v3229
    %3232 = vrot.lane.b32.xlu0 %v3231, 64
    %v3233 = vpop.permute.xlu0 %3232
    %v3236 = vsel %vm2065, %v3225, 0
    %v3239 = vsel %vm2065, %v3226, 0
    %3241 = vmatpush.bf16.msra.mxu0 0
    %3242 = vmatpush.bf16.msra.mxu0 0
    %3243 = vmatpush.bf16.msra.mxu0 0
    %3244 = vmatpush.bf16.msra.mxu0 0
    %3245 = vmatpush.bf16.msra.mxu0 0
    %3246 = vmatpush.bf16.msra.mxu0 0
    %3247 = vmatpush.bf16.msra.mxu0 0
    %3248 = vmatpush.bf16.msra.mxu0 %v3233
    %3249 = vmatmul.bf16.gmra.mxu0 %v3236
    %v3250 = vpop.f32.mrf.mxu0
    %v3251 = vadd.f32 0.0, %v3250
    %v3252 = vpop.f32.mrf.mxu0
    %v3253 = vadd.f32 0.0, %v3252
    %3254 = vmatmul.bf16.gmra.mxu0 %v3239
    %v3255 = vpop.f32.mrf.mxu0
    %v3256 = vadd.f32 0.0, %v3255
    %v3257 = vpop.f32.mrf.mxu0
    %3258 = vdwg.mxu0
    %v3259 = vadd.f32 %v2808, %v3251
    %v3260 = vadd.f32 %v2810, %v3253
    %v3261 = vadd.f32 %v2813, %v3256
    %3262 = vst [vmem:[#allocation1] ss:$9 sm:$0xff] %v1915
    %s3263 = scalar_lea.vmem [#allocation1], 1
    %3264 = vst [vmem:[%s3263] ss:$9 sm:$0xff] %v1917
    %s3265 = scalar_lea.vmem [#allocation1], 2
    %3266 = vst [vmem:[%s3265] ss:$9 sm:$0xff] %v1919
    %s3267 = scalar_lea.vmem [#allocation1], 3
    %3268 = vst [vmem:[%s3267] ss:$9 sm:$0xff] %v1921
    %s3269 = scalar_lea.vmem [#allocation1], 4
    %3270 = vst [vmem:[%s3269] ss:$9 sm:$0xff] %v1923
    %v3271 = vld [vmem:[#allocation1] sm:$0xff]
    %3272 = vst [vmem:[#allocation1] ss:$9 sm:$0xff] %v1925
    %3273 = vst [vmem:[%s3263] ss:$9 sm:$0xff] %v1927
    %3274 = vst [vmem:[%s3265] ss:$9 sm:$0xff] %v1929
    %3275 = vst [vmem:[%s3267] ss:$9 sm:$0xff] %v1930
    %3276 = vst [vmem:[%s3269] ss:$9 sm:$0xff] %v1932
    %v3277 = vld [vmem:[#allocation1] sm:$0xff]
    %3278 = vst [vmem:[#allocation1] ss:$9 sm:$0xff] %v1934
    %3279 = vst [vmem:[%s3263] ss:$9 sm:$0xff] %v1936
    %3280 = vst [vmem:[%s3265] ss:$9 sm:$0xff] %v1938
    %3281 = vst [vmem:[%s3267] ss:$9 sm:$0xff] %v1940
    %3282 = vst [vmem:[%s3269] ss:$9 sm:$0xff] %v1942
    %v3283 = vld [vmem:[#allocation1] sm:$0xff]
    %3284 = vst [vmem:[#allocation1] ss:$9 sm:$0xff] %v1944
    %3285 = vst [vmem:[%s3263] ss:$9 sm:$0xff] %v1945
    %3286 = vst [vmem:[%s3265] ss:$9 sm:$0xff] %v1947
    %3287 = vst [vmem:[%s3267] ss:$9 sm:$0xff] %v1949
    %3288 = vst [vmem:[%s3269] ss:$9 sm:$0xff] %v1951
    %v3289 = vld [vmem:[#allocation1] sm:$0xff]
    %v3294 = vpack.c.bf16 %v3271, %v3271
    %v3295 = vpack.c.bf16 %v3277, %v3277
    %v3296 = vpack.c.bf16 %v3283, %v3283
    %v3297 = vpack.c.bf16 %v3289, %v3289
    %3298 = vst [vmem:[#allocation1] ss:$9 sm:$0xff] %v1915
    %s3299 = scalar_lea.vmem [#allocation1], 1
    %3300 = vst [vmem:[%s3299] ss:$9 sm:$0xff] %v1917
    %s3301 = scalar_lea.vmem [#allocation1], 2
    %3302 = vst [vmem:[%s3301] ss:$9 sm:$0xff] %v1919
    %s3303 = scalar_lea.vmem [#allocation1], 3
    %3304 = vst [vmem:[%s3303] ss:$9 sm:$0xff] %v1921
    %s3305 = scalar_lea.vmem [#allocation1], 4
    %3306 = vst [vmem:[%s3305] ss:$9 sm:$0xff] %v1923
    %v3307 = vld [vmem:[#allocation1] sm:$0xff]
    %3308 = vst [vmem:[#allocation1] ss:$9 sm:$0xff] %v1925
    %3309 = vst [vmem:[%s3299] ss:$9 sm:$0xff] %v1927
    %3310 = vst [vmem:[%s3301] ss:$9 sm:$0xff] %v1929
    %3311 = vst [vmem:[%s3303] ss:$9 sm:$0xff] %v1930
    %3312 = vst [vmem:[%s3305] ss:$9 sm:$0xff] %v1932
    %v3313 = vld [vmem:[#allocation1] sm:$0xff]
    %3314 = vst [vmem:[#allocation1] ss:$9 sm:$0xff] %v1934
    %3315 = vst [vmem:[%s3299] ss:$9 sm:$0xff] %v1936
    %3316 = vst [vmem:[%s3301] ss:$9 sm:$0xff] %v1938
    %3317 = vst [vmem:[%s3303] ss:$9 sm:$0xff] %v1940
    %3318 = vst [vmem:[%s3305] ss:$9 sm:$0xff] %v1942
    %v3319 = vld [vmem:[#allocation1] sm:$0xff]
    %3320 = vst [vmem:[#allocation1] ss:$9 sm:$0xff] %v1944
    %3321 = vst [vmem:[%s3299] ss:$9 sm:$0xff] %v1945
    %3322 = vst [vmem:[%s3301] ss:$9 sm:$0xff] %v1947
    %3323 = vst [vmem:[%s3303] ss:$9 sm:$0xff] %v1949
    %3324 = vst [vmem:[%s3305] ss:$9 sm:$0xff] %v1951
    %v3325 = vld [vmem:[#allocation1] sm:$0xff]
    %v3330 = vpack.c.bf16 %v3307, %v3307
    %v3331 = vpack.c.bf16 %v3313, %v3313
    %v3332 = vpack.c.bf16 %v3319, %v3319
    %v3333 = vpack.c.bf16 %v3325, %v3325
    %3334 = vst [vmem:[#allocation1] ss:$9 sm:$0xff] %v1915
    %s3335 = scalar_lea.vmem [#allocation1], 1
    %3336 = vst [vmem:[%s3335] ss:$9 sm:$0xff] %v1917
    %s3337 = scalar_lea.vmem [#allocation1], 2
    %3338 = vst [vmem:[%s3337] ss:$9 sm:$0xff] %v1919
    %s3339 = scalar_lea.vmem [#allocation1], 3
    %3340 = vst [vmem:[%s3339] ss:$9 sm:$0xff] %v1921
    %s3341 = scalar_lea.vmem [#allocation1], 4
    %3342 = vst [vmem:[%s3341] ss:$9 sm:$0xff] %v1923
    %v3343 = vld [vmem:[#allocation1 + $0x9] sm:$0xff]
    %3344 = vst [vmem:[#allocation1] ss:$9 sm:$0xff] %v1925
    %3345 = vst [vmem:[%s3335] ss:$9 sm:$0xff] %v1927
    %3346 = vst [vmem:[%s3337] ss:$9 sm:$0xff] %v1929
    %3347 = vst [vmem:[%s3339] ss:$9 sm:$0xff] %v1930
    %3348 = vst [vmem:[%s3341] ss:$9 sm:$0xff] %v1932
    %v3349 = vld [vmem:[#allocation1 + $0x9] sm:$0xff]
    %3350 = vst [vmem:[#allocation1] ss:$9 sm:$0xff] %v1934
    %3351 = vst [vmem:[%s3335] ss:$9 sm:$0xff] %v1936
    %3352 = vst [vmem:[%s3337] ss:$9 sm:$0xff] %v1938
    %3353 = vst [vmem:[%s3339] ss:$9 sm:$0xff] %v1940
    %3354 = vst [vmem:[%s3341] ss:$9 sm:$0xff] %v1942
    %v3355 = vld [vmem:[#allocation1 + $0x9] sm:$0xff]
    %3356 = vst [vmem:[#allocation1] ss:$9 sm:$0xff] %v1944
    %3357 = vst [vmem:[%s3335] ss:$9 sm:$0xff] %v1945
    %3358 = vst [vmem:[%s3337] ss:$9 sm:$0xff] %v1947
    %3359 = vst [vmem:[%s3339] ss:$9 sm:$0xff] %v1949
    %3360 = vst [vmem:[%s3341] ss:$9 sm:$0xff] %v1951
    %v3361 = vld [vmem:[#allocation1 + $0x9] sm:$0xff]
    %3362 = vrot.lane.b32.xlu0 %v3343, 80
    %v3363 = vpop.permute.xlu0 %3362
    %3364 = vrot.lane.b32.xlu0 %v3349, 80
    %v3365 = vpop.permute.xlu0 %3364
    %3366 = vrot.lane.b32.xlu0 %v3355, 80
    %v3367 = vpop.permute.xlu0 %3366
    %3368 = vrot.lane.b32.xlu0 %v3361, 80
    %v3369 = vpop.permute.xlu0 %3368
    %v3374 = vpack.c.bf16 %v3363, %v3363
    %v3375 = vpack.c.bf16 %v3365, %v3365
    %v3376 = vpack.c.bf16 %v3367, %v3367
    %v3377 = vpack.c.bf16 %v3369, %v3369
    %v3379 = vunpack.c.l.b16 %v3294
    %v3380 = vpack.c.b16 %v3379, %v3379
    %3381 = vrot.lane.b32.xlu0 %v3380, 80
    %v3382 = vpop.permute.xlu0 %3381
    %v3384 = vunpack.c.l.b16 %v3330
    %v3385 = vpack.c.b16 %v3384, %v3384
    %3386 = vrot.lane.b32.xlu0 %v3385, 16
    %v3387 = vpop.permute.xlu0 %3386
    %v3389 = vsel %vm2065, %v3382, 0
    %v3392 = vsel %vm2065, %v3387, 0
    %3394 = vmatpush.bf16.xpose.msra.mxu0 0
    %3395 = vmatpush.bf16.xpose.msra.mxu0 0
    %3396 = vmatpush.bf16.xpose.msra.mxu0 0
    %3397 = vmatpush.bf16.xpose.msra.mxu0 0
    %3398 = vmatpush.bf16.xpose.msra.mxu0 0
    %3399 = vmatpush.bf16.xpose.msra.mxu0 0
    %3400 = vmatpush.bf16.xpose.msra.mxu0 0
    %3401 = vmatpush.bf16.xpose.msra.mxu0 %v3392
    %3402 = vmatmul.bf16.gmra.mxu0 %v3389
    %v3403 = vpop.f32.mrf.mxu0
    %v3404 = vadd.f32 0.0, %v3403
    %v3405 = vpop.f32.mrf.mxu0
    %3406 = vdwg.mxu0
    %v3408 = vunpack.c.l.b16 %v3295
    %v3409 = vpack.c.b16 %v3408, %v3408
    %3410 = vrot.lane.b32.xlu0 %v3409, 80
    %v3411 = vpop.permute.xlu0 %3410
    %v3413 = vunpack.c.l.b16 %v3331
    %v3414 = vpack.c.b16 %v3413, %v3413
    %3415 = vrot.lane.b32.xlu0 %v3414, 16
    %v3416 = vpop.permute.xlu0 %3415
    %v3418 = vsel %vm2065, %v3411, 0
    %v3421 = vsel %vm2065, %v3416, 0
    %3423 = vmatpush.bf16.xpose.msra.mxu0 0
    %3424 = vmatpush.bf16.xpose.msra.mxu0 0
    %3425 = vmatpush.bf16.xpose.msra.mxu0 0
    %3426 = vmatpush.bf16.xpose.msra.mxu0 0
    %3427 = vmatpush.bf16.xpose.msra.mxu0 0
    %3428 = vmatpush.bf16.xpose.msra.mxu0 0
    %3429 = vmatpush.bf16.xpose.msra.mxu0 0
    %3430 = vmatpush.bf16.xpose.msra.mxu0 %v3421
    %3431 = vmatmul.bf16.gmra.mxu0 %v3418
    %v3432 = vpop.f32.mrf.mxu0
    %v3433 = vadd.f32 0.0, %v3432
    %v3434 = vpop.f32.mrf.mxu0
    %3435 = vdwg.mxu0
    %v3437 = vunpack.c.l.b16 %v3296
    %v3438 = vpack.c.b16 %v3437, %v3437
    %3439 = vrot.lane.b32.xlu0 %v3438, 80
    %v3440 = vpop.permute.xlu0 %3439
    %v3442 = vunpack.c.l.b16 %v3332
    %v3443 = vpack.c.b16 %v3442, %v3442
    %3444 = vrot.lane.b32.xlu0 %v3443, 16
    %v3445 = vpop.permute.xlu0 %3444
    %v3447 = vsel %vm2065, %v3440, 0
    %v3450 = vsel %vm2065, %v3445, 0
    %3452 = vmatpush.bf16.xpose.msra.mxu0 0
    %3453 = vmatpush.bf16.xpose.msra.mxu0 0
    %3454 = vmatpush.bf16.xpose.msra.mxu0 0
    %3455 = vmatpush.bf16.xpose.msra.mxu0 0
    %3456 = vmatpush.bf16.xpose.msra.mxu0 0
    %3457 = vmatpush.bf16.xpose.msra.mxu0 0
    %3458 = vmatpush.bf16.xpose.msra.mxu0 0
    %3459 = vmatpush.bf16.xpose.msra.mxu0 %v3450
    %3460 = vmatmul.bf16.gmra.mxu0 %v3447
    %v3461 = vpop.f32.mrf.mxu0
    %v3462 = vadd.f32 0.0, %v3461
    %v3463 = vpop.f32.mrf.mxu0
    %3464 = vdwg.mxu0
    %v3466 = vunpack.c.l.b16 %v3297
    %v3467 = vpack.c.b16 %v3466, %v3466
    %3468 = vrot.lane.b32.xlu0 %v3467, 80
    %v3469 = vpop.permute.xlu0 %3468
    %v3471 = vunpack.c.l.b16 %v3333
    %v3472 = vpack.c.b16 %v3471, %v3471
    %3473 = vrot.lane.b32.xlu0 %v3472, 16
    %v3474 = vpop.permute.xlu0 %3473
    %v3476 = vsel %vm2065, %v3469, 0
    %v3479 = vsel %vm2065, %v3474, 0
    %3481 = vmatpush.bf16.xpose.msra.mxu0 0
    %3482 = vmatpush.bf16.xpose.msra.mxu0 0
    %3483 = vmatpush.bf16.xpose.msra.mxu0 0
    %3484 = vmatpush.bf16.xpose.msra.mxu0 0
    %3485 = vmatpush.bf16.xpose.msra.mxu0 0
    %3486 = vmatpush.bf16.xpose.msra.mxu0 0
    %3487 = vmatpush.bf16.xpose.msra.mxu0 0
    %3488 = vmatpush.bf16.xpose.msra.mxu0 %v3479
    %3489 = vmatmul.bf16.gmra.mxu0 %v3476
    %v3490 = vpop.f32.mrf.mxu0
    %v3491 = vadd.f32 0.0, %v3490
    %v3492 = vpop.f32.mrf.mxu0
    %3493 = vdwg.mxu0
    %v3494 = vsel %vm2157, %v3404, -inf
    %3495 = vmax.xlane.f32.xlu0 %v3494
    %v3496 = vpop.xlane.xlu0 %3495
    %v3497 = vsel %vm2157, %v3433, -inf
    %3498 = vmax.xlane.f32.xlu0 %v3497
    %v3499 = vpop.xlane.xlu0 %3498
    %v3500 = vsel %vm2157, %v3462, -inf
    %3501 = vmax.xlane.f32.xlu0 %v3500
    %v3502 = vpop.xlane.xlu0 %3501
    %v3503 = vsel %vm2157, %v3491, -inf
    %3504 = vmax.xlane.f32.xlu0 %v3503
    %v3505 = vpop.xlane.xlu0 %3504
    %v3506 = vsub.f32 %v3404, %v3496
    %v3507 = vsub.f32 %v3433, %v3499
    %v3508 = vsub.f32 %v3462, %v3502
    %v3509 = vsub.f32 %v3491, %v3505
    %v3510 = vmul.f32 %v3506, 1.442695
    %v3511 = vpow.pop %v3510
    %v3512 = vmul.f32 %v3507, 1.442695
    %v3513 = vpow.pop %v3512
    %v3514 = vmul.f32 %v3508, 1.442695
    %v3515 = vpow.pop %v3514
    %v3516 = vmul.f32 %v3509, 1.442695
    %v3517 = vpow.pop %v3516
    %v3518 = vsel %vm2157, %v3511, 0.0
    %3519 = vadd.xlane.f32.xlu0 %v3518
    %v3520 = vpop.xlane.xlu0 %3519
    %v3521 = vsel %vm2157, %v3513, 0.0
    %3522 = vadd.xlane.f32.xlu0 %v3521
    %v3523 = vpop.xlane.xlu0 %3522
    %v3524 = vsel %vm2157, %v3515, 0.0
    %3525 = vadd.xlane.f32.xlu0 %v3524
    %v3526 = vpop.xlane.xlu0 %3525
    %v3527 = vsel %vm2157, %v3517, 0.0
    %3528 = vadd.xlane.f32.xlu0 %v3527
    %v3529 = vpop.xlane.xlu0 %3528
    %v3530 = vrcp.pop %v3520
    %v3531 = vrcp.pop %v3523
    %v3532 = vrcp.pop %v3526
    %v3533 = vrcp.pop %v3529
    %v3534 = vmul.f32 %v3511, %v3530
    %v3535 = vmul.f32 %v3513, %v3531
    %v3536 = vmul.f32 %v3515, %v3532
    %v3537 = vmul.f32 %v3517, %v3533
    %v3538 = vpack.c.bf16 %v3534, %v3534
    %v3539 = vpack.c.bf16 %v3535, %v3535
    %v3540 = vpack.c.bf16 %v3536, %v3536
    %v3541 = vpack.c.bf16 %v3537, %v3537
    %v3543 = vsel %vm2206, %v3538, 0
    %v3546 = vand.u32 %v3374, %v2212
    %3548 = vmatpush.bf16.msra.mxu0 0
    %3549 = vmatpush.bf16.msra.mxu0 0
    %3550 = vmatpush.bf16.msra.mxu0 0
    %3551 = vmatpush.bf16.msra.mxu0 0
    %3552 = vmatpush.bf16.msra.mxu0 0
    %3553 = vmatpush.bf16.msra.mxu0 0
    %3554 = vmatpush.bf16.msra.mxu0 0
    %3555 = vmatpush.bf16.msra.mxu0 %v3546
    %3556 = vmatmul.bf16.gmra.mxu0 %v3543
    %v3557 = vpop.f32.mrf.mxu0
    %v3558 = vadd.f32 0.0, %v3557
    %v3559 = vpop.f32.mrf.mxu0
    %3560 = vdwg.mxu0
    %v3562 = vsel %vm2206, %v3539, 0
    %v3565 = vand.u32 %v3375, %v2212
    %3567 = vmatpush.bf16.msra.mxu0 0
    %3568 = vmatpush.bf16.msra.mxu0 0
    %3569 = vmatpush.bf16.msra.mxu0 0
    %3570 = vmatpush.bf16.msra.mxu0 0
    %3571 = vmatpush.bf16.msra.mxu0 0
    %3572 = vmatpush.bf16.msra.mxu0 0
    %3573 = vmatpush.bf16.msra.mxu0 0
    %3574 = vmatpush.bf16.msra.mxu0 %v3565
    %3575 = vmatmul.bf16.gmra.mxu0 %v3562
    %v3576 = vpop.f32.mrf.mxu0
    %v3577 = vadd.f32 0.0, %v3576
    %v3578 = vpop.f32.mrf.mxu0
    %3579 = vdwg.mxu0
    %v3581 = vsel %vm2206, %v3540, 0
    %v3584 = vand.u32 %v3376, %v2212
    %3586 = vmatpush.bf16.msra.mxu0 0
    %3587 = vmatpush.bf16.msra.mxu0 0
    %3588 = vmatpush.bf16.msra.mxu0 0
    %3589 = vmatpush.bf16.msra.mxu0 0
    %3590 = vmatpush.bf16.msra.mxu0 0
    %3591 = vmatpush.bf16.msra.mxu0 0
    %3592 = vmatpush.bf16.msra.mxu0 0
    %3593 = vmatpush.bf16.msra.mxu0 %v3584
    %3594 = vmatmul.bf16.gmra.mxu0 %v3581
    %v3595 = vpop.f32.mrf.mxu0
    %v3596 = vadd.f32 0.0, %v3595
    %v3597 = vpop.f32.mrf.mxu0
    %3598 = vdwg.mxu0
    %v3600 = vsel %vm2206, %v3541, 0
    %v3603 = vand.u32 %v3377, %v2212
    %3605 = vmatpush.bf16.msra.mxu0 0
    %3606 = vmatpush.bf16.msra.mxu0 0
    %3607 = vmatpush.bf16.msra.mxu0 0
    %3608 = vmatpush.bf16.msra.mxu0 0
    %3609 = vmatpush.bf16.msra.mxu0 0
    %3610 = vmatpush.bf16.msra.mxu0 0
    %3611 = vmatpush.bf16.msra.mxu0 0
    %3612 = vmatpush.bf16.msra.mxu0 %v3603
    %3613 = vmatmul.bf16.gmra.mxu0 %v3600
    %v3614 = vpop.f32.mrf.mxu0
    %v3615 = vadd.f32 0.0, %v3614
    %v3616 = vpop.f32.mrf.mxu0
    %3617 = vdwg.mxu0
    %v3622 = vrot.slane %v3558, 1
    %v3623 = vrot.slane %v3558, 2
    %v3624 = vrot.slane %v3558, 3
    %v3625 = vrot.slane %v3558, 4
    %v3626 = vrot.slane %v3577, 1
    %v3627 = vrot.slane %v3577, 2
    %v3628 = vrot.slane %v3577, 3
    %v3629 = vrot.slane %v3577, 4
    %v3630 = vrot.slane %v3596, 1
    %v3631 = vrot.slane %v3596, 2
    %v3632 = vrot.slane %v3596, 3
    %v3633 = vrot.slane %v3596, 4
    %v3634 = vrot.slane %v3615, 1
    %v3635 = vrot.slane %v3615, 2
    %v3636 = vrot.slane %v3615, 3
    %v3637 = vrot.slane %v3615, 4
    %3638 = vst [vmem:[#allocation1] ss:$9 sm:$0xff] %v3558
    %s3639 = scalar_lea.vmem [#allocation1], 1
    %3640 = vst [vmem:[%s3639] ss:$9 sm:$0xff] %v3622
    %s3641 = scalar_lea.vmem [#allocation1], 2
    %3642 = vst [vmem:[%s3641] ss:$9 sm:$0xff] %v3623
    %s3643 = scalar_lea.vmem [#allocation1], 3
    %3644 = vst [vmem:[%s3643] ss:$9 sm:$0xff] %v3624
    %s3645 = scalar_lea.vmem [#allocation1], 4
    %3646 = vst [vmem:[%s3645] ss:$9 sm:$0xff] %v3625
    %s3647 = scalar_lea.vmem [#allocation1], 5
    %3648 = vst [vmem:[%s3647] ss:$9 sm:$0xff] %v3577
    %s3649 = scalar_lea.vmem [#allocation1], 6
    %3650 = vst [vmem:[%s3649] ss:$9 sm:$0xff] %v3626
    %s3651 = scalar_lea.vmem [#allocation1], 7
    %3652 = vst [vmem:[%s3651] ss:$9 sm:$0xff] %v3627
    %v3653 = vld [vmem:[#allocation1] sm:$0xff]
    %3654 = vst [vmem:[#allocation1] ss:$9 sm:$0xff] %v3628
    %3655 = vst [vmem:[%s3639] ss:$9 sm:$0xff] %v3629
    %3656 = vst [vmem:[%s3641] ss:$9 sm:$0xff] %v3596
    %3657 = vst [vmem:[%s3643] ss:$9 sm:$0xff] %v3630
    %3658 = vst [vmem:[%s3645] ss:$9 sm:$0xff] %v3631
    %3659 = vst [vmem:[%s3647] ss:$9 sm:$0xff] %v3632
    %3660 = vst [vmem:[%s3649] ss:$9 sm:$0xff] %v3633
    %3661 = vst [vmem:[%s3651] ss:$9 sm:$0xff] %v3615
    %v3662 = vld [vmem:[#allocation1] sm:$0xff]
    %3663 = vst [vmem:[#allocation1] ss:$9 sm:$0xff] %v3634
    %3664 = vst [vmem:[%s3639] ss:$9 sm:$0xff] %v3635
    %3665 = vst [vmem:[%s3641] ss:$9 sm:$0xff] %v3636
    %3666 = vst [vmem:[%s3643] ss:$9 sm:$0xff] %v3637
    %v3667 = vld [vmem:[#allocation1] sm:$0xff]
    %v3671 = vpack.c.bf16 %v3662, %v3653
    %v3672 = vpack.c.bf16 %v3667, %v3667
    %v3675 = vunpack.c.l.b16 %v287
    %v3676 = vunpack.c.l.b16 %v288
    %v3677 = vpack.c.b16 %v3676, %v3675
    %3678 = vrot.lane.b32.xlu0 %v3677, 64
    %v3679 = vpop.permute.xlu0 %3678
    %v3682 = vsel %vm2065, %v3671, 0
    %v3685 = vsel %vm2065, %v3672, 0
    %3687 = vmatpush.bf16.msra.mxu0 0
    %3688 = vmatpush.bf16.msra.mxu0 0
    %3689 = vmatpush.bf16.msra.mxu0 0
    %3690 = vmatpush.bf16.msra.mxu0 0
    %3691 = vmatpush.bf16.msra.mxu0 0
    %3692 = vmatpush.bf16.msra.mxu0 0
    %3693 = vmatpush.bf16.msra.mxu0 0
    %3694 = vmatpush.bf16.msra.mxu0 %v3679
    %3695 = vmatmul.bf16.gmra.mxu0 %v3682
    %v3696 = vpop.f32.mrf.mxu0
    %v3697 = vadd.f32 0.0, %v3696
    %v3698 = vpop.f32.mrf.mxu0
    %v3699 = vadd.f32 0.0, %v3698
    %3700 = vmatmul.bf16.gmra.mxu0 %v3685
    %v3701 = vpop.f32.mrf.mxu0
    %v3702 = vadd.f32 0.0, %v3701
    %v3703 = vpop.f32.mrf.mxu0
    %3704 = vdwg.mxu0
    %v3705 = vadd.f32 %v3259, %v3697
    %v3706 = vadd.f32 %v3260, %v3699
    %v3707 = vadd.f32 %v3261, %v3702
    %v3711 = vrot.slane %v3705, 1
    %v3712 = vrot.slane %v3705, 2
    %v3713 = vrot.slane %v3705, 3
    %v3714 = vrot.slane %v3705, 4
    %v3715 = vrot.slane %v3705, 5
    %v3716 = vrot.slane %v3705, 6
    %v3717 = vrot.slane %v3705, 7
    %v3718 = vrot.slane %v3706, 1
    %v3719 = vrot.slane %v3706, 2
    %v3720 = vrot.slane %v3706, 3
    %v3721 = vrot.slane %v3706, 4
    %v3722 = vrot.slane %v3706, 5
    %v3723 = vrot.slane %v3706, 6
    %v3724 = vrot.slane %v3706, 7
    %v3725 = vrot.slane %v3707, 1
    %v3726 = vrot.slane %v3707, 2
    %v3727 = vrot.slane %v3707, 3
    %v3745 = vadd.f32 %v1328, %v3705
    %v3746 = vadd.f32 %v1329, %v3711
    %v3747 = vadd.f32 %v1330, %v3712
    %v3748 = vadd.f32 %v1331, %v3713
    %v3749 = vadd.f32 %v1332, %v3714
    %v3750 = vadd.f32 %v1333, %v3715
    %v3751 = vadd.f32 %v1334, %v3716
    %v3752 = vadd.f32 %v1335, %v3717
    %v3753 = vadd.f32 %v1336, %v3706
    %v3754 = vadd.f32 %v1337, %v3718
    %v3755 = vadd.f32 %v1338, %v3719
    %v3756 = vadd.f32 %v1339, %v3720
    %v3757 = vadd.f32 %v1340, %v3721
    %v3758 = vadd.f32 %v1341, %v3722
    %v3759 = vadd.f32 %v1342, %v3723
    %v3760 = vadd.f32 %v1343, %v3724
    %v3761 = vadd.f32 %v1344, %v3707
    %v3762 = vadd.f32 %v1345, %v3725
    %v3763 = vadd.f32 %v1346, %v3726
    %v3764 = vadd.f32 %v1347, %v3727
    %v3765 = vperm.slane %v36, 1
    %v3767 = vrot.slane %v3765, 1
    %v3768 = vrot.slane %v3765, 2
    %v3769 = vrot.slane %v3765, 3
    %v3770 = vrot.slane %v3765, 4
    %v3771 = vrot.slane %v3765, 5
    %v3772 = vrot.slane %v3765, 6
    %v3773 = vrot.slane %v3765, 7
    %v3781 = vadd.f32 %v3745, %v3765
    %v3782 = vadd.f32 %v3746, %v3767
    %v3783 = vadd.f32 %v3747, %v3768
    %v3784 = vadd.f32 %v3748, %v3769
    %v3785 = vadd.f32 %v3749, %v3770
    %v3786 = vadd.f32 %v3750, %v3771
    %v3787 = vadd.f32 %v3751, %v3772
    %v3788 = vadd.f32 %v3752, %v3773
    %v3789 = vadd.f32 %v3753, %v3765
    %v3790 = vadd.f32 %v3754, %v3767
    %v3791 = vadd.f32 %v3755, %v3768
    %v3792 = vadd.f32 %v3756, %v3769
    %v3793 = vadd.f32 %v3757, %v3770
    %v3794 = vadd.f32 %v3758, %v3771
    %v3795 = vadd.f32 %v3759, %v3772
    %v3796 = vadd.f32 %v3760, %v3773
    %v3797 = vadd.f32 %v3761, %v3765
    %v3798 = vadd.f32 %v3762, %v3767
    %v3799 = vadd.f32 %v3763, %v3768
    %v3800 = vadd.f32 %v3764, %v3769
    %3821 = vst [vmem:[#allocation1] ss:$9 sm:$0xff] %v3781
    %s3822 = scalar_lea.vmem [#allocation1], 1
    %3823 = vst [vmem:[%s3822] ss:$9 sm:$0xff] %v3782
    %s3824 = scalar_lea.vmem [#allocation1], 2
    %3825 = vst [vmem:[%s3824] ss:$9 sm:$0xff] %v3783
    %s3826 = scalar_lea.vmem [#allocation1], 3
    %3827 = vst [vmem:[%s3826] ss:$9 sm:$0xff] %v3784
    %s3828 = scalar_lea.vmem [#allocation1], 4
    %3829 = vst [vmem:[%s3828] ss:$9 sm:$0xff] %v3785
    %s3830 = scalar_lea.vmem [#allocation1], 5
    %3831 = vst [vmem:[%s3830] ss:$9 sm:$0xff] %v3786
    %s3832 = scalar_lea.vmem [#allocation1], 6
    %3833 = vst [vmem:[%s3832] ss:$9 sm:$0xff] %v3787
    %s3834 = scalar_lea.vmem [#allocation1], 7
    %3835 = vst [vmem:[%s3834] ss:$9 sm:$0xff] %v3788
    %v3836 = vld [vmem:[#allocation1] sm:$0xff]
    %3837 = vst [vmem:[#allocation1] ss:$9 sm:$0xff] %v3789
    %3838 = vst [vmem:[%s3822] ss:$9 sm:$0xff] %v3790
    %3839 = vst [vmem:[%s3824] ss:$9 sm:$0xff] %v3791
    %3840 = vst [vmem:[%s3826] ss:$9 sm:$0xff] %v3792
    %3841 = vst [vmem:[%s3828] ss:$9 sm:$0xff] %v3793
    %3842 = vst [vmem:[%s3830] ss:$9 sm:$0xff] %v3794
    %3843 = vst [vmem:[%s3832] ss:$9 sm:$0xff] %v3795
    %3844 = vst [vmem:[%s3834] ss:$9 sm:$0xff] %v3796
    %v3845 = vld [vmem:[#allocation1] sm:$0xff]
    %3846 = vst [vmem:[#allocation1] ss:$9 sm:$0xff] %v3797
    %3847 = vst [vmem:[%s3822] ss:$9 sm:$0xff] %v3798
    %3848 = vst [vmem:[%s3824] ss:$9 sm:$0xff] %v3799
    %3849 = vst [vmem:[%s3826] ss:$9 sm:$0xff] %v3800
    %v3850 = vld [vmem:[#allocation1] sm:$0xff]
    %v3854 = vsel %vm1011, %v3836, 0.0
    %3855 = vadd.xlane.f32.xlu0 %v3854
    %v3856 = vpop.xlane.xlu0 %3855
    %v3857 = vsel %vm1011, %v3845, 0.0
    %3858 = vadd.xlane.f32.xlu0 %v3857
    %v3859 = vpop.xlane.xlu0 %3858
    %v3860 = vsel %vm1018, %v3850, 0.0
    %3861 = vadd.xlane.f32.xlu0 %v3860
    %v3862 = vpop.xlane.xlu0 %3861
    %v3863 = vmul.f32 %v3856, %v1028
    %v3864 = vmul.f32 %v3859, %v1028
    %v3865 = vmul.f32 %v3862, %v1028
    %v3869 = vperm.slane %v3863, 0
    %v3870 = vperm.slane %v3863, 1
    %v3871 = vperm.slane %v3863, 2
    %v3872 = vperm.slane %v3863, 3
    %v3873 = vperm.slane %v3863, 4
    %v3874 = vperm.slane %v3863, 5
    %v3875 = vperm.slane %v3863, 6
    %v3876 = vperm.slane %v3863, 7
    %v3877 = vperm.slane %v3864, 0
    %v3878 = vperm.slane %v3864, 1
    %v3879 = vperm.slane %v3864, 2
    %v3880 = vperm.slane %v3864, 3
    %v3881 = vperm.slane %v3864, 4
    %v3882 = vperm.slane %v3864, 5
    %v3883 = vperm.slane %v3864, 6
    %v3884 = vperm.slane %v3864, 7
    %v3885 = vperm.slane %v3865, 0
    %v3886 = vperm.slane %v3865, 1
    %v3887 = vperm.slane %v3865, 2
    %v3888 = vperm.slane %v3865, 3
    %v3909 = vsub.f32 %v3781, %v3869
    %v3910 = vsub.f32 %v3782, %v3870
    %v3911 = vsub.f32 %v3783, %v3871
    %v3912 = vsub.f32 %v3784, %v3872
    %v3913 = vsub.f32 %v3785, %v3873
    %v3914 = vsub.f32 %v3786, %v3874
    %v3915 = vsub.f32 %v3787, %v3875
    %v3916 = vsub.f32 %v3788, %v3876
    %v3917 = vsub.f32 %v3789, %v3877
    %v3918 = vsub.f32 %v3790, %v3878
    %v3919 = vsub.f32 %v3791, %v3879
    %v3920 = vsub.f32 %v3792, %v3880
    %v3921 = vsub.f32 %v3793, %v3881
    %v3922 = vsub.f32 %v3794, %v3882
    %v3923 = vsub.f32 %v3795, %v3883
    %v3924 = vsub.f32 %v3796, %v3884
    %v3925 = vsub.f32 %v3797, %v3885
    %v3926 = vsub.f32 %v3798, %v3886
    %v3927 = vsub.f32 %v3799, %v3887
    %v3928 = vsub.f32 %v3800, %v3888
    %v3929 = vmul.f32 %v3909, %v3909
    %v3930 = vmul.f32 %v3910, %v3910
    %v3931 = vmul.f32 %v3911, %v3911
    %v3932 = vmul.f32 %v3912, %v3912
    %v3933 = vmul.f32 %v3913, %v3913
    %v3934 = vmul.f32 %v3914, %v3914
    %v3935 = vmul.f32 %v3915, %v3915
    %v3936 = vmul.f32 %v3916, %v3916
    %v3937 = vmul.f32 %v3917, %v3917
    %v3938 = vmul.f32 %v3918, %v3918
    %v3939 = vmul.f32 %v3919, %v3919
    %v3940 = vmul.f32 %v3920, %v3920
    %v3941 = vmul.f32 %v3921, %v3921
    %v3942 = vmul.f32 %v3922, %v3922
    %v3943 = vmul.f32 %v3923, %v3923
    %v3944 = vmul.f32 %v3924, %v3924
    %v3945 = vmul.f32 %v3925, %v3925
    %v3946 = vmul.f32 %v3926, %v3926
    %v3947 = vmul.f32 %v3927, %v3927
    %v3948 = vmul.f32 %v3928, %v3928
    %3969 = vst [vmem:[#allocation1] ss:$9 sm:$0xff] %v3929
    %s3970 = scalar_lea.vmem [#allocation1], 1
    %3971 = vst [vmem:[%s3970] ss:$9 sm:$0xff] %v3930
    %s3972 = scalar_lea.vmem [#allocation1], 2
    %3973 = vst [vmem:[%s3972] ss:$9 sm:$0xff] %v3931
    %s3974 = scalar_lea.vmem [#allocation1], 3
    %3975 = vst [vmem:[%s3974] ss:$9 sm:$0xff] %v3932
    %s3976 = scalar_lea.vmem [#allocation1], 4
    %3977 = vst [vmem:[%s3976] ss:$9 sm:$0xff] %v3933
    %s3978 = scalar_lea.vmem [#allocation1], 5
    %3979 = vst [vmem:[%s3978] ss:$9 sm:$0xff] %v3934
    %s3980 = scalar_lea.vmem [#allocation1], 6
    %3981 = vst [vmem:[%s3980] ss:$9 sm:$0xff] %v3935
    %s3982 = scalar_lea.vmem [#allocation1], 7
    %3983 = vst [vmem:[%s3982] ss:$9 sm:$0xff] %v3936
    %v3984 = vld [vmem:[#allocation1] sm:$0xff]
    %3985 = vst [vmem:[#allocation1] ss:$9 sm:$0xff] %v3937
    %3986 = vst [vmem:[%s3970] ss:$9 sm:$0xff] %v3938
    %3987 = vst [vmem:[%s3972] ss:$9 sm:$0xff] %v3939
    %3988 = vst [vmem:[%s3974] ss:$9 sm:$0xff] %v3940
    %3989 = vst [vmem:[%s3976] ss:$9 sm:$0xff] %v3941
    %3990 = vst [vmem:[%s3978] ss:$9 sm:$0xff] %v3942
    %3991 = vst [vmem:[%s3980] ss:$9 sm:$0xff] %v3943
    %3992 = vst [vmem:[%s3982] ss:$9 sm:$0xff] %v3944
    %v3993 = vld [vmem:[#allocation1] sm:$0xff]
    %3994 = vst [vmem:[#allocation1] ss:$9 sm:$0xff] %v3945
    %3995 = vst [vmem:[%s3970] ss:$9 sm:$0xff] %v3946
    %3996 = vst [vmem:[%s3972] ss:$9 sm:$0xff] %v3947
    %3997 = vst [vmem:[%s3974] ss:$9 sm:$0xff] %v3948
    %v3998 = vld [vmem:[#allocation1] sm:$0xff]
    %v4002 = vsel %vm1011, %v3984, 0.0
    %4003 = vadd.xlane.f32.xlu0 %v4002
    %v4004 = vpop.xlane.xlu0 %4003
    %v4005 = vsel %vm1011, %v3993, 0.0
    %4006 = vadd.xlane.f32.xlu0 %v4005
    %v4007 = vpop.xlane.xlu0 %4006
    %v4008 = vsel %vm1018, %v3998, 0.0
    %4009 = vadd.xlane.f32.xlu0 %v4008
    %v4010 = vpop.xlane.xlu0 %4009
    %v4011 = vmul.f32 %v4004, %v1028
    %v4012 = vmul.f32 %v4007, %v1028
    %v4013 = vmul.f32 %v4010, %v1028
    %v4014 = vadd.f32 %v4011, 1e-05
    %v4015 = vadd.f32 %v4012, 1e-05
    %v4016 = vadd.f32 %v4013, 1e-05
    %v4017 = vrsqrt.pop %v4014
    %v4018 = vmul.f32 %v4017, %v4014
    %v4019 = vmul.f32 %v4018, %v4017
    %v4020 = vmul.f32 0.5, %v4019
    %v4021 = vsub.f32 1.5, %v4020
    %v4022 = vmul.f32 %v4017, %v4021
    %vm4023 = vweird.f32 %v4014
    %vm4024 = vweird.f32 %v4017
    %vm4025 = vmor %vm4023, %vm4024
    %v4026 = vsel %vm4025, %v4017, %v4022
    %v4027 = vrsqrt.pop %v4015
    %v4028 = vmul.f32 %v4027, %v4015
    %v4029 = vmul.f32 %v4028, %v4027
    %v4030 = vmul.f32 0.5, %v4029
    %v4031 = vsub.f32 1.5, %v4030
    %v4032 = vmul.f32 %v4027, %v4031
    %vm4033 = vweird.f32 %v4015
    %vm4034 = vweird.f32 %v4027
    %vm4035 = vmor %vm4033, %vm4034
    %v4036 = vsel %vm4035, %v4027, %v4032
    %v4037 = vrsqrt.pop %v4016
    %v4038 = vmul.f32 %v4037, %v4016
    %v4039 = vmul.f32 %v4038, %v4037
    %v4040 = vmul.f32 0.5, %v4039
    %v4041 = vsub.f32 1.5, %v4040
    %v4042 = vmul.f32 %v4037, %v4041
    %vm4043 = vweird.f32 %v4016
    %vm4044 = vweird.f32 %v4037
    %vm4045 = vmor %vm4043, %vm4044
    %v4046 = vsel %vm4045, %v4037, %v4042
    %v4050 = vperm.slane %v4026, 0
    %v4051 = vperm.slane %v4026, 1
    %v4052 = vperm.slane %v4026, 2
    %v4053 = vperm.slane %v4026, 3
    %v4054 = vperm.slane %v4026, 4
    %v4055 = vperm.slane %v4026, 5
    %v4056 = vperm.slane %v4026, 6
    %v4057 = vperm.slane %v4026, 7
    %v4058 = vperm.slane %v4036, 0
    %v4059 = vperm.slane %v4036, 1
    %v4060 = vperm.slane %v4036, 2
    %v4061 = vperm.slane %v4036, 3
    %v4062 = vperm.slane %v4036, 4
    %v4063 = vperm.slane %v4036, 5
    %v4064 = vperm.slane %v4036, 6
    %v4065 = vperm.slane %v4036, 7
    %v4066 = vperm.slane %v4046, 0
    %v4067 = vperm.slane %v4046, 1
    %v4068 = vperm.slane %v4046, 2
    %v4069 = vperm.slane %v4046, 3
    %v4090 = vmul.f32 %v3909, %v4050
    %v4091 = vmul.f32 %v3910, %v4051
    %v4092 = vmul.f32 %v3911, %v4052
    %v4093 = vmul.f32 %v3912, %v4053
    %v4094 = vmul.f32 %v3913, %v4054
    %v4095 = vmul.f32 %v3914, %v4055
    %v4096 = vmul.f32 %v3915, %v4056
    %v4097 = vmul.f32 %v3916, %v4057
    %v4098 = vmul.f32 %v3917, %v4058
    %v4099 = vmul.f32 %v3918, %v4059
    %v4100 = vmul.f32 %v3919, %v4060
    %v4101 = vmul.f32 %v3920, %v4061
    %v4102 = vmul.f32 %v3921, %v4062
    %v4103 = vmul.f32 %v3922, %v4063
    %v4104 = vmul.f32 %v3923, %v4064
    %v4105 = vmul.f32 %v3924, %v4065
    %v4106 = vmul.f32 %v3925, %v4066
    %v4107 = vmul.f32 %v3926, %v4067
    %v4108 = vmul.f32 %v3927, %v4068
    %v4109 = vmul.f32 %v3928, %v4069
    %v4110 = vperm.slane %v36, 2
    %v4112 = vrot.slane %v4110, 1
    %v4113 = vrot.slane %v4110, 2
    %v4114 = vrot.slane %v4110, 3
    %v4115 = vrot.slane %v4110, 4
    %v4116 = vrot.slane %v4110, 5
    %v4117 = vrot.slane %v4110, 6
    %v4118 = vrot.slane %v4110, 7
    %v4126 = vmul.f32 %v4090, %v4110
    %v4127 = vmul.f32 %v4091, %v4112
    %v4128 = vmul.f32 %v4092, %v4113
    %v4129 = vmul.f32 %v4093, %v4114
    %v4130 = vmul.f32 %v4094, %v4115
    %v4131 = vmul.f32 %v4095, %v4116
    %v4132 = vmul.f32 %v4096, %v4117
    %v4133 = vmul.f32 %v4097, %v4118
    %v4134 = vmul.f32 %v4098, %v4110
    %v4135 = vmul.f32 %v4099, %v4112
    %v4136 = vmul.f32 %v4100, %v4113
    %v4137 = vmul.f32 %v4101, %v4114
    %v4138 = vmul.f32 %v4102, %v4115
    %v4139 = vmul.f32 %v4103, %v4116
    %v4140 = vmul.f32 %v4104, %v4117
    %v4141 = vmul.f32 %v4105, %v4118
    %v4142 = vmul.f32 %v4106, %v4110
    %v4143 = vmul.f32 %v4107, %v4112
    %v4144 = vmul.f32 %v4108, %v4113
    %v4145 = vmul.f32 %v4109, %v4114
    %v4146 = vperm.slane %v36, 3
    %v4148 = vrot.slane %v4146, 1
    %v4149 = vrot.slane %v4146, 2
    %v4150 = vrot.slane %v4146, 3
    %v4151 = vrot.slane %v4146, 4
    %v4152 = vrot.slane %v4146, 5
    %v4153 = vrot.slane %v4146, 6
    %v4154 = vrot.slane %v4146, 7
    %v4162 = vadd.f32 %v4126, %v4146
    %v4163 = vadd.f32 %v4127, %v4148
    %v4164 = vadd.f32 %v4128, %v4149
    %v4165 = vadd.f32 %v4129, %v4150
    %v4166 = vadd.f32 %v4130, %v4151
    %v4167 = vadd.f32 %v4131, %v4152
    %v4168 = vadd.f32 %v4132, %v4153
    %v4169 = vadd.f32 %v4133, %v4154
    %v4170 = vadd.f32 %v4134, %v4146
    %v4171 = vadd.f32 %v4135, %v4148
    %v4172 = vadd.f32 %v4136, %v4149
    %v4173 = vadd.f32 %v4137, %v4150
    %v4174 = vadd.f32 %v4138, %v4151
    %v4175 = vadd.f32 %v4139, %v4152
    %v4176 = vadd.f32 %v4140, %v4153
    %v4177 = vadd.f32 %v4141, %v4154
    %v4178 = vadd.f32 %v4142, %v4146
    %v4179 = vadd.f32 %v4143, %v4148
    %v4180 = vadd.f32 %v4144, %v4149
    %v4181 = vadd.f32 %v4145, %v4150
    %4202 = vst [vmem:[#allocation1] ss:$9 sm:$0xff] %v4162
    %s4203 = scalar_lea.vmem [#allocation1], 1
    %4204 = vst [vmem:[%s4203] ss:$9 sm:$0xff] %v4163
    %s4205 = scalar_lea.vmem [#allocation1], 2
    %4206 = vst [vmem:[%s4205] ss:$9 sm:$0xff] %v4164
    %s4207 = scalar_lea.vmem [#allocation1], 3
    %4208 = vst [vmem:[%s4207] ss:$9 sm:$0xff] %v4165
    %s4209 = scalar_lea.vmem [#allocation1], 4
    %4210 = vst [vmem:[%s4209] ss:$9 sm:$0xff] %v4166
    %s4211 = scalar_lea.vmem [#allocation1], 5
    %4212 = vst [vmem:[%s4211] ss:$9 sm:$0xff] %v4167
    %s4213 = scalar_lea.vmem [#allocation1], 6
    %4214 = vst [vmem:[%s4213] ss:$9 sm:$0xff] %v4168
    %s4215 = scalar_lea.vmem [#allocation1], 7
    %4216 = vst [vmem:[%s4215] ss:$9 sm:$0xff] %v4169
    %v4217 = vld [vmem:[#allocation1] sm:$0xff]
    %4218 = vst [vmem:[#allocation1] ss:$9 sm:$0xff] %v4170
    %4219 = vst [vmem:[%s4203] ss:$9 sm:$0xff] %v4171
    %4220 = vst [vmem:[%s4205] ss:$9 sm:$0xff] %v4172
    %4221 = vst [vmem:[%s4207] ss:$9 sm:$0xff] %v4173
    %4222 = vst [vmem:[%s4209] ss:$9 sm:$0xff] %v4174
    %4223 = vst [vmem:[%s4211] ss:$9 sm:$0xff] %v4175
    %4224 = vst [vmem:[%s4213] ss:$9 sm:$0xff] %v4176
    %4225 = vst [vmem:[%s4215] ss:$9 sm:$0xff] %v4177
    %v4226 = vld [vmem:[#allocation1] sm:$0xff]
    %4227 = vst [vmem:[#allocation1] ss:$9 sm:$0xff] %v4178
    %4228 = vst [vmem:[%s4203] ss:$9 sm:$0xff] %v4179
    %4229 = vst [vmem:[%s4205] ss:$9 sm:$0xff] %v4180
    %4230 = vst [vmem:[%s4207] ss:$9 sm:$0xff] %v4181
    %v4231 = vld [vmem:[#allocation1] sm:$0xff]
    %v4235 = vpack.c.bf16 %v4226, %v4217
    %v4236 = vpack.c.bf16 %v4231, %v4231
    %v4238 = vperm.slane %v1350, 0
    %v4239 = vperm.slane %v1350, 1
    %v4250 = vunpack.c.l.b16 %v289
    %v4251 = vunpack.c.h.b16 %v289
    %v4252 = vunpack.c.l.b16 %v290
    %v4253 = vunpack.c.h.b16 %v290
    %v4254 = vunpack.c.l.b16 %v291
    %v4255 = vunpack.c.h.b16 %v291
    %v4256 = vunpack.c.l.b16 %v292
    %v4257 = vunpack.c.h.b16 %v292
    %v4258 = vunpack.c.l.b16 %v293
    %v4259 = vunpack.c.h.b16 %v293
    %v4260 = vunpack.c.l.b16 %v294
    %v4261 = vunpack.c.h.b16 %v294
    %v4262 = vunpack.c.l.b16 %v295
    %v4263 = vunpack.c.h.b16 %v295
    %v4264 = vunpack.c.l.b16 %v296
    %v4265 = vunpack.c.h.b16 %v296
    %v4266 = vpack.c.b16 %v4252, %v4250
    %v4267 = vpack.c.b16 %v4253, %v4251
    %v4268 = vpack.c.b16 %v4256, %v4254
    %v4269 = vpack.c.b16 %v4257, %v4255
    %v4270 = vpack.c.b16 %v4260, %v4258
    %v4271 = vpack.c.b16 %v4261, %v4259
    %v4272 = vpack.c.b16 %v4264, %v4262
    %v4273 = vpack.c.b16 %v4265, %v4263
    %v4283 = vsel %vm1011, %v4235, 0
    %v4286 = vsel %vm1011, %v4236, 0
    %4288 = vmatpush.bf16.msra.mxu0 0
    %4289 = vmatpush.bf16.msra.mxu0 0
    %4290 = vmatpush.bf16.msra.mxu0 0
    %4291 = vmatpush.bf16.msra.mxu0 0
    %4292 = vmatpush.bf16.msra.mxu0 %v4272
    %4293 = vmatpush.bf16.msra.mxu0 %v4270
    %4294 = vmatpush.bf16.msra.mxu0 %v4268
    %4295 = vmatpush.bf16.msra.mxu0 %v4266
    %4296 = vmatmul.bf16.gmra.mxu0 %v4283
    %v4297 = vpop.f32.mrf.mxu0
    %v4298 = vadd.f32 %v4238, %v4297
    %v4299 = vpop.f32.mrf.mxu0
    %v4300 = vadd.f32 %v4238, %v4299
    %4301 = vmatmul.bf16.gmra.mxu0 %v4286
    %v4302 = vpop.f32.mrf.mxu0
    %v4303 = vadd.f32 %v4238, %v4302
    %v4304 = vpop.f32.mrf.mxu0
    %4305 = vdwg.mxu0
    %4306 = vmatpush.bf16.msra.mxu0 0
    %4307 = vmatpush.bf16.msra.mxu0 0
    %4308 = vmatpush.bf16.msra.mxu0 0
    %4309 = vmatpush.bf16.msra.mxu0 0
    %4310 = vmatpush.bf16.msra.mxu0 %v4273
    %4311 = vmatpush.bf16.msra.mxu0 %v4271
    %4312 = vmatpush.bf16.msra.mxu0 %v4269
    %4313 = vmatpush.bf16.msra.mxu0 %v4267
    %4314 = vmatmul.bf16.gmra.mxu0 %v4283
    %v4315 = vpop.f32.mrf.mxu0
    %v4316 = vadd.f32 %v4239, %v4315
    %v4317 = vpop.f32.mrf.mxu0
    %v4318 = vadd.f32 %v4239, %v4317
    %4319 = vmatmul.bf16.gmra.mxu0 %v4286
    %v4320 = vpop.f32.mrf.mxu0
    %v4321 = vadd.f32 %v4239, %v4320
    %v4322 = vpop.f32.mrf.mxu0
    %4323 = vdwg.mxu0
    %v4324 = vmul.f32 %v4298, 1.702
    %v4325 = vmul.f32 %v4316, 1.702
    %v4326 = vmul.f32 %v4300, 1.702
    %v4327 = vmul.f32 %v4318, 1.702
    %v4328 = vmul.f32 %v4303, 1.702
    %v4329 = vmul.f32 %v4321, 1.702
    %v4330 = vxor.u32 %v4324, 2147483648
    %v4331 = vxor.u32 %v4325, 2147483648
    %v4332 = vxor.u32 %v4326, 2147483648
    %v4333 = vxor.u32 %v4327, 2147483648
    %v4334 = vxor.u32 %v4328, 2147483648
    %v4335 = vxor.u32 %v4329, 2147483648
    %v4336 = vmul.f32 %v4330, 1.442695
    %v4337 = vpow.pop %v4336
    %v4338 = vmul.f32 %v4331, 1.442695
    %v4339 = vpow.pop %v4338
    %v4340 = vmul.f32 %v4332, 1.442695
    %v4341 = vpow.pop %v4340
    %v4342 = vmul.f32 %v4333, 1.442695
    %v4343 = vpow.pop %v4342
    %v4344 = vmul.f32 %v4334, 1.442695
    %v4345 = vpow.pop %v4344
    %v4346 = vmul.f32 %v4335, 1.442695
    %v4347 = vpow.pop %v4346
    %v4348 = vadd.f32 %v4337, 1.0
    %v4349 = vadd.f32 %v4339, 1.0
    %v4350 = vadd.f32 %v4341, 1.0
    %v4351 = vadd.f32 %v4343, 1.0
    %v4352 = vadd.f32 %v4345, 1.0
    %v4353 = vadd.f32 %v4347, 1.0
    %v4354 = vrcp.pop %v4348
    %v4355 = vmul.f32 %v4348, %v4354
    %v4356 = vsub.f32 1.0, %v4355
    %v4357 = vmul.f32 %v4354, %v4356
    %v4358 = vadd.f32 %v4354, %v4357
    %vm4359 = vweird.f32 %v4348
    %vm4360 = vweird.f32 %v4354
    %vm4361 = vmor %vm4359, %vm4360
    %v4362 = vsel %vm4361, %v4354, %v4358
    %v4363 = vand.u32 2147483647, %v4348
    %vm4364 = vcmp.eq.f32.partialorder %v4363, 8.507059e+37
    %v4365 = vand.u32 %v4348, 2147483648
    %v4366 = vor.u32 1.1754944e-38, %v4365
    %v4367 = vsel %vm4364, %v4366, %v4362
    %v4368 = vmul.f32 1.0, %v4367
    %v4369 = vrcp.pop %v4349
    %v4370 = vmul.f32 %v4349, %v4369
    %v4371 = vsub.f32 1.0, %v4370
    %v4372 = vmul.f32 %v4369, %v4371
    %v4373 = vadd.f32 %v4369, %v4372
    %vm4374 = vweird.f32 %v4349
    %vm4375 = vweird.f32 %v4369
    %vm4376 = vmor %vm4374, %vm4375
    %v4377 = vsel %vm4376, %v4369, %v4373
    %v4378 = vand.u32 2147483647, %v4349
    %vm4379 = vcmp.eq.f32.partialorder %v4378, 8.507059e+37
    %v4380 = vand.u32 %v4349, 2147483648
    %v4381 = vor.u32 1.1754944e-38, %v4380
    %v4382 = vsel %vm4379, %v4381, %v4377
    %v4383 = vmul.f32 1.0, %v4382
    %v4384 = vrcp.pop %v4350
    %v4385 = vmul.f32 %v4350, %v4384
    %v4386 = vsub.f32 1.0, %v4385
    %v4387 = vmul.f32 %v4384, %v4386
    %v4388 = vadd.f32 %v4384, %v4387
    %vm4389 = vweird.f32 %v4350
    %vm4390 = vweird.f32 %v4384
    %vm4391 = vmor %vm4389, %vm4390
    %v4392 = vsel %vm4391, %v4384, %v4388
    %v4393 = vand.u32 2147483647, %v4350
    %vm4394 = vcmp.eq.f32.partialorder %v4393, 8.507059e+37
    %v4395 = vand.u32 %v4350, 2147483648
    %v4396 = vor.u32 1.1754944e-38, %v4395
    %v4397 = vsel %vm4394, %v4396, %v4392
    %v4398 = vmul.f32 1.0, %v4397
    %v4399 = vrcp.pop %v4351
    %v4400 = vmul.f32 %v4351, %v4399
    %v4401 = vsub.f32 1.0, %v4400
    %v4402 = vmul.f32 %v4399, %v4401
    %v4403 = vadd.f32 %v4399, %v4402
    %vm4404 = vweird.f32 %v4351
    %vm4405 = vweird.f32 %v4399
    %vm4406 = vmor %vm4404, %vm4405
    %v4407 = vsel %vm4406, %v4399, %v4403
    %v4408 = vand.u32 2147483647, %v4351
    %vm4409 = vcmp.eq.f32.partialorder %v4408, 8.507059e+37
    %v4410 = vand.u32 %v4351, 2147483648
    %v4411 = vor.u32 1.1754944e-38, %v4410
    %v4412 = vsel %vm4409, %v4411, %v4407
    %v4413 = vmul.f32 1.0, %v4412
    %v4414 = vrcp.pop %v4352
    %v4415 = vmul.f32 %v4352, %v4414
    %v4416 = vsub.f32 1.0, %v4415
    %v4417 = vmul.f32 %v4414, %v4416
    %v4418 = vadd.f32 %v4414, %v4417
    %vm4419 = vweird.f32 %v4352
    %vm4420 = vweird.f32 %v4414
    %vm4421 = vmor %vm4419, %vm4420
    %v4422 = vsel %vm4421, %v4414, %v4418
    %v4423 = vand.u32 2147483647, %v4352
    %vm4424 = vcmp.eq.f32.partialorder %v4423, 8.507059e+37
    %v4425 = vand.u32 %v4352, 2147483648
    %v4426 = vor.u32 1.1754944e-38, %v4425
    %v4427 = vsel %vm4424, %v4426, %v4422
    %v4428 = vmul.f32 1.0, %v4427
    %v4429 = vrcp.pop %v4353
    %v4430 = vmul.f32 %v4353, %v4429
    %v4431 = vsub.f32 1.0, %v4430
    %v4432 = vmul.f32 %v4429, %v4431
    %v4433 = vadd.f32 %v4429, %v4432
    %vm4434 = vweird.f32 %v4353
    %vm4435 = vweird.f32 %v4429
    %vm4436 = vmor %vm4434, %vm4435
    %v4437 = vsel %vm4436, %v4429, %v4433
    %v4438 = vand.u32 2147483647, %v4353
    %vm4439 = vcmp.eq.f32.partialorder %v4438, 8.507059e+37
    %v4440 = vand.u32 %v4353, 2147483648
    %v4441 = vor.u32 1.1754944e-38, %v4440
    %v4442 = vsel %vm4439, %v4441, %v4437
    %v4443 = vmul.f32 1.0, %v4442
    %v4444 = vmul.f32 %v4298, %v4368
    %v4445 = vmul.f32 %v4316, %v4383
    %v4446 = vmul.f32 %v4300, %v4398
    %v4447 = vmul.f32 %v4318, %v4413
    %v4448 = vmul.f32 %v4303, %v4428
    %v4449 = vmul.f32 %v4321, %v4443
    %v4450 = vpack.c.bf16 %v4446, %v4444
    %v4451 = vpack.c.bf16 %v4447, %v4445
    %v4452 = vpack.c.bf16 %v4448, %v4448
    %v4453 = vpack.c.bf16 %v4449, %v4449
    %v4454 = vperm.slane %v36, 4
    %v4487 = vunpack.c.l.b16 %v1351
    %v4488 = vunpack.c.l.b16 %v1352
    %v4489 = vunpack.c.l.b16 %v1353
    %v4490 = vunpack.c.l.b16 %v1354
    %v4491 = vunpack.c.l.b16 %v1355
    %v4492 = vunpack.c.l.b16 %v1356
    %v4493 = vunpack.c.l.b16 %v1357
    %v4494 = vunpack.c.l.b16 %v1358
    %v4495 = vunpack.c.l.b16 %v1359
    %v4496 = vunpack.c.l.b16 %v1360
    %v4497 = vunpack.c.l.b16 %v1361
    %v4498 = vunpack.c.l.b16 %v1362
    %v4499 = vunpack.c.l.b16 %v1363
    %v4500 = vunpack.c.l.b16 %v1364
    %v4501 = vunpack.c.l.b16 %v1365
    %v4502 = vunpack.c.l.b16 %v1366
    %v4503 = vunpack.c.l.b16 %v1367
    %v4504 = vunpack.c.l.b16 %v1368
    %v4505 = vunpack.c.l.b16 %v1369
    %v4506 = vunpack.c.l.b16 %v1370
    %v4507 = vunpack.c.l.b16 %v1371
    %v4508 = vunpack.c.l.b16 %v1372
    %v4509 = vunpack.c.l.b16 %v1373
    %v4510 = vunpack.c.l.b16 %v1374
    %v4511 = vunpack.c.l.b16 %v1375
    %v4512 = vunpack.c.l.b16 %v1376
    %v4513 = vunpack.c.l.b16 %v1377
    %v4514 = vunpack.c.l.b16 %v1378
    %v4515 = vunpack.c.l.b16 %v1379
    %v4516 = vunpack.c.l.b16 %v1380
    %v4517 = vunpack.c.l.b16 %v1381
    %v4518 = vunpack.c.l.b16 %v1382
    %v4519 = vpack.c.b16 %v4488, %v4487
    %v4520 = vpack.c.b16 %v4490, %v4489
    %v4521 = vpack.c.b16 %v4492, %v4491
    %v4522 = vpack.c.b16 %v4494, %v4493
    %v4523 = vpack.c.b16 %v4496, %v4495
    %v4524 = vpack.c.b16 %v4498, %v4497
    %v4525 = vpack.c.b16 %v4500, %v4499
    %v4526 = vpack.c.b16 %v4502, %v4501
    %v4527 = vpack.c.b16 %v4504, %v4503
    %v4528 = vpack.c.b16 %v4506, %v4505
    %v4529 = vpack.c.b16 %v4508, %v4507
    %v4530 = vpack.c.b16 %v4510, %v4509
    %v4531 = vpack.c.b16 %v4512, %v4511
    %v4532 = vpack.c.b16 %v4514, %v4513
    %v4533 = vpack.c.b16 %v4516, %v4515
    %v4534 = vpack.c.b16 %v4518, %v4517
    %4551 = vmatpush.bf16.msra.mxu0 %v4526
    %4552 = vmatpush.bf16.msra.mxu0 %v4525
    %4553 = vmatpush.bf16.msra.mxu0 %v4524
    %4554 = vmatpush.bf16.msra.mxu0 %v4523
    %4555 = vmatpush.bf16.msra.mxu0 %v4522
    %4556 = vmatpush.bf16.msra.mxu0 %v4521
    %4557 = vmatpush.bf16.msra.mxu0 %v4520
    %4558 = vmatpush.bf16.msra.mxu0 %v4519
    %4559 = vmatmul.bf16.gmra.mxu0 %v4450
    %v4560 = vpop.f32.mrf.mxu0
    %v4561 = vadd.f32 %v4454, %v4560
    %v4562 = vpop.f32.mrf.mxu0
    %v4563 = vadd.f32 %v4454, %v4562
    %4564 = vmatmul.bf16.gmra.mxu0 %v4452
    %v4565 = vpop.f32.mrf.mxu0
    %v4566 = vadd.f32 %v4454, %v4565
    %v4567 = vpop.f32.mrf.mxu0
    %4568 = vdwg.mxu0
    %4569 = vmatpush.bf16.msra.mxu0 %v4534
    %4570 = vmatpush.bf16.msra.mxu0 %v4533
    %4571 = vmatpush.bf16.msra.mxu0 %v4532
    %4572 = vmatpush.bf16.msra.mxu0 %v4531
    %4573 = vmatpush.bf16.msra.mxu0 %v4530
    %4574 = vmatpush.bf16.msra.mxu0 %v4529
    %4575 = vmatpush.bf16.msra.mxu0 %v4528
    %4576 = vmatpush.bf16.msra.mxu0 %v4527
    %4577 = vmatmul.bf16.gmra.mxu0 %v4451
    %v4578 = vpop.f32.mrf.mxu0
    %v4579 = vadd.f32 %v4561, %v4578
    %v4580 = vpop.f32.mrf.mxu0
    %v4581 = vadd.f32 %v4563, %v4580
    %4582 = vmatmul.bf16.gmra.mxu0 %v4453
    %v4583 = vpop.f32.mrf.mxu0
    %v4584 = vadd.f32 %v4566, %v4583
    %v4585 = vpop.f32.mrf.mxu0
    %4586 = vdwg.mxu0
    %v4590 = vrot.slane %v4579, 1
    %v4591 = vrot.slane %v4579, 2
    %v4592 = vrot.slane %v4579, 3
    %v4593 = vrot.slane %v4579, 4
    %v4594 = vrot.slane %v4579, 5
    %v4595 = vrot.slane %v4579, 6
    %v4596 = vrot.slane %v4579, 7
    %v4597 = vrot.slane %v4581, 1
    %v4598 = vrot.slane %v4581, 2
    %v4599 = vrot.slane %v4581, 3
    %v4600 = vrot.slane %v4581, 4
    %v4601 = vrot.slane %v4581, 5
    %v4602 = vrot.slane %v4581, 6
    %v4603 = vrot.slane %v4581, 7
    %v4604 = vrot.slane %v4584, 1
    %v4605 = vrot.slane %v4584, 2
    %v4606 = vrot.slane %v4584, 3
    %v4624 = vadd.f32 %v3781, %v4579
    %v4625 = vadd.f32 %v3782, %v4590
    %v4626 = vadd.f32 %v3783, %v4591
    %v4627 = vadd.f32 %v3784, %v4592
    %v4628 = vadd.f32 %v3785, %v4593
    %v4629 = vadd.f32 %v3786, %v4594
    %v4630 = vadd.f32 %v3787, %v4595
    %v4631 = vadd.f32 %v3788, %v4596
    %v4632 = vadd.f32 %v3789, %v4581
    %v4633 = vadd.f32 %v3790, %v4597
    %v4634 = vadd.f32 %v3791, %v4598
    %v4635 = vadd.f32 %v3792, %v4599
    %v4636 = vadd.f32 %v3793, %v4600
    %v4637 = vadd.f32 %v3794, %v4601
    %v4638 = vadd.f32 %v3795, %v4602
    %v4639 = vadd.f32 %v3796, %v4603
    %v4640 = vadd.f32 %v3797, %v4584
    %v4641 = vadd.f32 %v3798, %v4604
    %v4642 = vadd.f32 %v3799, %v4605
    %v4643 = vadd.f32 %v3800, %v4606
    %v4644 = vlaneseq
    %v4645 = vshrl.u32 %v4644, 7
    %v4646 = vlaneseq
    %v4647 = vand.u32 %v4646, 127
    %v4648 = vmul.u32 %v4645, 5
    %vm4649 = vcmp.eq.s32.totalorder %v4647, %v4648
    %v4650 = vsel %vm4649, 1, 0
    %v4651 = vcvt.s32.f32 %v4650
    %4672 = vst [vmem:[#allocation1] ss:$9 sm:$0xff] %v4624
    %s4673 = scalar_lea.vmem [#allocation1], 1
    %4674 = vst [vmem:[%s4673] ss:$9 sm:$0xff] %v4625
    %s4675 = scalar_lea.vmem [#allocation1], 2
    %4676 = vst [vmem:[%s4675] ss:$9 sm:$0xff] %v4626
    %s4677 = scalar_lea.vmem [#allocation1], 3
    %4678 = vst [vmem:[%s4677] ss:$9 sm:$0xff] %v4627
    %s4679 = scalar_lea.vmem [#allocation1], 4
    %4680 = vst [vmem:[%s4679] ss:$9 sm:$0xff] %v4628
    %s4681 = scalar_lea.vmem [#allocation1], 5
    %4682 = vst [vmem:[%s4681] ss:$9 sm:$0xff] %v4629
    %s4683 = scalar_lea.vmem [#allocation1], 6
    %4684 = vst [vmem:[%s4683] ss:$9 sm:$0xff] %v4630
    %s4685 = scalar_lea.vmem [#allocation1], 7
    %4686 = vst [vmem:[%s4685] ss:$9 sm:$0xff] %v4631
    %v4687 = vld [vmem:[#allocation1] sm:$0xff]
    %4688 = vst [vmem:[#allocation1] ss:$9 sm:$0xff] %v4632
    %4689 = vst [vmem:[%s4673] ss:$9 sm:$0xff] %v4633
    %4690 = vst [vmem:[%s4675] ss:$9 sm:$0xff] %v4634
    %4691 = vst [vmem:[%s4677] ss:$9 sm:$0xff] %v4635
    %4692 = vst [vmem:[%s4679] ss:$9 sm:$0xff] %v4636
    %4693 = vst [vmem:[%s4681] ss:$9 sm:$0xff] %v4637
    %4694 = vst [vmem:[%s4683] ss:$9 sm:$0xff] %v4638
    %4695 = vst [vmem:[%s4685] ss:$9 sm:$0xff] %v4639
    %v4696 = vld [vmem:[#allocation1] sm:$0xff]
    %4697 = vst [vmem:[#allocation1] ss:$9 sm:$0xff] %v4640
    %4698 = vst [vmem:[%s4673] ss:$9 sm:$0xff] %v4641
    %4699 = vst [vmem:[%s4675] ss:$9 sm:$0xff] %v4642
    %4700 = vst [vmem:[%s4677] ss:$9 sm:$0xff] %v4643
    %v4701 = vld [vmem:[#allocation1] sm:$0xff]
    %vm4704 = vcmask 162816
    %v4706 = vsel %vm4704, %v4651, 0
    %v4708 = vsel %vm120, %v4701, 0
    %4710 = vmatpush.msra.mxu0 0.0
    %4711 = vmatpush.msra.mxu0 0.0
    %4712 = vmatpush.msra.mxu0 0.0
    %4713 = vmatpush.msra.mxu0 0.0
    %4714 = vmatpush.msra.mxu0 0.0
    %4715 = vmatpush.msra.mxu0 0.0
    %4716 = vmatpush.msra.mxu0 0.0
    %4717 = vmatpush.msra.mxu0 0.0
    %4718 = vmatpush.msra.mxu0 0.0
    %4719 = vmatpush.msra.mxu0 0.0
    %4720 = vmatpush.msra.mxu0 0.0
    %4721 = vmatpush.msra.mxu0 0.0
    %4722 = vmatpush.msra.mxu0 0.0
    %4723 = vmatpush.msra.mxu0 %v4708
    %4724 = vmatpush.msra.mxu0 %v4696
    %4725 = vmatpush.msra.mxu0 %v4687
    %4726 = vmatmul.f32.gmra.mxu0 %v4706
    %v4727 = vpop.f32.mrf.mxu0
    %v4728 = vadd.f32 0.0, %v4727
    %4729 = vdwg.mxu0
    %v4730 = vsel %vm1018, %v4728, 0.0
    %4731 = vadd.xlane.f32.xlu0 %v4730
    %v4732 = vpop.xlane.xlu0 %4731
    %v4733 = vmul.f32 %v4732, %v1028
    %v4734 = vsub.f32 %v4728, %v4733
    %v4735 = vmul.f32 %v4734, %v4734
    %v4736 = vsel %vm1018, %v4735, 0.0
    %4737 = vadd.xlane.f32.xlu0 %v4736
    %v4738 = vpop.xlane.xlu0 %4737
    %v4739 = vmul.f32 %v4738, %v1028
    %v4740 = vadd.f32 %v4739, 1e-05
    %v4741 = vrsqrt.pop %v4740
    %v4742 = vmul.f32 %v4741, %v4740
    %v4743 = vmul.f32 %v4742, %v4741
    %v4744 = vmul.f32 0.5, %v4743
    %v4745 = vsub.f32 1.5, %v4744
    %v4746 = vmul.f32 %v4741, %v4745
    %vm4747 = vweird.f32 %v4740
    %vm4748 = vweird.f32 %v4741
    %vm4749 = vmor %vm4747, %vm4748
    %v4750 = vsel %vm4749, %v4741, %v4746
    %v4751 = vmul.f32 %v4734, %v4750
    %v4752 = vperm.slane %v36, 5
    %v4753 = vmul.f32 %v4751, %v4752
    %v4754 = vperm.slane %v36, 6
    %v4755 = vadd.f32 %v4753, %v4754
    %v4756 = vpack.c.bf16 %v4755, %v4755
    %v4765 = vunpack.c.l.b16 %v297
    %v4766 = vunpack.c.l.b16 %v298
    %v4767 = vunpack.c.l.b16 %v299
    %v4768 = vunpack.c.l.b16 %v300
    %v4769 = vunpack.c.l.b16 %v301
    %v4770 = vunpack.c.l.b16 %v302
    %v4771 = vunpack.c.l.b16 %v303
    %v4772 = vunpack.c.l.b16 %v304
    %v4773 = vpack.c.b16 %v4766, %v4765
    %v4774 = vpack.c.b16 %v4768, %v4767
    %v4775 = vpack.c.b16 %v4770, %v4769
    %v4776 = vpack.c.b16 %v4772, %v4771
    %v4782 = vsel %vm1011, %v4756, 0
    %4784 = vmatpush.bf16.msra.mxu0 0
    %4785 = vmatpush.bf16.msra.mxu0 0
    %4786 = vmatpush.bf16.msra.mxu0 0
    %4787 = vmatpush.bf16.msra.mxu0 0
    %4788 = vmatpush.bf16.msra.mxu0 %v4776
    %4789 = vmatpush.bf16.msra.mxu0 %v4775
    %4790 = vmatpush.bf16.msra.mxu0 %v4774
    %4791 = vmatpush.bf16.msra.mxu0 %v4773
    %4792 = vmatmul.bf16.gmra.mxu0 %v4782
    %v4793 = vpop.f32.mrf.mxu0
    %v4794 = vadd.f32 0.0, %v4793
    %v4795 = vpop.f32.mrf.mxu0
    %4796 = vdwg.mxu0
    %v4797 = vld [vmem:[%s5 + $0x10] sm:$0xff]
    %v4798 = vld [vmem:[%s5 + $0x34] sm:$0xff]
    %v4799 = vld [vmem:[%s5 + $0x58] sm:$0xff]
    %v4800 = vld [vmem:[%s5 + $0x7c] sm:$0xff]
    %v4801 = vld [vmem:[%s5 + $0xa0] sm:$0xff]
    %v4802 = vld [vmem:[%s5 + $0xc4] sm:$0xff]
    %v4803 = vld [vmem:[%s5 + $0xe8] sm:$0xff]
    %v4804 = vld [vmem:[%s5 + $0x10c] sm:$0xff]
    %v4805 = vld [vmem:[%s5 + $0x18] sm:$0xf]
    %v4806 = vld [vmem:[%s5 + $0x3c] sm:$0xf]
    %v4807 = vld [vmem:[%s5 + $0x60] sm:$0xf]
    %v4808 = vld [vmem:[%s5 + $0x84] sm:$0xf]
    %v4809 = vld [vmem:[%s5 + $0xa8] sm:$0xf]
    %v4810 = vld [vmem:[%s5 + $0xcc] sm:$0xf]
    %v4811 = vld [vmem:[%s5 + $0xf0] sm:$0xf]
    %v4812 = vld [vmem:[%s5 + $0x114] sm:$0xf]
    %v4813 = vld [vmem:[%s5 + $0x18] sm:$0xff]
    %v4814 = vld [vmem:[%s5 + $0x20] sm:$0xf]
    %v4815 = vld [vmem:[%s5 + $0x3c] sm:$0xff]
    %v4816 = vld [vmem:[%s5 + $0x44] sm:$0xf]
    %v4817 = vld [vmem:[%s5 + $0x60] sm:$0xff]
    %v4818 = vld [vmem:[%s5 + $0x68] sm:$0xf]
    %v4819 = vld [vmem:[%s5 + $0x84] sm:$0xff]
    %v4820 = vld [vmem:[%s5 + $0x8c] sm:$0xf]
    %v4821 = vld [vmem:[%s5 + $0xa8] sm:$0xff]
    %v4822 = vld [vmem:[%s5 + $0xb0] sm:$0xf]
    %v4823 = vld [vmem:[%s5 + $0xcc] sm:$0xff]
    %v4824 = vld [vmem:[%s5 + $0xd4] sm:$0xf]
    %v4825 = vld [vmem:[%s5 + $0xf0] sm:$0xff]
    %v4826 = vld [vmem:[%s5 + $0xf8] sm:$0xf]
    %v4827 = vld [vmem:[%s5 + $0x114] sm:$0xff]
    %v4828 = vld [vmem:[%s5 + $0x11c] sm:$0xf]
    %v4829 = vld [vmem:[%s2] sm:$0xff]
    %v4830 = vld [vmem:[%s2 + $0x8] sm:$0xff]
    %v4831 = vld [vmem:[%s2 + $0x10] sm:$0xff]
    %v4832 = vld [vmem:[%s2 + $0x18] sm:$0xff]
    %v4833 = vld [vmem:[%s2 + $0x20] sm:$0xff]
    %v4834 = vld [vmem:[%s2 + $0x28] sm:$0xff]
    %v4835 = vadd.f32 %v4829, %v37
    %v4836 = vadd.f32 %v4830, %v38
    %v4837 = vadd.f32 %v4831, %v37
    %v4838 = vadd.f32 %v4832, %v38
    %v4839 = vadd.f32 %v4833, %v37
    %v4840 = vadd.f32 %v4834, %v38
    %v4841 = vadd.s32 %v4645, 8
    %vm4842 = vcmp.le.s32.totalorder %v4647, %v4645
    %vm4843 = vcmp.le.s32.totalorder %v4647, %v4841
    %v4844 = vsel %vm4842, 0.0, -1e+30
    %v4845 = vsel %vm4843, 0.0, -1e+30
    %s4846 = scalar_lea.vmem %s8, 2
    %v4847 = vld [vmem:[%s4846] ss:$4 sm:$0x3]
    %s4848 = scalar_lea.vmem %s8, 3
    %v4849 = vld [vmem:[%s4848] ss:$4 sm:$0x3]
    %v4850 = vld [vmem:[%s6] sm:$0xf]
    %v4851 = vld [vmem:[%s6 + $0x4] sm:$0xf]
    %v4852 = vld [vmem:[%s6 + $0x8] sm:$0xf]
    %v4853 = vld [vmem:[%s6 + $0xc] sm:$0xf]
    %v4854 = vld [vmem:[%s6 + $0x10] sm:$0xf]
    %v4855 = vld [vmem:[%s6 + $0x14] sm:$0xf]
    %v4856 = vld [vmem:[%s6 + $0x18] sm:$0xf]
    %v4857 = vld [vmem:[%s6 + $0x1c] sm:$0xf]
    %v4858 = vld [vmem:[%s6 + $0x20] sm:$0xf]
    %v4859 = vld [vmem:[%s6 + $0x24] sm:$0xf]
    %v4860 = vld [vmem:[%s6 + $0x28] sm:$0xf]
    %v4861 = vld [vmem:[%s6 + $0x2c] sm:$0xf]
    %v4862 = vld [vmem:[%s6 + $0x30] sm:$0xf]
    %v4863 = vld [vmem:[%s6 + $0x34] sm:$0xf]
    %v4864 = vld [vmem:[%s6 + $0x38] sm:$0xf]
    %v4865 = vld [vmem:[%s6 + $0x3c] sm:$0xf]
    %v4866 = vld [vmem:[%s6 + $0x40] sm:$0xf]
    %v4867 = vld [vmem:[%s6 + $0x44] sm:$0xf]
    %v4868 = vld [vmem:[%s6 + $0x48] sm:$0xf]
    %v4869 = vld [vmem:[%s6 + $0x4c] sm:$0xf]
    %v4870 = vld [vmem:[%s6 + $0x50] sm:$0xf]
    %v4871 = vld [vmem:[%s6 + $0x54] sm:$0xf]
    %v4872 = vld [vmem:[%s6 + $0x58] sm:$0xf]
    %v4873 = vld [vmem:[%s6 + $0x5c] sm:$0xf]
    %v4874 = vld [vmem:[%s6 + $0x60] sm:$0xf]
    %v4875 = vld [vmem:[%s6 + $0x64] sm:$0xf]
    %v4876 = vld [vmem:[%s6 + $0x68] sm:$0xf]
    %v4877 = vld [vmem:[%s6 + $0x6c] sm:$0xf]
    %v4878 = vld [vmem:[%s6 + $0x70] sm:$0xf]
    %v4879 = vld [vmem:[%s6 + $0x74] sm:$0xf]
    %v4880 = vld [vmem:[%s6 + $0x78] sm:$0xf]
    %v4881 = vld [vmem:[%s6 + $0x7c] sm:$0xf]
    %v4882 = vsel %vm1011, %v4835, 0.0
    %4883 = vadd.xlane.f32.xlu0 %v4882
    %v4884 = vpop.xlane.xlu0 %4883
    %v4885 = vsel %vm1011, %v4836, 0.0
    %4886 = vadd.xlane.f32.xlu0 %v4885
    %v4887 = vpop.xlane.xlu0 %4886
    %v4888 = vsel %vm1011, %v4837, 0.0
    %4889 = vadd.xlane.f32.xlu0 %v4888
    %v4890 = vpop.xlane.xlu0 %4889
    %v4891 = vsel %vm1011, %v4838, 0.0
    %4892 = vadd.xlane.f32.xlu0 %v4891
    %v4893 = vpop.xlane.xlu0 %4892
    %v4894 = vsel %vm1011, %v4839, 0.0
    %4895 = vadd.xlane.f32.xlu0 %v4894
    %v4896 = vpop.xlane.xlu0 %4895
    %v4897 = vsel %vm1011, %v4840, 0.0
    %4898 = vadd.xlane.f32.xlu0 %v4897
    %v4899 = vpop.xlane.xlu0 %4898
    %v4900 = vmul.f32 %v4884, %v1028
    %v4901 = vmul.f32 %v4887, %v1028
    %v4902 = vmul.f32 %v4890, %v1028
    %v4903 = vmul.f32 %v4893, %v1028
    %v4904 = vmul.f32 %v4896, %v1028
    %v4905 = vmul.f32 %v4899, %v1028
    %v4906 = vsub.f32 %v4835, %v4900
    %v4907 = vsub.f32 %v4836, %v4901
    %v4908 = vsub.f32 %v4837, %v4902
    %v4909 = vsub.f32 %v4838, %v4903
    %v4910 = vsub.f32 %v4839, %v4904
    %v4911 = vsub.f32 %v4840, %v4905
    %v4912 = vmul.f32 %v4906, %v4906
    %v4913 = vmul.f32 %v4907, %v4907
    %v4914 = vmul.f32 %v4908, %v4908
    %v4915 = vmul.f32 %v4909, %v4909
    %v4916 = vmul.f32 %v4910, %v4910
    %v4917 = vmul.f32 %v4911, %v4911
    %v4918 = vsel %vm1011, %v4912, 0.0
    %4919 = vadd.xlane.f32.xlu0 %v4918
    %v4920 = vpop.xlane.xlu0 %4919
    %v4921 = vsel %vm1011, %v4913, 0.0
    %4922 = vadd.xlane.f32.xlu0 %v4921
    %v4923 = vpop.xlane.xlu0 %4922
    %v4924 = vsel %vm1011, %v4914, 0.0
    %4925 = vadd.xlane.f32.xlu0 %v4924
    %v4926 = vpop.xlane.xlu0 %4925
    %v4927 = vsel %vm1011, %v4915, 0.0
    %4928 = vadd.xlane.f32.xlu0 %v4927
    %v4929 = vpop.xlane.xlu0 %4928
    %v4930 = vsel %vm1011, %v4916, 0.0
    %4931 = vadd.xlane.f32.xlu0 %v4930
    %v4932 = vpop.xlane.xlu0 %4931
    %v4933 = vsel %vm1011, %v4917, 0.0
    %4934 = vadd.xlane.f32.xlu0 %v4933
    %v4935 = vpop.xlane.xlu0 %4934
    %v4936 = vmul.f32 %v4920, %v1028
    %v4937 = vmul.f32 %v4923, %v1028
    %v4938 = vmul.f32 %v4926, %v1028
    %v4939 = vmul.f32 %v4929, %v1028
    %v4940 = vmul.f32 %v4932, %v1028
    %v4941 = vmul.f32 %v4935, %v1028
    %v4942 = vadd.f32 %v4936, 1e-05
    %v4943 = vadd.f32 %v4937, 1e-05
    %v4944 = vadd.f32 %v4938, 1e-05
    %v4945 = vadd.f32 %v4939, 1e-05
    %v4946 = vadd.f32 %v4940, 1e-05
    %v4947 = vadd.f32 %v4941, 1e-05
    %v4948 = vrsqrt.pop %v4942
    %v4949 = vmul.f32 %v4948, %v4942
    %v4950 = vmul.f32 %v4949, %v4948
    %v4951 = vmul.f32 0.5, %v4950
    %v4952 = vsub.f32 1.5, %v4951
    %v4953 = vmul.f32 %v4948, %v4952
    %vm4954 = vweird.f32 %v4942
    %vm4955 = vweird.f32 %v4948
    %vm4956 = vmor %vm4954, %vm4955
    %v4957 = vsel %vm4956, %v4948, %v4953
    %v4958 = vrsqrt.pop %v4943
    %v4959 = vmul.f32 %v4958, %v4943
    %v4960 = vmul.f32 %v4959, %v4958
    %v4961 = vmul.f32 0.5, %v4960
    %v4962 = vsub.f32 1.5, %v4961
    %v4963 = vmul.f32 %v4958, %v4962
    %vm4964 = vweird.f32 %v4943
    %vm4965 = vweird.f32 %v4958
    %vm4966 = vmor %vm4964, %vm4965
    %v4967 = vsel %vm4966, %v4958, %v4963
    %v4968 = vrsqrt.pop %v4944
    %v4969 = vmul.f32 %v4968, %v4944
    %v4970 = vmul.f32 %v4969, %v4968
    %v4971 = vmul.f32 0.5, %v4970
    %v4972 = vsub.f32 1.5, %v4971
    %v4973 = vmul.f32 %v4968, %v4972
    %vm4974 = vweird.f32 %v4944
    %vm4975 = vweird.f32 %v4968
    %vm4976 = vmor %vm4974, %vm4975
    %v4977 = vsel %vm4976, %v4968, %v4973
    %v4978 = vrsqrt.pop %v4945
    %v4979 = vmul.f32 %v4978, %v4945
    %v4980 = vmul.f32 %v4979, %v4978
    %v4981 = vmul.f32 0.5, %v4980
    %v4982 = vsub.f32 1.5, %v4981
    %v4983 = vmul.f32 %v4978, %v4982
    %vm4984 = vweird.f32 %v4945
    %vm4985 = vweird.f32 %v4978
    %vm4986 = vmor %vm4984, %vm4985
    %v4987 = vsel %vm4986, %v4978, %v4983
    %v4988 = vrsqrt.pop %v4946
    %v4989 = vmul.f32 %v4988, %v4946
    %v4990 = vmul.f32 %v4989, %v4988
    %v4991 = vmul.f32 0.5, %v4990
    %v4992 = vsub.f32 1.5, %v4991
    %v4993 = vmul.f32 %v4988, %v4992
    %vm4994 = vweird.f32 %v4946
    %vm4995 = vweird.f32 %v4988
    %vm4996 = vmor %vm4994, %vm4995
    %v4997 = vsel %vm4996, %v4988, %v4993
    %v4998 = vrsqrt.pop %v4947
    %v4999 = vmul.f32 %v4998, %v4947
    %v5000 = vmul.f32 %v4999, %v4998
    %v5001 = vmul.f32 0.5, %v5000
    %v5002 = vsub.f32 1.5, %v5001
    %v5003 = vmul.f32 %v4998, %v5002
    %vm5004 = vweird.f32 %v4947
    %vm5005 = vweird.f32 %v4998
    %vm5006 = vmor %vm5004, %vm5005
    %v5007 = vsel %vm5006, %v4998, %v5003
    %v5008 = vmul.f32 %v4906, %v4957
    %v5009 = vmul.f32 %v4907, %v4967
    %v5010 = vmul.f32 %v4908, %v4977
    %v5011 = vmul.f32 %v4909, %v4987
    %v5012 = vmul.f32 %v4910, %v4997
    %v5013 = vmul.f32 %v4911, %v5007
    %v5014 = vperm.slane %v39, 0
    %v5015 = vmul.f32 %v5008, %v5014
    %v5016 = vmul.f32 %v5009, %v5014
    %v5017 = vmul.f32 %v5010, %v5014
    %v5018 = vmul.f32 %v5011, %v5014
    %v5019 = vmul.f32 %v5012, %v5014
    %v5020 = vmul.f32 %v5013, %v5014
    %v5021 = vperm.slane %v39, 1
    %v5022 = vadd.f32 %v5015, %v5021
    %v5023 = vadd.f32 %v5016, %v5021
    %v5024 = vadd.f32 %v5017, %v5021
    %v5025 = vadd.f32 %v5018, %v5021
    %v5026 = vadd.f32 %v5019, %v5021
    %v5027 = vadd.f32 %v5020, %v5021
    %v5028 = vpack.c.bf16 %v5023, %v5022
    %v5029 = vpack.c.bf16 %v5025, %v5024
    %v5030 = vpack.c.bf16 %v5027, %v5026
    %v5032 = vperm.slane %v4847, 0
    %v5033 = vperm.slane %v4847, 1
    %v5044 = vunpack.c.l.b16 %v4797
    %v5045 = vunpack.c.h.b16 %v4797
    %v5046 = vunpack.c.l.b16 %v4798
    %v5047 = vunpack.c.h.b16 %v4798
    %v5048 = vunpack.c.l.b16 %v4799
    %v5049 = vunpack.c.h.b16 %v4799
    %v5050 = vunpack.c.l.b16 %v4800
    %v5051 = vunpack.c.h.b16 %v4800
    %v5052 = vunpack.c.l.b16 %v4801
    %v5053 = vunpack.c.h.b16 %v4801
    %v5054 = vunpack.c.l.b16 %v4802
    %v5055 = vunpack.c.h.b16 %v4802
    %v5056 = vunpack.c.l.b16 %v4803
    %v5057 = vunpack.c.h.b16 %v4803
    %v5058 = vunpack.c.l.b16 %v4804
    %v5059 = vunpack.c.h.b16 %v4804
    %v5060 = vpack.c.b16 %v5046, %v5044
    %v5061 = vpack.c.b16 %v5047, %v5045
    %v5062 = vpack.c.b16 %v5050, %v5048
    %v5063 = vpack.c.b16 %v5051, %v5049
    %v5064 = vpack.c.b16 %v5054, %v5052
    %v5065 = vpack.c.b16 %v5055, %v5053
    %v5066 = vpack.c.b16 %v5058, %v5056
    %v5067 = vpack.c.b16 %v5059, %v5057
    %5068 = vrot.lane.b32.xlu0 %v5060, 64
    %v5069 = vpop.permute.xlu0 %5068
    %5070 = vrot.lane.b32.xlu0 %v5061, 64
    %v5071 = vpop.permute.xlu0 %5070
    %5072 = vrot.lane.b32.xlu0 %v5062, 64
    %v5073 = vpop.permute.xlu0 %5072
    %5074 = vrot.lane.b32.xlu0 %v5063, 64
    %v5075 = vpop.permute.xlu0 %5074
    %5076 = vrot.lane.b32.xlu0 %v5064, 64
    %v5077 = vpop.permute.xlu0 %5076
    %5078 = vrot.lane.b32.xlu0 %v5065, 64
    %v5079 = vpop.permute.xlu0 %5078
    %5080 = vrot.lane.b32.xlu0 %v5066, 64
    %v5081 = vpop.permute.xlu0 %5080
    %5082 = vrot.lane.b32.xlu0 %v5067, 64
    %v5083 = vpop.permute.xlu0 %5082
    %vm5084 = vcmask 523264
    %v5085 = vsel %vm5084, %v5069, %v5071
    %v5086 = vsel %vm5084, %v5073, %v5075
    %v5087 = vsel %vm5084, %v5077, %v5079
    %v5088 = vsel %vm5084, %v5081, %v5083
    %v5098 = vsel %vm1011, %v5028, 0
    %v5101 = vsel %vm1011, %v5029, 0
    %v5104 = vsel %vm1011, %v5030, 0
    %5106 = vmatpush.bf16.msra.mxu0 0
    %5107 = vmatpush.bf16.msra.mxu0 0
    %5108 = vmatpush.bf16.msra.mxu0 0
    %5109 = vmatpush.bf16.msra.mxu0 0
    %5110 = vmatpush.bf16.msra.mxu0 %v5088
    %5111 = vmatpush.bf16.msra.mxu0 %v5087
    %5112 = vmatpush.bf16.msra.mxu0 %v5086
    %5113 = vmatpush.bf16.msra.mxu0 %v5085
    %5114 = vmatmul.bf16.gmra.mxu0 %v5098
    %v5115 = vpop.f32.mrf.mxu0
    %v5116 = vadd.f32 %v5032, %v5115
    %v5117 = vpop.f32.mrf.mxu0
    %v5118 = vadd.f32 %v5032, %v5117
    %5119 = vmatmul.bf16.gmra.mxu0 %v5101
    %v5120 = vpop.f32.mrf.mxu0
    %v5121 = vadd.f32 %v5032, %v5120
    %v5122 = vpop.f32.mrf.mxu0
    %v5123 = vadd.f32 %v5032, %v5122
    %5124 = vmatmul.bf16.gmra.mxu0 %v5104
    %v5125 = vpop.f32.mrf.mxu0
    %v5126 = vadd.f32 %v5032, %v5125
    %v5127 = vpop.f32.mrf.mxu0
    %v5128 = vadd.f32 %v5032, %v5127
    %5129 = vdwg.mxu0
    %5130 = vmatpush.bf16.msra.mxu0 0
    %5131 = vmatpush.bf16.msra.mxu0 0
    %5132 = vmatpush.bf16.msra.mxu0 0
    %5133 = vmatpush.bf16.msra.mxu0 0
    %5134 = vmatpush.bf16.msra.mxu0 %v5083
    %5135 = vmatpush.bf16.msra.mxu0 %v5079
    %5136 = vmatpush.bf16.msra.mxu0 %v5075
    %5137 = vmatpush.bf16.msra.mxu0 %v5071
    %5138 = vmatmul.bf16.gmra.mxu0 %v5098
    %v5139 = vpop.f32.mrf.mxu0
    %v5140 = vadd.f32 %v5033, %v5139
    %v5141 = vpop.f32.mrf.mxu0
    %v5142 = vadd.f32 %v5033, %v5141
    %5143 = vmatmul.bf16.gmra.mxu0 %v5101
    %v5144 = vpop.f32.mrf.mxu0
    %v5145 = vadd.f32 %v5033, %v5144
    %v5146 = vpop.f32.mrf.mxu0
    %v5147 = vadd.f32 %v5033, %v5146
    %5148 = vmatmul.bf16.gmra.mxu0 %v5104
    %v5149 = vpop.f32.mrf.mxu0
    %v5150 = vadd.f32 %v5033, %v5149
    %v5151 = vpop.f32.mrf.mxu0
    %v5152 = vadd.f32 %v5033, %v5151
    %5153 = vdwg.mxu0
    %v5154 = vpack.c.bf16 %v5116, %v5116
    %v5155 = vpack.c.bf16 %v5118, %v5118
    %v5156 = vpack.c.bf16 %v5121, %v5121
    %v5157 = vpack.c.bf16 %v5123, %v5123
    %v5158 = vpack.c.bf16 %v5126, %v5126
    %v5159 = vpack.c.bf16 %v5128, %v5128
    %v5160 = vpack.c.bf16 %v5140, %v5140
    %v5161 = vpack.c.bf16 %v5142, %v5142
    %v5162 = vpack.c.bf16 %v5145, %v5145
    %v5163 = vpack.c.bf16 %v5147, %v5147
    %v5164 = vpack.c.bf16 %v5150, %v5150
    %v5165 = vpack.c.bf16 %v5152, %v5152
    %v5168 = vunpack.c.l.b16 %v5154
    %v5169 = vunpack.c.l.b16 %v5155
    %v5170 = vpack.c.b16 %v5169, %v5168
    %5171 = vrot.lane.b32.xlu0 %v5170, 64
    %v5172 = vpop.permute.xlu0 %5171
    %v5174 = vsel %vm2065, %v5170, 0
    %v5177 = vsel %vm2065, %v5172, 0
    %5179 = vmatpush.bf16.xpose.msra.mxu0 0
    %5180 = vmatpush.bf16.xpose.msra.mxu0 0
    %5181 = vmatpush.bf16.xpose.msra.mxu0 0
    %5182 = vmatpush.bf16.xpose.msra.mxu0 0
    %5183 = vmatpush.bf16.xpose.msra.mxu0 0
    %5184 = vmatpush.bf16.xpose.msra.mxu0 0
    %5185 = vmatpush.bf16.xpose.msra.mxu0 0
    %5186 = vmatpush.bf16.xpose.msra.mxu0 %v5177
    %5187 = vmatmul.bf16.gmra.mxu0 %v5174
    %v5188 = vpop.f32.mrf.mxu0
    %v5189 = vadd.f32 %v4844, %v5188
    %v5190 = vpop.f32.mrf.mxu0
    %v5191 = vadd.f32 %v4845, %v5190
    %5192 = vdwg.mxu0
    %v5195 = vunpack.c.l.b16 %v5156
    %v5196 = vunpack.c.l.b16 %v5157
    %v5197 = vpack.c.b16 %v5196, %v5195
    %5198 = vrot.lane.b32.xlu0 %v5197, 64
    %v5199 = vpop.permute.xlu0 %5198
    %v5201 = vsel %vm2065, %v5197, 0
    %v5204 = vsel %vm2065, %v5199, 0
    %5206 = vmatpush.bf16.xpose.msra.mxu0 0
    %5207 = vmatpush.bf16.xpose.msra.mxu0 0
    %5208 = vmatpush.bf16.xpose.msra.mxu0 0
    %5209 = vmatpush.bf16.xpose.msra.mxu0 0
    %5210 = vmatpush.bf16.xpose.msra.mxu0 0
    %5211 = vmatpush.bf16.xpose.msra.mxu0 0
    %5212 = vmatpush.bf16.xpose.msra.mxu0 0
    %5213 = vmatpush.bf16.xpose.msra.mxu0 %v5204
    %5214 = vmatmul.bf16.gmra.mxu0 %v5201
    %v5215 = vpop.f32.mrf.mxu0
    %v5216 = vadd.f32 %v4844, %v5215
    %v5217 = vpop.f32.mrf.mxu0
    %v5218 = vadd.f32 %v4845, %v5217
    %5219 = vdwg.mxu0
    %v5222 = vunpack.c.l.b16 %v5158
    %v5223 = vunpack.c.l.b16 %v5159
    %v5224 = vpack.c.b16 %v5223, %v5222
    %5225 = vrot.lane.b32.xlu0 %v5224, 64
    %v5226 = vpop.permute.xlu0 %5225
    %v5228 = vsel %vm2065, %v5224, 0
    %v5231 = vsel %vm2065, %v5226, 0
    %5233 = vmatpush.bf16.xpose.msra.mxu0 0
    %5234 = vmatpush.bf16.xpose.msra.mxu0 0
    %5235 = vmatpush.bf16.xpose.msra.mxu0 0
    %5236 = vmatpush.bf16.xpose.msra.mxu0 0
    %5237 = vmatpush.bf16.xpose.msra.mxu0 0
    %5238 = vmatpush.bf16.xpose.msra.mxu0 0
    %5239 = vmatpush.bf16.xpose.msra.mxu0 0
    %5240 = vmatpush.bf16.xpose.msra.mxu0 %v5231
    %5241 = vmatmul.bf16.gmra.mxu0 %v5228
    %v5242 = vpop.f32.mrf.mxu0
    %v5243 = vadd.f32 %v4844, %v5242
    %v5244 = vpop.f32.mrf.mxu0
    %v5245 = vadd.f32 %v4845, %v5244
    %5246 = vdwg.mxu0
    %v5247 = vsel %vm2065, %v5189, -inf
    %5248 = vmax.xlane.f32.xlu0 %v5247
    %v5249 = vpop.xlane.xlu0 %5248
    %v5250 = vsel %vm2065, %v5191, -inf
    %5251 = vmax.xlane.f32.xlu0 %v5250
    %v5252 = vpop.xlane.xlu0 %5251
    %v5253 = vsel %vm2065, %v5216, -inf
    %5254 = vmax.xlane.f32.xlu0 %v5253
    %v5255 = vpop.xlane.xlu0 %5254
    %v5256 = vsel %vm2065, %v5218, -inf
    %5257 = vmax.xlane.f32.xlu0 %v5256
    %v5258 = vpop.xlane.xlu0 %5257
    %v5259 = vsel %vm2065, %v5243, -inf
    %5260 = vmax.xlane.f32.xlu0 %v5259
    %v5261 = vpop.xlane.xlu0 %5260
    %v5262 = vsel %vm2065, %v5245, -inf
    %5263 = vmax.xlane.f32.xlu0 %v5262
    %v5264 = vpop.xlane.xlu0 %5263
    %v5265 = vsub.f32 %v5189, %v5249
    %v5266 = vsub.f32 %v5191, %v5252
    %v5267 = vsub.f32 %v5216, %v5255
    %v5268 = vsub.f32 %v5218, %v5258
    %v5269 = vsub.f32 %v5243, %v5261
    %v5270 = vsub.f32 %v5245, %v5264
    %v5271 = vmul.f32 %v5265, 1.442695
    %v5272 = vpow.pop %v5271
    %v5273 = vmul.f32 %v5266, 1.442695
    %v5274 = vpow.pop %v5273
    %v5275 = vmul.f32 %v5267, 1.442695
    %v5276 = vpow.pop %v5275
    %v5277 = vmul.f32 %v5268, 1.442695
    %v5278 = vpow.pop %v5277
    %v5279 = vmul.f32 %v5269, 1.442695
    %v5280 = vpow.pop %v5279
    %v5281 = vmul.f32 %v5270, 1.442695
    %v5282 = vpow.pop %v5281
    %v5283 = vsel %vm2065, %v5272, 0.0
    %5284 = vadd.xlane.f32.xlu0 %v5283
    %v5285 = vpop.xlane.xlu0 %5284
    %v5286 = vsel %vm2065, %v5274, 0.0
    %5287 = vadd.xlane.f32.xlu0 %v5286
    %v5288 = vpop.xlane.xlu0 %5287
    %v5289 = vsel %vm2065, %v5276, 0.0
    %5290 = vadd.xlane.f32.xlu0 %v5289
    %v5291 = vpop.xlane.xlu0 %5290
    %v5292 = vsel %vm2065, %v5278, 0.0
    %5293 = vadd.xlane.f32.xlu0 %v5292
    %v5294 = vpop.xlane.xlu0 %5293
    %v5295 = vsel %vm2065, %v5280, 0.0
    %5296 = vadd.xlane.f32.xlu0 %v5295
    %v5297 = vpop.xlane.xlu0 %5296
    %v5298 = vsel %vm2065, %v5282, 0.0
    %5299 = vadd.xlane.f32.xlu0 %v5298
    %v5300 = vpop.xlane.xlu0 %5299
    %v5301 = vrcp.pop %v5285
    %v5302 = vrcp.pop %v5288
    %v5303 = vrcp.pop %v5291
    %v5304 = vrcp.pop %v5294
    %v5305 = vrcp.pop %v5297
    %v5306 = vrcp.pop %v5300
    %v5307 = vmul.f32 %v5272, %v5301
    %v5308 = vmul.f32 %v5274, %v5302
    %v5309 = vmul.f32 %v5276, %v5303
    %v5310 = vmul.f32 %v5278, %v5304
    %v5311 = vmul.f32 %v5280, %v5305
    %v5312 = vmul.f32 %v5282, %v5306
    %v5313 = vpack.c.bf16 %v5307, %v5307
    %v5314 = vpack.c.bf16 %v5308, %v5308
    %v5315 = vpack.c.bf16 %v5309, %v5309
    %v5316 = vpack.c.bf16 %v5310, %v5310
    %v5317 = vpack.c.bf16 %v5311, %v5311
    %v5318 = vpack.c.bf16 %v5312, %v5312
    %v5321 = vunpack.c.l.b16 %v5313
    %v5322 = vunpack.c.l.b16 %v5314
    %v5323 = vpack.c.b16 %v5322, %v5321
    %v5326 = vunpack.c.l.b16 %v5160
    %v5327 = vunpack.c.l.b16 %v5161
    %v5328 = vpack.c.b16 %v5327, %v5326
    %v5331 = vsel %vm2065, %v5323, 0
    %5333 = vmatpush.bf16.msra.mxu0 0
    %5334 = vmatpush.bf16.msra.mxu0 0
    %5335 = vmatpush.bf16.msra.mxu0 0
    %5336 = vmatpush.bf16.msra.mxu0 0
    %5337 = vmatpush.bf16.msra.mxu0 0
    %5338 = vmatpush.bf16.msra.mxu0 0
    %5339 = vmatpush.bf16.msra.mxu0 0
    %5340 = vmatpush.bf16.msra.mxu0 %v5328
    %5341 = vmatmul.bf16.gmra.mxu0 %v5331
    %v5342 = vpop.f32.mrf.mxu0
    %v5343 = vadd.f32 0.0, %v5342
    %v5344 = vpop.f32.mrf.mxu0
    %v5345 = vadd.f32 0.0, %v5344
    %5346 = vdwg.mxu0
    %v5349 = vunpack.c.l.b16 %v5315
    %v5350 = vunpack.c.l.b16 %v5316
    %v5351 = vpack.c.b16 %v5350, %v5349
    %v5354 = vunpack.c.l.b16 %v5162
    %v5355 = vunpack.c.l.b16 %v5163
    %v5356 = vpack.c.b16 %v5355, %v5354
    %v5359 = vsel %vm2065, %v5351, 0
    %5361 = vmatpush.bf16.msra.mxu0 0
    %5362 = vmatpush.bf16.msra.mxu0 0
    %5363 = vmatpush.bf16.msra.mxu0 0
    %5364 = vmatpush.bf16.msra.mxu0 0
    %5365 = vmatpush.bf16.msra.mxu0 0
    %5366 = vmatpush.bf16.msra.mxu0 0
    %5367 = vmatpush.bf16.msra.mxu0 0
    %5368 = vmatpush.bf16.msra.mxu0 %v5356
    %5369 = vmatmul.bf16.gmra.mxu0 %v5359
    %v5370 = vpop.f32.mrf.mxu0
    %v5371 = vadd.f32 0.0, %v5370
    %v5372 = vpop.f32.mrf.mxu0
    %v5373 = vadd.f32 0.0, %v5372
    %5374 = vdwg.mxu0
    %v5377 = vunpack.c.l.b16 %v5317
    %v5378 = vunpack.c.l.b16 %v5318
    %v5379 = vpack.c.b16 %v5378, %v5377
    %v5382 = vunpack.c.l.b16 %v5164
    %v5383 = vunpack.c.l.b16 %v5165
    %v5384 = vpack.c.b16 %v5383, %v5382
    %v5387 = vsel %vm2065, %v5379, 0
    %5389 = vmatpush.bf16.msra.mxu0 0
    %5390 = vmatpush.bf16.msra.mxu0 0
    %5391 = vmatpush.bf16.msra.mxu0 0
    %5392 = vmatpush.bf16.msra.mxu0 0
    %5393 = vmatpush.bf16.msra.mxu0 0
    %5394 = vmatpush.bf16.msra.mxu0 0
    %5395 = vmatpush.bf16.msra.mxu0 0
    %5396 = vmatpush.bf16.msra.mxu0 %v5384
    %5397 = vmatmul.bf16.gmra.mxu0 %v5387
    %v5398 = vpop.f32.mrf.mxu0
    %v5399 = vadd.f32 0.0, %v5398
    %v5400 = vpop.f32.mrf.mxu0
    %v5401 = vadd.f32 0.0, %v5400
    %5402 = vdwg.mxu0
    %v5403 = vpack.c.bf16 %v5345, %v5343
    %v5404 = vpack.c.bf16 %v5373, %v5371
    %v5405 = vpack.c.bf16 %v5401, %v5399
    %5406 = vrot.lane.b32.xlu0 %v5170, 112
    %v5407 = vpop.permute.xlu0 %5406
    %5408 = vrot.lane.b32.xlu0 %v5170, 48
    %v5409 = vpop.permute.xlu0 %5408
    %v5411 = vsel %vm2065, %v5407, 0
    %v5414 = vsel %vm2065, %v5409, 0
    %5416 = vmatpush.bf16.xpose.msra.mxu0 0
    %5417 = vmatpush.bf16.xpose.msra.mxu0 0
    %5418 = vmatpush.bf16.xpose.msra.mxu0 0
    %5419 = vmatpush.bf16.xpose.msra.mxu0 0
    %5420 = vmatpush.bf16.xpose.msra.mxu0 0
    %5421 = vmatpush.bf16.xpose.msra.mxu0 0
    %5422 = vmatpush.bf16.xpose.msra.mxu0 0
    %5423 = vmatpush.bf16.xpose.msra.mxu0 %v5414
    %5424 = vmatmul.bf16.gmra.mxu0 %v5411
    %v5425 = vpop.f32.mrf.mxu0
    %v5426 = vadd.f32 %v4844, %v5425
    %v5427 = vpop.f32.mrf.mxu0
    %v5428 = vadd.f32 %v4845, %v5427
    %5429 = vdwg.mxu0
    %5430 = vrot.lane.b32.xlu0 %v5197, 112
    %v5431 = vpop.permute.xlu0 %5430
    %5432 = vrot.lane.b32.xlu0 %v5197, 48
    %v5433 = vpop.permute.xlu0 %5432
    %v5435 = vsel %vm2065, %v5431, 0
    %v5438 = vsel %vm2065, %v5433, 0
    %5440 = vmatpush.bf16.xpose.msra.mxu0 0
    %5441 = vmatpush.bf16.xpose.msra.mxu0 0
    %5442 = vmatpush.bf16.xpose.msra.mxu0 0
    %5443 = vmatpush.bf16.xpose.msra.mxu0 0
    %5444 = vmatpush.bf16.xpose.msra.mxu0 0
    %5445 = vmatpush.bf16.xpose.msra.mxu0 0
    %5446 = vmatpush.bf16.xpose.msra.mxu0 0
    %5447 = vmatpush.bf16.xpose.msra.mxu0 %v5438
    %5448 = vmatmul.bf16.gmra.mxu0 %v5435
    %v5449 = vpop.f32.mrf.mxu0
    %v5450 = vadd.f32 %v4844, %v5449
    %v5451 = vpop.f32.mrf.mxu0
    %v5452 = vadd.f32 %v4845, %v5451
    %5453 = vdwg.mxu0
    %5454 = vrot.lane.b32.xlu0 %v5224, 112
    %v5455 = vpop.permute.xlu0 %5454
    %5456 = vrot.lane.b32.xlu0 %v5224, 48
    %v5457 = vpop.permute.xlu0 %5456
    %v5459 = vsel %vm2065, %v5455, 0
    %v5462 = vsel %vm2065, %v5457, 0
    %5464 = vmatpush.bf16.xpose.msra.mxu0 0
    %5465 = vmatpush.bf16.xpose.msra.mxu0 0
    %5466 = vmatpush.bf16.xpose.msra.mxu0 0
    %5467 = vmatpush.bf16.xpose.msra.mxu0 0
    %5468 = vmatpush.bf16.xpose.msra.mxu0 0
    %5469 = vmatpush.bf16.xpose.msra.mxu0 0
    %5470 = vmatpush.bf16.xpose.msra.mxu0 0
    %5471 = vmatpush.bf16.xpose.msra.mxu0 %v5462
    %5472 = vmatmul.bf16.gmra.mxu0 %v5459
    %v5473 = vpop.f32.mrf.mxu0
    %v5474 = vadd.f32 %v4844, %v5473
    %v5475 = vpop.f32.mrf.mxu0
    %v5476 = vadd.f32 %v4845, %v5475
    %5477 = vdwg.mxu0
    %v5478 = vsel %vm2065, %v5426, -inf
    %5479 = vmax.xlane.f32.xlu0 %v5478
    %v5480 = vpop.xlane.xlu0 %5479
    %v5481 = vsel %vm2065, %v5428, -inf
    %5482 = vmax.xlane.f32.xlu0 %v5481
    %v5483 = vpop.xlane.xlu0 %5482
    %v5484 = vsel %vm2065, %v5450, -inf
    %5485 = vmax.xlane.f32.xlu0 %v5484
    %v5486 = vpop.xlane.xlu0 %5485
    %v5487 = vsel %vm2065, %v5452, -inf
    %5488 = vmax.xlane.f32.xlu0 %v5487
    %v5489 = vpop.xlane.xlu0 %5488
    %v5490 = vsel %vm2065, %v5474, -inf
    %5491 = vmax.xlane.f32.xlu0 %v5490
    %v5492 = vpop.xlane.xlu0 %5491
    %v5493 = vsel %vm2065, %v5476, -inf
    %5494 = vmax.xlane.f32.xlu0 %v5493
    %v5495 = vpop.xlane.xlu0 %5494
    %v5496 = vsub.f32 %v5426, %v5480
    %v5497 = vsub.f32 %v5428, %v5483
    %v5498 = vsub.f32 %v5450, %v5486
    %v5499 = vsub.f32 %v5452, %v5489
    %v5500 = vsub.f32 %v5474, %v5492
    %v5501 = vsub.f32 %v5476, %v5495
    %v5502 = vmul.f32 %v5496, 1.442695
    %v5503 = vpow.pop %v5502
    %v5504 = vmul.f32 %v5497, 1.442695
    %v5505 = vpow.pop %v5504
    %v5506 = vmul.f32 %v5498, 1.442695
    %v5507 = vpow.pop %v5506
    %v5508 = vmul.f32 %v5499, 1.442695
    %v5509 = vpow.pop %v5508
    %v5510 = vmul.f32 %v5500, 1.442695
    %v5511 = vpow.pop %v5510
    %v5512 = vmul.f32 %v5501, 1.442695
    %v5513 = vpow.pop %v5512
    %v5514 = vsel %vm2065, %v5503, 0.0
    %5515 = vadd.xlane.f32.xlu0 %v5514
    %v5516 = vpop.xlane.xlu0 %5515
    %v5517 = vsel %vm2065, %v5505, 0.0
    %5518 = vadd.xlane.f32.xlu0 %v5517
    %v5519 = vpop.xlane.xlu0 %5518
    %v5520 = vsel %vm2065, %v5507, 0.0
    %5521 = vadd.xlane.f32.xlu0 %v5520
    %v5522 = vpop.xlane.xlu0 %5521
    %v5523 = vsel %vm2065, %v5509, 0.0
    %5524 = vadd.xlane.f32.xlu0 %v5523
    %v5525 = vpop.xlane.xlu0 %5524
    %v5526 = vsel %vm2065, %v5511, 0.0
    %5527 = vadd.xlane.f32.xlu0 %v5526
    %v5528 = vpop.xlane.xlu0 %5527
    %v5529 = vsel %vm2065, %v5513, 0.0
    %5530 = vadd.xlane.f32.xlu0 %v5529
    %v5531 = vpop.xlane.xlu0 %5530
    %v5532 = vrcp.pop %v5516
    %v5533 = vrcp.pop %v5519
    %v5534 = vrcp.pop %v5522
    %v5535 = vrcp.pop %v5525
    %v5536 = vrcp.pop %v5528
    %v5537 = vrcp.pop %v5531
    %v5538 = vmul.f32 %v5503, %v5532
    %v5539 = vmul.f32 %v5505, %v5533
    %v5540 = vmul.f32 %v5507, %v5534
    %v5541 = vmul.f32 %v5509, %v5535
    %v5542 = vmul.f32 %v5511, %v5536
    %v5543 = vmul.f32 %v5513, %v5537
    %v5544 = vpack.c.bf16 %v5538, %v5538
    %v5545 = vpack.c.bf16 %v5539, %v5539
    %v5546 = vpack.c.bf16 %v5540, %v5540
    %v5547 = vpack.c.bf16 %v5541, %v5541
    %v5548 = vpack.c.bf16 %v5542, %v5542
    %v5549 = vpack.c.bf16 %v5543, %v5543
    %v5552 = vunpack.c.l.b16 %v5544
    %v5553 = vunpack.c.l.b16 %v5545
    %v5554 = vpack.c.b16 %v5553, %v5552
    %5555 = vrot.lane.b32.xlu0 %v5328, 112
    %v5556 = vpop.permute.xlu0 %5555
    %v5559 = vsel %vm2065, %v5554, 0
    %5561 = vmatpush.bf16.msra.mxu0 0
    %5562 = vmatpush.bf16.msra.mxu0 0
    %5563 = vmatpush.bf16.msra.mxu0 0
    %5564 = vmatpush.bf16.msra.mxu0 0
    %5565 = vmatpush.bf16.msra.mxu0 0
    %5566 = vmatpush.bf16.msra.mxu0 0
    %5567 = vmatpush.bf16.msra.mxu0 0
    %5568 = vmatpush.bf16.msra.mxu0 %v5556
    %5569 = vmatmul.bf16.gmra.mxu0 %v5559
    %v5570 = vpop.f32.mrf.mxu0
    %v5571 = vadd.f32 0.0, %v5570
    %v5572 = vpop.f32.mrf.mxu0
    %v5573 = vadd.f32 0.0, %v5572
    %5574 = vdwg.mxu0
    %v5577 = vunpack.c.l.b16 %v5546
    %v5578 = vunpack.c.l.b16 %v5547
    %v5579 = vpack.c.b16 %v5578, %v5577
    %5580 = vrot.lane.b32.xlu0 %v5356, 112
    %v5581 = vpop.permute.xlu0 %5580
    %v5584 = vsel %vm2065, %v5579, 0
    %5586 = vmatpush.bf16.msra.mxu0 0
    %5587 = vmatpush.bf16.msra.mxu0 0
    %5588 = vmatpush.bf16.msra.mxu0 0
    %5589 = vmatpush.bf16.msra.mxu0 0
    %5590 = vmatpush.bf16.msra.mxu0 0
    %5591 = vmatpush.bf16.msra.mxu0 0
    %5592 = vmatpush.bf16.msra.mxu0 0
    %5593 = vmatpush.bf16.msra.mxu0 %v5581
    %5594 = vmatmul.bf16.gmra.mxu0 %v5584
    %v5595 = vpop.f32.mrf.mxu0
    %v5596 = vadd.f32 0.0, %v5595
    %v5597 = vpop.f32.mrf.mxu0
    %v5598 = vadd.f32 0.0, %v5597
    %5599 = vdwg.mxu0
    %v5602 = vunpack.c.l.b16 %v5548
    %v5603 = vunpack.c.l.b16 %v5549
    %v5604 = vpack.c.b16 %v5603, %v5602
    %5605 = vrot.lane.b32.xlu0 %v5384, 112
    %v5606 = vpop.permute.xlu0 %5605
    %v5609 = vsel %vm2065, %v5604, 0
    %5611 = vmatpush.bf16.msra.mxu0 0
    %5612 = vmatpush.bf16.msra.mxu0 0
    %5613 = vmatpush.bf16.msra.mxu0 0
    %5614 = vmatpush.bf16.msra.mxu0 0
    %5615 = vmatpush.bf16.msra.mxu0 0
    %5616 = vmatpush.bf16.msra.mxu0 0
    %5617 = vmatpush.bf16.msra.mxu0 0
    %5618 = vmatpush.bf16.msra.mxu0 %v5606
    %5619 = vmatmul.bf16.gmra.mxu0 %v5609
    %v5620 = vpop.f32.mrf.mxu0
    %v5621 = vadd.f32 0.0, %v5620
    %v5622 = vpop.f32.mrf.mxu0
    %v5623 = vadd.f32 0.0, %v5622
    %5624 = vdwg.mxu0
    %v5625 = vpack.c.bf16 %v5573, %v5571
    %v5626 = vpack.c.bf16 %v5598, %v5596
    %v5627 = vpack.c.bf16 %v5623, %v5621
    %v5630 = vunpack.c.l.b16 %v4807
    %v5631 = vunpack.c.l.b16 %v4808
    %v5632 = vpack.c.b16 %v5631, %v5630
    %v5635 = vsel %vm2065, %v5625, 0
    %v5638 = vsel %vm2065, %v5626, 0
    %v5641 = vsel %vm2065, %v5627, 0
    %5643 = vmatpush.bf16.msra.mxu0 0
    %5644 = vmatpush.bf16.msra.mxu0 0
    %5645 = vmatpush.bf16.msra.mxu0 0
    %5646 = vmatpush.bf16.msra.mxu0 0
    %5647 = vmatpush.bf16.msra.mxu0 0
    %5648 = vmatpush.bf16.msra.mxu0 0
    %5649 = vmatpush.bf16.msra.mxu0 0
    %5650 = vmatpush.bf16.msra.mxu0 %v5632
    %5651 = vmatmul.bf16.gmra.mxu0 %v5635
    %v5652 = vpop.f32.mrf.mxu0
    %v5653 = vadd.f32 0.0, %v5652
    %v5654 = vpop.f32.mrf.mxu0
    %v5655 = vadd.f32 0.0, %v5654
    %5656 = vmatmul.bf16.gmra.mxu0 %v5638
    %v5657 = vpop.f32.mrf.mxu0
    %v5658 = vadd.f32 0.0, %v5657
    %v5659 = vpop.f32.mrf.mxu0
    %v5660 = vadd.f32 0.0, %v5659
    %5661 = vmatmul.bf16.gmra.mxu0 %v5641
    %v5662 = vpop.f32.mrf.mxu0
    %v5663 = vadd.f32 0.0, %v5662
    %v5664 = vpop.f32.mrf.mxu0
    %v5665 = vadd.f32 0.0, %v5664
    %5666 = vdwg.mxu0
    %v5669 = vunpack.c.l.b16 %v4805
    %v5670 = vunpack.c.l.b16 %v4806
    %v5671 = vpack.c.b16 %v5670, %v5669
    %v5674 = vsel %vm2065, %v5403, 0
    %v5677 = vsel %vm2065, %v5404, 0
    %v5680 = vsel %vm2065, %v5405, 0
    %5682 = vmatpush.bf16.msra.mxu0 0
    %5683 = vmatpush.bf16.msra.mxu0 0
    %5684 = vmatpush.bf16.msra.mxu0 0
    %5685 = vmatpush.bf16.msra.mxu0 0
    %5686 = vmatpush.bf16.msra.mxu0 0
    %5687 = vmatpush.bf16.msra.mxu0 0
    %5688 = vmatpush.bf16.msra.mxu0 0
    %5689 = vmatpush.bf16.msra.mxu0 %v5671
    %5690 = vmatmul.bf16.gmra.mxu0 %v5674
    %v5691 = vpop.f32.mrf.mxu0
    %v5692 = vadd.f32 %v5653, %v5691
    %v5693 = vpop.f32.mrf.mxu0
    %v5694 = vadd.f32 %v5655, %v5693
    %5695 = vmatmul.bf16.gmra.mxu0 %v5677
    %v5696 = vpop.f32.mrf.mxu0
    %v5697 = vadd.f32 %v5658, %v5696
    %v5698 = vpop.f32.mrf.mxu0
    %v5699 = vadd.f32 %v5660, %v5698
    %5700 = vmatmul.bf16.gmra.mxu0 %v5680
    %v5701 = vpop.f32.mrf.mxu0
    %v5702 = vadd.f32 %v5663, %v5701
    %v5703 = vpop.f32.mrf.mxu0
    %v5704 = vadd.f32 %v5665, %v5703
    %5705 = vdwg.mxu0
    %5706 = vrot.lane.b32.xlu0 %v5170, 96
    %v5707 = vpop.permute.xlu0 %5706
    %5708 = vrot.lane.b32.xlu0 %v5170, 32
    %v5709 = vpop.permute.xlu0 %5708
    %v5711 = vsel %vm2065, %v5707, 0
    %v5714 = vsel %vm2065, %v5709, 0
    %5716 = vmatpush.bf16.xpose.msra.mxu0 0
    %5717 = vmatpush.bf16.xpose.msra.mxu0 0
    %5718 = vmatpush.bf16.xpose.msra.mxu0 0
    %5719 = vmatpush.bf16.xpose.msra.mxu0 0
    %5720 = vmatpush.bf16.xpose.msra.mxu0 0
    %5721 = vmatpush.bf16.xpose.msra.mxu0 0
    %5722 = vmatpush.bf16.xpose.msra.mxu0 0
    %5723 = vmatpush.bf16.xpose.msra.mxu0 %v5714
    %5724 = vmatmul.bf16.gmra.mxu0 %v5711
    %v5725 = vpop.f32.mrf.mxu0
    %v5726 = vadd.f32 %v4844, %v5725
    %v5727 = vpop.f32.mrf.mxu0
    %v5728 = vadd.f32 %v4845, %v5727
    %5729 = vdwg.mxu0
    %5730 = vrot.lane.b32.xlu0 %v5197, 96
    %v5731 = vpop.permute.xlu0 %5730
    %5732 = vrot.lane.b32.xlu0 %v5197, 32
    %v5733 = vpop.permute.xlu0 %5732
    %v5735 = vsel %vm2065, %v5731, 0
    %v5738 = vsel %vm2065, %v5733, 0
    %5740 = vmatpush.bf16.xpose.msra.mxu0 0
    %5741 = vmatpush.bf16.xpose.msra.mxu0 0
    %5742 = vmatpush.bf16.xpose.msra.mxu0 0
    %5743 = vmatpush.bf16.xpose.msra.mxu0 0
    %5744 = vmatpush.bf16.xpose.msra.mxu0 0
    %5745 = vmatpush.bf16.xpose.msra.mxu0 0
    %5746 = vmatpush.bf16.xpose.msra.mxu0 0
    %5747 = vmatpush.bf16.xpose.msra.mxu0 %v5738
    %5748 = vmatmul.bf16.gmra.mxu0 %v5735
    %v5749 = vpop.f32.mrf.mxu0
    %v5750 = vadd.f32 %v4844, %v5749
    %v5751 = vpop.f32.mrf.mxu0
    %v5752 = vadd.f32 %v4845, %v5751
    %5753 = vdwg.mxu0
    %5754 = vrot.lane.b32.xlu0 %v5224, 96
    %v5755 = vpop.permute.xlu0 %5754
    %5756 = vrot.lane.b32.xlu0 %v5224, 32
    %v5757 = vpop.permute.xlu0 %5756
    %v5759 = vsel %vm2065, %v5755, 0
    %v5762 = vsel %vm2065, %v5757, 0
    %5764 = vmatpush.bf16.xpose.msra.mxu0 0
    %5765 = vmatpush.bf16.xpose.msra.mxu0 0
    %5766 = vmatpush.bf16.xpose.msra.mxu0 0
    %5767 = vmatpush.bf16.xpose.msra.mxu0 0
    %5768 = vmatpush.bf16.xpose.msra.mxu0 0
    %5769 = vmatpush.bf16.xpose.msra.mxu0 0
    %5770 = vmatpush.bf16.xpose.msra.mxu0 0
    %5771 = vmatpush.bf16.xpose.msra.mxu0 %v5762
    %5772 = vmatmul.bf16.gmra.mxu0 %v5759
    %v5773 = vpop.f32.mrf.mxu0
    %v5774 = vadd.f32 %v4844, %v5773
    %v5775 = vpop.f32.mrf.mxu0
    %v5776 = vadd.f32 %v4845, %v5775
    %5777 = vdwg.mxu0
    %v5778 = vsel %vm2065, %v5726, -inf
    %5779 = vmax.xlane.f32.xlu0 %v5778
    %v5780 = vpop.xlane.xlu0 %5779
    %v5781 = vsel %vm2065, %v5728, -inf
    %5782 = vmax.xlane.f32.xlu0 %v5781
    %v5783 = vpop.xlane.xlu0 %5782
    %v5784 = vsel %vm2065, %v5750, -inf
    %5785 = vmax.xlane.f32.xlu0 %v5784
    %v5786 = vpop.xlane.xlu0 %5785
    %v5787 = vsel %vm2065, %v5752, -inf
    %5788 = vmax.xlane.f32.xlu0 %v5787
    %v5789 = vpop.xlane.xlu0 %5788
    %v5790 = vsel %vm2065, %v5774, -inf
    %5791 = vmax.xlane.f32.xlu0 %v5790
    %v5792 = vpop.xlane.xlu0 %5791
    %v5793 = vsel %vm2065, %v5776, -inf
    %5794 = vmax.xlane.f32.xlu0 %v5793
    %v5795 = vpop.xlane.xlu0 %5794
    %v5796 = vsub.f32 %v5726, %v5780
    %v5797 = vsub.f32 %v5728, %v5783
    %v5798 = vsub.f32 %v5750, %v5786
    %v5799 = vsub.f32 %v5752, %v5789
    %v5800 = vsub.f32 %v5774, %v5792
    %v5801 = vsub.f32 %v5776, %v5795
    %v5802 = vmul.f32 %v5796, 1.442695
    %v5803 = vpow.pop %v5802
    %v5804 = vmul.f32 %v5797, 1.442695
    %v5805 = vpow.pop %v5804
    %v5806 = vmul.f32 %v5798, 1.442695
    %v5807 = vpow.pop %v5806
    %v5808 = vmul.f32 %v5799, 1.442695
    %v5809 = vpow.pop %v5808
    %v5810 = vmul.f32 %v5800, 1.442695
    %v5811 = vpow.pop %v5810
    %v5812 = vmul.f32 %v5801, 1.442695
    %v5813 = vpow.pop %v5812
    %v5814 = vsel %vm2065, %v5803, 0.0
    %5815 = vadd.xlane.f32.xlu0 %v5814
    %v5816 = vpop.xlane.xlu0 %5815
    %v5817 = vsel %vm2065, %v5805, 0.0
    %5818 = vadd.xlane.f32.xlu0 %v5817
    %v5819 = vpop.xlane.xlu0 %5818
    %v5820 = vsel %vm2065, %v5807, 0.0
    %5821 = vadd.xlane.f32.xlu0 %v5820
    %v5822 = vpop.xlane.xlu0 %5821
    %v5823 = vsel %vm2065, %v5809, 0.0
    %5824 = vadd.xlane.f32.xlu0 %v5823
    %v5825 = vpop.xlane.xlu0 %5824
    %v5826 = vsel %vm2065, %v5811, 0.0
    %5827 = vadd.xlane.f32.xlu0 %v5826
    %v5828 = vpop.xlane.xlu0 %5827
    %v5829 = vsel %vm2065, %v5813, 0.0
    %5830 = vadd.xlane.f32.xlu0 %v5829
    %v5831 = vpop.xlane.xlu0 %5830
    %v5832 = vrcp.pop %v5816
    %v5833 = vrcp.pop %v5819
    %v5834 = vrcp.pop %v5822
    %v5835 = vrcp.pop %v5825
    %v5836 = vrcp.pop %v5828
    %v5837 = vrcp.pop %v5831
    %v5838 = vmul.f32 %v5803, %v5832
    %v5839 = vmul.f32 %v5805, %v5833
    %v5840 = vmul.f32 %v5807, %v5834
    %v5841 = vmul.f32 %v5809, %v5835
    %v5842 = vmul.f32 %v5811, %v5836
    %v5843 = vmul.f32 %v5813, %v5837
    %v5844 = vpack.c.bf16 %v5838, %v5838
    %v5845 = vpack.c.bf16 %v5839, %v5839
    %v5846 = vpack.c.bf16 %v5840, %v5840
    %v5847 = vpack.c.bf16 %v5841, %v5841
    %v5848 = vpack.c.bf16 %v5842, %v5842
    %v5849 = vpack.c.bf16 %v5843, %v5843
    %v5852 = vunpack.c.l.b16 %v5844
    %v5853 = vunpack.c.l.b16 %v5845
    %v5854 = vpack.c.b16 %v5853, %v5852
    %5855 = vrot.lane.b32.xlu0 %v5328, 96
    %v5856 = vpop.permute.xlu0 %5855
    %v5859 = vsel %vm2065, %v5854, 0
    %5861 = vmatpush.bf16.msra.mxu0 0
    %5862 = vmatpush.bf16.msra.mxu0 0
    %5863 = vmatpush.bf16.msra.mxu0 0
    %5864 = vmatpush.bf16.msra.mxu0 0
    %5865 = vmatpush.bf16.msra.mxu0 0
    %5866 = vmatpush.bf16.msra.mxu0 0
    %5867 = vmatpush.bf16.msra.mxu0 0
    %5868 = vmatpush.bf16.msra.mxu0 %v5856
    %5869 = vmatmul.bf16.gmra.mxu0 %v5859
    %v5870 = vpop.f32.mrf.mxu0
    %v5871 = vadd.f32 0.0, %v5870
    %v5872 = vpop.f32.mrf.mxu0
    %v5873 = vadd.f32 0.0, %v5872
    %5874 = vdwg.mxu0
    %v5877 = vunpack.c.l.b16 %v5846
    %v5878 = vunpack.c.l.b16 %v5847
    %v5879 = vpack.c.b16 %v5878, %v5877
    %5880 = vrot.lane.b32.xlu0 %v5356, 96
    %v5881 = vpop.permute.xlu0 %5880
    %v5884 = vsel %vm2065, %v5879, 0
    %5886 = vmatpush.bf16.msra.mxu0 0
    %5887 = vmatpush.bf16.msra.mxu0 0
    %5888 = vmatpush.bf16.msra.mxu0 0
    %5889 = vmatpush.bf16.msra.mxu0 0
    %5890 = vmatpush.bf16.msra.mxu0 0
    %5891 = vmatpush.bf16.msra.mxu0 0
    %5892 = vmatpush.bf16.msra.mxu0 0
    %5893 = vmatpush.bf16.msra.mxu0 %v5881
    %5894 = vmatmul.bf16.gmra.mxu0 %v5884
    %v5895 = vpop.f32.mrf.mxu0
    %v5896 = vadd.f32 0.0, %v5895
    %v5897 = vpop.f32.mrf.mxu0
    %v5898 = vadd.f32 0.0, %v5897
    %5899 = vdwg.mxu0
    %v5902 = vunpack.c.l.b16 %v5848
    %v5903 = vunpack.c.l.b16 %v5849
    %v5904 = vpack.c.b16 %v5903, %v5902
    %5905 = vrot.lane.b32.xlu0 %v5384, 96
    %v5906 = vpop.permute.xlu0 %5905
    %v5909 = vsel %vm2065, %v5904, 0
    %5911 = vmatpush.bf16.msra.mxu0 0
    %5912 = vmatpush.bf16.msra.mxu0 0
    %5913 = vmatpush.bf16.msra.mxu0 0
    %5914 = vmatpush.bf16.msra.mxu0 0
    %5915 = vmatpush.bf16.msra.mxu0 0
    %5916 = vmatpush.bf16.msra.mxu0 0
    %5917 = vmatpush.bf16.msra.mxu0 0
    %5918 = vmatpush.bf16.msra.mxu0 %v5906
    %5919 = vmatmul.bf16.gmra.mxu0 %v5909
    %v5920 = vpop.f32.mrf.mxu0
    %v5921 = vadd.f32 0.0, %v5920
    %v5922 = vpop.f32.mrf.mxu0
    %v5923 = vadd.f32 0.0, %v5922
    %5924 = vdwg.mxu0
    %v5925 = vpack.c.bf16 %v5873, %v5871
    %v5926 = vpack.c.bf16 %v5898, %v5896
    %v5927 = vpack.c.bf16 %v5923, %v5921
    %v5930 = vunpack.c.l.b16 %v4809
    %v5931 = vunpack.c.l.b16 %v4810
    %v5932 = vpack.c.b16 %v5931, %v5930
    %v5935 = vsel %vm2065, %v5925, 0
    %v5938 = vsel %vm2065, %v5926, 0
    %v5941 = vsel %vm2065, %v5927, 0
    %5943 = vmatpush.bf16.msra.mxu0 0
    %5944 = vmatpush.bf16.msra.mxu0 0
    %5945 = vmatpush.bf16.msra.mxu0 0
    %5946 = vmatpush.bf16.msra.mxu0 0
    %5947 = vmatpush.bf16.msra.mxu0 0
    %5948 = vmatpush.bf16.msra.mxu0 0
    %5949 = vmatpush.bf16.msra.mxu0 0
    %5950 = vmatpush.bf16.msra.mxu0 %v5932
    %5951 = vmatmul.bf16.gmra.mxu0 %v5935
    %v5952 = vpop.f32.mrf.mxu0
    %v5953 = vadd.f32 0.0, %v5952
    %v5954 = vpop.f32.mrf.mxu0
    %v5955 = vadd.f32 0.0, %v5954
    %5956 = vmatmul.bf16.gmra.mxu0 %v5938
    %v5957 = vpop.f32.mrf.mxu0
    %v5958 = vadd.f32 0.0, %v5957
    %v5959 = vpop.f32.mrf.mxu0
    %v5960 = vadd.f32 0.0, %v5959
    %5961 = vmatmul.bf16.gmra.mxu0 %v5941
    %v5962 = vpop.f32.mrf.mxu0
    %v5963 = vadd.f32 0.0, %v5962
    %v5964 = vpop.f32.mrf.mxu0
    %v5965 = vadd.f32 0.0, %v5964
    %5966 = vdwg.mxu0
    %v5967 = vadd.f32 %v5692, %v5953
    %v5968 = vadd.f32 %v5694, %v5955
    %v5969 = vadd.f32 %v5697, %v5958
    %v5970 = vadd.f32 %v5699, %v5960
    %v5971 = vadd.f32 %v5702, %v5963
    %v5972 = vadd.f32 %v5704, %v5965
    %5973 = vrot.lane.b32.xlu0 %v5170, 80
    %v5974 = vpop.permute.xlu0 %5973
    %5975 = vrot.lane.b32.xlu0 %v5170, 16
    %v5976 = vpop.permute.xlu0 %5975
    %v5978 = vsel %vm2065, %v5974, 0
    %v5981 = vsel %vm2065, %v5976, 0
    %5983 = vmatpush.bf16.xpose.msra.mxu0 0
    %5984 = vmatpush.bf16.xpose.msra.mxu0 0
    %5985 = vmatpush.bf16.xpose.msra.mxu0 0
    %5986 = vmatpush.bf16.xpose.msra.mxu0 0
    %5987 = vmatpush.bf16.xpose.msra.mxu0 0
    %5988 = vmatpush.bf16.xpose.msra.mxu0 0
    %5989 = vmatpush.bf16.xpose.msra.mxu0 0
    %5990 = vmatpush.bf16.xpose.msra.mxu0 %v5981
    %5991 = vmatmul.bf16.gmra.mxu0 %v5978
    %v5992 = vpop.f32.mrf.mxu0
    %v5993 = vadd.f32 %v4844, %v5992
    %v5994 = vpop.f32.mrf.mxu0
    %v5995 = vadd.f32 %v4845, %v5994
    %5996 = vdwg.mxu0
    %5997 = vrot.lane.b32.xlu0 %v5197, 80
    %v5998 = vpop.permute.xlu0 %5997
    %5999 = vrot.lane.b32.xlu0 %v5197, 16
    %v6000 = vpop.permute.xlu0 %5999
    %v6002 = vsel %vm2065, %v5998, 0
    %v6005 = vsel %vm2065, %v6000, 0
    %6007 = vmatpush.bf16.xpose.msra.mxu0 0
    %6008 = vmatpush.bf16.xpose.msra.mxu0 0
    %6009 = vmatpush.bf16.xpose.msra.mxu0 0
    %6010 = vmatpush.bf16.xpose.msra.mxu0 0
    %6011 = vmatpush.bf16.xpose.msra.mxu0 0
    %6012 = vmatpush.bf16.xpose.msra.mxu0 0
    %6013 = vmatpush.bf16.xpose.msra.mxu0 0
    %6014 = vmatpush.bf16.xpose.msra.mxu0 %v6005
    %6015 = vmatmul.bf16.gmra.mxu0 %v6002
    %v6016 = vpop.f32.mrf.mxu0
    %v6017 = vadd.f32 %v4844, %v6016
    %v6018 = vpop.f32.mrf.mxu0
    %v6019 = vadd.f32 %v4845, %v6018
    %6020 = vdwg.mxu0
    %6021 = vrot.lane.b32.xlu0 %v5224, 80
    %v6022 = vpop.permute.xlu0 %6021
    %6023 = vrot.lane.b32.xlu0 %v5224, 16
    %v6024 = vpop.permute.xlu0 %6023
    %v6026 = vsel %vm2065, %v6022, 0
    %v6029 = vsel %vm2065, %v6024, 0
    %6031 = vmatpush.bf16.xpose.msra.mxu0 0
    %6032 = vmatpush.bf16.xpose.msra.mxu0 0
    %6033 = vmatpush.bf16.xpose.msra.mxu0 0
    %6034 = vmatpush.bf16.xpose.msra.mxu0 0
    %6035 = vmatpush.bf16.xpose.msra.mxu0 0
    %6036 = vmatpush.bf16.xpose.msra.mxu0 0
    %6037 = vmatpush.bf16.xpose.msra.mxu0 0
    %6038 = vmatpush.bf16.xpose.msra.mxu0 %v6029
    %6039 = vmatmul.bf16.gmra.mxu0 %v6026
    %v6040 = vpop.f32.mrf.mxu0
    %v6041 = vadd.f32 %v4844, %v6040
    %v6042 = vpop.f32.mrf.mxu0
    %v6043 = vadd.f32 %v4845, %v6042
    %6044 = vdwg.mxu0
    %v6045 = vsel %vm2065, %v5993, -inf
    %6046 = vmax.xlane.f32.xlu0 %v6045
    %v6047 = vpop.xlane.xlu0 %6046
    %v6048 = vsel %vm2065, %v5995, -inf
    %6049 = vmax.xlane.f32.xlu0 %v6048
    %v6050 = vpop.xlane.xlu0 %6049
    %v6051 = vsel %vm2065, %v6017, -inf
    %6052 = vmax.xlane.f32.xlu0 %v6051
    %v6053 = vpop.xlane.xlu0 %6052
    %v6054 = vsel %vm2065, %v6019, -inf
    %6055 = vmax.xlane.f32.xlu0 %v6054
    %v6056 = vpop.xlane.xlu0 %6055
    %v6057 = vsel %vm2065, %v6041, -inf
    %6058 = vmax.xlane.f32.xlu0 %v6057
    %v6059 = vpop.xlane.xlu0 %6058
    %v6060 = vsel %vm2065, %v6043, -inf
    %6061 = vmax.xlane.f32.xlu0 %v6060
    %v6062 = vpop.xlane.xlu0 %6061
    %v6063 = vsub.f32 %v5993, %v6047
    %v6064 = vsub.f32 %v5995, %v6050
    %v6065 = vsub.f32 %v6017, %v6053
    %v6066 = vsub.f32 %v6019, %v6056
    %v6067 = vsub.f32 %v6041, %v6059
    %v6068 = vsub.f32 %v6043, %v6062
    %v6069 = vmul.f32 %v6063, 1.442695
    %v6070 = vpow.pop %v6069
    %v6071 = vmul.f32 %v6064, 1.442695
    %v6072 = vpow.pop %v6071
    %v6073 = vmul.f32 %v6065, 1.442695
    %v6074 = vpow.pop %v6073
    %v6075 = vmul.f32 %v6066, 1.442695
    %v6076 = vpow.pop %v6075
    %v6077 = vmul.f32 %v6067, 1.442695
    %v6078 = vpow.pop %v6077
    %v6079 = vmul.f32 %v6068, 1.442695
    %v6080 = vpow.pop %v6079
    %v6081 = vsel %vm2065, %v6070, 0.0
    %6082 = vadd.xlane.f32.xlu0 %v6081
    %v6083 = vpop.xlane.xlu0 %6082
    %v6084 = vsel %vm2065, %v6072, 0.0
    %6085 = vadd.xlane.f32.xlu0 %v6084
    %v6086 = vpop.xlane.xlu0 %6085
    %v6087 = vsel %vm2065, %v6074, 0.0
    %6088 = vadd.xlane.f32.xlu0 %v6087
    %v6089 = vpop.xlane.xlu0 %6088
    %v6090 = vsel %vm2065, %v6076, 0.0
    %6091 = vadd.xlane.f32.xlu0 %v6090
    %v6092 = vpop.xlane.xlu0 %6091
    %v6093 = vsel %vm2065, %v6078, 0.0
    %6094 = vadd.xlane.f32.xlu0 %v6093
    %v6095 = vpop.xlane.xlu0 %6094
    %v6096 = vsel %vm2065, %v6080, 0.0
    %6097 = vadd.xlane.f32.xlu0 %v6096
    %v6098 = vpop.xlane.xlu0 %6097
    %v6099 = vrcp.pop %v6083
    %v6100 = vrcp.pop %v6086
    %v6101 = vrcp.pop %v6089
    %v6102 = vrcp.pop %v6092
    %v6103 = vrcp.pop %v6095
    %v6104 = vrcp.pop %v6098
    %v6105 = vmul.f32 %v6070, %v6099
    %v6106 = vmul.f32 %v6072, %v6100
    %v6107 = vmul.f32 %v6074, %v6101
    %v6108 = vmul.f32 %v6076, %v6102
    %v6109 = vmul.f32 %v6078, %v6103
    %v6110 = vmul.f32 %v6080, %v6104
    %v6111 = vpack.c.bf16 %v6105, %v6105
    %v6112 = vpack.c.bf16 %v6106, %v6106
    %v6113 = vpack.c.bf16 %v6107, %v6107
    %v6114 = vpack.c.bf16 %v6108, %v6108
    %v6115 = vpack.c.bf16 %v6109, %v6109
    %v6116 = vpack.c.bf16 %v6110, %v6110
    %v6119 = vunpack.c.l.b16 %v6111
    %v6120 = vunpack.c.l.b16 %v6112
    %v6121 = vpack.c.b16 %v6120, %v6119
    %6122 = vrot.lane.b32.xlu0 %v5328, 80
    %v6123 = vpop.permute.xlu0 %6122
    %v6126 = vsel %vm2065, %v6121, 0
    %6128 = vmatpush.bf16.msra.mxu0 0
    %6129 = vmatpush.bf16.msra.mxu0 0
    %6130 = vmatpush.bf16.msra.mxu0 0
    %6131 = vmatpush.bf16.msra.mxu0 0
    %6132 = vmatpush.bf16.msra.mxu0 0
    %6133 = vmatpush.bf16.msra.mxu0 0
    %6134 = vmatpush.bf16.msra.mxu0 0
    %6135 = vmatpush.bf16.msra.mxu0 %v6123
    %6136 = vmatmul.bf16.gmra.mxu0 %v6126
    %v6137 = vpop.f32.mrf.mxu0
    %v6138 = vadd.f32 0.0, %v6137
    %v6139 = vpop.f32.mrf.mxu0
    %v6140 = vadd.f32 0.0, %v6139
    %6141 = vdwg.mxu0
    %v6144 = vunpack.c.l.b16 %v6113
    %v6145 = vunpack.c.l.b16 %v6114
    %v6146 = vpack.c.b16 %v6145, %v6144
    %6147 = vrot.lane.b32.xlu0 %v5356, 80
    %v6148 = vpop.permute.xlu0 %6147
    %v6151 = vsel %vm2065, %v6146, 0
    %6153 = vmatpush.bf16.msra.mxu0 0
    %6154 = vmatpush.bf16.msra.mxu0 0
    %6155 = vmatpush.bf16.msra.mxu0 0
    %6156 = vmatpush.bf16.msra.mxu0 0
    %6157 = vmatpush.bf16.msra.mxu0 0
    %6158 = vmatpush.bf16.msra.mxu0 0
    %6159 = vmatpush.bf16.msra.mxu0 0
    %6160 = vmatpush.bf16.msra.mxu0 %v6148
    %6161 = vmatmul.bf16.gmra.mxu0 %v6151
    %v6162 = vpop.f32.mrf.mxu0
    %v6163 = vadd.f32 0.0, %v6162
    %v6164 = vpop.f32.mrf.mxu0
    %v6165 = vadd.f32 0.0, %v6164
    %6166 = vdwg.mxu0
    %v6169 = vunpack.c.l.b16 %v6115
    %v6170 = vunpack.c.l.b16 %v6116
    %v6171 = vpack.c.b16 %v6170, %v6169
    %6172 = vrot.lane.b32.xlu0 %v5384, 80
    %v6173 = vpop.permute.xlu0 %6172
    %v6176 = vsel %vm2065, %v6171, 0
    %6178 = vmatpush.bf16.msra.mxu0 0
    %6179 = vmatpush.bf16.msra.mxu0 0
    %6180 = vmatpush.bf16.msra.mxu0 0
    %6181 = vmatpush.bf16.msra.mxu0 0
    %6182 = vmatpush.bf16.msra.mxu0 0
    %6183 = vmatpush.bf16.msra.mxu0 0
    %6184 = vmatpush.bf16.msra.mxu0 0
    %6185 = vmatpush.bf16.msra.mxu0 %v6173
    %6186 = vmatmul.bf16.gmra.mxu0 %v6176
    %v6187 = vpop.f32.mrf.mxu0
    %v6188 = vadd.f32 0.0, %v6187
    %v6189 = vpop.f32.mrf.mxu0
    %v6190 = vadd.f32 0.0, %v6189
    %6191 = vdwg.mxu0
    %v6192 = vpack.c.bf16 %v6140, %v6138
    %v6193 = vpack.c.bf16 %v6165, %v6163
    %v6194 = vpack.c.bf16 %v6190, %v6188
    %v6197 = vunpack.c.l.b16 %v4811
    %v6198 = vunpack.c.l.b16 %v4812
    %v6199 = vpack.c.b16 %v6198, %v6197
    %v6202 = vsel %vm2065, %v6192, 0
    %v6205 = vsel %vm2065, %v6193, 0
    %v6208 = vsel %vm2065, %v6194, 0
    %6210 = vmatpush.bf16.msra.mxu0 0
    %6211 = vmatpush.bf16.msra.mxu0 0
    %6212 = vmatpush.bf16.msra.mxu0 0
    %6213 = vmatpush.bf16.msra.mxu0 0
    %6214 = vmatpush.bf16.msra.mxu0 0
    %6215 = vmatpush.bf16.msra.mxu0 0
    %6216 = vmatpush.bf16.msra.mxu0 0
    %6217 = vmatpush.bf16.msra.mxu0 %v6199
    %6218 = vmatmul.bf16.gmra.mxu0 %v6202
    %v6219 = vpop.f32.mrf.mxu0
    %v6220 = vadd.f32 0.0, %v6219
    %v6221 = vpop.f32.mrf.mxu0
    %v6222 = vadd.f32 0.0, %v6221
    %6223 = vmatmul.bf16.gmra.mxu0 %v6205
    %v6224 = vpop.f32.mrf.mxu0
    %v6225 = vadd.f32 0.0, %v6224
    %v6226 = vpop.f32.mrf.mxu0
    %v6227 = vadd.f32 0.0, %v6226
    %6228 = vmatmul.bf16.gmra.mxu0 %v6208
    %v6229 = vpop.f32.mrf.mxu0
    %v6230 = vadd.f32 0.0, %v6229
    %v6231 = vpop.f32.mrf.mxu0
    %v6232 = vadd.f32 0.0, %v6231
    %6233 = vdwg.mxu0
    %v6234 = vadd.f32 %v5967, %v6220
    %v6235 = vadd.f32 %v5968, %v6222
    %v6236 = vadd.f32 %v5969, %v6225
    %v6237 = vadd.f32 %v5970, %v6227
    %v6238 = vadd.f32 %v5971, %v6230
    %v6239 = vadd.f32 %v5972, %v6232
    %v6240 = vadd.f32 %v4835, %v6234
    %v6241 = vadd.f32 %v4836, %v6235
    %v6242 = vadd.f32 %v4837, %v6236
    %v6243 = vadd.f32 %v4838, %v6237
    %v6244 = vadd.f32 %v4839, %v6238
    %v6245 = vadd.f32 %v4840, %v6239
    %v6246 = vperm.slane %v39, 2
    %v6247 = vadd.f32 %v6240, %v6246
    %v6248 = vadd.f32 %v6241, %v6246
    %v6249 = vadd.f32 %v6242, %v6246
    %v6250 = vadd.f32 %v6243, %v6246
    %v6251 = vadd.f32 %v6244, %v6246
    %v6252 = vadd.f32 %v6245, %v6246
    %v6253 = vsel %vm1011, %v6247, 0.0
    %6254 = vadd.xlane.f32.xlu0 %v6253
    %v6255 = vpop.xlane.xlu0 %6254
    %v6256 = vsel %vm1011, %v6248, 0.0
    %6257 = vadd.xlane.f32.xlu0 %v6256
    %v6258 = vpop.xlane.xlu0 %6257
    %v6259 = vsel %vm1011, %v6249, 0.0
    %6260 = vadd.xlane.f32.xlu0 %v6259
    %v6261 = vpop.xlane.xlu0 %6260
    %v6262 = vsel %vm1011, %v6250, 0.0
    %6263 = vadd.xlane.f32.xlu0 %v6262
    %v6264 = vpop.xlane.xlu0 %6263
    %v6265 = vsel %vm1011, %v6251, 0.0
    %6266 = vadd.xlane.f32.xlu0 %v6265
    %v6267 = vpop.xlane.xlu0 %6266
    %v6268 = vsel %vm1011, %v6252, 0.0
    %6269 = vadd.xlane.f32.xlu0 %v6268
    %v6270 = vpop.xlane.xlu0 %6269
    %v6271 = vmul.f32 %v6255, %v1028
    %v6272 = vmul.f32 %v6258, %v1028
    %v6273 = vmul.f32 %v6261, %v1028
    %v6274 = vmul.f32 %v6264, %v1028
    %v6275 = vmul.f32 %v6267, %v1028
    %v6276 = vmul.f32 %v6270, %v1028
    %v6277 = vsub.f32 %v6247, %v6271
    %v6278 = vsub.f32 %v6248, %v6272
    %v6279 = vsub.f32 %v6249, %v6273
    %v6280 = vsub.f32 %v6250, %v6274
    %v6281 = vsub.f32 %v6251, %v6275
    %v6282 = vsub.f32 %v6252, %v6276
    %v6283 = vmul.f32 %v6277, %v6277
    %v6284 = vmul.f32 %v6278, %v6278
    %v6285 = vmul.f32 %v6279, %v6279
    %v6286 = vmul.f32 %v6280, %v6280
    %v6287 = vmul.f32 %v6281, %v6281
    %v6288 = vmul.f32 %v6282, %v6282
    %v6289 = vsel %vm1011, %v6283, 0.0
    %6290 = vadd.xlane.f32.xlu0 %v6289
    %v6291 = vpop.xlane.xlu0 %6290
    %v6292 = vsel %vm1011, %v6284, 0.0
    %6293 = vadd.xlane.f32.xlu0 %v6292
    %v6294 = vpop.xlane.xlu0 %6293
    %v6295 = vsel %vm1011, %v6285, 0.0
    %6296 = vadd.xlane.f32.xlu0 %v6295
    %v6297 = vpop.xlane.xlu0 %6296
    %v6298 = vsel %vm1011, %v6286, 0.0
    %6299 = vadd.xlane.f32.xlu0 %v6298
    %v6300 = vpop.xlane.xlu0 %6299
    %v6301 = vsel %vm1011, %v6287, 0.0
    %6302 = vadd.xlane.f32.xlu0 %v6301
    %v6303 = vpop.xlane.xlu0 %6302
    %v6304 = vsel %vm1011, %v6288, 0.0
    %6305 = vadd.xlane.f32.xlu0 %v6304
    %v6306 = vpop.xlane.xlu0 %6305
    %v6307 = vmul.f32 %v6291, %v1028
    %v6308 = vmul.f32 %v6294, %v1028
    %v6309 = vmul.f32 %v6297, %v1028
    %v6310 = vmul.f32 %v6300, %v1028
    %v6311 = vmul.f32 %v6303, %v1028
    %v6312 = vmul.f32 %v6306, %v1028
    %v6313 = vadd.f32 %v6307, 1e-05
    %v6314 = vadd.f32 %v6308, 1e-05
    %v6315 = vadd.f32 %v6309, 1e-05
    %v6316 = vadd.f32 %v6310, 1e-05
    %v6317 = vadd.f32 %v6311, 1e-05
    %v6318 = vadd.f32 %v6312, 1e-05
    %v6319 = vrsqrt.pop %v6313
    %v6320 = vmul.f32 %v6319, %v6313
    %v6321 = vmul.f32 %v6320, %v6319
    %v6322 = vmul.f32 0.5, %v6321
    %v6323 = vsub.f32 1.5, %v6322
    %v6324 = vmul.f32 %v6319, %v6323
    %vm6325 = vweird.f32 %v6313
    %vm6326 = vweird.f32 %v6319
    %vm6327 = vmor %vm6325, %vm6326
    %v6328 = vsel %vm6327, %v6319, %v6324
    %v6329 = vrsqrt.pop %v6314
    %v6330 = vmul.f32 %v6329, %v6314
    %v6331 = vmul.f32 %v6330, %v6329
    %v6332 = vmul.f32 0.5, %v6331
    %v6333 = vsub.f32 1.5, %v6332
    %v6334 = vmul.f32 %v6329, %v6333
    %vm6335 = vweird.f32 %v6314
    %vm6336 = vweird.f32 %v6329
    %vm6337 = vmor %vm6335, %vm6336
    %v6338 = vsel %vm6337, %v6329, %v6334
    %v6339 = vrsqrt.pop %v6315
    %v6340 = vmul.f32 %v6339, %v6315
    %v6341 = vmul.f32 %v6340, %v6339
    %v6342 = vmul.f32 0.5, %v6341
    %v6343 = vsub.f32 1.5, %v6342
    %v6344 = vmul.f32 %v6339, %v6343
    %vm6345 = vweird.f32 %v6315
    %vm6346 = vweird.f32 %v6339
    %vm6347 = vmor %vm6345, %vm6346
    %v6348 = vsel %vm6347, %v6339, %v6344
    %v6349 = vrsqrt.pop %v6316
    %v6350 = vmul.f32 %v6349, %v6316
    %v6351 = vmul.f32 %v6350, %v6349
    %v6352 = vmul.f32 0.5, %v6351
    %v6353 = vsub.f32 1.5, %v6352
    %v6354 = vmul.f32 %v6349, %v6353
    %vm6355 = vweird.f32 %v6316
    %vm6356 = vweird.f32 %v6349
    %vm6357 = vmor %vm6355, %vm6356
    %v6358 = vsel %vm6357, %v6349, %v6354
    %v6359 = vrsqrt.pop %v6317
    %v6360 = vmul.f32 %v6359, %v6317
    %v6361 = vmul.f32 %v6360, %v6359
    %v6362 = vmul.f32 0.5, %v6361
    %v6363 = vsub.f32 1.5, %v6362
    %v6364 = vmul.f32 %v6359, %v6363
    %vm6365 = vweird.f32 %v6317
    %vm6366 = vweird.f32 %v6359
    %vm6367 = vmor %vm6365, %vm6366
    %v6368 = vsel %vm6367, %v6359, %v6364
    %v6369 = vrsqrt.pop %v6318
    %v6370 = vmul.f32 %v6369, %v6318
    %v6371 = vmul.f32 %v6370, %v6369
    %v6372 = vmul.f32 0.5, %v6371
    %v6373 = vsub.f32 1.5, %v6372
    %v6374 = vmul.f32 %v6369, %v6373
    %vm6375 = vweird.f32 %v6318
    %vm6376 = vweird.f32 %v6369
    %vm6377 = vmor %vm6375, %vm6376
    %v6378 = vsel %vm6377, %v6369, %v6374
    %v6379 = vmul.f32 %v6277, %v6328
    %v6380 = vmul.f32 %v6278, %v6338
    %v6381 = vmul.f32 %v6279, %v6348
    %v6382 = vmul.f32 %v6280, %v6358
    %v6383 = vmul.f32 %v6281, %v6368
    %v6384 = vmul.f32 %v6282, %v6378
    %v6385 = vperm.slane %v39, 3
    %v6386 = vmul.f32 %v6379, %v6385
    %v6387 = vmul.f32 %v6380, %v6385
    %v6388 = vmul.f32 %v6381, %v6385
    %v6389 = vmul.f32 %v6382, %v6385
    %v6390 = vmul.f32 %v6383, %v6385
    %v6391 = vmul.f32 %v6384, %v6385
    %v6392 = vperm.slane %v39, 4
    %v6393 = vadd.f32 %v6386, %v6392
    %v6394 = vadd.f32 %v6387, %v6392
    %v6395 = vadd.f32 %v6388, %v6392
    %v6396 = vadd.f32 %v6389, %v6392
    %v6397 = vadd.f32 %v6390, %v6392
    %v6398 = vadd.f32 %v6391, %v6392
    %v6399 = vpack.c.bf16 %v6394, %v6393
    %v6400 = vpack.c.bf16 %v6396, %v6395
    %v6401 = vpack.c.bf16 %v6398, %v6397
    %v6403 = vperm.slane %v4849, 0
    %v6404 = vperm.slane %v4849, 1
    %v6423 = vunpack.c.l.b16 %v4813
    %v6424 = vunpack.c.h.b16 %v4813
    %v6425 = vunpack.c.l.b16 %v4814
    %v6426 = vunpack.c.l.b16 %v4815
    %v6427 = vunpack.c.h.b16 %v4815
    %v6428 = vunpack.c.l.b16 %v4816
    %v6429 = vunpack.c.l.b16 %v4817
    %v6430 = vunpack.c.h.b16 %v4817
    %v6431 = vunpack.c.l.b16 %v4818
    %v6432 = vunpack.c.l.b16 %v4819
    %v6433 = vunpack.c.h.b16 %v4819
    %v6434 = vunpack.c.l.b16 %v4820
    %v6435 = vunpack.c.l.b16 %v4821
    %v6436 = vunpack.c.h.b16 %v4821
    %v6437 = vunpack.c.l.b16 %v4822
    %v6438 = vunpack.c.l.b16 %v4823
    %v6439 = vunpack.c.h.b16 %v4823
    %v6440 = vunpack.c.l.b16 %v4824
    %v6441 = vunpack.c.l.b16 %v4825
    %v6442 = vunpack.c.h.b16 %v4825
    %v6443 = vunpack.c.l.b16 %v4826
    %v6444 = vunpack.c.l.b16 %v4827
    %v6445 = vunpack.c.h.b16 %v4827
    %v6446 = vunpack.c.l.b16 %v4828
    %v6447 = vpack.c.b16 %v6426, %v6423
    %v6448 = vpack.c.b16 %v6427, %v6424
    %v6449 = vpack.c.b16 %v6428, %v6425
    %v6450 = vpack.c.b16 %v6432, %v6429
    %v6451 = vpack.c.b16 %v6433, %v6430
    %v6452 = vpack.c.b16 %v6434, %v6431
    %v6453 = vpack.c.b16 %v6438, %v6435
    %v6454 = vpack.c.b16 %v6439, %v6436
    %v6455 = vpack.c.b16 %v6440, %v6437
    %v6456 = vpack.c.b16 %v6444, %v6441
    %v6457 = vpack.c.b16 %v6445, %v6442
    %v6458 = vpack.c.b16 %v6446, %v6443
    %6459 = vrot.lane.b32.xlu0 %v6447, 64
    %v6460 = vpop.permute.xlu0 %6459
    %6461 = vrot.lane.b32.xlu0 %v6448, 64
    %v6462 = vpop.permute.xlu0 %6461
    %6463 = vrot.lane.b32.xlu0 %v6449, 64
    %v6464 = vpop.permute.xlu0 %6463
    %6465 = vrot.lane.b32.xlu0 %v6450, 64
    %v6466 = vpop.permute.xlu0 %6465
    %6467 = vrot.lane.b32.xlu0 %v6451, 64
    %v6468 = vpop.permute.xlu0 %6467
    %6469 = vrot.lane.b32.xlu0 %v6452, 64
    %v6470 = vpop.permute.xlu0 %6469
    %6471 = vrot.lane.b32.xlu0 %v6453, 64
    %v6472 = vpop.permute.xlu0 %6471
    %6473 = vrot.lane.b32.xlu0 %v6454, 64
    %v6474 = vpop.permute.xlu0 %6473
    %6475 = vrot.lane.b32.xlu0 %v6455, 64
    %v6476 = vpop.permute.xlu0 %6475
    %6477 = vrot.lane.b32.xlu0 %v6456, 64
    %v6478 = vpop.permute.xlu0 %6477
    %6479 = vrot.lane.b32.xlu0 %v6457, 64
    %v6480 = vpop.permute.xlu0 %6479
    %6481 = vrot.lane.b32.xlu0 %v6458, 64
    %v6482 = vpop.permute.xlu0 %6481
    %v6483 = vsel %vm5084, %v6460, %v6462
    %v6484 = vsel %vm5084, %v6462, %v6464
    %v6485 = vsel %vm5084, %v6466, %v6468
    %v6486 = vsel %vm5084, %v6468, %v6470
    %v6487 = vsel %vm5084, %v6472, %v6474
    %v6488 = vsel %vm5084, %v6474, %v6476
    %v6489 = vsel %vm5084, %v6478, %v6480
    %v6490 = vsel %vm5084, %v6480, %v6482
    %v6500 = vsel %vm1011, %v6399, 0
    %v6503 = vsel %vm1011, %v6400, 0
    %v6506 = vsel %vm1011, %v6401, 0
    %6508 = vmatpush.bf16.msra.mxu0 0
    %6509 = vmatpush.bf16.msra.mxu0 0
    %6510 = vmatpush.bf16.msra.mxu0 0
    %6511 = vmatpush.bf16.msra.mxu0 0
    %6512 = vmatpush.bf16.msra.mxu0 %v6489
    %6513 = vmatpush.bf16.msra.mxu0 %v6487
    %6514 = vmatpush.bf16.msra.mxu0 %v6485
    %6515 = vmatpush.bf16.msra.mxu0 %v6483
    %6516 = vmatmul.bf16.gmra.mxu0 %v6500
    %v6517 = vpop.f32.mrf.mxu0
    %v6518 = vadd.f32 %v6403, %v6517
    %v6519 = vpop.f32.mrf.mxu0
    %v6520 = vadd.f32 %v6403, %v6519
    %6521 = vmatmul.bf16.gmra.mxu0 %v6503
    %v6522 = vpop.f32.mrf.mxu0
    %v6523 = vadd.f32 %v6403, %v6522
    %v6524 = vpop.f32.mrf.mxu0
    %v6525 = vadd.f32 %v6403, %v6524
    %6526 = vmatmul.bf16.gmra.mxu0 %v6506
    %v6527 = vpop.f32.mrf.mxu0
    %v6528 = vadd.f32 %v6403, %v6527
    %v6529 = vpop.f32.mrf.mxu0
    %v6530 = vadd.f32 %v6403, %v6529
    %6531 = vdwg.mxu0
    %6532 = vmatpush.bf16.msra.mxu0 0
    %6533 = vmatpush.bf16.msra.mxu0 0
    %6534 = vmatpush.bf16.msra.mxu0 0
    %6535 = vmatpush.bf16.msra.mxu0 0
    %6536 = vmatpush.bf16.msra.mxu0 %v6490
    %6537 = vmatpush.bf16.msra.mxu0 %v6488
    %6538 = vmatpush.bf16.msra.mxu0 %v6486
    %6539 = vmatpush.bf16.msra.mxu0 %v6484
    %6540 = vmatmul.bf16.gmra.mxu0 %v6500
    %v6541 = vpop.f32.mrf.mxu0
    %v6542 = vadd.f32 %v6404, %v6541
    %v6543 = vpop.f32.mrf.mxu0
    %v6544 = vadd.f32 %v6404, %v6543
    %6545 = vmatmul.bf16.gmra.mxu0 %v6503
    %v6546 = vpop.f32.mrf.mxu0
    %v6547 = vadd.f32 %v6404, %v6546
    %v6548 = vpop.f32.mrf.mxu0
    %v6549 = vadd.f32 %v6404, %v6548
    %6550 = vmatmul.bf16.gmra.mxu0 %v6506
    %v6551 = vpop.f32.mrf.mxu0
    %v6552 = vadd.f32 %v6404, %v6551
    %v6553 = vpop.f32.mrf.mxu0
    %v6554 = vadd.f32 %v6404, %v6553
    %6555 = vdwg.mxu0
    %v6556 = vmul.f32 %v6518, 1.702
    %v6557 = vmul.f32 %v6542, 1.702
    %v6558 = vmul.f32 %v6520, 1.702
    %v6559 = vmul.f32 %v6544, 1.702
    %v6560 = vmul.f32 %v6523, 1.702
    %v6561 = vmul.f32 %v6547, 1.702
    %v6562 = vmul.f32 %v6525, 1.702
    %v6563 = vmul.f32 %v6549, 1.702
    %v6564 = vmul.f32 %v6528, 1.702
    %v6565 = vmul.f32 %v6552, 1.702
    %v6566 = vmul.f32 %v6530, 1.702
    %v6567 = vmul.f32 %v6554, 1.702
    %v6568 = vxor.u32 %v6556, 2147483648
    %v6569 = vxor.u32 %v6557, 2147483648
    %v6570 = vxor.u32 %v6558, 2147483648
    %v6571 = vxor.u32 %v6559, 2147483648
    %v6572 = vxor.u32 %v6560, 2147483648
    %v6573 = vxor.u32 %v6561, 2147483648
    %v6574 = vxor.u32 %v6562, 2147483648
    %v6575 = vxor.u32 %v6563, 2147483648
    %v6576 = vxor.u32 %v6564, 2147483648
    %v6577 = vxor.u32 %v6565, 2147483648
    %v6578 = vxor.u32 %v6566, 2147483648
    %v6579 = vxor.u32 %v6567, 2147483648
    %v6580 = vmul.f32 %v6568, 1.442695
    %v6581 = vpow.pop %v6580
    %v6582 = vmul.f32 %v6569, 1.442695
    %v6583 = vpow.pop %v6582
    %v6584 = vmul.f32 %v6570, 1.442695
    %v6585 = vpow.pop %v6584
    %v6586 = vmul.f32 %v6571, 1.442695
    %v6587 = vpow.pop %v6586
    %v6588 = vmul.f32 %v6572, 1.442695
    %v6589 = vpow.pop %v6588
    %v6590 = vmul.f32 %v6573, 1.442695
    %v6591 = vpow.pop %v6590
    %v6592 = vmul.f32 %v6574, 1.442695
    %v6593 = vpow.pop %v6592
    %v6594 = vmul.f32 %v6575, 1.442695
    %v6595 = vpow.pop %v6594
    %v6596 = vmul.f32 %v6576, 1.442695
    %v6597 = vpow.pop %v6596
    %v6598 = vmul.f32 %v6577, 1.442695
    %v6599 = vpow.pop %v6598
    %v6600 = vmul.f32 %v6578, 1.442695
    %v6601 = vpow.pop %v6600
    %v6602 = vmul.f32 %v6579, 1.442695
    %v6603 = vpow.pop %v6602
    %v6604 = vadd.f32 %v6581, 1.0
    %v6605 = vadd.f32 %v6583, 1.0
    %v6606 = vadd.f32 %v6585, 1.0
    %v6607 = vadd.f32 %v6587, 1.0
    %v6608 = vadd.f32 %v6589, 1.0
    %v6609 = vadd.f32 %v6591, 1.0
    %v6610 = vadd.f32 %v6593, 1.0
    %v6611 = vadd.f32 %v6595, 1.0
    %v6612 = vadd.f32 %v6597, 1.0
    %v6613 = vadd.f32 %v6599, 1.0
    %v6614 = vadd.f32 %v6601, 1.0
    %v6615 = vadd.f32 %v6603, 1.0
    %v6616 = vrcp.pop %v6604
    %v6617 = vmul.f32 %v6604, %v6616
    %v6618 = vsub.f32 1.0, %v6617
    %v6619 = vmul.f32 %v6616, %v6618
    %v6620 = vadd.f32 %v6616, %v6619
    %vm6621 = vweird.f32 %v6604
    %vm6622 = vweird.f32 %v6616
    %vm6623 = vmor %vm6621, %vm6622
    %v6624 = vsel %vm6623, %v6616, %v6620
    %v6625 = vand.u32 2147483647, %v6604
    %vm6626 = vcmp.eq.f32.partialorder %v6625, 8.507059e+37
    %v6627 = vand.u32 %v6604, 2147483648
    %v6628 = vor.u32 1.1754944e-38, %v6627
    %v6629 = vsel %vm6626, %v6628, %v6624
    %v6630 = vmul.f32 1.0, %v6629
    %v6631 = vrcp.pop %v6605
    %v6632 = vmul.f32 %v6605, %v6631
    %v6633 = vsub.f32 1.0, %v6632
    %v6634 = vmul.f32 %v6631, %v6633
    %v6635 = vadd.f32 %v6631, %v6634
    %vm6636 = vweird.f32 %v6605
    %vm6637 = vweird.f32 %v6631
    %vm6638 = vmor %vm6636, %vm6637
    %v6639 = vsel %vm6638, %v6631, %v6635
    %v6640 = vand.u32 2147483647, %v6605
    %vm6641 = vcmp.eq.f32.partialorder %v6640, 8.507059e+37
    %v6642 = vand.u32 %v6605, 2147483648
    %v6643 = vor.u32 1.1754944e-38, %v6642
    %v6644 = vsel %vm6641, %v6643, %v6639
    %v6645 = vmul.f32 1.0, %v6644
    %v6646 = vrcp.pop %v6606
    %v6647 = vmul.f32 %v6606, %v6646
    %v6648 = vsub.f32 1.0, %v6647
    %v6649 = vmul.f32 %v6646, %v6648
    %v6650 = vadd.f32 %v6646, %v6649
    %vm6651 = vweird.f32 %v6606
    %vm6652 = vweird.f32 %v6646
    %vm6653 = vmor %vm6651, %vm6652
    %v6654 = vsel %vm6653, %v6646, %v6650
    %v6655 = vand.u32 2147483647, %v6606
    %vm6656 = vcmp.eq.f32.partialorder %v6655, 8.507059e+37
    %v6657 = vand.u32 %v6606, 2147483648
    %v6658 = vor.u32 1.1754944e-38, %v6657
    %v6659 = vsel %vm6656, %v6658, %v6654
    %v6660 = vmul.f32 1.0, %v6659
    %v6661 = vrcp.pop %v6607
    %v6662 = vmul.f32 %v6607, %v6661
    %v6663 = vsub.f32 1.0, %v6662
    %v6664 = vmul.f32 %v6661, %v6663
    %v6665 = vadd.f32 %v6661, %v6664
    %vm6666 = vweird.f32 %v6607
    %vm6667 = vweird.f32 %v6661
    %vm6668 = vmor %vm6666, %vm6667
    %v6669 = vsel %vm6668, %v6661, %v6665
    %v6670 = vand.u32 2147483647, %v6607
    %vm6671 = vcmp.eq.f32.partialorder %v6670, 8.507059e+37
    %v6672 = vand.u32 %v6607, 2147483648
    %v6673 = vor.u32 1.1754944e-38, %v6672
    %v6674 = vsel %vm6671, %v6673, %v6669
    %v6675 = vmul.f32 1.0, %v6674
    %v6676 = vrcp.pop %v6608
    %v6677 = vmul.f32 %v6608, %v6676
    %v6678 = vsub.f32 1.0, %v6677
    %v6679 = vmul.f32 %v6676, %v6678
    %v6680 = vadd.f32 %v6676, %v6679
    %vm6681 = vweird.f32 %v6608
    %vm6682 = vweird.f32 %v6676
    %vm6683 = vmor %vm6681, %vm6682
    %v6684 = vsel %vm6683, %v6676, %v6680
    %v6685 = vand.u32 2147483647, %v6608
    %vm6686 = vcmp.eq.f32.partialorder %v6685, 8.507059e+37
    %v6687 = vand.u32 %v6608, 2147483648
    %v6688 = vor.u32 1.1754944e-38, %v6687
    %v6689 = vsel %vm6686, %v6688, %v6684
    %v6690 = vmul.f32 1.0, %v6689
    %v6691 = vrcp.pop %v6609
    %v6692 = vmul.f32 %v6609, %v6691
    %v6693 = vsub.f32 1.0, %v6692
    %v6694 = vmul.f32 %v6691, %v6693
    %v6695 = vadd.f32 %v6691, %v6694
    %vm6696 = vweird.f32 %v6609
    %vm6697 = vweird.f32 %v6691
    %vm6698 = vmor %vm6696, %vm6697
    %v6699 = vsel %vm6698, %v6691, %v6695
    %v6700 = vand.u32 2147483647, %v6609
    %vm6701 = vcmp.eq.f32.partialorder %v6700, 8.507059e+37
    %v6702 = vand.u32 %v6609, 2147483648
    %v6703 = vor.u32 1.1754944e-38, %v6702
    %v6704 = vsel %vm6701, %v6703, %v6699
    %v6705 = vmul.f32 1.0, %v6704
    %v6706 = vrcp.pop %v6610
    %v6707 = vmul.f32 %v6610, %v6706
    %v6708 = vsub.f32 1.0, %v6707
    %v6709 = vmul.f32 %v6706, %v6708
    %v6710 = vadd.f32 %v6706, %v6709
    %vm6711 = vweird.f32 %v6610
    %vm6712 = vweird.f32 %v6706
    %vm6713 = vmor %vm6711, %vm6712
    %v6714 = vsel %vm6713, %v6706, %v6710
    %v6715 = vand.u32 2147483647, %v6610
    %vm6716 = vcmp.eq.f32.partialorder %v6715, 8.507059e+37
    %v6717 = vand.u32 %v6610, 2147483648
    %v6718 = vor.u32 1.1754944e-38, %v6717
    %v6719 = vsel %vm6716, %v6718, %v6714
    %v6720 = vmul.f32 1.0, %v6719
    %v6721 = vrcp.pop %v6611
    %v6722 = vmul.f32 %v6611, %v6721
    %v6723 = vsub.f32 1.0, %v6722
    %v6724 = vmul.f32 %v6721, %v6723
    %v6725 = vadd.f32 %v6721, %v6724
    %vm6726 = vweird.f32 %v6611
    %vm6727 = vweird.f32 %v6721
    %vm6728 = vmor %vm6726, %vm6727
    %v6729 = vsel %vm6728, %v6721, %v6725
    %v6730 = vand.u32 2147483647, %v6611
    %vm6731 = vcmp.eq.f32.partialorder %v6730, 8.507059e+37
    %v6732 = vand.u32 %v6611, 2147483648
    %v6733 = vor.u32 1.1754944e-38, %v6732
    %v6734 = vsel %vm6731, %v6733, %v6729
    %v6735 = vmul.f32 1.0, %v6734
    %v6736 = vrcp.pop %v6612
    %v6737 = vmul.f32 %v6612, %v6736
    %v6738 = vsub.f32 1.0, %v6737
    %v6739 = vmul.f32 %v6736, %v6738
    %v6740 = vadd.f32 %v6736, %v6739
    %vm6741 = vweird.f32 %v6612
    %vm6742 = vweird.f32 %v6736
    %vm6743 = vmor %vm6741, %vm6742
    %v6744 = vsel %vm6743, %v6736, %v6740
    %v6745 = vand.u32 2147483647, %v6612
    %vm6746 = vcmp.eq.f32.partialorder %v6745, 8.507059e+37
    %v6747 = vand.u32 %v6612, 2147483648
    %v6748 = vor.u32 1.1754944e-38, %v6747
    %v6749 = vsel %vm6746, %v6748, %v6744
    %v6750 = vmul.f32 1.0, %v6749
    %v6751 = vrcp.pop %v6613
    %v6752 = vmul.f32 %v6613, %v6751
    %v6753 = vsub.f32 1.0, %v6752
    %v6754 = vmul.f32 %v6751, %v6753
    %v6755 = vadd.f32 %v6751, %v6754
    %vm6756 = vweird.f32 %v6613
    %vm6757 = vweird.f32 %v6751
    %vm6758 = vmor %vm6756, %vm6757
    %v6759 = vsel %vm6758, %v6751, %v6755
    %v6760 = vand.u32 2147483647, %v6613
    %vm6761 = vcmp.eq.f32.partialorder %v6760, 8.507059e+37
    %v6762 = vand.u32 %v6613, 2147483648
    %v6763 = vor.u32 1.1754944e-38, %v6762
    %v6764 = vsel %vm6761, %v6763, %v6759
    %v6765 = vmul.f32 1.0, %v6764
    %v6766 = vrcp.pop %v6614
    %v6767 = vmul.f32 %v6614, %v6766
    %v6768 = vsub.f32 1.0, %v6767
    %v6769 = vmul.f32 %v6766, %v6768
    %v6770 = vadd.f32 %v6766, %v6769
    %vm6771 = vweird.f32 %v6614
    %vm6772 = vweird.f32 %v6766
    %vm6773 = vmor %vm6771, %vm6772
    %v6774 = vsel %vm6773, %v6766, %v6770
    %v6775 = vand.u32 2147483647, %v6614
    %vm6776 = vcmp.eq.f32.partialorder %v6775, 8.507059e+37
    %v6777 = vand.u32 %v6614, 2147483648
    %v6778 = vor.u32 1.1754944e-38, %v6777
    %v6779 = vsel %vm6776, %v6778, %v6774
    %v6780 = vmul.f32 1.0, %v6779
    %v6781 = vrcp.pop %v6615
    %v6782 = vmul.f32 %v6615, %v6781
    %v6783 = vsub.f32 1.0, %v6782
    %v6784 = vmul.f32 %v6781, %v6783
    %v6785 = vadd.f32 %v6781, %v6784
    %vm6786 = vweird.f32 %v6615
    %vm6787 = vweird.f32 %v6781
    %vm6788 = vmor %vm6786, %vm6787
    %v6789 = vsel %vm6788, %v6781, %v6785
    %v6790 = vand.u32 2147483647, %v6615
    %vm6791 = vcmp.eq.f32.partialorder %v6790, 8.507059e+37
    %v6792 = vand.u32 %v6615, 2147483648
    %v6793 = vor.u32 1.1754944e-38, %v6792
    %v6794 = vsel %vm6791, %v6793, %v6789
    %v6795 = vmul.f32 1.0, %v6794
    %v6796 = vmul.f32 %v6518, %v6630
    %v6797 = vmul.f32 %v6542, %v6645
    %v6798 = vmul.f32 %v6520, %v6660
    %v6799 = vmul.f32 %v6544, %v6675
    %v6800 = vmul.f32 %v6523, %v6690
    %v6801 = vmul.f32 %v6547, %v6705
    %v6802 = vmul.f32 %v6525, %v6720
    %v6803 = vmul.f32 %v6549, %v6735
    %v6804 = vmul.f32 %v6528, %v6750
    %v6805 = vmul.f32 %v6552, %v6765
    %v6806 = vmul.f32 %v6530, %v6780
    %v6807 = vmul.f32 %v6554, %v6795
    %v6808 = vpack.c.bf16 %v6798, %v6796
    %v6809 = vpack.c.bf16 %v6799, %v6797
    %v6810 = vpack.c.bf16 %v6802, %v6800
    %v6811 = vpack.c.bf16 %v6803, %v6801
    %v6812 = vpack.c.bf16 %v6806, %v6804
    %v6813 = vpack.c.bf16 %v6807, %v6805
    %v6814 = vperm.slane %v39, 5
    %v6847 = vunpack.c.l.b16 %v4850
    %v6848 = vunpack.c.l.b16 %v4851
    %v6849 = vunpack.c.l.b16 %v4852
    %v6850 = vunpack.c.l.b16 %v4853
    %v6851 = vunpack.c.l.b16 %v4854
    %v6852 = vunpack.c.l.b16 %v4855
    %v6853 = vunpack.c.l.b16 %v4856
    %v6854 = vunpack.c.l.b16 %v4857
    %v6855 = vunpack.c.l.b16 %v4858
    %v6856 = vunpack.c.l.b16 %v4859
    %v6857 = vunpack.c.l.b16 %v4860
    %v6858 = vunpack.c.l.b16 %v4861
    %v6859 = vunpack.c.l.b16 %v4862
    %v6860 = vunpack.c.l.b16 %v4863
    %v6861 = vunpack.c.l.b16 %v4864
    %v6862 = vunpack.c.l.b16 %v4865
    %v6863 = vunpack.c.l.b16 %v4866
    %v6864 = vunpack.c.l.b16 %v4867
    %v6865 = vunpack.c.l.b16 %v4868
    %v6866 = vunpack.c.l.b16 %v4869
    %v6867 = vunpack.c.l.b16 %v4870
    %v6868 = vunpack.c.l.b16 %v4871
    %v6869 = vunpack.c.l.b16 %v4872
    %v6870 = vunpack.c.l.b16 %v4873
    %v6871 = vunpack.c.l.b16 %v4874
    %v6872 = vunpack.c.l.b16 %v4875
    %v6873 = vunpack.c.l.b16 %v4876
    %v6874 = vunpack.c.l.b16 %v4877
    %v6875 = vunpack.c.l.b16 %v4878
    %v6876 = vunpack.c.l.b16 %v4879
    %v6877 = vunpack.c.l.b16 %v4880
    %v6878 = vunpack.c.l.b16 %v4881
    %v6879 = vpack.c.b16 %v6848, %v6847
    %v6880 = vpack.c.b16 %v6850, %v6849
    %v6881 = vpack.c.b16 %v6852, %v6851
    %v6882 = vpack.c.b16 %v6854, %v6853
    %v6883 = vpack.c.b16 %v6856, %v6855
    %v6884 = vpack.c.b16 %v6858, %v6857
    %v6885 = vpack.c.b16 %v6860, %v6859
    %v6886 = vpack.c.b16 %v6862, %v6861
    %v6887 = vpack.c.b16 %v6864, %v6863
    %v6888 = vpack.c.b16 %v6866, %v6865
    %v6889 = vpack.c.b16 %v6868, %v6867
    %v6890 = vpack.c.b16 %v6870, %v6869
    %v6891 = vpack.c.b16 %v6872, %v6871
    %v6892 = vpack.c.b16 %v6874, %v6873
    %v6893 = vpack.c.b16 %v6876, %v6875
    %v6894 = vpack.c.b16 %v6878, %v6877
    %6895 = vrot.lane.b32.xlu0 %v6879, 64
    %v6896 = vpop.permute.xlu0 %6895
    %6897 = vrot.lane.b32.xlu0 %v6880, 64
    %v6898 = vpop.permute.xlu0 %6897
    %6899 = vrot.lane.b32.xlu0 %v6881, 64
    %v6900 = vpop.permute.xlu0 %6899
    %6901 = vrot.lane.b32.xlu0 %v6882, 64
    %v6902 = vpop.permute.xlu0 %6901
    %6903 = vrot.lane.b32.xlu0 %v6883, 64
    %v6904 = vpop.permute.xlu0 %6903
    %6905 = vrot.lane.b32.xlu0 %v6884, 64
    %v6906 = vpop.permute.xlu0 %6905
    %6907 = vrot.lane.b32.xlu0 %v6885, 64
    %v6908 = vpop.permute.xlu0 %6907
    %6909 = vrot.lane.b32.xlu0 %v6886, 64
    %v6910 = vpop.permute.xlu0 %6909
    %6911 = vrot.lane.b32.xlu0 %v6887, 64
    %v6912 = vpop.permute.xlu0 %6911
    %6913 = vrot.lane.b32.xlu0 %v6888, 64
    %v6914 = vpop.permute.xlu0 %6913
    %6915 = vrot.lane.b32.xlu0 %v6889, 64
    %v6916 = vpop.permute.xlu0 %6915
    %6917 = vrot.lane.b32.xlu0 %v6890, 64
    %v6918 = vpop.permute.xlu0 %6917
    %6919 = vrot.lane.b32.xlu0 %v6891, 64
    %v6920 = vpop.permute.xlu0 %6919
    %6921 = vrot.lane.b32.xlu0 %v6892, 64
    %v6922 = vpop.permute.xlu0 %6921
    %6923 = vrot.lane.b32.xlu0 %v6893, 64
    %v6924 = vpop.permute.xlu0 %6923
    %6925 = vrot.lane.b32.xlu0 %v6894, 64
    %v6926 = vpop.permute.xlu0 %6925
    %6943 = vmatpush.bf16.msra.mxu0 %v6910
    %6944 = vmatpush.bf16.msra.mxu0 %v6908
    %6945 = vmatpush.bf16.msra.mxu0 %v6906
    %6946 = vmatpush.bf16.msra.mxu0 %v6904
    %6947 = vmatpush.bf16.msra.mxu0 %v6902
    %6948 = vmatpush.bf16.msra.mxu0 %v6900
    %6949 = vmatpush.bf16.msra.mxu0 %v6898
    %6950 = vmatpush.bf16.msra.mxu0 %v6896
    %6951 = vmatmul.bf16.gmra.mxu0 %v6808
    %v6952 = vpop.f32.mrf.mxu0
    %v6953 = vadd.f32 %v6814, %v6952
    %v6954 = vpop.f32.mrf.mxu0
    %v6955 = vadd.f32 %v6814, %v6954
    %6956 = vmatmul.bf16.gmra.mxu0 %v6810
    %v6957 = vpop.f32.mrf.mxu0
    %v6958 = vadd.f32 %v6814, %v6957
    %v6959 = vpop.f32.mrf.mxu0
    %v6960 = vadd.f32 %v6814, %v6959
    %6961 = vmatmul.bf16.gmra.mxu0 %v6812
    %v6962 = vpop.f32.mrf.mxu0
    %v6963 = vadd.f32 %v6814, %v6962
    %v6964 = vpop.f32.mrf.mxu0
    %v6965 = vadd.f32 %v6814, %v6964
    %6966 = vdwg.mxu0
    %6967 = vmatpush.bf16.msra.mxu0 %v6926
    %6968 = vmatpush.bf16.msra.mxu0 %v6924
    %6969 = vmatpush.bf16.msra.mxu0 %v6922
    %6970 = vmatpush.bf16.msra.mxu0 %v6920
    %6971 = vmatpush.bf16.msra.mxu0 %v6918
    %6972 = vmatpush.bf16.msra.mxu0 %v6916
    %6973 = vmatpush.bf16.msra.mxu0 %v6914
    %6974 = vmatpush.bf16.msra.mxu0 %v6912
    %6975 = vmatmul.bf16.gmra.mxu0 %v6809
    %v6976 = vpop.f32.mrf.mxu0
    %v6977 = vadd.f32 %v6953, %v6976
    %v6978 = vpop.f32.mrf.mxu0
    %v6979 = vadd.f32 %v6955, %v6978
    %6980 = vmatmul.bf16.gmra.mxu0 %v6811
    %v6981 = vpop.f32.mrf.mxu0
    %v6982 = vadd.f32 %v6958, %v6981
    %v6983 = vpop.f32.mrf.mxu0
    %v6984 = vadd.f32 %v6960, %v6983
    %6985 = vmatmul.bf16.gmra.mxu0 %v6813
    %v6986 = vpop.f32.mrf.mxu0
    %v6987 = vadd.f32 %v6963, %v6986
    %v6988 = vpop.f32.mrf.mxu0
    %v6989 = vadd.f32 %v6965, %v6988
    %6990 = vdwg.mxu0
    %v6991 = vadd.f32 %v6247, %v6977
    %v6992 = vadd.f32 %v6248, %v6979
    %v6993 = vadd.f32 %v6249, %v6982
    %v6994 = vadd.f32 %v6250, %v6984
    %v6995 = vadd.f32 %v6251, %v6987
    %v6996 = vadd.f32 %v6252, %v6989
    %v6997 = vsel %vm1011, %v6991, 0.0
    %6998 = vadd.xlane.f32.xlu0 %v6997
    %v6999 = vpop.xlane.xlu0 %6998
    %v7000 = vsel %vm1011, %v6992, 0.0
    %7001 = vadd.xlane.f32.xlu0 %v7000
    %v7002 = vpop.xlane.xlu0 %7001
    %v7003 = vsel %vm1011, %v6993, 0.0
    %7004 = vadd.xlane.f32.xlu0 %v7003
    %v7005 = vpop.xlane.xlu0 %7004
    %v7006 = vsel %vm1011, %v6994, 0.0
    %7007 = vadd.xlane.f32.xlu0 %v7006
    %v7008 = vpop.xlane.xlu0 %7007
    %v7009 = vsel %vm1011, %v6995, 0.0
    %7010 = vadd.xlane.f32.xlu0 %v7009
    %v7011 = vpop.xlane.xlu0 %7010
    %v7012 = vsel %vm1011, %v6996, 0.0
    %7013 = vadd.xlane.f32.xlu0 %v7012
    %v7014 = vpop.xlane.xlu0 %7013
    %v7015 = vmul.f32 %v6999, %v1028
    %v7016 = vmul.f32 %v7002, %v1028
    %v7017 = vmul.f32 %v7005, %v1028
    %v7018 = vmul.f32 %v7008, %v1028
    %v7019 = vmul.f32 %v7011, %v1028
    %v7020 = vmul.f32 %v7014, %v1028
    %v7021 = vsub.f32 %v6991, %v7015
    %v7022 = vsub.f32 %v6992, %v7016
    %v7023 = vsub.f32 %v6993, %v7017
    %v7024 = vsub.f32 %v6994, %v7018
    %v7025 = vsub.f32 %v6995, %v7019
    %v7026 = vsub.f32 %v6996, %v7020
    %v7027 = vmul.f32 %v7021, %v7021
    %v7028 = vmul.f32 %v7022, %v7022
    %v7029 = vmul.f32 %v7023, %v7023
    %v7030 = vmul.f32 %v7024, %v7024
    %v7031 = vmul.f32 %v7025, %v7025
    %v7032 = vmul.f32 %v7026, %v7026
    %v7033 = vsel %vm1011, %v7027, 0.0
    %7034 = vadd.xlane.f32.xlu0 %v7033
    %v7035 = vpop.xlane.xlu0 %7034
    %v7036 = vsel %vm1011, %v7028, 0.0
    %7037 = vadd.xlane.f32.xlu0 %v7036
    %v7038 = vpop.xlane.xlu0 %7037
    %v7039 = vsel %vm1011, %v7029, 0.0
    %7040 = vadd.xlane.f32.xlu0 %v7039
    %v7041 = vpop.xlane.xlu0 %7040
    %v7042 = vsel %vm1011, %v7030, 0.0
    %7043 = vadd.xlane.f32.xlu0 %v7042
    %v7044 = vpop.xlane.xlu0 %7043
    %v7045 = vsel %vm1011, %v7031, 0.0
    %7046 = vadd.xlane.f32.xlu0 %v7045
    %v7047 = vpop.xlane.xlu0 %7046
    %v7048 = vsel %vm1011, %v7032, 0.0
    %7049 = vadd.xlane.f32.xlu0 %v7048
    %v7050 = vpop.xlane.xlu0 %7049
    %v7051 = vmul.f32 %v7035, %v1028
    %v7052 = vmul.f32 %v7038, %v1028
    %v7053 = vmul.f32 %v7041, %v1028
    %v7054 = vmul.f32 %v7044, %v1028
    %v7055 = vmul.f32 %v7047, %v1028
    %v7056 = vmul.f32 %v7050, %v1028
    %v7057 = vadd.f32 %v7051, 1e-05
    %v7058 = vadd.f32 %v7052, 1e-05
    %v7059 = vadd.f32 %v7053, 1e-05
    %v7060 = vadd.f32 %v7054, 1e-05
    %v7061 = vadd.f32 %v7055, 1e-05
    %v7062 = vadd.f32 %v7056, 1e-05
    %v7063 = vrsqrt.pop %v7057
    %v7064 = vmul.f32 %v7063, %v7057
    %v7065 = vmul.f32 %v7064, %v7063
    %v7066 = vmul.f32 0.5, %v7065
    %v7067 = vsub.f32 1.5, %v7066
    %v7068 = vmul.f32 %v7063, %v7067
    %vm7069 = vweird.f32 %v7057
    %vm7070 = vweird.f32 %v7063
    %vm7071 = vmor %vm7069, %vm7070
    %v7072 = vsel %vm7071, %v7063, %v7068
    %v7073 = vrsqrt.pop %v7058
    %v7074 = vmul.f32 %v7073, %v7058
    %v7075 = vmul.f32 %v7074, %v7073
    %v7076 = vmul.f32 0.5, %v7075
    %v7077 = vsub.f32 1.5, %v7076
    %v7078 = vmul.f32 %v7073, %v7077
    %vm7079 = vweird.f32 %v7058
    %vm7080 = vweird.f32 %v7073
    %vm7081 = vmor %vm7079, %vm7080
    %v7082 = vsel %vm7081, %v7073, %v7078
    %v7083 = vrsqrt.pop %v7059
    %v7084 = vmul.f32 %v7083, %v7059
    %v7085 = vmul.f32 %v7084, %v7083
    %v7086 = vmul.f32 0.5, %v7085
    %v7087 = vsub.f32 1.5, %v7086
    %v7088 = vmul.f32 %v7083, %v7087
    %vm7089 = vweird.f32 %v7059
    %vm7090 = vweird.f32 %v7083
    %vm7091 = vmor %vm7089, %vm7090
    %v7092 = vsel %vm7091, %v7083, %v7088
    %v7093 = vrsqrt.pop %v7060
    %v7094 = vmul.f32 %v7093, %v7060
    %v7095 = vmul.f32 %v7094, %v7093
    %v7096 = vmul.f32 0.5, %v7095
    %v7097 = vsub.f32 1.5, %v7096
    %v7098 = vmul.f32 %v7093, %v7097
    %vm7099 = vweird.f32 %v7060
    %vm7100 = vweird.f32 %v7093
    %vm7101 = vmor %vm7099, %vm7100
    %v7102 = vsel %vm7101, %v7093, %v7098
    %v7103 = vrsqrt.pop %v7061
    %v7104 = vmul.f32 %v7103, %v7061
    %v7105 = vmul.f32 %v7104, %v7103
    %v7106 = vmul.f32 0.5, %v7105
    %v7107 = vsub.f32 1.5, %v7106
    %v7108 = vmul.f32 %v7103, %v7107
    %vm7109 = vweird.f32 %v7061
    %vm7110 = vweird.f32 %v7103
    %vm7111 = vmor %vm7109, %vm7110
    %v7112 = vsel %vm7111, %v7103, %v7108
    %v7113 = vrsqrt.pop %v7062
    %v7114 = vmul.f32 %v7113, %v7062
    %v7115 = vmul.f32 %v7114, %v7113
    %v7116 = vmul.f32 0.5, %v7115
    %v7117 = vsub.f32 1.5, %v7116
    %v7118 = vmul.f32 %v7113, %v7117
    %vm7119 = vweird.f32 %v7062
    %vm7120 = vweird.f32 %v7113
    %vm7121 = vmor %vm7119, %vm7120
    %v7122 = vsel %vm7121, %v7113, %v7118
    %v7123 = vmul.f32 %v7021, %v7072
    %v7124 = vmul.f32 %v7022, %v7082
    %v7125 = vmul.f32 %v7023, %v7092
    %v7126 = vmul.f32 %v7024, %v7102
    %v7127 = vmul.f32 %v7025, %v7112
    %v7128 = vmul.f32 %v7026, %v7122
    %v7129 = vperm.slane %v39, 6
    %v7130 = vmul.f32 %v7123, %v7129
    %v7131 = vmul.f32 %v7124, %v7129
    %v7132 = vmul.f32 %v7125, %v7129
    %v7133 = vmul.f32 %v7126, %v7129
    %v7134 = vmul.f32 %v7127, %v7129
    %v7135 = vmul.f32 %v7128, %v7129
    %v7136 = vperm.slane %v39, 7
    %v7137 = vadd.f32 %v7130, %v7136
    %v7138 = vadd.f32 %v7131, %v7136
    %v7139 = vadd.f32 %v7132, %v7136
    %v7140 = vadd.f32 %v7133, %v7136
    %v7141 = vadd.f32 %v7134, %v7136
    %v7142 = vadd.f32 %v7135, %v7136
    %v7143 = vld [vmem:[%s3] sm:$0x7]
    %vm7144 = vcmask 392192
    %v7146 = vsel %vm7144, %v7143, 0
    %7148 = vmatpush.msra.mxu0 0.0
    %7149 = vmatpush.msra.mxu0 0.0
    %7150 = vmatpush.msra.mxu0 0.0
    %7151 = vmatpush.msra.mxu0 0.0
    %7152 = vmatpush.msra.mxu0 0.0
    %7153 = vmatpush.msra.mxu0 0.0
    %7154 = vmatpush.msra.mxu0 0.0
    %7155 = vmatpush.msra.mxu0 0.0
    %7156 = vmatpush.msra.mxu0 0.0
    %7157 = vmatpush.msra.mxu0 0.0
    %7158 = vmatpush.msra.mxu0 %v7142
    %7159 = vmatpush.msra.mxu0 %v7141
    %7160 = vmatpush.msra.mxu0 %v7140
    %7161 = vmatpush.msra.mxu0 %v7139
    %7162 = vmatpush.msra.mxu0 %v7138
    %7163 = vmatpush.msra.mxu0 %v7137
    %7164 = vmatmul.f32.gmra.mxu0 %v7146
    %v7165 = vpop.f32.mrf.mxu0
    %v7166 = vadd.f32 0.0, %v7165
    %7167 = vdwg.mxu0
    %v7168 = vpack.c.bf16 %v7166, %v7166
    %v7174 = vsel %vm1011, %v7168, 0
    %7176 = vmatpush.bf16.msra.mxu0 0
    %7177 = vmatpush.bf16.msra.mxu0 0
    %7178 = vmatpush.bf16.msra.mxu0 0
    %7179 = vmatpush.bf16.msra.mxu0 0
    %7180 = vmatpush.bf16.msra.mxu0 %v6482
    %7181 = vmatpush.bf16.msra.mxu0 %v6476
    %7182 = vmatpush.bf16.msra.mxu0 %v6470
    %7183 = vmatpush.bf16.msra.mxu0 %v6464
    %7184 = vmatmul.bf16.gmra.mxu0 %v7174
    %v7185 = vpop.f32.mrf.mxu0
    %v7186 = vadd.f32 0.0, %v7185
    %v7187 = vpop.f32.mrf.mxu0
    %7188 = vdwg.mxu0
    %v7189 = vmul.f32 %v7186, %v7186
    %vm7190 = vcmask 518144
    %v7191 = vsel %vm7190, %v7189, 0.0
    %7192 = vadd.xlane.f32.xlu0 %v7191
    %v7193 = vpop.xlane.xlu0 %7192
    %v7194 = vrsqrt.pop %v7193
    %v7195 = vmul.f32 %v7194, %v7193
    %v7196 = vmul.f32 %v7195, %v7194
    %v7197 = vmul.f32 0.5, %v7196
    %v7198 = vsub.f32 1.5, %v7197
    %v7199 = vmul.f32 %v7194, %v7198
    %vm7200 = vweird.f32 %v7193
    %vm7201 = vweird.f32 %v7194
    %vm7202 = vmor %vm7200, %vm7201
    %v7203 = vsel %vm7202, %v7194, %v7199
    %v7204 = vmul.f32 %v7186, %v7203
    %v7205 = vmul.f32 %v4794, %v4794
    %v7206 = vsel %vm1018, %v7205, 0.0
    %7207 = vadd.xlane.f32.xlu0 %v7206
    %v7208 = vpop.xlane.xlu0 %7207
    %v7209 = vrsqrt.pop %v7208
    %v7210 = vmul.f32 %v7209, %v7208
    %v7211 = vmul.f32 %v7210, %v7209
    %v7212 = vmul.f32 0.5, %v7211
    %v7213 = vsub.f32 1.5, %v7212
    %v7214 = vmul.f32 %v7209, %v7213
    %vm7215 = vweird.f32 %v7208
    %vm7216 = vweird.f32 %v7209
    %vm7217 = vmor %vm7215, %vm7216
    %v7218 = vsel %vm7217, %v7209, %v7214
    %v7219 = vmul.f32 %v4794, %v7218
    %s7220 = sld [smem:[#allocation2]]
    %v7222 = vsel %vm1011, %v7219, 0
    %v7225 = vsel %vm1011, %v7204, 0
    %7227 = vmatpush.xpose.msra.mxu0 0.0
    %7228 = vmatpush.xpose.msra.mxu0 0.0
    %7229 = vmatpush.xpose.msra.mxu0 0.0
    %7230 = vmatpush.xpose.msra.mxu0 0.0
    %7231 = vmatpush.xpose.msra.mxu0 0.0
    %7232 = vmatpush.xpose.msra.mxu0 0.0
    %7233 = vmatpush.xpose.msra.mxu0 0.0
    %7234 = vmatpush.xpose.msra.mxu0 0.0
    %7235 = vmatpush.xpose.msra.mxu0 0.0
    %7236 = vmatpush.xpose.msra.mxu0 0.0
    %7237 = vmatpush.xpose.msra.mxu0 0.0
    %7238 = vmatpush.xpose.msra.mxu0 0.0
    %7239 = vmatpush.xpose.msra.mxu0 0.0
    %7240 = vmatpush.xpose.msra.mxu0 0.0
    %7241 = vmatpush.xpose.msra.mxu0 0.0
    %7242 = vmatpush.xpose.msra.mxu0 %v7225
    %7243 = vmatmul.f32.gmra.mxu0 %v7222
    %v7244 = vpop.f32.mrf.mxu0
    %v7245 = vadd.f32 0.0, %v7244
    %7246 = vdwg.mxu0
    %v7247 = vstv %s7220
    %v7248 = vmul.f32 %v7247, %v7245
    %vm7249 = vcmask 19456
    %v7250 = vsel %vm7249, %v7248, 0.0
    %v7251 = vrot.slane %v7250, 4
    %v7252 = vadd.f32 %v7250, %v7251
    %v7253 = vrot.slane %v7252, 2
    %v7254 = vadd.f32 %v7252, %v7253
    %v7255 = vrot.slane %v7254, 1
    %v7256 = vadd.f32 %v7254, %v7255
    %v7257 = vrcp.pop 4.0
    %v7258 = vmul.f32 4.0, %v7257
    %v7259 = vsub.f32 1.0, %v7258
    %v7260 = vmul.f32 %v7257, %v7259
    %v7261 = vadd.f32 %v7257, %v7260
    %vm7262 = vweird.f32 %v7257
    %v7263 = vsel %vm7262, %v7257, %v7261
    %v7264 = vmul.f32 %v7256, %v7263
    %vm7265 = vcmask 16384
    %7266 = vst.msk [vmem:[#allocation3] sm:$0x1] %vm7265, %v7264
    // Predicated region
    $region38: #{clip_ttt_forward.1} parent=1 // pred_check
      _
    $region39: #{clip_ttt_forward.1} parent=1 // pred_check_branch
      %7268 = sbr.rel (0) target = $region41
    $region40: #{clip_ttt_forward.1} parent=1 // pred_region
      %7270 = vsyncadd [#allocation4], 0
      %s7272 = sshll.u32 [#allocation3], 4
      %s7273 = int_to_ptr.vmem [resolvable:$true] %s7272
      %s7274 = sshll.u32 %s9, 4
      %s7275 = int_to_ptr.hbm [resolvable:$true] %s7274
      %7277 = dma.vmem_to_hbm [thread:$0]  %s7273, 16, %s7275, [#allocation4]
    $region41: #{clip_ttt_forward.1} parent=1 // pred_fallthru
      _
    // Predicated region
    $region42: #{clip_ttt_forward.1} parent=1 // pred_check
      _
    $region43: #{clip_ttt_forward.1} parent=1 // pred_check_branch
      %7279 = sbr.rel (0) target = $region45
    $region44: #{clip_ttt_forward.1} parent=1 // pred_region
      %7281 = dma.done [#allocation4], 16
    $region45: #{clip_ttt_forward.1} parent=1 // pred_fallthru
      _
    %7282 = vsyncpa [#allocation4], 1

</llo_original>
